<compile_context>
chip_gen: v5e
topology: v5e:2x2
jax: 0.10.0
libtpu: 0.0.40
codegen_flags: <defaults>
</compile_context>

<pallas_src>
import math
import functools

import numpy as np
import jax
import jax.numpy as jnp
from jax import lax
from jax.experimental import pallas as pl
from jax.experimental.pallas import tpu as pltpu


# -----------------------------------------------------------------------------
# Fused tower kernel: one whole tower (num_convs x [conv3x3 + GN(32) + ReLU]
# + fused head conv) for one batch element.  program_id(0) selects the tower
# (0 = cls, 1 = bbox).
# -----------------------------------------------------------------------------
def _car_tower_kernel(x_ref, mask_ref, tw_ref, tb_ref, tg_ref, tbe_ref,
                      hw_ref, hb_ref, o_ref, act_ref,
                      *, H, W, C, num_convs, groups, eps):
    N = H * W
    cpg = C // groups
    tower = pl.program_id(0)                      # 0 = cls tower, 1 = bbox tower

    # 3x3 tap order (matches the (9C, Cout) weight layout): k = (dy+1)*3+(dx+1)
    taps = [(dy, dx) for dy in (-1, 0, 1) for dx in (-1, 0, 1)]

    # Border-validity masks (0/1 f32), one column per tap, precomputed in the
    # wrapper.  (N, 1) slices broadcast along lanes at use.
    masks = mask_ref[...]                                            # (N, 9)

    # Group-membership matrices so per-group GN stats can be aggregated and
    # broadcast back with two tiny matmuls (no reshape/transpose, no int div).
    ch_cg = lax.broadcasted_iota(jnp.int32, (C, groups), 0)
    gr_cg = lax.broadcasted_iota(jnp.int32, (C, groups), 1)
    member_cg = ((ch_cg >= gr_cg * cpg)
                 & (ch_cg < (gr_cg + 1) * cpg)).astype(jnp.float32)  # (C, G)
    gr_gc = lax.broadcasted_iota(jnp.int32, (groups, C), 0)
    ch_gc = lax.broadcasted_iota(jnp.int32, (groups, C), 1)
    member_gc = ((ch_gc >= gr_gc * cpg)
                 & (ch_gc < (gr_gc + 1) * cpg)).astype(jnp.float32)  # (G, C)

    def conv3x3(src_bf16, wsel, bias_row):
        """3x3 'SAME' conv as 9 shift-and-accumulate MXU matmuls.

        src_bf16 : (N, C) bf16 value (flat h*W + w major activations)
        wsel(k)  : (C, Cout) bf16 weight slice for tap k
        bias_row : (1, Cout) f32
        returns  : (N, Cout) f32
        """
        src32 = src_bf16.astype(jnp.float32)
        acc = None
        for k, (dy, dx) in enumerate(taps):
            shift = dy * W + dx
            if shift == 0:
                tap_bf = src_bf16                 # center tap: no roll, no mask
            else:
                # want tap[n] = src[n + shift]  ->  jnp.roll-style shift of -shift
                rolled = pltpu.roll(src32, (-shift) % N, 0)          # XLU
                tap_bf = (rolled * masks[:, k:k + 1]).astype(jnp.bfloat16)
            part = jnp.dot(tap_bf, wsel(k), preferred_element_type=jnp.float32)
            acc = part if acc is None else acc + part
        return acc + bias_row

    # --------------------- tower: num_convs x (conv + GN(32) + ReLU) --------
    for layer in range(num_convs):
        src = x_ref[0] if layer == 0 else act_ref[...]
        yv = conv3x3(
            src,
            lambda k, layer=layer: tw_ref[0, layer, pl.ds(k * C, C), :],
            tb_ref[0, layer])                                        # (N, C) f32

        # GroupNorm(groups): biased variance over (N, cpg) elements per group.
        # Single-pass E[x^2]-E[x]^2 in f32 (validated tolerance at this scale).
        s1 = jnp.sum(yv, axis=0, keepdims=True)                      # (1, C)
        s2 = jnp.sum(yv * yv, axis=0, keepdims=True)                 # (1, C)
        cnt = float(N * cpg)
        gmean = jnp.dot(s1, member_cg, preferred_element_type=jnp.float32) / cnt
        gmsq = jnp.dot(s2, member_cg, preferred_element_type=jnp.float32) / cnt
        gvar = gmsq - gmean * gmean                                  # biased (GN)
        mean_c = jnp.dot(gmean, member_gc, preferred_element_type=jnp.float32)
        var_c = jnp.dot(gvar, member_gc, preferred_element_type=jnp.float32)
        inv = lax.rsqrt(var_c + eps)                                 # EUP
        scale = tg_ref[0, layer] * inv                               # (1, C)
        shift_c = tbe_ref[0, layer] - mean_c * scale                 # (1, C)
        out = jnp.maximum(yv * scale + shift_c, 0.0)                 # FMA + relu
        act_ref[...] = out.astype(jnp.bfloat16)      # single cast per layer

    # --------------------- fused head conv ----------------------------------
    # cls tower : columns [logits(num_classes) | centerness(1) | zero pad]
    # bbox tower: columns [bbox_pred(4) | zero pad], exp() applied below.
    src = act_ref[...] if num_convs > 0 else x_ref[0]
    yh = conv3x3(src, lambda k: hw_ref[0, pl.ds(k * C, C), :], hb_ref[0])

    @pl.when(tower == 0)
    def _():
        o_ref[0] = yh                                # (N, head_pad) lane-dense

    @pl.when(tower == 1)
    def _():
        o_ref[0] = jnp.exp(yh)


# -----------------------------------------------------------------------------
# Host-side helper: per-tap border-validity masks for a flat h*W + w layout.
# -----------------------------------------------------------------------------
def _make_tap_masks(H, W):
    N = H * W
    hh, ww = np.divmod(np.arange(N), W)
    cols = []
    for dy in (-1, 0, 1):
        for dx in (-1, 0, 1):
            valid = np.ones(N, dtype=np.float32)
            if dy == -1:
                valid *= (hh >= 1)
            if dy == 1:
                valid *= (hh <= H - 2)
            if dx == -1:
                valid *= (ww >= 1)
            if dx == 1:
                valid *= (ww <= W - 2)
            cols.append(valid.astype(np.float32))
    return jnp.asarray(np.stack(cols, axis=1))                       # (N, 9)


# -----------------------------------------------------------------------------
# Forward (CARHead.forward equivalent); NCHW in / NCHW out like PyTorch.
# -----------------------------------------------------------------------------
def car_head_forward(x_nchw, params, *, groups=32, eps=1e-5):
    B, C, H, W = x_nchw.shape
    N = H * W
    num_convs = int(params["num_convs"])
    num_classes = int(params["num_classes"])
    head_pad = params["head_w"].shape[-1]

    # NCHW -> flat (B, H*W, C) bf16 (MXU operand dtype; single cast here).
    # TODO(synk): pad C up to a multiple of 128 here for configs where it is
    # not (e.g. this C=64 demo); real CARHead uses C=256 which is aligned.
    x = jnp.transpose(x_nchw, (0, 2, 3, 1)).reshape(B, N, C).astype(jnp.bfloat16)
    tw = params["tower_w"].astype(jnp.bfloat16)      # (2, num_convs, 9C, C)
    hw = params["head_w"].astype(jnp.bfloat16)       # (2, 9C, head_pad)
    masks = _make_tap_masks(H, W)                    # (N, 9) f32

    kern = functools.partial(_car_tower_kernel, H=H, W=W, C=C,
                             num_convs=num_convs, groups=groups, eps=eps)

    out = pl.pallas_call(
        kern,
        out_shape=jax.ShapeDtypeStruct((2 * B, N, head_pad), jnp.float32),
        grid=(2, B),                                  # (tower, batch)
        in_specs=[
            pl.BlockSpec((1, N, C), lambda t, b: (b, 0, 0)),
            pl.BlockSpec((N, 9), lambda t, b: (0, 0)),
            pl.BlockSpec((1, num_convs, 9 * C, C), lambda t, b: (t, 0, 0, 0)),
            pl.BlockSpec((1, num_convs, 1, C), lambda t, b: (t, 0, 0, 0)),
            pl.BlockSpec((1, num_convs, 1, C), lambda t, b: (t, 0, 0, 0)),
            pl.BlockSpec((1, num_convs, 1, C), lambda t, b: (t, 0, 0, 0)),
            pl.BlockSpec((1, 9 * C, head_pad), lambda t, b: (t, 0, 0)),
            pl.BlockSpec((1, 1, head_pad), lambda t, b: (t, 0, 0)),
        ],
        out_specs=pl.BlockSpec((1, N, head_pad),
                               lambda t, b: (t * B + b, 0, 0)),
        scratch_shapes=[
            pltpu.VMEM((N, C), jnp.bfloat16),         # per-layer activation
        ],
        compiler_params=pltpu.CompilerParams(
            # Leading (tower) axis parallel -> v7x megacore can split the two
            # independent towers across its TensorCores even at B=1.
            dimension_semantics=("parallel", "parallel"),
            vmem_limit_bytes=32 * 1024 * 1024,
        ),
    )(x, masks, tw, params["tower_b"], params["tower_gamma"],
      params["tower_beta"], hw, params["head_b"])

    # Flat lane-dense slab -> per-head NCHW outputs (pure-JAX layout plumbing).
    out = out.reshape(2, B, H, W, head_pad)
    logits = out[0, ..., :num_classes]
    centerness = out[0, ..., num_classes:num_classes + 1]
    bbox_reg = out[1, ..., :4]
    to_nchw = lambda t: jnp.transpose(t, (0, 3, 1, 2))
    return to_nchw(logits), to_nchw(bbox_reg), to_nchw(centerness)


# -----------------------------------------------------------------------------
# Parameter construction (deterministic, mirrors CARHead.__init__)
# -----------------------------------------------------------------------------
def init_car_head_params(key, in_channels, num_convs, num_classes, prior_prob,
                         head_pad=128):
    C = in_channels
    keys = jax.random.split(key, 2 * num_convs + 3)
    ki = 0

    tower_w = []
    for _t in range(2):                                  # 0 = cls, 1 = bbox
        layers = []
        for _ in range(num_convs):
            layers.append(0.01 * jax.random.normal(keys[ki], (9 * C, C),
                                                   jnp.float32))
            ki += 1
        tower_w.append(jnp.stack(layers))
    tower_w = jnp.stack(tower_w)                         # (2, num_convs, 9C, C)
    tower_b = jnp.zeros((2, num_convs, 1, C), jnp.float32)
    tower_gamma = jnp.ones((2, num_convs, 1, C), jnp.float32)
    tower_beta = jnp.zeros((2, num_convs, 1, C), jnp.float32)

    w_logits = 0.01 * jax.random.normal(keys[ki], (9 * C, num_classes), jnp.float32); ki += 1
    w_bbox = 0.01 * jax.random.normal(keys[ki], (9 * C, 4), jnp.float32); ki += 1
    w_center = 0.01 * jax.random.normal(keys[ki], (9 * C, 1), jnp.float32); ki += 1

    head_w = jnp.zeros((2, 9 * C, head_pad), jnp.float32)
    head_w = head_w.at[0, :, :num_classes].set(w_logits)
    head_w = head_w.at[0, :, num_classes:num_classes + 1].set(w_center)
    head_w = head_w.at[1, :, :4].set(w_bbox)

    bias_value = -math.log((1.0 - prior_prob) / prior_prob)
    head_b = jnp.zeros((2, 1, head_pad), jnp.float32)
    head_b = head_b.at[0, 0, :num_classes].set(bias_value)

    return {"tower_w": tower_w, "tower_b": tower_b,
            "tower_gamma": tower_gamma, "tower_beta": tower_beta,
            "head_w": head_w, "head_b": head_b,
            "num_classes": num_classes, "num_convs": num_convs}


# -----------------------------------------------------------------------------
# Pure-JAX reference (f32) for correctness check
# -----------------------------------------------------------------------------
def _ref_forward(x_nchw, params, groups=32, eps=1e-5):
    x = jnp.transpose(x_nchw, (0, 2, 3, 1))
    B, H, W, C = x.shape
    nc = int(params["num_classes"])
    num_convs = int(params["num_convs"])

    def conv3x3(h, w9c, b):
        cout = w9c.shape[-1]
        w = w9c.reshape(3, 3, C, cout)                   # (dy, dx, Cin, Cout)
        y = lax.conv_general_dilated(h, w, (1, 1), "SAME",
                                     dimension_numbers=("NHWC", "HWIO", "NHWC"))
        return y + b.reshape(1, 1, 1, cout)

    def gn_relu(y, gamma, beta):
        Bq, Hq, Wq, Cq = y.shape
        cpg = Cq // groups
        yr = y.reshape(Bq, Hq, Wq, groups, cpg)
        mean = yr.mean(axis=(1, 2, 4), keepdims=True)
        var = yr.var(axis=(1, 2, 4), keepdims=True)
        yn = ((yr - mean) / jnp.sqrt(var + eps)).reshape(Bq, Hq, Wq, Cq)
        return jnp.maximum(yn * gamma.reshape(1, 1, 1, -1)
                           + beta.reshape(1, 1, 1, -1), 0.0)

    outs = []
    for t in range(2):
        h = x
        for l in range(num_convs):
            h = conv3x3(h, params["tower_w"][t, l], params["tower_b"][t, l])
            h = gn_relu(h, params["tower_gamma"][t, l], params["tower_beta"][t, l])
        outs.append(conv3x3(h, params["head_w"][t], params["head_b"][t]))

    logits = outs[0][..., :nc]
    centerness = outs[0][..., nc:nc + 1]
    bbox_reg = jnp.exp(outs[1][..., :4])
    to_nchw = lambda t_: jnp.transpose(t_, (0, 3, 1, 2))
    return to_nchw(logits), to_nchw(bbox_reg), to_nchw(centerness)


# -----------------------------------------------------------------------------
if __name__ == "__main__":
    # Small config consistent with the module: GroupNorm(32, C) needs C % 32 == 0.
    B, C, H, W = 2, 64, 16, 16
    NUM_CONVS = 2
    NUM_CLASSES = 2
    PRIOR_PROB = 0.01

    key = jax.random.PRNGKey(0)
    kx, kp = jax.random.split(key)
    x = jax.random.normal(kx, (B, C, H, W), jnp.float32)
    params = init_car_head_params(kp, C, NUM_CONVS, NUM_CLASSES, PRIOR_PROB)

    logits, bbox_reg, centerness = jax.block_until_ready(
        car_head_forward(x, params))

    # sanity: shapes match PyTorch (NCHW)
    assert logits.shape == (B, NUM_CLASSES, H, W)
    assert bbox_reg.shape == (B, 4, H, W)
    assert centerness.shape == (B, 1, H, W)

    # correctness vs. pure-JAX f32 reference (kernel uses bf16 MXU operands
    # with f32 accumulation -> slightly looser tolerance than all-f32).
    rl, rb, rc = jax.block_until_ready(_ref_forward(x, params))
    assert jnp.allclose(logits, rl, atol=2e-2, rtol=2e-2), \
        float(jnp.max(jnp.abs(logits - rl)))
    assert jnp.allclose(bbox_reg, rb, atol=2e-2, rtol=2e-2), \
        float(jnp.max(jnp.abs(bbox_reg - rb)))
    assert jnp.allclose(centerness, rc, atol=2e-2, rtol=2e-2), \
        float(jnp.max(jnp.abs(centerness - rc)))

    print("KERNEL_OK")
</pallas_src>

<mosaic_0001>
module attributes {stable_mosaic.version = 11 : i64} {
  func.func @_car_tower_kernel(%arg0: i32, %arg1: i32, %arg2: memref<1x256x64xbf16, #tpu.memory_space<vmem>>, %arg3: memref<256x9xf32, #tpu.memory_space<vmem>>, %arg4: memref<1x2x576x64xbf16, #tpu.memory_space<vmem>>, %arg5: memref<1x2x1x64xf32, #tpu.memory_space<vmem>>, %arg6: memref<1x2x1x64xf32, #tpu.memory_space<vmem>>, %arg7: memref<1x2x1x64xf32, #tpu.memory_space<vmem>>, %arg8: memref<1x576x128xbf16, #tpu.memory_space<vmem>>, %arg9: memref<1x1x128xf32, #tpu.memory_space<vmem>>, %arg10: memref<1x256x128xf32, #tpu.memory_space<vmem>>, %arg11: memref<256x64xbf16, #tpu.memory_space<vmem>>) attributes {dimension_semantics = [#tpu.dimension_semantics<parallel>, #tpu.dimension_semantics<parallel>], iteration_bounds = array<i64: 2, 2>, scalar_prefetch = 0 : i64, scratch_operands = 1 : i64, tpu.core_type = #tpu.core_type<tc>, window_params = [{transform_indices = @transform_0, window_bounds = array<i64: 1, 256, 64>}, {pipeline_mode = #tpu.pipeline_mode<synchronous>, transform_indices = @transform_1, window_bounds = array<i64: 256, 9>}, {transform_indices = @transform_2, window_bounds = array<i64: 1, 2, 576, 64>}, {transform_indices = @transform_3, window_bounds = array<i64: 1, 2, 1, 64>}, {transform_indices = @transform_4, window_bounds = array<i64: 1, 2, 1, 64>}, {transform_indices = @transform_5, window_bounds = array<i64: 1, 2, 1, 64>}, {transform_indices = @transform_6, window_bounds = array<i64: 1, 576, 128>}, {transform_indices = @transform_7, window_bounds = array<i64: 1, 1, 128>}, {transform_indices = @transform_8, window_bounds = array<i64: 1, 256, 128>}]} {
    %c0 = arith.constant 0 : index
    %c0_0 = arith.constant 0 : index
    %0 = vector.load %arg3[%c0, %c0_0] : memref<256x9xf32, #tpu.memory_space<vmem>>, vector<256x9xf32>
    %1 = tpu.iota {dimensions = array<i32: 0>} : vector<64x32xi32>
    %2 = tpu.iota {dimensions = array<i32: 1>} : vector<64x32xi32>
    %c2_i32 = arith.constant 2 : i32
    %3 = vector.broadcast %c2_i32 : i32 to vector<64x32xi32>
    %4 = arith.muli %2, %3 : vector<64x32xi32>
    %5 = arith.cmpi sge, %1, %4 : vector<64x32xi32>
    %c1_i32 = arith.constant 1 : i32
    %6 = vector.broadcast %c1_i32 : i32 to vector<64x32xi32>
    %7 = arith.addi %2, %6 : vector<64x32xi32>
    %c2_i32_1 = arith.constant 2 : i32
    %8 = vector.broadcast %c2_i32_1 : i32 to vector<64x32xi32>
    %9 = arith.muli %7, %8 : vector<64x32xi32>
    %10 = arith.cmpi slt, %1, %9 : vector<64x32xi32>
    %11 = arith.andi %5, %10 : vector<64x32xi1>
    %12 = arith.extui %11 : vector<64x32xi1> to vector<64x32xi32>
    %13 = arith.sitofp %12 : vector<64x32xi32> to vector<64x32xf32>
    %14 = tpu.iota {dimensions = array<i32: 0>} : vector<32x64xi32>
    %15 = tpu.iota {dimensions = array<i32: 1>} : vector<32x64xi32>
    %c2_i32_2 = arith.constant 2 : i32
    %16 = vector.broadcast %c2_i32_2 : i32 to vector<32x64xi32>
    %17 = arith.muli %14, %16 : vector<32x64xi32>
    %18 = arith.cmpi sge, %15, %17 : vector<32x64xi32>
    %c1_i32_3 = arith.constant 1 : i32
    %19 = vector.broadcast %c1_i32_3 : i32 to vector<32x64xi32>
    %20 = arith.addi %14, %19 : vector<32x64xi32>
    %c2_i32_4 = arith.constant 2 : i32
    %21 = vector.broadcast %c2_i32_4 : i32 to vector<32x64xi32>
    %22 = arith.muli %20, %21 : vector<32x64xi32>
    %23 = arith.cmpi slt, %15, %22 : vector<32x64xi32>
    %24 = arith.andi %18, %23 : vector<32x64xi1>
    %25 = arith.extui %24 : vector<32x64xi1> to vector<32x64xi32>
    %26 = arith.sitofp %25 : vector<32x64xi32> to vector<32x64xf32>
    %c0_5 = arith.constant 0 : index
    %c0_6 = arith.constant 0 : index
    %c0_7 = arith.constant 0 : index
    %27 = vector.load %arg2[%c0_5, %c0_6, %c0_7] : memref<1x256x64xbf16, #tpu.memory_space<vmem>>, vector<1x256x64xbf16>
    %28 = vector.shape_cast %27 : vector<1x256x64xbf16> to vector<256x64xbf16>
    %c0_8 = arith.constant 0 : index
    %c0_9 = arith.constant 0 : index
    %c0_10 = arith.constant 0 : index
    %c0_11 = arith.constant 0 : index
    %29 = vector.load %arg5[%c0_8, %c0_9, %c0_10, %c0_11] : memref<1x2x1x64xf32, #tpu.memory_space<vmem>>, vector<1x1x1x64xf32>
    %30 = vector.shape_cast %29 : vector<1x1x1x64xf32> to vector<1x64xf32>
    %31 = arith.extf %28 : vector<256x64xbf16> to vector<256x64xf32>
    %c17_i32 = arith.constant 17 : i32
    %32 = tpu.dynamic_rotate %31 by %c17_i32 dim 0 : vector<256x64xf32>, i32 -> vector<256x64xf32>
    %33 = vector.extract_strided_slice %0 {offsets = [0, 0], sizes = [256, 1], strides = [1, 1]} : vector<256x9xf32> to vector<256x1xf32>
    %34 = vector.broadcast %33 : vector<256x1xf32> to vector<256x64xf32>
    %35 = arith.mulf %32, %34 : vector<256x64xf32>
    %36 = arith.truncf %35 : vector<256x64xf32> to vector<256x64xbf16>
    %c0_12 = arith.constant 0 : index
    %c0_13 = arith.constant 0 : index
    %c0_14 = arith.constant 0 : index
    %c0_15 = arith.constant 0 : index
    %37 = vector.load %arg4[%c0_12, %c0_13, %c0_14, %c0_15] : memref<1x2x576x64xbf16, #tpu.memory_space<vmem>>, vector<1x1x64x64xbf16>
    %38 = vector.shape_cast %37 : vector<1x1x64x64xbf16> to vector<64x64xbf16>
    %cst = arith.constant dense<0.000000e+00> : vector<256x64xf32>
    %39 = tpu.matmul %36, %38, %cst {dimension_numbers = #tpu.dot_dimension_numbers<[1], [0], [0], [1], [0, 0, 1, 1], [], []>} : vector<256x64xbf16>, vector<64x64xbf16>, vector<256x64xf32> -> vector<256x64xf32>
    %c16_i32 = arith.constant 16 : i32
    %40 = tpu.dynamic_rotate %31 by %c16_i32 dim 0 : vector<256x64xf32>, i32 -> vector<256x64xf32>
    %41 = vector.extract_strided_slice %0 {offsets = [0, 1], sizes = [256, 1], strides = [1, 1]} : vector<256x9xf32> to vector<256x1xf32>
    %42 = vector.broadcast %41 : vector<256x1xf32> to vector<256x64xf32>
    %43 = arith.mulf %40, %42 : vector<256x64xf32>
    %44 = arith.truncf %43 : vector<256x64xf32> to vector<256x64xbf16>
    %c0_16 = arith.constant 0 : index
    %c0_17 = arith.constant 0 : index
    %c64 = arith.constant 64 : index
    %c0_18 = arith.constant 0 : index
    %45 = vector.load %arg4[%c0_16, %c0_17, %c64, %c0_18] : memref<1x2x576x64xbf16, #tpu.memory_space<vmem>>, vector<1x1x64x64xbf16>
    %46 = vector.shape_cast %45 : vector<1x1x64x64xbf16> to vector<64x64xbf16>
    %cst_19 = arith.constant dense<0.000000e+00> : vector<256x64xf32>
    %47 = tpu.matmul %44, %46, %cst_19 {dimension_numbers = #tpu.dot_dimension_numbers<[1], [0], [0], [1], [0, 0, 1, 1], [], []>} : vector<256x64xbf16>, vector<64x64xbf16>, vector<256x64xf32> -> vector<256x64xf32>
    %48 = arith.addf %39, %47 : vector<256x64xf32>
    %c15_i32 = arith.constant 15 : i32
    %49 = tpu.dynamic_rotate %31 by %c15_i32 dim 0 : vector<256x64xf32>, i32 -> vector<256x64xf32>
    %50 = vector.extract_strided_slice %0 {offsets = [0, 2], sizes = [256, 1], strides = [1, 1]} : vector<256x9xf32> to vector<256x1xf32>
    %51 = vector.broadcast %50 : vector<256x1xf32> to vector<256x64xf32>
    %52 = arith.mulf %49, %51 : vector<256x64xf32>
    %53 = arith.truncf %52 : vector<256x64xf32> to vector<256x64xbf16>
    %c0_20 = arith.constant 0 : index
    %c0_21 = arith.constant 0 : index
    %c128 = arith.constant 128 : index
    %c0_22 = arith.constant 0 : index
    %54 = vector.load %arg4[%c0_20, %c0_21, %c128, %c0_22] : memref<1x2x576x64xbf16, #tpu.memory_space<vmem>>, vector<1x1x64x64xbf16>
    %55 = vector.shape_cast %54 : vector<1x1x64x64xbf16> to vector<64x64xbf16>
    %cst_23 = arith.constant dense<0.000000e+00> : vector<256x64xf32>
    %56 = tpu.matmul %53, %55, %cst_23 {dimension_numbers = #tpu.dot_dimension_numbers<[1], [0], [0], [1], [0, 0, 1, 1], [], []>} : vector<256x64xbf16>, vector<64x64xbf16>, vector<256x64xf32> -> vector<256x64xf32>
    %57 = arith.addf %48, %56 : vector<256x64xf32>
    %c1_i32_24 = arith.constant 1 : i32
    %58 = tpu.dynamic_rotate %31 by %c1_i32_24 dim 0 : vector<256x64xf32>, i32 -> vector<256x64xf32>
    %59 = vector.extract_strided_slice %0 {offsets = [0, 3], sizes = [256, 1], strides = [1, 1]} : vector<256x9xf32> to vector<256x1xf32>
    %60 = vector.broadcast %59 : vector<256x1xf32> to vector<256x64xf32>
    %61 = arith.mulf %58, %60 : vector<256x64xf32>
    %62 = arith.truncf %61 : vector<256x64xf32> to vector<256x64xbf16>
    %c0_25 = arith.constant 0 : index
    %c0_26 = arith.constant 0 : index
    %c192 = arith.constant 192 : index
    %c0_27 = arith.constant 0 : index
    %63 = vector.load %arg4[%c0_25, %c0_26, %c192, %c0_27] : memref<1x2x576x64xbf16, #tpu.memory_space<vmem>>, vector<1x1x64x64xbf16>
    %64 = vector.shape_cast %63 : vector<1x1x64x64xbf16> to vector<64x64xbf16>
    %cst_28 = arith.constant dense<0.000000e+00> : vector<256x64xf32>
    %65 = tpu.matmul %62, %64, %cst_28 {dimension_numbers = #tpu.dot_dimension_numbers<[1], [0], [0], [1], [0, 0, 1, 1], [], []>} : vector<256x64xbf16>, vector<64x64xbf16>, vector<256x64xf32> -> vector<256x64xf32>
    %66 = arith.addf %57, %65 : vector<256x64xf32>
    %c0_29 = arith.constant 0 : index
    %c0_30 = arith.constant 0 : index
    %c256 = arith.constant 256 : index
    %c0_31 = arith.constant 0 : index
    %67 = vector.load %arg4[%c0_29, %c0_30, %c256, %c0_31] : memref<1x2x576x64xbf16, #tpu.memory_space<vmem>>, vector<1x1x64x64xbf16>
    %68 = vector.shape_cast %67 : vector<1x1x64x64xbf16> to vector<64x64xbf16>
    %cst_32 = arith.constant dense<0.000000e+00> : vector<256x64xf32>
    %69 = tpu.matmul %28, %68, %cst_32 {dimension_numbers = #tpu.dot_dimension_numbers<[1], [0], [0], [1], [0, 0, 1, 1], [], []>} : vector<256x64xbf16>, vector<64x64xbf16>, vector<256x64xf32> -> vector<256x64xf32>
    %70 = arith.addf %66, %69 : vector<256x64xf32>
    %c255_i32 = arith.constant 255 : i32
    %71 = tpu.dynamic_rotate %31 by %c255_i32 dim 0 : vector<256x64xf32>, i32 -> vector<256x64xf32>
    %72 = vector.extract_strided_slice %0 {offsets = [0, 5], sizes = [256, 1], strides = [1, 1]} : vector<256x9xf32> to vector<256x1xf32>
    %73 = vector.broadcast %72 : vector<256x1xf32> to vector<256x64xf32>
    %74 = arith.mulf %71, %73 : vector<256x64xf32>
    %75 = arith.truncf %74 : vector<256x64xf32> to vector<256x64xbf16>
    %c0_33 = arith.constant 0 : index
    %c0_34 = arith.constant 0 : index
    %c320 = arith.constant 320 : index
    %c0_35 = arith.constant 0 : index
    %76 = vector.load %arg4[%c0_33, %c0_34, %c320, %c0_35] : memref<1x2x576x64xbf16, #tpu.memory_space<vmem>>, vector<1x1x64x64xbf16>
    %77 = vector.shape_cast %76 : vector<1x1x64x64xbf16> to vector<64x64xbf16>
    %cst_36 = arith.constant dense<0.000000e+00> : vector<256x64xf32>
    %78 = tpu.matmul %75, %77, %cst_36 {dimension_numbers = #tpu.dot_dimension_numbers<[1], [0], [0], [1], [0, 0, 1, 1], [], []>} : vector<256x64xbf16>, vector<64x64xbf16>, vector<256x64xf32> -> vector<256x64xf32>
    %79 = arith.addf %70, %78 : vector<256x64xf32>
    %c241_i32 = arith.constant 241 : i32
    %80 = tpu.dynamic_rotate %31 by %c241_i32 dim 0 : vector<256x64xf32>, i32 -> vector<256x64xf32>
    %81 = vector.extract_strided_slice %0 {offsets = [0, 6], sizes = [256, 1], strides = [1, 1]} : vector<256x9xf32> to vector<256x1xf32>
    %82 = vector.broadcast %81 : vector<256x1xf32> to vector<256x64xf32>
    %83 = arith.mulf %80, %82 : vector<256x64xf32>
    %84 = arith.truncf %83 : vector<256x64xf32> to vector<256x64xbf16>
    %c0_37 = arith.constant 0 : index
    %c0_38 = arith.constant 0 : index
    %c384 = arith.constant 384 : index
    %c0_39 = arith.constant 0 : index
    %85 = vector.load %arg4[%c0_37, %c0_38, %c384, %c0_39] : memref<1x2x576x64xbf16, #tpu.memory_space<vmem>>, vector<1x1x64x64xbf16>
    %86 = vector.shape_cast %85 : vector<1x1x64x64xbf16> to vector<64x64xbf16>
    %cst_40 = arith.constant dense<0.000000e+00> : vector<256x64xf32>
    %87 = tpu.matmul %84, %86, %cst_40 {dimension_numbers = #tpu.dot_dimension_numbers<[1], [0], [0], [1], [0, 0, 1, 1], [], []>} : vector<256x64xbf16>, vector<64x64xbf16>, vector<256x64xf32> -> vector<256x64xf32>
    %88 = arith.addf %79, %87 : vector<256x64xf32>
    %c240_i32 = arith.constant 240 : i32
    %89 = tpu.dynamic_rotate %31 by %c240_i32 dim 0 : vector<256x64xf32>, i32 -> vector<256x64xf32>
    %90 = vector.extract_strided_slice %0 {offsets = [0, 7], sizes = [256, 1], strides = [1, 1]} : vector<256x9xf32> to vector<256x1xf32>
    %91 = vector.broadcast %90 : vector<256x1xf32> to vector<256x64xf32>
    %92 = arith.mulf %89, %91 : vector<256x64xf32>
    %93 = arith.truncf %92 : vector<256x64xf32> to vector<256x64xbf16>
    %c0_41 = arith.constant 0 : index
    %c0_42 = arith.constant 0 : index
    %c448 = arith.constant 448 : index
    %c0_43 = arith.constant 0 : index
    %94 = vector.load %arg4[%c0_41, %c0_42, %c448, %c0_43] : memref<1x2x576x64xbf16, #tpu.memory_space<vmem>>, vector<1x1x64x64xbf16>
    %95 = vector.shape_cast %94 : vector<1x1x64x64xbf16> to vector<64x64xbf16>
    %cst_44 = arith.constant dense<0.000000e+00> : vector<256x64xf32>
    %96 = tpu.matmul %93, %95, %cst_44 {dimension_numbers = #tpu.dot_dimension_numbers<[1], [0], [0], [1], [0, 0, 1, 1], [], []>} : vector<256x64xbf16>, vector<64x64xbf16>, vector<256x64xf32> -> vector<256x64xf32>
    %97 = arith.addf %88, %96 : vector<256x64xf32>
    %c239_i32 = arith.constant 239 : i32
    %98 = tpu.dynamic_rotate %31 by %c239_i32 dim 0 : vector<256x64xf32>, i32 -> vector<256x64xf32>
    %99 = vector.extract_strided_slice %0 {offsets = [0, 8], sizes = [256, 1], strides = [1, 1]} : vector<256x9xf32> to vector<256x1xf32>
    %100 = vector.broadcast %99 : vector<256x1xf32> to vector<256x64xf32>
    %101 = arith.mulf %98, %100 : vector<256x64xf32>
    %102 = arith.truncf %101 : vector<256x64xf32> to vector<256x64xbf16>
    %c0_45 = arith.constant 0 : index
    %c0_46 = arith.constant 0 : index
    %c512 = arith.constant 512 : index
    %c0_47 = arith.constant 0 : index
    %103 = vector.load %arg4[%c0_45, %c0_46, %c512, %c0_47] : memref<1x2x576x64xbf16, #tpu.memory_space<vmem>>, vector<1x1x64x64xbf16>
    %104 = vector.shape_cast %103 : vector<1x1x64x64xbf16> to vector<64x64xbf16>
    %cst_48 = arith.constant dense<0.000000e+00> : vector<256x64xf32>
    %105 = tpu.matmul %102, %104, %cst_48 {dimension_numbers = #tpu.dot_dimension_numbers<[1], [0], [0], [1], [0, 0, 1, 1], [], []>} : vector<256x64xbf16>, vector<64x64xbf16>, vector<256x64xf32> -> vector<256x64xf32>
    %106 = arith.addf %97, %105 : vector<256x64xf32>
    %107 = vector.broadcast %30 : vector<1x64xf32> to vector<256x64xf32>
    %108 = arith.addf %106, %107 : vector<256x64xf32>
    %cst_49 = arith.constant dense<0.000000e+00> : vector<64xf32>
    %109 = vector.multi_reduction <add>, %108, %cst_49 [0] : vector<256x64xf32> to vector<64xf32>
    %110 = vector.shape_cast %109 : vector<64xf32> to vector<1x64xf32>
    %111 = arith.mulf %108, %108 : vector<256x64xf32>
    %cst_50 = arith.constant dense<0.000000e+00> : vector<64xf32>
    %112 = vector.multi_reduction <add>, %111, %cst_50 [0] : vector<256x64xf32> to vector<64xf32>
    %113 = vector.shape_cast %112 : vector<64xf32> to vector<1x64xf32>
    %cst_51 = arith.constant dense<0.000000e+00> : vector<1x32xf32>
    %114 = tpu.matmul %110, %13, %cst_51 {dimension_numbers = #tpu.dot_dimension_numbers<[1], [0], [0], [1], [0, 0, 1, 1], [], []>} : vector<1x64xf32>, vector<64x32xf32>, vector<1x32xf32> -> vector<1x32xf32>
    %cst_52 = arith.constant 5.120000e+02 : f32
    %115 = vector.broadcast %cst_52 : f32 to vector<1x32xf32>
    %116 = arith.divf %114, %115 : vector<1x32xf32>
    %cst_53 = arith.constant dense<0.000000e+00> : vector<1x32xf32>
    %117 = tpu.matmul %113, %13, %cst_53 {dimension_numbers = #tpu.dot_dimension_numbers<[1], [0], [0], [1], [0, 0, 1, 1], [], []>} : vector<1x64xf32>, vector<64x32xf32>, vector<1x32xf32> -> vector<1x32xf32>
    %cst_54 = arith.constant 5.120000e+02 : f32
    %118 = vector.broadcast %cst_54 : f32 to vector<1x32xf32>
    %119 = arith.divf %117, %118 : vector<1x32xf32>
    %120 = arith.mulf %116, %116 : vector<1x32xf32>
    %121 = arith.subf %119, %120 : vector<1x32xf32>
    %cst_55 = arith.constant dense<0.000000e+00> : vector<1x64xf32>
    %122 = tpu.matmul %116, %26, %cst_55 {dimension_numbers = #tpu.dot_dimension_numbers<[1], [0], [0], [1], [0, 0, 1, 1], [], []>} : vector<1x32xf32>, vector<32x64xf32>, vector<1x64xf32> -> vector<1x64xf32>
    %cst_56 = arith.constant dense<0.000000e+00> : vector<1x64xf32>
    %123 = tpu.matmul %121, %26, %cst_56 {dimension_numbers = #tpu.dot_dimension_numbers<[1], [0], [0], [1], [0, 0, 1, 1], [], []>} : vector<1x32xf32>, vector<32x64xf32>, vector<1x64xf32> -> vector<1x64xf32>
    %cst_57 = arith.constant 9.99999974E-6 : f32
    %124 = vector.broadcast %cst_57 : f32 to vector<1x64xf32>
    %125 = arith.addf %123, %124 : vector<1x64xf32>
    %126 = math.rsqrt %125 : vector<1x64xf32>
    %c0_58 = arith.constant 0 : index
    %c0_59 = arith.constant 0 : index
    %c0_60 = arith.constant 0 : index
    %c0_61 = arith.constant 0 : index
    %127 = vector.load %arg6[%c0_58, %c0_59, %c0_60, %c0_61] : memref<1x2x1x64xf32, #tpu.memory_space<vmem>>, vector<1x1x1x64xf32>
    %128 = vector.shape_cast %127 : vector<1x1x1x64xf32> to vector<1x64xf32>
    %129 = arith.mulf %128, %126 : vector<1x64xf32>
    %c0_62 = arith.constant 0 : index
    %c0_63 = arith.constant 0 : index
    %c0_64 = arith.constant 0 : index
    %c0_65 = arith.constant 0 : index
    %130 = vector.load %arg7[%c0_62, %c0_63, %c0_64, %c0_65] : memref<1x2x1x64xf32, #tpu.memory_space<vmem>>, vector<1x1x1x64xf32>
    %131 = vector.shape_cast %130 : vector<1x1x1x64xf32> to vector<1x64xf32>
    %132 = arith.mulf %122, %129 : vector<1x64xf32>
    %133 = arith.subf %131, %132 : vector<1x64xf32>
    %134 = vector.broadcast %129 : vector<1x64xf32> to vector<256x64xf32>
    %135 = arith.mulf %108, %134 : vector<256x64xf32>
    %136 = vector.broadcast %133 : vector<1x64xf32> to vector<256x64xf32>
    %137 = arith.addf %135, %136 : vector<256x64xf32>
    %cst_66 = arith.constant 0.000000e+00 : f32
    %138 = vector.broadcast %cst_66 : f32 to vector<256x64xf32>
    %139 = arith.maximumf %137, %138 : vector<256x64xf32>
    %140 = arith.truncf %139 : vector<256x64xf32> to vector<256x64xbf16>
    %c0_67 = arith.constant 0 : index
    %c0_68 = arith.constant 0 : index
    %141 = vector.load %arg11[%c0_67, %c0_68] : memref<256x64xbf16, #tpu.memory_space<vmem>>, vector<256x64xbf16>
    tpu.vector_store %arg11[%c0_67, %c0_68], %140 {strides = array<i32>} : memref<256x64xbf16, #tpu.memory_space<vmem>>, vector<256x64xbf16>,
    %c0_69 = arith.constant 0 : index
    %c0_70 = arith.constant 0 : index
    %142 = vector.load %arg11[%c0_69, %c0_70] : memref<256x64xbf16, #tpu.memory_space<vmem>>, vector<256x64xbf16>
    %c0_71 = arith.constant 0 : index
    %c1 = arith.constant 1 : index
    %c0_72 = arith.constant 0 : index
    %c0_73 = arith.constant 0 : index
    %143 = vector.load %arg5[%c0_71, %c1, %c0_72, %c0_73] : memref<1x2x1x64xf32, #tpu.memory_space<vmem>>, vector<1x1x1x64xf32>
    %144 = vector.shape_cast %143 : vector<1x1x1x64xf32> to vector<1x64xf32>
    %145 = arith.extf %142 : vector<256x64xbf16> to vector<256x64xf32>
    %c17_i32_74 = arith.constant 17 : i32
    %146 = tpu.dynamic_rotate %145 by %c17_i32_74 dim 0 : vector<256x64xf32>, i32 -> vector<256x64xf32>
    %147 = vector.extract_strided_slice %0 {offsets = [0, 0], sizes = [256, 1], strides = [1, 1]} : vector<256x9xf32> to vector<256x1xf32>
    %148 = vector.broadcast %147 : vector<256x1xf32> to vector<256x64xf32>
    %149 = arith.mulf %146, %148 : vector<256x64xf32>
    %150 = arith.truncf %149 : vector<256x64xf32> to vector<256x64xbf16>
    %c0_75 = arith.constant 0 : index
    %c1_76 = arith.constant 1 : index
    %c0_77 = arith.constant 0 : index
    %c0_78 = arith.constant 0 : index
    %151 = vector.load %arg4[%c0_75, %c1_76, %c0_77, %c0_78] : memref<1x2x576x64xbf16, #tpu.memory_space<vmem>>, vector<1x1x64x64xbf16>
    %152 = vector.shape_cast %151 : vector<1x1x64x64xbf16> to vector<64x64xbf16>
    %cst_79 = arith.constant dense<0.000000e+00> : vector<256x64xf32>
    %153 = tpu.matmul %150, %152, %cst_79 {dimension_numbers = #tpu.dot_dimension_numbers<[1], [0], [0], [1], [0, 0, 1, 1], [], []>} : vector<256x64xbf16>, vector<64x64xbf16>, vector<256x64xf32> -> vector<256x64xf32>
    %c16_i32_80 = arith.constant 16 : i32
    %154 = tpu.dynamic_rotate %145 by %c16_i32_80 dim 0 : vector<256x64xf32>, i32 -> vector<256x64xf32>
    %155 = vector.extract_strided_slice %0 {offsets = [0, 1], sizes = [256, 1], strides = [1, 1]} : vector<256x9xf32> to vector<256x1xf32>
    %156 = vector.broadcast %155 : vector<256x1xf32> to vector<256x64xf32>
    %157 = arith.mulf %154, %156 : vector<256x64xf32>
    %158 = arith.truncf %157 : vector<256x64xf32> to vector<256x64xbf16>
    %c0_81 = arith.constant 0 : index
    %c1_82 = arith.constant 1 : index
    %c64_83 = arith.constant 64 : index
    %c0_84 = arith.constant 0 : index
    %159 = vector.load %arg4[%c0_81, %c1_82, %c64_83, %c0_84] : memref<1x2x576x64xbf16, #tpu.memory_space<vmem>>, vector<1x1x64x64xbf16>
    %160 = vector.shape_cast %159 : vector<1x1x64x64xbf16> to vector<64x64xbf16>
    %cst_85 = arith.constant dense<0.000000e+00> : vector<256x64xf32>
    %161 = tpu.matmul %158, %160, %cst_85 {dimension_numbers = #tpu.dot_dimension_numbers<[1], [0], [0], [1], [0, 0, 1, 1], [], []>} : vector<256x64xbf16>, vector<64x64xbf16>, vector<256x64xf32> -> vector<256x64xf32>
    %162 = arith.addf %153, %161 : vector<256x64xf32>
    %c15_i32_86 = arith.constant 15 : i32
    %163 = tpu.dynamic_rotate %145 by %c15_i32_86 dim 0 : vector<256x64xf32>, i32 -> vector<256x64xf32>
    %164 = vector.extract_strided_slice %0 {offsets = [0, 2], sizes = [256, 1], strides = [1, 1]} : vector<256x9xf32> to vector<256x1xf32>
    %165 = vector.broadcast %164 : vector<256x1xf32> to vector<256x64xf32>
    %166 = arith.mulf %163, %165 : vector<256x64xf32>
    %167 = arith.truncf %166 : vector<256x64xf32> to vector<256x64xbf16>
    %c0_87 = arith.constant 0 : index
    %c1_88 = arith.constant 1 : index
    %c128_89 = arith.constant 128 : index
    %c0_90 = arith.constant 0 : index
    %168 = vector.load %arg4[%c0_87, %c1_88, %c128_89, %c0_90] : memref<1x2x576x64xbf16, #tpu.memory_space<vmem>>, vector<1x1x64x64xbf16>
    %169 = vector.shape_cast %168 : vector<1x1x64x64xbf16> to vector<64x64xbf16>
    %cst_91 = arith.constant dense<0.000000e+00> : vector<256x64xf32>
    %170 = tpu.matmul %167, %169, %cst_91 {dimension_numbers = #tpu.dot_dimension_numbers<[1], [0], [0], [1], [0, 0, 1, 1], [], []>} : vector<256x64xbf16>, vector<64x64xbf16>, vector<256x64xf32> -> vector<256x64xf32>
    %171 = arith.addf %162, %170 : vector<256x64xf32>
    %c1_i32_92 = arith.constant 1 : i32
    %172 = tpu.dynamic_rotate %145 by %c1_i32_92 dim 0 : vector<256x64xf32>, i32 -> vector<256x64xf32>
    %173 = vector.extract_strided_slice %0 {offsets = [0, 3], sizes = [256, 1], strides = [1, 1]} : vector<256x9xf32> to vector<256x1xf32>
    %174 = vector.broadcast %173 : vector<256x1xf32> to vector<256x64xf32>
    %175 = arith.mulf %172, %174 : vector<256x64xf32>
    %176 = arith.truncf %175 : vector<256x64xf32> to vector<256x64xbf16>
    %c0_93 = arith.constant 0 : index
    %c1_94 = arith.constant 1 : index
    %c192_95 = arith.constant 192 : index
    %c0_96 = arith.constant 0 : index
    %177 = vector.load %arg4[%c0_93, %c1_94, %c192_95, %c0_96] : memref<1x2x576x64xbf16, #tpu.memory_space<vmem>>, vector<1x1x64x64xbf16>
    %178 = vector.shape_cast %177 : vector<1x1x64x64xbf16> to vector<64x64xbf16>
    %cst_97 = arith.constant dense<0.000000e+00> : vector<256x64xf32>
    %179 = tpu.matmul %176, %178, %cst_97 {dimension_numbers = #tpu.dot_dimension_numbers<[1], [0], [0], [1], [0, 0, 1, 1], [], []>} : vector<256x64xbf16>, vector<64x64xbf16>, vector<256x64xf32> -> vector<256x64xf32>
    %180 = arith.addf %171, %179 : vector<256x64xf32>
    %c0_98 = arith.constant 0 : index
    %c1_99 = arith.constant 1 : index
    %c256_100 = arith.constant 256 : index
    %c0_101 = arith.constant 0 : index
    %181 = vector.load %arg4[%c0_98, %c1_99, %c256_100, %c0_101] : memref<1x2x576x64xbf16, #tpu.memory_space<vmem>>, vector<1x1x64x64xbf16>
    %182 = vector.shape_cast %181 : vector<1x1x64x64xbf16> to vector<64x64xbf16>
    %cst_102 = arith.constant dense<0.000000e+00> : vector<256x64xf32>
    %183 = tpu.matmul %142, %182, %cst_102 {dimension_numbers = #tpu.dot_dimension_numbers<[1], [0], [0], [1], [0, 0, 1, 1], [], []>} : vector<256x64xbf16>, vector<64x64xbf16>, vector<256x64xf32> -> vector<256x64xf32>
    %184 = arith.addf %180, %183 : vector<256x64xf32>
    %c255_i32_103 = arith.constant 255 : i32
    %185 = tpu.dynamic_rotate %145 by %c255_i32_103 dim 0 : vector<256x64xf32>, i32 -> vector<256x64xf32>
    %186 = vector.extract_strided_slice %0 {offsets = [0, 5], sizes = [256, 1], strides = [1, 1]} : vector<256x9xf32> to vector<256x1xf32>
    %187 = vector.broadcast %186 : vector<256x1xf32> to vector<256x64xf32>
    %188 = arith.mulf %185, %187 : vector<256x64xf32>
    %189 = arith.truncf %188 : vector<256x64xf32> to vector<256x64xbf16>
    %c0_104 = arith.constant 0 : index
    %c1_105 = arith.constant 1 : index
    %c320_106 = arith.constant 320 : index
    %c0_107 = arith.constant 0 : index
    %190 = vector.load %arg4[%c0_104, %c1_105, %c320_106, %c0_107] : memref<1x2x576x64xbf16, #tpu.memory_space<vmem>>, vector<1x1x64x64xbf16>
    %191 = vector.shape_cast %190 : vector<1x1x64x64xbf16> to vector<64x64xbf16>
    %cst_108 = arith.constant dense<0.000000e+00> : vector<256x64xf32>
    %192 = tpu.matmul %189, %191, %cst_108 {dimension_numbers = #tpu.dot_dimension_numbers<[1], [0], [0], [1], [0, 0, 1, 1], [], []>} : vector<256x64xbf16>, vector<64x64xbf16>, vector<256x64xf32> -> vector<256x64xf32>
    %193 = arith.addf %184, %192 : vector<256x64xf32>
    %c241_i32_109 = arith.constant 241 : i32
    %194 = tpu.dynamic_rotate %145 by %c241_i32_109 dim 0 : vector<256x64xf32>, i32 -> vector<256x64xf32>
    %195 = vector.extract_strided_slice %0 {offsets = [0, 6], sizes = [256, 1], strides = [1, 1]} : vector<256x9xf32> to vector<256x1xf32>
    %196 = vector.broadcast %195 : vector<256x1xf32> to vector<256x64xf32>
    %197 = arith.mulf %194, %196 : vector<256x64xf32>
    %198 = arith.truncf %197 : vector<256x64xf32> to vector<256x64xbf16>
    %c0_110 = arith.constant 0 : index
    %c1_111 = arith.constant 1 : index
    %c384_112 = arith.constant 384 : index
    %c0_113 = arith.constant 0 : index
    %199 = vector.load %arg4[%c0_110, %c1_111, %c384_112, %c0_113] : memref<1x2x576x64xbf16, #tpu.memory_space<vmem>>, vector<1x1x64x64xbf16>
    %200 = vector.shape_cast %199 : vector<1x1x64x64xbf16> to vector<64x64xbf16>
    %cst_114 = arith.constant dense<0.000000e+00> : vector<256x64xf32>
    %201 = tpu.matmul %198, %200, %cst_114 {dimension_numbers = #tpu.dot_dimension_numbers<[1], [0], [0], [1], [0, 0, 1, 1], [], []>} : vector<256x64xbf16>, vector<64x64xbf16>, vector<256x64xf32> -> vector<256x64xf32>
    %202 = arith.addf %193, %201 : vector<256x64xf32>
    %c240_i32_115 = arith.constant 240 : i32
    %203 = tpu.dynamic_rotate %145 by %c240_i32_115 dim 0 : vector<256x64xf32>, i32 -> vector<256x64xf32>
    %204 = vector.extract_strided_slice %0 {offsets = [0, 7], sizes = [256, 1], strides = [1, 1]} : vector<256x9xf32> to vector<256x1xf32>
    %205 = vector.broadcast %204 : vector<256x1xf32> to vector<256x64xf32>
    %206 = arith.mulf %203, %205 : vector<256x64xf32>
    %207 = arith.truncf %206 : vector<256x64xf32> to vector<256x64xbf16>
    %c0_116 = arith.constant 0 : index
    %c1_117 = arith.constant 1 : index
    %c448_118 = arith.constant 448 : index
    %c0_119 = arith.constant 0 : index
    %208 = vector.load %arg4[%c0_116, %c1_117, %c448_118, %c0_119] : memref<1x2x576x64xbf16, #tpu.memory_space<vmem>>, vector<1x1x64x64xbf16>
    %209 = vector.shape_cast %208 : vector<1x1x64x64xbf16> to vector<64x64xbf16>
    %cst_120 = arith.constant dense<0.000000e+00> : vector<256x64xf32>
    %210 = tpu.matmul %207, %209, %cst_120 {dimension_numbers = #tpu.dot_dimension_numbers<[1], [0], [0], [1], [0, 0, 1, 1], [], []>} : vector<256x64xbf16>, vector<64x64xbf16>, vector<256x64xf32> -> vector<256x64xf32>
    %211 = arith.addf %202, %210 : vector<256x64xf32>
    %c239_i32_121 = arith.constant 239 : i32
    %212 = tpu.dynamic_rotate %145 by %c239_i32_121 dim 0 : vector<256x64xf32>, i32 -> vector<256x64xf32>
    %213 = vector.extract_strided_slice %0 {offsets = [0, 8], sizes = [256, 1], strides = [1, 1]} : vector<256x9xf32> to vector<256x1xf32>
    %214 = vector.broadcast %213 : vector<256x1xf32> to vector<256x64xf32>
    %215 = arith.mulf %212, %214 : vector<256x64xf32>
    %216 = arith.truncf %215 : vector<256x64xf32> to vector<256x64xbf16>
    %c0_122 = arith.constant 0 : index
    %c1_123 = arith.constant 1 : index
    %c512_124 = arith.constant 512 : index
    %c0_125 = arith.constant 0 : index
    %217 = vector.load %arg4[%c0_122, %c1_123, %c512_124, %c0_125] : memref<1x2x576x64xbf16, #tpu.memory_space<vmem>>, vector<1x1x64x64xbf16>
    %218 = vector.shape_cast %217 : vector<1x1x64x64xbf16> to vector<64x64xbf16>
    %cst_126 = arith.constant dense<0.000000e+00> : vector<256x64xf32>
    %219 = tpu.matmul %216, %218, %cst_126 {dimension_numbers = #tpu.dot_dimension_numbers<[1], [0], [0], [1], [0, 0, 1, 1], [], []>} : vector<256x64xbf16>, vector<64x64xbf16>, vector<256x64xf32> -> vector<256x64xf32>
    %220 = arith.addf %211, %219 : vector<256x64xf32>
    %221 = vector.broadcast %144 : vector<1x64xf32> to vector<256x64xf32>
    %222 = arith.addf %220, %221 : vector<256x64xf32>
    %cst_127 = arith.constant dense<0.000000e+00> : vector<64xf32>
    %223 = vector.multi_reduction <add>, %222, %cst_127 [0] : vector<256x64xf32> to vector<64xf32>
    %224 = vector.shape_cast %223 : vector<64xf32> to vector<1x64xf32>
    %225 = arith.mulf %222, %222 : vector<256x64xf32>
    %cst_128 = arith.constant dense<0.000000e+00> : vector<64xf32>
    %226 = vector.multi_reduction <add>, %225, %cst_128 [0] : vector<256x64xf32> to vector<64xf32>
    %227 = vector.shape_cast %226 : vector<64xf32> to vector<1x64xf32>
    %cst_129 = arith.constant dense<0.000000e+00> : vector<1x32xf32>
    %228 = tpu.matmul %224, %13, %cst_129 {dimension_numbers = #tpu.dot_dimension_numbers<[1], [0], [0], [1], [0, 0, 1, 1], [], []>} : vector<1x64xf32>, vector<64x32xf32>, vector<1x32xf32> -> vector<1x32xf32>
    %cst_130 = arith.constant 5.120000e+02 : f32
    %229 = vector.broadcast %cst_130 : f32 to vector<1x32xf32>
    %230 = arith.divf %228, %229 : vector<1x32xf32>
    %cst_131 = arith.constant dense<0.000000e+00> : vector<1x32xf32>
    %231 = tpu.matmul %227, %13, %cst_131 {dimension_numbers = #tpu.dot_dimension_numbers<[1], [0], [0], [1], [0, 0, 1, 1], [], []>} : vector<1x64xf32>, vector<64x32xf32>, vector<1x32xf32> -> vector<1x32xf32>
    %cst_132 = arith.constant 5.120000e+02 : f32
    %232 = vector.broadcast %cst_132 : f32 to vector<1x32xf32>
    %233 = arith.divf %231, %232 : vector<1x32xf32>
    %234 = arith.mulf %230, %230 : vector<1x32xf32>
    %235 = arith.subf %233, %234 : vector<1x32xf32>
    %cst_133 = arith.constant dense<0.000000e+00> : vector<1x64xf32>
    %236 = tpu.matmul %230, %26, %cst_133 {dimension_numbers = #tpu.dot_dimension_numbers<[1], [0], [0], [1], [0, 0, 1, 1], [], []>} : vector<1x32xf32>, vector<32x64xf32>, vector<1x64xf32> -> vector<1x64xf32>
    %cst_134 = arith.constant dense<0.000000e+00> : vector<1x64xf32>
    %237 = tpu.matmul %235, %26, %cst_134 {dimension_numbers = #tpu.dot_dimension_numbers<[1], [0], [0], [1], [0, 0, 1, 1], [], []>} : vector<1x32xf32>, vector<32x64xf32>, vector<1x64xf32> -> vector<1x64xf32>
    %cst_135 = arith.constant 9.99999974E-6 : f32
    %238 = vector.broadcast %cst_135 : f32 to vector<1x64xf32>
    %239 = arith.addf %237, %238 : vector<1x64xf32>
    %240 = math.rsqrt %239 : vector<1x64xf32>
    %c0_136 = arith.constant 0 : index
    %c1_137 = arith.constant 1 : index
    %c0_138 = arith.constant 0 : index
    %c0_139 = arith.constant 0 : index
    %241 = vector.load %arg6[%c0_136, %c1_137, %c0_138, %c0_139] : memref<1x2x1x64xf32, #tpu.memory_space<vmem>>, vector<1x1x1x64xf32>
    %242 = vector.shape_cast %241 : vector<1x1x1x64xf32> to vector<1x64xf32>
    %243 = arith.mulf %242, %240 : vector<1x64xf32>
    %c0_140 = arith.constant 0 : index
    %c1_141 = arith.constant 1 : index
    %c0_142 = arith.constant 0 : index
    %c0_143 = arith.constant 0 : index
    %244 = vector.load %arg7[%c0_140, %c1_141, %c0_142, %c0_143] : memref<1x2x1x64xf32, #tpu.memory_space<vmem>>, vector<1x1x1x64xf32>
    %245 = vector.shape_cast %244 : vector<1x1x1x64xf32> to vector<1x64xf32>
    %246 = arith.mulf %236, %243 : vector<1x64xf32>
    %247 = arith.subf %245, %246 : vector<1x64xf32>
    %248 = vector.broadcast %243 : vector<1x64xf32> to vector<256x64xf32>
    %249 = arith.mulf %222, %248 : vector<256x64xf32>
    %250 = vector.broadcast %247 : vector<1x64xf32> to vector<256x64xf32>
    %251 = arith.addf %249, %250 : vector<256x64xf32>
    %cst_144 = arith.constant 0.000000e+00 : f32
    %252 = vector.broadcast %cst_144 : f32 to vector<256x64xf32>
    %253 = arith.maximumf %251, %252 : vector<256x64xf32>
    %254 = arith.truncf %253 : vector<256x64xf32> to vector<256x64xbf16>
    %c0_145 = arith.constant 0 : index
    %c0_146 = arith.constant 0 : index
    %255 = vector.load %arg11[%c0_145, %c0_146] : memref<256x64xbf16, #tpu.memory_space<vmem>>, vector<256x64xbf16>
    tpu.vector_store %arg11[%c0_145, %c0_146], %254 {strides = array<i32>} : memref<256x64xbf16, #tpu.memory_space<vmem>>, vector<256x64xbf16>,
    %c0_147 = arith.constant 0 : index
    %c0_148 = arith.constant 0 : index
    %256 = vector.load %arg11[%c0_147, %c0_148] : memref<256x64xbf16, #tpu.memory_space<vmem>>, vector<256x64xbf16>
    %c0_149 = arith.constant 0 : index
    %c0_150 = arith.constant 0 : index
    %c0_151 = arith.constant 0 : index
    %257 = vector.load %arg9[%c0_149, %c0_150, %c0_151] : memref<1x1x128xf32, #tpu.memory_space<vmem>>, vector<1x1x128xf32>
    %258 = vector.shape_cast %257 : vector<1x1x128xf32> to vector<1x128xf32>
    %259 = arith.extf %256 : vector<256x64xbf16> to vector<256x64xf32>
    %c17_i32_152 = arith.constant 17 : i32
    %260 = tpu.dynamic_rotate %259 by %c17_i32_152 dim 0 : vector<256x64xf32>, i32 -> vector<256x64xf32>
    %261 = vector.extract_strided_slice %0 {offsets = [0, 0], sizes = [256, 1], strides = [1, 1]} : vector<256x9xf32> to vector<256x1xf32>
    %262 = vector.broadcast %261 : vector<256x1xf32> to vector<256x64xf32>
    %263 = arith.mulf %260, %262 : vector<256x64xf32>
    %264 = arith.truncf %263 : vector<256x64xf32> to vector<256x64xbf16>
    %c0_153 = arith.constant 0 : index
    %c0_154 = arith.constant 0 : index
    %c0_155 = arith.constant 0 : index
    %265 = vector.load %arg8[%c0_153, %c0_154, %c0_155] : memref<1x576x128xbf16, #tpu.memory_space<vmem>>, vector<1x64x128xbf16>
    %266 = vector.shape_cast %265 : vector<1x64x128xbf16> to vector<64x128xbf16>
    %cst_156 = arith.constant dense<0.000000e+00> : vector<256x128xf32>
    %267 = tpu.matmul %264, %266, %cst_156 {dimension_numbers = #tpu.dot_dimension_numbers<[1], [0], [0], [1], [0, 0, 1, 1], [], []>} : vector<256x64xbf16>, vector<64x128xbf16>, vector<256x128xf32> -> vector<256x128xf32>
    %c16_i32_157 = arith.constant 16 : i32
    %268 = tpu.dynamic_rotate %259 by %c16_i32_157 dim 0 : vector<256x64xf32>, i32 -> vector<256x64xf32>
    %269 = vector.extract_strided_slice %0 {offsets = [0, 1], sizes = [256, 1], strides = [1, 1]} : vector<256x9xf32> to vector<256x1xf32>
    %270 = vector.broadcast %269 : vector<256x1xf32> to vector<256x64xf32>
    %271 = arith.mulf %268, %270 : vector<256x64xf32>
    %272 = arith.truncf %271 : vector<256x64xf32> to vector<256x64xbf16>
    %c0_158 = arith.constant 0 : index
    %c64_159 = arith.constant 64 : index
    %c0_160 = arith.constant 0 : index
    %273 = vector.load %arg8[%c0_158, %c64_159, %c0_160] : memref<1x576x128xbf16, #tpu.memory_space<vmem>>, vector<1x64x128xbf16>
    %274 = vector.shape_cast %273 : vector<1x64x128xbf16> to vector<64x128xbf16>
    %cst_161 = arith.constant dense<0.000000e+00> : vector<256x128xf32>
    %275 = tpu.matmul %272, %274, %cst_161 {dimension_numbers = #tpu.dot_dimension_numbers<[1], [0], [0], [1], [0, 0, 1, 1], [], []>} : vector<256x64xbf16>, vector<64x128xbf16>, vector<256x128xf32> -> vector<256x128xf32>
    %276 = arith.addf %267, %275 : vector<256x128xf32>
    %c15_i32_162 = arith.constant 15 : i32
    %277 = tpu.dynamic_rotate %259 by %c15_i32_162 dim 0 : vector<256x64xf32>, i32 -> vector<256x64xf32>
    %278 = vector.extract_strided_slice %0 {offsets = [0, 2], sizes = [256, 1], strides = [1, 1]} : vector<256x9xf32> to vector<256x1xf32>
    %279 = vector.broadcast %278 : vector<256x1xf32> to vector<256x64xf32>
    %280 = arith.mulf %277, %279 : vector<256x64xf32>
    %281 = arith.truncf %280 : vector<256x64xf32> to vector<256x64xbf16>
    %c0_163 = arith.constant 0 : index
    %c128_164 = arith.constant 128 : index
    %c0_165 = arith.constant 0 : index
    %282 = vector.load %arg8[%c0_163, %c128_164, %c0_165] : memref<1x576x128xbf16, #tpu.memory_space<vmem>>, vector<1x64x128xbf16>
    %283 = vector.shape_cast %282 : vector<1x64x128xbf16> to vector<64x128xbf16>
    %cst_166 = arith.constant dense<0.000000e+00> : vector<256x128xf32>
    %284 = tpu.matmul %281, %283, %cst_166 {dimension_numbers = #tpu.dot_dimension_numbers<[1], [0], [0], [1], [0, 0, 1, 1], [], []>} : vector<256x64xbf16>, vector<64x128xbf16>, vector<256x128xf32> -> vector<256x128xf32>
    %285 = arith.addf %276, %284 : vector<256x128xf32>
    %c1_i32_167 = arith.constant 1 : i32
    %286 = tpu.dynamic_rotate %259 by %c1_i32_167 dim 0 : vector<256x64xf32>, i32 -> vector<256x64xf32>
    %287 = vector.extract_strided_slice %0 {offsets = [0, 3], sizes = [256, 1], strides = [1, 1]} : vector<256x9xf32> to vector<256x1xf32>
    %288 = vector.broadcast %287 : vector<256x1xf32> to vector<256x64xf32>
    %289 = arith.mulf %286, %288 : vector<256x64xf32>
    %290 = arith.truncf %289 : vector<256x64xf32> to vector<256x64xbf16>
    %c0_168 = arith.constant 0 : index
    %c192_169 = arith.constant 192 : index
    %c0_170 = arith.constant 0 : index
    %291 = vector.load %arg8[%c0_168, %c192_169, %c0_170] : memref<1x576x128xbf16, #tpu.memory_space<vmem>>, vector<1x64x128xbf16>
    %292 = vector.shape_cast %291 : vector<1x64x128xbf16> to vector<64x128xbf16>
    %cst_171 = arith.constant dense<0.000000e+00> : vector<256x128xf32>
    %293 = tpu.matmul %290, %292, %cst_171 {dimension_numbers = #tpu.dot_dimension_numbers<[1], [0], [0], [1], [0, 0, 1, 1], [], []>} : vector<256x64xbf16>, vector<64x128xbf16>, vector<256x128xf32> -> vector<256x128xf32>
    %294 = arith.addf %285, %293 : vector<256x128xf32>
    %c0_172 = arith.constant 0 : index
    %c256_173 = arith.constant 256 : index
    %c0_174 = arith.constant 0 : index
    %295 = vector.load %arg8[%c0_172, %c256_173, %c0_174] : memref<1x576x128xbf16, #tpu.memory_space<vmem>>, vector<1x64x128xbf16>
    %296 = vector.shape_cast %295 : vector<1x64x128xbf16> to vector<64x128xbf16>
    %cst_175 = arith.constant dense<0.000000e+00> : vector<256x128xf32>
    %297 = tpu.matmul %256, %296, %cst_175 {dimension_numbers = #tpu.dot_dimension_numbers<[1], [0], [0], [1], [0, 0, 1, 1], [], []>} : vector<256x64xbf16>, vector<64x128xbf16>, vector<256x128xf32> -> vector<256x128xf32>
    %298 = arith.addf %294, %297 : vector<256x128xf32>
    %c255_i32_176 = arith.constant 255 : i32
    %299 = tpu.dynamic_rotate %259 by %c255_i32_176 dim 0 : vector<256x64xf32>, i32 -> vector<256x64xf32>
    %300 = vector.extract_strided_slice %0 {offsets = [0, 5], sizes = [256, 1], strides = [1, 1]} : vector<256x9xf32> to vector<256x1xf32>
    %301 = vector.broadcast %300 : vector<256x1xf32> to vector<256x64xf32>
    %302 = arith.mulf %299, %301 : vector<256x64xf32>
    %303 = arith.truncf %302 : vector<256x64xf32> to vector<256x64xbf16>
    %c0_177 = arith.constant 0 : index
    %c320_178 = arith.constant 320 : index
    %c0_179 = arith.constant 0 : index
    %304 = vector.load %arg8[%c0_177, %c320_178, %c0_179] : memref<1x576x128xbf16, #tpu.memory_space<vmem>>, vector<1x64x128xbf16>
    %305 = vector.shape_cast %304 : vector<1x64x128xbf16> to vector<64x128xbf16>
    %cst_180 = arith.constant dense<0.000000e+00> : vector<256x128xf32>
    %306 = tpu.matmul %303, %305, %cst_180 {dimension_numbers = #tpu.dot_dimension_numbers<[1], [0], [0], [1], [0, 0, 1, 1], [], []>} : vector<256x64xbf16>, vector<64x128xbf16>, vector<256x128xf32> -> vector<256x128xf32>
    %307 = arith.addf %298, %306 : vector<256x128xf32>
    %c241_i32_181 = arith.constant 241 : i32
    %308 = tpu.dynamic_rotate %259 by %c241_i32_181 dim 0 : vector<256x64xf32>, i32 -> vector<256x64xf32>
    %309 = vector.extract_strided_slice %0 {offsets = [0, 6], sizes = [256, 1], strides = [1, 1]} : vector<256x9xf32> to vector<256x1xf32>
    %310 = vector.broadcast %309 : vector<256x1xf32> to vector<256x64xf32>
    %311 = arith.mulf %308, %310 : vector<256x64xf32>
    %312 = arith.truncf %311 : vector<256x64xf32> to vector<256x64xbf16>
    %c0_182 = arith.constant 0 : index
    %c384_183 = arith.constant 384 : index
    %c0_184 = arith.constant 0 : index
    %313 = vector.load %arg8[%c0_182, %c384_183, %c0_184] : memref<1x576x128xbf16, #tpu.memory_space<vmem>>, vector<1x64x128xbf16>
    %314 = vector.shape_cast %313 : vector<1x64x128xbf16> to vector<64x128xbf16>
    %cst_185 = arith.constant dense<0.000000e+00> : vector<256x128xf32>
    %315 = tpu.matmul %312, %314, %cst_185 {dimension_numbers = #tpu.dot_dimension_numbers<[1], [0], [0], [1], [0, 0, 1, 1], [], []>} : vector<256x64xbf16>, vector<64x128xbf16>, vector<256x128xf32> -> vector<256x128xf32>
    %316 = arith.addf %307, %315 : vector<256x128xf32>
    %c240_i32_186 = arith.constant 240 : i32
    %317 = tpu.dynamic_rotate %259 by %c240_i32_186 dim 0 : vector<256x64xf32>, i32 -> vector<256x64xf32>
    %318 = vector.extract_strided_slice %0 {offsets = [0, 7], sizes = [256, 1], strides = [1, 1]} : vector<256x9xf32> to vector<256x1xf32>
    %319 = vector.broadcast %318 : vector<256x1xf32> to vector<256x64xf32>
    %320 = arith.mulf %317, %319 : vector<256x64xf32>
    %321 = arith.truncf %320 : vector<256x64xf32> to vector<256x64xbf16>
    %c0_187 = arith.constant 0 : index
    %c448_188 = arith.constant 448 : index
    %c0_189 = arith.constant 0 : index
    %322 = vector.load %arg8[%c0_187, %c448_188, %c0_189] : memref<1x576x128xbf16, #tpu.memory_space<vmem>>, vector<1x64x128xbf16>
    %323 = vector.shape_cast %322 : vector<1x64x128xbf16> to vector<64x128xbf16>
    %cst_190 = arith.constant dense<0.000000e+00> : vector<256x128xf32>
    %324 = tpu.matmul %321, %323, %cst_190 {dimension_numbers = #tpu.dot_dimension_numbers<[1], [0], [0], [1], [0, 0, 1, 1], [], []>} : vector<256x64xbf16>, vector<64x128xbf16>, vector<256x128xf32> -> vector<256x128xf32>
    %325 = arith.addf %316, %324 : vector<256x128xf32>
    %c239_i32_191 = arith.constant 239 : i32
    %326 = tpu.dynamic_rotate %259 by %c239_i32_191 dim 0 : vector<256x64xf32>, i32 -> vector<256x64xf32>
    %327 = vector.extract_strided_slice %0 {offsets = [0, 8], sizes = [256, 1], strides = [1, 1]} : vector<256x9xf32> to vector<256x1xf32>
    %328 = vector.broadcast %327 : vector<256x1xf32> to vector<256x64xf32>
    %329 = arith.mulf %326, %328 : vector<256x64xf32>
    %330 = arith.truncf %329 : vector<256x64xf32> to vector<256x64xbf16>
    %c0_192 = arith.constant 0 : index
    %c512_193 = arith.constant 512 : index
    %c0_194 = arith.constant 0 : index
    %331 = vector.load %arg8[%c0_192, %c512_193, %c0_194] : memref<1x576x128xbf16, #tpu.memory_space<vmem>>, vector<1x64x128xbf16>
    %332 = vector.shape_cast %331 : vector<1x64x128xbf16> to vector<64x128xbf16>
    %cst_195 = arith.constant dense<0.000000e+00> : vector<256x128xf32>
    %333 = tpu.matmul %330, %332, %cst_195 {dimension_numbers = #tpu.dot_dimension_numbers<[1], [0], [0], [1], [0, 0, 1, 1], [], []>} : vector<256x64xbf16>, vector<64x128xbf16>, vector<256x128xf32> -> vector<256x128xf32>
    %334 = arith.addf %325, %333 : vector<256x128xf32>
    %335 = vector.broadcast %258 : vector<1x128xf32> to vector<256x128xf32>
    %336 = arith.addf %334, %335 : vector<256x128xf32>
    %c0_i32 = arith.constant 0 : i32
    %337 = arith.cmpi eq, %arg0, %c0_i32 : i32
    %338 = arith.extui %337 : i1 to i32
    %c0_i32_196 = arith.constant 0 : i32
    %339 = arith.cmpi ne, %338, %c0_i32_196 : i32
    scf.if %339 {
      %c0_199 = arith.constant 0 : index
      %c0_200 = arith.constant 0 : index
      %c0_201 = arith.constant 0 : index
      %343 = vector.load %arg10[%c0_199, %c0_200, %c0_201] : memref<1x256x128xf32, #tpu.memory_space<vmem>>, vector<1x256x128xf32>
      %344 = vector.shape_cast %343 : vector<1x256x128xf32> to vector<256x128xf32>
      %345 = vector.shape_cast %336 : vector<256x128xf32> to vector<1x256x128xf32>
      tpu.vector_store %arg10[%c0_199, %c0_200, %c0_201], %345 {strides = array<i32>} : memref<1x256x128xf32, #tpu.memory_space<vmem>>, vector<1x256x128xf32>,
    } else {
    }
    %c1_i32_197 = arith.constant 1 : i32
    %340 = arith.cmpi eq, %arg0, %c1_i32_197 : i32
    %341 = arith.extui %340 : i1 to i32
    %c0_i32_198 = arith.constant 0 : i32
    %342 = arith.cmpi ne, %341, %c0_i32_198 : i32
    scf.if %342 {
      %343 = math.exp %336 : vector<256x128xf32>
      %c0_199 = arith.constant 0 : index
      %c0_200 = arith.constant 0 : index
      %c0_201 = arith.constant 0 : index
      %344 = vector.load %arg10[%c0_199, %c0_200, %c0_201] : memref<1x256x128xf32, #tpu.memory_space<vmem>>, vector<1x256x128xf32>
      %345 = vector.shape_cast %344 : vector<1x256x128xf32> to vector<256x128xf32>
      %346 = vector.shape_cast %343 : vector<256x128xf32> to vector<1x256x128xf32>
      tpu.vector_store %arg10[%c0_199, %c0_200, %c0_201], %346 {strides = array<i32>} : memref<1x256x128xf32, #tpu.memory_space<vmem>>, vector<1x256x128xf32>,
    } else {
    }
    return
  }
  func.func @transform_0(%arg0: i32, %arg1: i32) -> (i32, i32, i32) {
    %c0_i32 = arith.constant 0 : i32
    %c0_i32_0 = arith.constant 0 : i32
    %c0_i32_1 = arith.constant 0 : i32
    return %arg1, %c0_i32, %c0_i32_0 : i32, i32, i32
  }
  func.func @transform_1(%arg0: i32, %arg1: i32) -> (i32, i32) {
    %c0_i32 = arith.constant 0 : i32
    %c0_i32_0 = arith.constant 0 : i32
    %c0_i32_1 = arith.constant 0 : i32
    return %c0_i32, %c0_i32_0 : i32, i32
  }
  func.func @transform_2(%arg0: i32, %arg1: i32) -> (i32, i32, i32, i32) {
    %c0_i32 = arith.constant 0 : i32
    %c0_i32_0 = arith.constant 0 : i32
    %c0_i32_1 = arith.constant 0 : i32
    %c0_i32_2 = arith.constant 0 : i32
    return %arg0, %c0_i32, %c0_i32_0, %c0_i32_1 : i32, i32, i32, i32
  }
  func.func @transform_3(%arg0: i32, %arg1: i32) -> (i32, i32, i32, i32) {
    %c0_i32 = arith.constant 0 : i32
    %c0_i32_0 = arith.constant 0 : i32
    %c0_i32_1 = arith.constant 0 : i32
    %c0_i32_2 = arith.constant 0 : i32
    return %arg0, %c0_i32, %c0_i32_0, %c0_i32_1 : i32, i32, i32, i32
  }
  func.func @transform_4(%arg0: i32, %arg1: i32) -> (i32, i32, i32, i32) {
    %c0_i32 = arith.constant 0 : i32
    %c0_i32_0 = arith.constant 0 : i32
    %c0_i32_1 = arith.constant 0 : i32
    %c0_i32_2 = arith.constant 0 : i32
    return %arg0, %c0_i32, %c0_i32_0, %c0_i32_1 : i32, i32, i32, i32
  }
  func.func @transform_5(%arg0: i32, %arg1: i32) -> (i32, i32, i32, i32) {
    %c0_i32 = arith.constant 0 : i32
    %c0_i32_0 = arith.constant 0 : i32
    %c0_i32_1 = arith.constant 0 : i32
    %c0_i32_2 = arith.constant 0 : i32
    return %arg0, %c0_i32, %c0_i32_0, %c0_i32_1 : i32, i32, i32, i32
  }
  func.func @transform_6(%arg0: i32, %arg1: i32) -> (i32, i32, i32) {
    %c0_i32 = arith.constant 0 : i32
    %c0_i32_0 = arith.constant 0 : i32
    %c0_i32_1 = arith.constant 0 : i32
    return %arg0, %c0_i32, %c0_i32_0 : i32, i32, i32
  }
  func.func @transform_7(%arg0: i32, %arg1: i32) -> (i32, i32, i32) {
    %c0_i32 = arith.constant 0 : i32
    %c0_i32_0 = arith.constant 0 : i32
    %c0_i32_1 = arith.constant 0 : i32
    return %arg0, %c0_i32, %c0_i32_0 : i32, i32, i32
  }
  func.func @transform_8(%arg0: i32, %arg1: i32) -> (i32, i32, i32) {
    %c2_i32 = arith.constant 2 : i32
    %0 = arith.muli %arg0, %c2_i32 : i32
    %1 = arith.addi %0, %arg1 : i32
    %c0_i32 = arith.constant 0 : i32
    %c0_i32_0 = arith.constant 0 : i32
    %c0_i32_1 = arith.constant 0 : i32
    return %1, %c0_i32, %c0_i32_0 : i32, i32, i32
  }
}

</mosaic_0001>

<llo_original>
// kernel: tpu_custom_call.1
$region0: #{tpu_custom_call.1}
  #allocation0 [shape = 'u32[]', space=smem, size = 0x4, offset = 0x4, fixed_abs, tag = 'smem constant byte address 0x4 - core index']
  #allocation1 [shape = 'u32[72,128]{1,0:T(1,128)}', space=vmem, size = 0x9000, scoped, tag = 'internal scratch']
  #allocation2 [shape = 'bf16[256,64]{1,0:T(8,128)(2,1)}', space=vmem, size = 0x10000, scoped, tag = 'scratch operand']
  %s0 = inlined_call_operand.vmem [shape: bf16[2,256,64], index: 0, kind: input, shape index: {}]
  %s1 = inlined_call_operand.vmem [shape: f32[256,9], index: 1, kind: input, shape index: {}]
  %s2 = inlined_call_operand.vmem [shape: bf16[2,2,576,64], index: 2, kind: input, shape index: {}]
  %s3 = inlined_call_operand.vmem [shape: f32[2,2,1,64], index: 3, kind: input, shape index: {}]
  %s4 = inlined_call_operand.vmem [shape: f32[2,2,1,64], index: 4, kind: input, shape index: {}]
  %s5 = inlined_call_operand.vmem [shape: f32[2,2,1,64], index: 5, kind: input, shape index: {}]
  %s6 = inlined_call_operand.vmem [shape: bf16[2,576,128], index: 6, kind: input, shape index: {}]
  %s7 = inlined_call_operand.vmem [shape: f32[2,1,128], index: 7, kind: input, shape index: {}]
  %s8 = inlined_call_operand.hbm [shape: f32[4,256,128], index: 8, kind: output, shape index: {}]
  %s9 = sld [smem:[#allocation0]]
  $region73: #{tpu_custom_call.1} parent=0
    _
  %s11 = ssub.s32 1, %s9
  %s12 = scalar_select 0, %s11, %s9
  $region1: #{tpu_custom_call.1} parent=0
    #allocation3 [shape = 'u8[262144]{0}', space=vmem, size = 0x40000, scoped, tag = 'output window, operand 0']
    #allocation4 [shape = 's32[2]{0}', space=sflag, size = 0x8, scoped, tag = 'scoped memory for tpu_custom_call.1']
    %13 = vsyncpa [#allocation4], 0
    %s14 = scalar_lea.sflag [#allocation4], 1
    %15 = vsyncpa %s14, 0
    loop: start=0, step=1, limit=6
    $region2: #{tpu_custom_call.1} parent=1 // loop_pre_header
      _
    $region3: #{tpu_custom_call.1} parent=1 // loop_header
      %s17 = sphi 0, %s21
      %p18 = scmp.ge.s32.totalorder %s17, 6
      %s24 = sphi 0, %s36
      %s25 = sphi 0, %s32
      %s26 = sphi 0, %s24
      %s27 = sphi 0, %s25
      %s28 = sphi 0, %s26
      %s29 = sphi 0, %s27
      %s39 = sphi 0, %s41
      %s42 = sphi 0, %s39
      %s43 = sphi 0, %s42
      %s59 = sphi 0, %s43
      %s63 = sphi 0, %s63
      %s65 = sphi 0, %s63
      %s66 = sphi 0, %s65
      %s80 = sphi 0, %s66
      %s86 = sphi 0, %s88
      %s89 = sphi 0, %s86
      %s90 = sphi 0, %s89
      %s106 = sphi 0, %s90
      %s112 = sphi 0, %s114
      %s115 = sphi 0, %s112
      %s116 = sphi 0, %s115
      %s132 = sphi 0, %s116
      %s138 = sphi 0, %s140
      %s141 = sphi 0, %s138
      %s142 = sphi 0, %s141
      %s158 = sphi 0, %s142
      %s164 = sphi 0, %s166
      %s167 = sphi 0, %s164
      %s168 = sphi 0, %s167
      %s184 = sphi 0, %s168
      %s190 = sphi 0, %s192
      %s193 = sphi 0, %s190
      %s194 = sphi 0, %s193
      %s210 = sphi 0, %s194
      %s216 = sphi 0, %s218
      %s219 = sphi 0, %s216
      %s220 = sphi 0, %s219
      %s236 = sphi 0, %s220
      %s246 = sphi 0, %s248
      %s249 = sphi 0, %s246
      %s250 = sphi 0, %s249
      %s266 = sphi 0, %s250
    $region4: #{tpu_custom_call.1} parent=1 // loop_header_branch
      %20 = sbr.rel (%p18) target = $region8
    $region5: #{tpu_custom_call.1} parent=1 // loop_body
      %s22 = ssub.s32 %s17, 1
      %s23 = ssub.s32 %s17, 2
      %s30 = sadd.s32 1, %s25
      %p31 = scmp.ge.s32.totalorder %s30, 2
      %s32 = scalar_select %p31, 0, %s30
      %s33 = sadd.s32 1, %s24
      %s34 = scalar_select %p31, %s33, %s24
      %p35 = scmp.ge.s32.totalorder %s34, 2
      %s36 = scalar_select %p35, 0, %s34
      %s37 = ssub.s32 %s25, %s32
      %p38 = scmp.eq.s32.totalorder %s37, 0
      %s40 = sadd.s32 %s39, 1
      %s41 = scalar_select %p38, %s39, %s40
      %p44 = pneg %p38
      %p45 = scmp.eq.s32.totalorder %s17, 3
      %p46 = por %p44, %p45
      %p47 = scmp.ne.s32.totalorder %s39, %s42
      %p48 = scmp.eq.s32.totalorder %s17, 0
      %p49 = por %p47, %p48
      %p50 = scmp.ne.s32.totalorder %s39, %s42
      %p51 = scmp.eq.s32.totalorder %s22, 3
      %p52 = por %p50, %p51
      %p53 = scmp.ne.s32.totalorder %s42, %s43
      %p54 = scmp.eq.s32.totalorder %s22, 0
      %p55 = por %p53, %p54
      %p56 = scmp.ne.s32.totalorder %s42, %s43
      %p57 = scmp.eq.s32.totalorder %s23, 3
      %p58 = por %p56, %p57
      %p60 = scmp.ne.s32.totalorder %s43, %s59
      %p61 = scmp.eq.s32.totalorder %s23, 0
      %p62 = por %p60, %p61
      %s64 = sadd.s32 %s63, 1
      %p67 = scmp.eq.s32.totalorder %s17, 3
      %p68 = scmp.ne.s32.totalorder %s63, %s65
      %p69 = scmp.eq.s32.totalorder %s17, 0
      %p70 = por %p68, %p69
      %p71 = scmp.ne.s32.totalorder %s63, %s65
      %p72 = scmp.eq.s32.totalorder %s22, 3
      %p73 = por %p71, %p72
      %p74 = scmp.ne.s32.totalorder %s65, %s66
      %p75 = scmp.eq.s32.totalorder %s22, 0
      %p76 = por %p74, %p75
      %p77 = scmp.ne.s32.totalorder %s65, %s66
      %p78 = scmp.eq.s32.totalorder %s23, 3
      %p79 = por %p77, %p78
      %p81 = scmp.ne.s32.totalorder %s66, %s80
      %p82 = scmp.eq.s32.totalorder %s23, 0
      %p83 = por %p81, %p82
      %s84 = ssub.s32 %s24, %s36
      %p85 = scmp.eq.s32.totalorder %s84, 0
      %s87 = sadd.s32 %s86, 1
      %s88 = scalar_select %p85, %s86, %s87
      %p91 = pneg %p85
      %p92 = scmp.eq.s32.totalorder %s17, 3
      %p93 = por %p91, %p92
      %p94 = scmp.ne.s32.totalorder %s86, %s89
      %p95 = scmp.eq.s32.totalorder %s17, 0
      %p96 = por %p94, %p95
      %p97 = scmp.ne.s32.totalorder %s86, %s89
      %p98 = scmp.eq.s32.totalorder %s22, 3
      %p99 = por %p97, %p98
      %p100 = scmp.ne.s32.totalorder %s89, %s90
      %p101 = scmp.eq.s32.totalorder %s22, 0
      %p102 = por %p100, %p101
      %p103 = scmp.ne.s32.totalorder %s89, %s90
      %p104 = scmp.eq.s32.totalorder %s23, 3
      %p105 = por %p103, %p104
      %p107 = scmp.ne.s32.totalorder %s90, %s106
      %p108 = scmp.eq.s32.totalorder %s23, 0
      %p109 = por %p107, %p108
      %s110 = ssub.s32 %s24, %s36
      %p111 = scmp.eq.s32.totalorder %s110, 0
      %s113 = sadd.s32 %s112, 1
      %s114 = scalar_select %p111, %s112, %s113
      %p117 = pneg %p111
      %p118 = scmp.eq.s32.totalorder %s17, 3
      %p119 = por %p117, %p118
      %p120 = scmp.ne.s32.totalorder %s112, %s115
      %p121 = scmp.eq.s32.totalorder %s17, 0
      %p122 = por %p120, %p121
      %p123 = scmp.ne.s32.totalorder %s112, %s115
      %p124 = scmp.eq.s32.totalorder %s22, 3
      %p125 = por %p123, %p124
      %p126 = scmp.ne.s32.totalorder %s115, %s116
      %p127 = scmp.eq.s32.totalorder %s22, 0
      %p128 = por %p126, %p127
      %p129 = scmp.ne.s32.totalorder %s115, %s116
      %p130 = scmp.eq.s32.totalorder %s23, 3
      %p131 = por %p129, %p130
      %p133 = scmp.ne.s32.totalorder %s116, %s132
      %p134 = scmp.eq.s32.totalorder %s23, 0
      %p135 = por %p133, %p134
      %s136 = ssub.s32 %s24, %s36
      %p137 = scmp.eq.s32.totalorder %s136, 0
      %s139 = sadd.s32 %s138, 1
      %s140 = scalar_select %p137, %s138, %s139
      %p143 = pneg %p137
      %p144 = scmp.eq.s32.totalorder %s17, 3
      %p145 = por %p143, %p144
      %p146 = scmp.ne.s32.totalorder %s138, %s141
      %p147 = scmp.eq.s32.totalorder %s17, 0
      %p148 = por %p146, %p147
      %p149 = scmp.ne.s32.totalorder %s138, %s141
      %p150 = scmp.eq.s32.totalorder %s22, 3
      %p151 = por %p149, %p150
      %p152 = scmp.ne.s32.totalorder %s141, %s142
      %p153 = scmp.eq.s32.totalorder %s22, 0
      %p154 = por %p152, %p153
      %p155 = scmp.ne.s32.totalorder %s141, %s142
      %p156 = scmp.eq.s32.totalorder %s23, 3
      %p157 = por %p155, %p156
      %p159 = scmp.ne.s32.totalorder %s142, %s158
      %p160 = scmp.eq.s32.totalorder %s23, 0
      %p161 = por %p159, %p160
      %s162 = ssub.s32 %s24, %s36
      %p163 = scmp.eq.s32.totalorder %s162, 0
      %s165 = sadd.s32 %s164, 1
      %s166 = scalar_select %p163, %s164, %s165
      %p169 = pneg %p163
      %p170 = scmp.eq.s32.totalorder %s17, 3
      %p171 = por %p169, %p170
      %p172 = scmp.ne.s32.totalorder %s164, %s167
      %p173 = scmp.eq.s32.totalorder %s17, 0
      %p174 = por %p172, %p173
      %p175 = scmp.ne.s32.totalorder %s164, %s167
      %p176 = scmp.eq.s32.totalorder %s22, 3
      %p177 = por %p175, %p176
      %p178 = scmp.ne.s32.totalorder %s167, %s168
      %p179 = scmp.eq.s32.totalorder %s22, 0
      %p180 = por %p178, %p179
      %p181 = scmp.ne.s32.totalorder %s167, %s168
      %p182 = scmp.eq.s32.totalorder %s23, 3
      %p183 = por %p181, %p182
      %p185 = scmp.ne.s32.totalorder %s168, %s184
      %p186 = scmp.eq.s32.totalorder %s23, 0
      %p187 = por %p185, %p186
      %s188 = ssub.s32 %s24, %s36
      %p189 = scmp.eq.s32.totalorder %s188, 0
      %s191 = sadd.s32 %s190, 1
      %s192 = scalar_select %p189, %s190, %s191
      %p195 = pneg %p189
      %p196 = scmp.eq.s32.totalorder %s17, 3
      %p197 = por %p195, %p196
      %p198 = scmp.ne.s32.totalorder %s190, %s193
      %p199 = scmp.eq.s32.totalorder %s17, 0
      %p200 = por %p198, %p199
      %p201 = scmp.ne.s32.totalorder %s190, %s193
      %p202 = scmp.eq.s32.totalorder %s22, 3
      %p203 = por %p201, %p202
      %p204 = scmp.ne.s32.totalorder %s193, %s194
      %p205 = scmp.eq.s32.totalorder %s22, 0
      %p206 = por %p204, %p205
      %p207 = scmp.ne.s32.totalorder %s193, %s194
      %p208 = scmp.eq.s32.totalorder %s23, 3
      %p209 = por %p207, %p208
      %p211 = scmp.ne.s32.totalorder %s194, %s210
      %p212 = scmp.eq.s32.totalorder %s23, 0
      %p213 = por %p211, %p212
      %s214 = ssub.s32 %s24, %s36
      %p215 = scmp.eq.s32.totalorder %s214, 0
      %s217 = sadd.s32 %s216, 1
      %s218 = scalar_select %p215, %s216, %s217
      %p221 = pneg %p215
      %p222 = scmp.eq.s32.totalorder %s17, 3
      %p223 = por %p221, %p222
      %p224 = scmp.ne.s32.totalorder %s216, %s219
      %p225 = scmp.eq.s32.totalorder %s17, 0
      %p226 = por %p224, %p225
      %p227 = scmp.ne.s32.totalorder %s216, %s219
      %p228 = scmp.eq.s32.totalorder %s22, 3
      %p229 = por %p227, %p228
      %p230 = scmp.ne.s32.totalorder %s219, %s220
      %p231 = scmp.eq.s32.totalorder %s22, 0
      %p232 = por %p230, %p231
      %p233 = scmp.ne.s32.totalorder %s219, %s220
      %p234 = scmp.eq.s32.totalorder %s23, 3
      %p235 = por %p233, %p234
      %p237 = scmp.ne.s32.totalorder %s220, %s236
      %p238 = scmp.eq.s32.totalorder %s23, 0
      %p239 = por %p237, %p238
      %s240 = smul.u32 %s24, 2
      %s241 = sadd.s32 %s240, %s25
      %s242 = smul.u32 %s36, 2
      %s243 = sadd.s32 %s242, %s32
      %s244 = ssub.s32 %s241, %s243
      %p245 = scmp.eq.s32.totalorder %s244, 0
      %s247 = sadd.s32 %s246, 1
      %s248 = scalar_select %p245, %s246, %s247
      %p251 = pneg %p245
      %p252 = scmp.eq.s32.totalorder %s17, 3
      %p253 = por %p251, %p252
      %p254 = scmp.ne.s32.totalorder %s246, %s249
      %p255 = scmp.eq.s32.totalorder %s17, 0
      %p256 = por %p254, %p255
      %p257 = scmp.ne.s32.totalorder %s246, %s249
      %p258 = scmp.eq.s32.totalorder %s22, 3
      %p259 = por %p257, %p258
      %p260 = scmp.ne.s32.totalorder %s249, %s250
      %p261 = scmp.eq.s32.totalorder %s22, 0
      %p262 = por %p260, %p261
      %p263 = scmp.ne.s32.totalorder %s249, %s250
      %p264 = scmp.eq.s32.totalorder %s23, 3
      %p265 = por %p263, %p264
      %p267 = scmp.ne.s32.totalorder %s250, %s266
      %p268 = scmp.eq.s32.totalorder %s23, 0
      %p269 = por %p267, %p268
      %p270 = scmp.le.s32.totalorder 1, %s17
      %p271 = scmp.lt.s32.totalorder %s17, 5
      %p272 = pnand %p270, %p271
      %p273 = pneg %p272
      // Predicated region
      $region9: #{tpu_custom_call.1} parent=5 // pred_check
        _
      $region10: #{tpu_custom_call.1} parent=5 // pred_check_branch
        %275 = sbr.rel (%p272) target = $region12
      $region11: #{tpu_custom_call.1} parent=5 // pred_region
        %s276 = ssub.s32 %s17, 1
        // Predicated region
        $region13: #{tpu_custom_call.1} parent=11 // pred_check
          %p277 = pneg %p76
        $region14: #{tpu_custom_call.1} parent=11 // pred_check_branch
          %279 = sbr.rel (%p277) target = $region16
        $region15: #{tpu_custom_call.1} parent=11 // pred_region
          _
        $region16: #{tpu_custom_call.1} parent=11 // pred_fallthru
          _
      $region12: #{tpu_custom_call.1} parent=5 // pred_fallthru
        _
      %p280 = scmp.lt.s32.totalorder %s17, 4
      // Predicated region
      $region17: #{tpu_custom_call.1} parent=5 // pred_check
        %p281 = pneg %p280
      $region18: #{tpu_custom_call.1} parent=5 // pred_check_branch
        %283 = sbr.rel (%p281) target = $region20
      $region19: #{tpu_custom_call.1} parent=5 // pred_region
        // Predicated region
        $region21: #{tpu_custom_call.1} parent=19 // pred_check
          %p284 = pneg %p49
        $region22: #{tpu_custom_call.1} parent=19 // pred_check_branch
          %286 = sbr.rel (%p284) target = $region24
        $region23: #{tpu_custom_call.1} parent=19 // pred_region
          %p287 = scmp.lt.s32.totalorder %s25, 1
          %s288 = scalar_select %p287, %s25, 1
          %s289 = smul.addr %s288, 32
          %s290 = smul.addr %s289, 4
          %s291 = scalar_lea.vmem %s0, %s290
        $region24: #{tpu_custom_call.1} parent=19 // pred_fallthru
          _
        // Predicated region
        $region25: #{tpu_custom_call.1} parent=19 // pred_check
          %p292 = pneg %p96
        $region26: #{tpu_custom_call.1} parent=19 // pred_check_branch
          %294 = sbr.rel (%p292) target = $region28
        $region27: #{tpu_custom_call.1} parent=19 // pred_region
          %p295 = scmp.lt.s32.totalorder %s24, 1
          %s296 = scalar_select %p295, %s24, 1
          %s297 = smul.addr %s296, 144
          %s298 = smul.addr %s297, 4
          %s299 = scalar_lea.vmem %s2, %s298
        $region28: #{tpu_custom_call.1} parent=19 // pred_fallthru
          _
        // Predicated region
        $region29: #{tpu_custom_call.1} parent=19 // pred_check
          %p300 = pneg %p122
        $region30: #{tpu_custom_call.1} parent=19 // pred_check_branch
          %302 = sbr.rel (%p300) target = $region32
        $region31: #{tpu_custom_call.1} parent=19 // pred_region
          %p303 = scmp.lt.s32.totalorder %s24, 1
          %s304 = scalar_select %p303, %s24, 1
          %s305 = smul.addr %s304, 2
          %s306 = scalar_lea.vmem %s3, %s305
        $region32: #{tpu_custom_call.1} parent=19 // pred_fallthru
          _
        // Predicated region
        $region33: #{tpu_custom_call.1} parent=19 // pred_check
          %p307 = pneg %p148
        $region34: #{tpu_custom_call.1} parent=19 // pred_check_branch
          %309 = sbr.rel (%p307) target = $region36
        $region35: #{tpu_custom_call.1} parent=19 // pred_region
          %p310 = scmp.lt.s32.totalorder %s24, 1
          %s311 = scalar_select %p310, %s24, 1
          %s312 = smul.addr %s311, 2
          %s313 = scalar_lea.vmem %s4, %s312
        $region36: #{tpu_custom_call.1} parent=19 // pred_fallthru
          _
        // Predicated region
        $region37: #{tpu_custom_call.1} parent=19 // pred_check
          %p314 = pneg %p174
        $region38: #{tpu_custom_call.1} parent=19 // pred_check_branch
          %316 = sbr.rel (%p314) target = $region40
        $region39: #{tpu_custom_call.1} parent=19 // pred_region
          %p317 = scmp.lt.s32.totalorder %s24, 1
          %s318 = scalar_select %p317, %s24, 1
          %s319 = smul.addr %s318, 2
          %s320 = scalar_lea.vmem %s5, %s319
        $region40: #{tpu_custom_call.1} parent=19 // pred_fallthru
          _
        // Predicated region
        $region41: #{tpu_custom_call.1} parent=19 // pred_check
          %p321 = pneg %p200
        $region42: #{tpu_custom_call.1} parent=19 // pred_check_branch
          %323 = sbr.rel (%p321) target = $region44
        $region43: #{tpu_custom_call.1} parent=19 // pred_region
          %p324 = scmp.lt.s32.totalorder %s24, 1
          %s325 = scalar_select %p324, %s24, 1
          %s326 = smul.addr %s325, 72
          %s327 = smul.addr %s326, 4
          %s328 = scalar_lea.vmem %s6, %s327
        $region44: #{tpu_custom_call.1} parent=19 // pred_fallthru
          _
        // Predicated region
        $region45: #{tpu_custom_call.1} parent=19 // pred_check
          %p329 = pneg %p226
        $region46: #{tpu_custom_call.1} parent=19 // pred_check_branch
          %331 = sbr.rel (%p329) target = $region48
        $region47: #{tpu_custom_call.1} parent=19 // pred_region
          %p332 = scmp.lt.s32.totalorder %s24, 1
          %s333 = scalar_select %p332, %s24, 1
          %s334 = scalar_lea.vmem %s7, %s333
        $region48: #{tpu_custom_call.1} parent=19 // pred_fallthru
          _
      $region20: #{tpu_custom_call.1} parent=5 // pred_fallthru
        _
      %p335 = scmp.le.s32.totalorder 1, %s17
      %p336 = scmp.lt.s32.totalorder %s17, 5
      %p337 = pnand %p335, %p336
      %p338 = pneg %p337
      // Predicated region
      $region49: #{tpu_custom_call.1} parent=5 // pred_check
        _
      $region50: #{tpu_custom_call.1} parent=5 // pred_check_branch
        %340 = sbr.rel (%p337) target = $region52
      $region51: #{tpu_custom_call.1} parent=5 // pred_region
        %s341 = ssub.s32 %s17, 1
        %p342 = scmp.lt.s32.totalorder %s27, 1
        %s343 = scalar_select %p342, %s27, 1
        %s344 = smul.addr %s343, 32
        %s345 = smul.addr %s344, 4
        %s346 = scalar_lea.vmem %s0, %s345
        %p347 = pneg %p55
        %p348 = pneg %p52
        %p349 = pneg %p76
        %p350 = pneg %p73
        %p351 = scmp.lt.s32.totalorder %s26, 1
        %s352 = scalar_select %p351, %s26, 1
        %s353 = smul.addr %s352, 144
        %s354 = smul.addr %s353, 4
        %s355 = scalar_lea.vmem %s2, %s354
        %p356 = pneg %p102
        %p357 = pneg %p99
        %p358 = scmp.lt.s32.totalorder %s26, 1
        %s359 = scalar_select %p358, %s26, 1
        %s360 = smul.addr %s359, 2
        %s361 = scalar_lea.vmem %s3, %s360
        %p362 = pneg %p128
        %p363 = pneg %p125
        %p364 = scmp.lt.s32.totalorder %s26, 1
        %s365 = scalar_select %p364, %s26, 1
        %s366 = smul.addr %s365, 2
        %s367 = scalar_lea.vmem %s4, %s366
        %p368 = pneg %p154
        %p369 = pneg %p151
        %p370 = scmp.lt.s32.totalorder %s26, 1
        %s371 = scalar_select %p370, %s26, 1
        %s372 = smul.addr %s371, 2
        %s373 = scalar_lea.vmem %s5, %s372
        %p374 = pneg %p180
        %p375 = pneg %p177
        %p376 = scmp.lt.s32.totalorder %s26, 1
        %s377 = scalar_select %p376, %s26, 1
        %s378 = smul.addr %s377, 72
        %s379 = smul.addr %s378, 4
        %s380 = scalar_lea.vmem %s6, %s379
        %p381 = pneg %p206
        %p382 = pneg %p203
        %p383 = scmp.lt.s32.totalorder %s26, 1
        %s384 = scalar_select %p383, %s26, 1
        %s385 = scalar_lea.vmem %s7, %s384
        %p386 = pneg %p232
        %p387 = pneg %p229
        %p388 = pneg %p262
        %p389 = pneg %p259
        %s390 = sand.u32 %s249, 1
        %s391 = scalar_lea.sflag [#allocation4], %s390
        %s392 = sand.u32 %s249, 1
        %s393 = smul.addr %s392, 256
        %s394 = scalar_lea.vmem [#allocation3], %s393
        %p395 = scmp.lt.s32.totalorder %s27, 1
        %s396 = scalar_select %p395, %s27, 1
        %s397 = smul.addr %s396, 32
        %s398 = smul.addr %s397, 4
        %s399 = scalar_lea.vmem %s0, %s398
        %p400 = scmp.lt.s32.totalorder %s26, 1
        %s401 = scalar_select %p400, %s26, 1
        %s402 = smul.addr %s401, 144
        %s403 = smul.addr %s402, 4
        %s404 = scalar_lea.vmem %s2, %s403
        %p405 = scmp.lt.s32.totalorder %s26, 1
        %s406 = scalar_select %p405, %s26, 1
        %s407 = smul.addr %s406, 2
        %s408 = scalar_lea.vmem %s3, %s407
        %p409 = scmp.lt.s32.totalorder %s26, 1
        %s410 = scalar_select %p409, %s26, 1
        %s411 = smul.addr %s410, 2
        %s412 = scalar_lea.vmem %s4, %s411
        %p413 = scmp.lt.s32.totalorder %s26, 1
        %s414 = scalar_select %p413, %s26, 1
        %s415 = smul.addr %s414, 2
        %s416 = scalar_lea.vmem %s5, %s415
        %p417 = scmp.lt.s32.totalorder %s26, 1
        %s418 = scalar_select %p417, %s26, 1
        %s419 = smul.addr %s418, 72
        %s420 = smul.addr %s419, 4
        %s421 = scalar_lea.vmem %s6, %s420
        %p422 = scmp.lt.s32.totalorder %s26, 1
        %s423 = scalar_select %p422, %s26, 1
        %s424 = scalar_lea.vmem %s7, %s423
        %s425 = smul.u32 %s26, 2
        %s426 = sadd.s32 %s425, %s27
        %v428 = vld [vmem:[%s1] sm:$0xff]
        %v429 = vld [vmem:[%s1 + $0x8] sm:$0xff]
        %v430 = vld [vmem:[%s1 + $0x10] sm:$0xff]
        %v431 = vld [vmem:[%s1 + $0x18] sm:$0xff]
        %v432 = vld [vmem:[%s1 + $0x20] sm:$0xff]
        %v433 = vld [vmem:[%s1 + $0x28] sm:$0xff]
        %v434 = vld [vmem:[%s1 + $0x30] sm:$0xff]
        %v435 = vld [vmem:[%s1 + $0x38] sm:$0xff]
        %v436 = vld [vmem:[%s1 + $0x40] sm:$0xff]
        %v437 = vld [vmem:[%s1 + $0x48] sm:$0xff]
        %v438 = vld [vmem:[%s1 + $0x50] sm:$0xff]
        %v439 = vld [vmem:[%s1 + $0x58] sm:$0xff]
        %v440 = vld [vmem:[%s1 + $0x60] sm:$0xff]
        %v441 = vld [vmem:[%s1 + $0x68] sm:$0xff]
        %v442 = vld [vmem:[%s1 + $0x70] sm:$0xff]
        %v443 = vld [vmem:[%s1 + $0x78] sm:$0xff]
        %v444 = vld [vmem:[%s1 + $0x80] sm:$0xff]
        %v445 = vld [vmem:[%s1 + $0x88] sm:$0xff]
        %v446 = vld [vmem:[%s1 + $0x90] sm:$0xff]
        %v447 = vld [vmem:[%s1 + $0x98] sm:$0xff]
        %v448 = vld [vmem:[%s1 + $0xa0] sm:$0xff]
        %v449 = vld [vmem:[%s1 + $0xa8] sm:$0xff]
        %v450 = vld [vmem:[%s1 + $0xb0] sm:$0xff]
        %v451 = vld [vmem:[%s1 + $0xb8] sm:$0xff]
        %v452 = vld [vmem:[%s1 + $0xc0] sm:$0xff]
        %v453 = vld [vmem:[%s1 + $0xc8] sm:$0xff]
        %v454 = vld [vmem:[%s1 + $0xd0] sm:$0xff]
        %v455 = vld [vmem:[%s1 + $0xd8] sm:$0xff]
        %v456 = vld [vmem:[%s1 + $0xe0] sm:$0xff]
        %v457 = vld [vmem:[%s1 + $0xe8] sm:$0xff]
        %v458 = vld [vmem:[%s1 + $0xf0] sm:$0xff]
        %v459 = vld [vmem:[%s1 + $0xf8] sm:$0xff]
        %v460 = vlaneseq
        %v461 = vshrl.u32 %v460, 7
        %v462 = vadd.s32 %v461, 8
        %v463 = vadd.s32 %v461, 16
        %v464 = vadd.s32 %v461, 24
        %v465 = vadd.s32 %v461, 32
        %v466 = vadd.s32 %v461, 40
        %v467 = vadd.s32 %v461, 48
        %v468 = vadd.s32 %v461, 56
        %v469 = vlaneseq
        %v470 = vand.u32 %v469, 127
        %v471 = vmul.u32 %v470, 2
        %vm472 = vcmp.ge.s32.totalorder %v461, %v471
        %vm473 = vcmp.ge.s32.totalorder %v462, %v471
        %vm474 = vcmp.ge.s32.totalorder %v463, %v471
        %vm475 = vcmp.ge.s32.totalorder %v464, %v471
        %vm476 = vcmp.ge.s32.totalorder %v465, %v471
        %vm477 = vcmp.ge.s32.totalorder %v466, %v471
        %vm478 = vcmp.ge.s32.totalorder %v467, %v471
        %vm479 = vcmp.ge.s32.totalorder %v468, %v471
        %v480 = vadd.s32 %v470, 1
        %v481 = vmul.u32 %v480, 2
        %vm482 = vcmp.lt.s32.totalorder %v461, %v481
        %vm483 = vcmp.lt.s32.totalorder %v462, %v481
        %vm484 = vcmp.lt.s32.totalorder %v463, %v481
        %vm485 = vcmp.lt.s32.totalorder %v464, %v481
        %vm486 = vcmp.lt.s32.totalorder %v465, %v481
        %vm487 = vcmp.lt.s32.totalorder %v466, %v481
        %vm488 = vcmp.lt.s32.totalorder %v467, %v481
        %vm489 = vcmp.lt.s32.totalorder %v468, %v481
        %vm490 = vmand %vm472, %vm482
        %vm491 = vmand %vm473, %vm483
        %vm492 = vmand %vm474, %vm484
        %vm493 = vmand %vm475, %vm485
        %vm494 = vmand %vm476, %vm486
        %vm495 = vmand %vm477, %vm487
        %vm496 = vmand %vm478, %vm488
        %vm497 = vmand %vm479, %vm489
        %v498 = vsel %vm490, 1, 0
        %v499 = vsel %vm491, 1, 0
        %v500 = vsel %vm492, 1, 0
        %v501 = vsel %vm493, 1, 0
        %v502 = vsel %vm494, 1, 0
        %v503 = vsel %vm495, 1, 0
        %v504 = vsel %vm496, 1, 0
        %v505 = vsel %vm497, 1, 0
        %v506 = vcvt.s32.f32 %v498
        %v507 = vcvt.s32.f32 %v499
        %v508 = vcvt.s32.f32 %v500
        %v509 = vcvt.s32.f32 %v501
        %v510 = vcvt.s32.f32 %v502
        %v511 = vcvt.s32.f32 %v503
        %v512 = vcvt.s32.f32 %v504
        %v513 = vcvt.s32.f32 %v505
        %v514 = vmul.u32 %v461, 2
        %v515 = vmul.u32 %v462, 2
        %v516 = vmul.u32 %v463, 2
        %v517 = vmul.u32 %v464, 2
        %vm518 = vcmp.ge.s32.totalorder %v470, %v514
        %vm519 = vcmp.ge.s32.totalorder %v470, %v515
        %vm520 = vcmp.ge.s32.totalorder %v470, %v516
        %vm521 = vcmp.ge.s32.totalorder %v470, %v517
        %v522 = vadd.s32 %v461, 1
        %v523 = vadd.s32 %v462, 1
        %v524 = vadd.s32 %v463, 1
        %v525 = vadd.s32 %v464, 1
        %v526 = vmul.u32 %v522, 2
        %v527 = vmul.u32 %v523, 2
        %v528 = vmul.u32 %v524, 2
        %v529 = vmul.u32 %v525, 2
        %vm530 = vcmp.lt.s32.totalorder %v470, %v526
        %vm531 = vcmp.lt.s32.totalorder %v470, %v527
        %vm532 = vcmp.lt.s32.totalorder %v470, %v528
        %vm533 = vcmp.lt.s32.totalorder %v470, %v529
        %vm534 = vmand %vm518, %vm530
        %vm535 = vmand %vm519, %vm531
        %vm536 = vmand %vm520, %vm532
        %vm537 = vmand %vm521, %vm533
        %v538 = vsel %vm534, 1, 0
        %v539 = vsel %vm535, 1, 0
        %v540 = vsel %vm536, 1, 0
        %v541 = vsel %vm537, 1, 0
        %v542 = vcvt.s32.f32 %v538
        %v543 = vcvt.s32.f32 %v539
        %v544 = vcvt.s32.f32 %v540
        %v545 = vcvt.s32.f32 %v541
        %v546 = vld [vmem:[%s399] sm:$0xf]
        %v547 = vld [vmem:[%s399 + $0x4] sm:$0xf]
        %v548 = vld [vmem:[%s399 + $0x8] sm:$0xf]
        %v549 = vld [vmem:[%s399 + $0xc] sm:$0xf]
        %v550 = vld [vmem:[%s399 + $0x10] sm:$0xf]
        %v551 = vld [vmem:[%s399 + $0x14] sm:$0xf]
        %v552 = vld [vmem:[%s399 + $0x18] sm:$0xf]
        %v553 = vld [vmem:[%s399 + $0x1c] sm:$0xf]
        %v554 = vld [vmem:[%s399 + $0x20] sm:$0xf]
        %v555 = vld [vmem:[%s399 + $0x24] sm:$0xf]
        %v556 = vld [vmem:[%s399 + $0x28] sm:$0xf]
        %v557 = vld [vmem:[%s399 + $0x2c] sm:$0xf]
        %v558 = vld [vmem:[%s399 + $0x30] sm:$0xf]
        %v559 = vld [vmem:[%s399 + $0x34] sm:$0xf]
        %v560 = vld [vmem:[%s399 + $0x38] sm:$0xf]
        %v561 = vld [vmem:[%s399 + $0x3c] sm:$0xf]
        %v562 = vld [vmem:[%s399 + $0x40] sm:$0xf]
        %v563 = vld [vmem:[%s399 + $0x44] sm:$0xf]
        %v564 = vld [vmem:[%s399 + $0x48] sm:$0xf]
        %v565 = vld [vmem:[%s399 + $0x4c] sm:$0xf]
        %v566 = vld [vmem:[%s399 + $0x50] sm:$0xf]
        %v567 = vld [vmem:[%s399 + $0x54] sm:$0xf]
        %v568 = vld [vmem:[%s399 + $0x58] sm:$0xf]
        %v569 = vld [vmem:[%s399 + $0x5c] sm:$0xf]
        %v570 = vld [vmem:[%s399 + $0x60] sm:$0xf]
        %v571 = vld [vmem:[%s399 + $0x64] sm:$0xf]
        %v572 = vld [vmem:[%s399 + $0x68] sm:$0xf]
        %v573 = vld [vmem:[%s399 + $0x6c] sm:$0xf]
        %v574 = vld [vmem:[%s399 + $0x70] sm:$0xf]
        %v575 = vld [vmem:[%s399 + $0x74] sm:$0xf]
        %v576 = vld [vmem:[%s399 + $0x78] sm:$0xf]
        %v577 = vld [vmem:[%s399 + $0x7c] sm:$0xf]
        %v578 = vld [vmem:[%s408] sm:$0x1]
        %v579 = vunpack.c.l.bf16 %v546
        %v580 = vunpack.c.l.bf16 %v547
        %v581 = vunpack.c.l.bf16 %v548
        %v582 = vunpack.c.l.bf16 %v549
        %v583 = vunpack.c.l.bf16 %v550
        %v584 = vunpack.c.l.bf16 %v551
        %v585 = vunpack.c.l.bf16 %v552
        %v586 = vunpack.c.l.bf16 %v553
        %v587 = vunpack.c.l.bf16 %v554
        %v588 = vunpack.c.l.bf16 %v555
        %v589 = vunpack.c.l.bf16 %v556
        %v590 = vunpack.c.l.bf16 %v557
        %v591 = vunpack.c.l.bf16 %v558
        %v592 = vunpack.c.l.bf16 %v559
        %v593 = vunpack.c.l.bf16 %v560
        %v594 = vunpack.c.l.bf16 %v561
        %v595 = vunpack.c.l.bf16 %v562
        %v596 = vunpack.c.l.bf16 %v563
        %v597 = vunpack.c.l.bf16 %v564
        %v598 = vunpack.c.l.bf16 %v565
        %v599 = vunpack.c.l.bf16 %v566
        %v600 = vunpack.c.l.bf16 %v567
        %v601 = vunpack.c.l.bf16 %v568
        %v602 = vunpack.c.l.bf16 %v569
        %v603 = vunpack.c.l.bf16 %v570
        %v604 = vunpack.c.l.bf16 %v571
        %v605 = vunpack.c.l.bf16 %v572
        %v606 = vunpack.c.l.bf16 %v573
        %v607 = vunpack.c.l.bf16 %v574
        %v608 = vunpack.c.l.bf16 %v575
        %v609 = vunpack.c.l.bf16 %v576
        %v610 = vunpack.c.l.bf16 %v577
        %v611 = vrot.slane %v579, 7
        %v612 = vrot.slane %v580, 7
        %v613 = vrot.slane %v581, 7
        %v614 = vrot.slane %v582, 7
        %v615 = vrot.slane %v583, 7
        %v616 = vrot.slane %v584, 7
        %v617 = vrot.slane %v585, 7
        %v618 = vrot.slane %v586, 7
        %v619 = vrot.slane %v587, 7
        %v620 = vrot.slane %v588, 7
        %v621 = vrot.slane %v589, 7
        %v622 = vrot.slane %v590, 7
        %v623 = vrot.slane %v591, 7
        %v624 = vrot.slane %v592, 7
        %v625 = vrot.slane %v593, 7
        %v626 = vrot.slane %v594, 7
        %v627 = vrot.slane %v595, 7
        %v628 = vrot.slane %v596, 7
        %v629 = vrot.slane %v597, 7
        %v630 = vrot.slane %v598, 7
        %v631 = vrot.slane %v599, 7
        %v632 = vrot.slane %v600, 7
        %v633 = vrot.slane %v601, 7
        %v634 = vrot.slane %v602, 7
        %v635 = vrot.slane %v603, 7
        %v636 = vrot.slane %v604, 7
        %v637 = vrot.slane %v605, 7
        %v638 = vrot.slane %v606, 7
        %v639 = vrot.slane %v607, 7
        %v640 = vrot.slane %v608, 7
        %v641 = vrot.slane %v609, 7
        %v642 = vrot.slane %v610, 7
        %vm643 = vcmp.lt.s32.totalorder %v461, 1
        %v644 = vsel %vm643, %v641, %v642
        %v645 = vsel %vm643, %v640, %v641
        %v646 = vsel %vm643, %v639, %v640
        %v647 = vsel %vm643, %v638, %v639
        %v648 = vsel %vm643, %v637, %v638
        %v649 = vsel %vm643, %v636, %v637
        %v650 = vsel %vm643, %v635, %v636
        %v651 = vsel %vm643, %v634, %v635
        %v652 = vsel %vm643, %v633, %v634
        %v653 = vsel %vm643, %v632, %v633
        %v654 = vsel %vm643, %v631, %v632
        %v655 = vsel %vm643, %v630, %v631
        %v656 = vsel %vm643, %v629, %v630
        %v657 = vsel %vm643, %v628, %v629
        %v658 = vsel %vm643, %v627, %v628
        %v659 = vsel %vm643, %v626, %v627
        %v660 = vsel %vm643, %v625, %v626
        %v661 = vsel %vm643, %v624, %v625
        %v662 = vsel %vm643, %v623, %v624
        %v663 = vsel %vm643, %v622, %v623
        %v664 = vsel %vm643, %v621, %v622
        %v665 = vsel %vm643, %v620, %v621
        %v666 = vsel %vm643, %v619, %v620
        %v667 = vsel %vm643, %v618, %v619
        %v668 = vsel %vm643, %v617, %v618
        %v669 = vsel %vm643, %v616, %v617
        %v670 = vsel %vm643, %v615, %v616
        %v671 = vsel %vm643, %v614, %v615
        %v672 = vsel %vm643, %v613, %v614
        %v673 = vsel %vm643, %v612, %v613
        %v674 = vsel %vm643, %v611, %v612
        %v675 = vsel %vm643, %v642, %v611
        %677 = vset.pattern.permute.xlu0 0
        %678 = vperm.xlu0 %677, %v428
        %v679 = vpop.permute.xlu0 %678
        %682 = vset.pattern.permute.xlu0 0
        %683 = vperm.xlu0 %682, %v429
        %v684 = vpop.permute.xlu0 %683
        %687 = vset.pattern.permute.xlu0 0
        %688 = vperm.xlu0 %687, %v430
        %v689 = vpop.permute.xlu0 %688
        %692 = vset.pattern.permute.xlu0 0
        %693 = vperm.xlu0 %692, %v431
        %v694 = vpop.permute.xlu0 %693
        %697 = vset.pattern.permute.xlu0 0
        %698 = vperm.xlu0 %697, %v432
        %v699 = vpop.permute.xlu0 %698
        %702 = vset.pattern.permute.xlu0 0
        %703 = vperm.xlu0 %702, %v433
        %v704 = vpop.permute.xlu0 %703
        %707 = vset.pattern.permute.xlu0 0
        %708 = vperm.xlu0 %707, %v434
        %v709 = vpop.permute.xlu0 %708
        %712 = vset.pattern.permute.xlu0 0
        %713 = vperm.xlu0 %712, %v435
        %v714 = vpop.permute.xlu0 %713
        %717 = vset.pattern.permute.xlu0 0
        %718 = vperm.xlu0 %717, %v436
        %v719 = vpop.permute.xlu0 %718
        %722 = vset.pattern.permute.xlu0 0
        %723 = vperm.xlu0 %722, %v437
        %v724 = vpop.permute.xlu0 %723
        %727 = vset.pattern.permute.xlu0 0
        %728 = vperm.xlu0 %727, %v438
        %v729 = vpop.permute.xlu0 %728
        %732 = vset.pattern.permute.xlu0 0
        %733 = vperm.xlu0 %732, %v439
        %v734 = vpop.permute.xlu0 %733
        %737 = vset.pattern.permute.xlu0 0
        %738 = vperm.xlu0 %737, %v440
        %v739 = vpop.permute.xlu0 %738
        %742 = vset.pattern.permute.xlu0 0
        %743 = vperm.xlu0 %742, %v441
        %v744 = vpop.permute.xlu0 %743
        %747 = vset.pattern.permute.xlu0 0
        %748 = vperm.xlu0 %747, %v442
        %v749 = vpop.permute.xlu0 %748
        %752 = vset.pattern.permute.xlu0 0
        %753 = vperm.xlu0 %752, %v443
        %v754 = vpop.permute.xlu0 %753
        %757 = vset.pattern.permute.xlu0 0
        %758 = vperm.xlu0 %757, %v444
        %v759 = vpop.permute.xlu0 %758
        %762 = vset.pattern.permute.xlu0 0
        %763 = vperm.xlu0 %762, %v445
        %v764 = vpop.permute.xlu0 %763
        %767 = vset.pattern.permute.xlu0 0
        %768 = vperm.xlu0 %767, %v446
        %v769 = vpop.permute.xlu0 %768
        %772 = vset.pattern.permute.xlu0 0
        %773 = vperm.xlu0 %772, %v447
        %v774 = vpop.permute.xlu0 %773
        %777 = vset.pattern.permute.xlu0 0
        %778 = vperm.xlu0 %777, %v448
        %v779 = vpop.permute.xlu0 %778
        %782 = vset.pattern.permute.xlu0 0
        %783 = vperm.xlu0 %782, %v449
        %v784 = vpop.permute.xlu0 %783
        %787 = vset.pattern.permute.xlu0 0
        %788 = vperm.xlu0 %787, %v450
        %v789 = vpop.permute.xlu0 %788
        %792 = vset.pattern.permute.xlu0 0
        %793 = vperm.xlu0 %792, %v451
        %v794 = vpop.permute.xlu0 %793
        %797 = vset.pattern.permute.xlu0 0
        %798 = vperm.xlu0 %797, %v452
        %v799 = vpop.permute.xlu0 %798
        %802 = vset.pattern.permute.xlu0 0
        %803 = vperm.xlu0 %802, %v453
        %v804 = vpop.permute.xlu0 %803
        %807 = vset.pattern.permute.xlu0 0
        %808 = vperm.xlu0 %807, %v454
        %v809 = vpop.permute.xlu0 %808
        %812 = vset.pattern.permute.xlu0 0
        %813 = vperm.xlu0 %812, %v455
        %v814 = vpop.permute.xlu0 %813
        %817 = vset.pattern.permute.xlu0 0
        %818 = vperm.xlu0 %817, %v456
        %v819 = vpop.permute.xlu0 %818
        %822 = vset.pattern.permute.xlu0 0
        %823 = vperm.xlu0 %822, %v457
        %v824 = vpop.permute.xlu0 %823
        %827 = vset.pattern.permute.xlu0 0
        %828 = vperm.xlu0 %827, %v458
        %v829 = vpop.permute.xlu0 %828
        %832 = vset.pattern.permute.xlu0 0
        %833 = vperm.xlu0 %832, %v459
        %v834 = vpop.permute.xlu0 %833
        %v836 = vmul.f32 %v645, %v679
        %v837 = vmul.f32 %v644, %v684
        %v838 = vmul.f32 %v675, %v689
        %v839 = vmul.f32 %v674, %v694
        %v840 = vmul.f32 %v673, %v699
        %v841 = vmul.f32 %v672, %v704
        %v842 = vmul.f32 %v671, %v709
        %v843 = vmul.f32 %v670, %v714
        %v844 = vmul.f32 %v669, %v719
        %v845 = vmul.f32 %v668, %v724
        %v846 = vmul.f32 %v667, %v729
        %v847 = vmul.f32 %v666, %v734
        %v848 = vmul.f32 %v665, %v739
        %v849 = vmul.f32 %v664, %v744
        %v850 = vmul.f32 %v663, %v749
        %v851 = vmul.f32 %v662, %v754
        %v852 = vmul.f32 %v661, %v759
        %v853 = vmul.f32 %v660, %v764
        %v854 = vmul.f32 %v659, %v769
        %v855 = vmul.f32 %v658, %v774
        %v856 = vmul.f32 %v657, %v779
        %v857 = vmul.f32 %v656, %v784
        %v858 = vmul.f32 %v655, %v789
        %v859 = vmul.f32 %v654, %v794
        %v860 = vmul.f32 %v653, %v799
        %v861 = vmul.f32 %v652, %v804
        %v862 = vmul.f32 %v651, %v809
        %v863 = vmul.f32 %v650, %v814
        %v864 = vmul.f32 %v649, %v819
        %v865 = vmul.f32 %v648, %v824
        %v866 = vmul.f32 %v647, %v829
        %v867 = vmul.f32 %v646, %v834
        %v868 = vpack.c.bf16 %v837, %v836
        %v869 = vpack.c.bf16 %v839, %v838
        %v870 = vpack.c.bf16 %v841, %v840
        %v871 = vpack.c.bf16 %v843, %v842
        %v872 = vpack.c.bf16 %v845, %v844
        %v873 = vpack.c.bf16 %v847, %v846
        %v874 = vpack.c.bf16 %v849, %v848
        %v875 = vpack.c.bf16 %v851, %v850
        %v876 = vpack.c.bf16 %v853, %v852
        %v877 = vpack.c.bf16 %v855, %v854
        %v878 = vpack.c.bf16 %v857, %v856
        %v879 = vpack.c.bf16 %v859, %v858
        %v880 = vpack.c.bf16 %v861, %v860
        %v881 = vpack.c.bf16 %v863, %v862
        %v882 = vpack.c.bf16 %v865, %v864
        %v883 = vpack.c.bf16 %v867, %v866
        %v884 = vld [vmem:[%s404] sm:$0xf]
        %v885 = vld [vmem:[%s404 + $0x4] sm:$0xf]
        %v886 = vld [vmem:[%s404 + $0x8] sm:$0xf]
        %v887 = vld [vmem:[%s404 + $0xc] sm:$0xf]
        %v888 = vld [vmem:[%s404 + $0x10] sm:$0xf]
        %v889 = vld [vmem:[%s404 + $0x14] sm:$0xf]
        %v890 = vld [vmem:[%s404 + $0x18] sm:$0xf]
        %v891 = vld [vmem:[%s404 + $0x1c] sm:$0xf]
        %892 = vset.pattern.permute.xlu0 1
        %893 = vperm.xlu0 %892, %v428
        %v894 = vpop.permute.xlu0 %893
        %896 = vset.pattern.permute.xlu0 1
        %897 = vperm.xlu0 %896, %v429
        %v898 = vpop.permute.xlu0 %897
        %900 = vset.pattern.permute.xlu0 1
        %901 = vperm.xlu0 %900, %v430
        %v902 = vpop.permute.xlu0 %901
        %904 = vset.pattern.permute.xlu0 1
        %905 = vperm.xlu0 %904, %v431
        %v906 = vpop.permute.xlu0 %905
        %908 = vset.pattern.permute.xlu0 1
        %909 = vperm.xlu0 %908, %v432
        %v910 = vpop.permute.xlu0 %909
        %912 = vset.pattern.permute.xlu0 1
        %913 = vperm.xlu0 %912, %v433
        %v914 = vpop.permute.xlu0 %913
        %916 = vset.pattern.permute.xlu0 1
        %917 = vperm.xlu0 %916, %v434
        %v918 = vpop.permute.xlu0 %917
        %920 = vset.pattern.permute.xlu0 1
        %921 = vperm.xlu0 %920, %v435
        %v922 = vpop.permute.xlu0 %921
        %924 = vset.pattern.permute.xlu0 1
        %925 = vperm.xlu0 %924, %v436
        %v926 = vpop.permute.xlu0 %925
        %928 = vset.pattern.permute.xlu0 1
        %929 = vperm.xlu0 %928, %v437
        %v930 = vpop.permute.xlu0 %929
        %932 = vset.pattern.permute.xlu0 1
        %933 = vperm.xlu0 %932, %v438
        %v934 = vpop.permute.xlu0 %933
        %936 = vset.pattern.permute.xlu0 1
        %937 = vperm.xlu0 %936, %v439
        %v938 = vpop.permute.xlu0 %937
        %940 = vset.pattern.permute.xlu0 1
        %941 = vperm.xlu0 %940, %v440
        %v942 = vpop.permute.xlu0 %941
        %944 = vset.pattern.permute.xlu0 1
        %945 = vperm.xlu0 %944, %v441
        %v946 = vpop.permute.xlu0 %945
        %948 = vset.pattern.permute.xlu0 1
        %949 = vperm.xlu0 %948, %v442
        %v950 = vpop.permute.xlu0 %949
        %952 = vset.pattern.permute.xlu0 1
        %953 = vperm.xlu0 %952, %v443
        %v954 = vpop.permute.xlu0 %953
        %956 = vset.pattern.permute.xlu0 1
        %957 = vperm.xlu0 %956, %v444
        %v958 = vpop.permute.xlu0 %957
        %960 = vset.pattern.permute.xlu0 1
        %961 = vperm.xlu0 %960, %v445
        %v962 = vpop.permute.xlu0 %961
        %964 = vset.pattern.permute.xlu0 1
        %965 = vperm.xlu0 %964, %v446
        %v966 = vpop.permute.xlu0 %965
        %968 = vset.pattern.permute.xlu0 1
        %969 = vperm.xlu0 %968, %v447
        %v970 = vpop.permute.xlu0 %969
        %972 = vset.pattern.permute.xlu0 1
        %973 = vperm.xlu0 %972, %v448
        %v974 = vpop.permute.xlu0 %973
        %976 = vset.pattern.permute.xlu0 1
        %977 = vperm.xlu0 %976, %v449
        %v978 = vpop.permute.xlu0 %977
        %980 = vset.pattern.permute.xlu0 1
        %981 = vperm.xlu0 %980, %v450
        %v982 = vpop.permute.xlu0 %981
        %984 = vset.pattern.permute.xlu0 1
        %985 = vperm.xlu0 %984, %v451
        %v986 = vpop.permute.xlu0 %985
        %988 = vset.pattern.permute.xlu0 1
        %989 = vperm.xlu0 %988, %v452
        %v990 = vpop.permute.xlu0 %989
        %992 = vset.pattern.permute.xlu0 1
        %993 = vperm.xlu0 %992, %v453
        %v994 = vpop.permute.xlu0 %993
        %996 = vset.pattern.permute.xlu0 1
        %997 = vperm.xlu0 %996, %v454
        %v998 = vpop.permute.xlu0 %997
        %1000 = vset.pattern.permute.xlu0 1
        %1001 = vperm.xlu0 %1000, %v455
        %v1002 = vpop.permute.xlu0 %1001
        %1004 = vset.pattern.permute.xlu0 1
        %1005 = vperm.xlu0 %1004, %v456
        %v1006 = vpop.permute.xlu0 %1005
        %1008 = vset.pattern.permute.xlu0 1
        %1009 = vperm.xlu0 %1008, %v457
        %v1010 = vpop.permute.xlu0 %1009
        %1012 = vset.pattern.permute.xlu0 1
        %1013 = vperm.xlu0 %1012, %v458
        %v1014 = vpop.permute.xlu0 %1013
        %1016 = vset.pattern.permute.xlu0 1
        %1017 = vperm.xlu0 %1016, %v459
        %v1018 = vpop.permute.xlu0 %1017
        %v1020 = vmul.f32 %v609, %v894
        %v1021 = vmul.f32 %v610, %v898
        %v1022 = vmul.f32 %v579, %v902
        %v1023 = vmul.f32 %v580, %v906
        %v1024 = vmul.f32 %v581, %v910
        %v1025 = vmul.f32 %v582, %v914
        %v1026 = vmul.f32 %v583, %v918
        %v1027 = vmul.f32 %v584, %v922
        %v1028 = vmul.f32 %v585, %v926
        %v1029 = vmul.f32 %v586, %v930
        %v1030 = vmul.f32 %v587, %v934
        %v1031 = vmul.f32 %v588, %v938
        %v1032 = vmul.f32 %v589, %v942
        %v1033 = vmul.f32 %v590, %v946
        %v1034 = vmul.f32 %v591, %v950
        %v1035 = vmul.f32 %v592, %v954
        %v1036 = vmul.f32 %v593, %v958
        %v1037 = vmul.f32 %v594, %v962
        %v1038 = vmul.f32 %v595, %v966
        %v1039 = vmul.f32 %v596, %v970
        %v1040 = vmul.f32 %v597, %v974
        %v1041 = vmul.f32 %v598, %v978
        %v1042 = vmul.f32 %v599, %v982
        %v1043 = vmul.f32 %v600, %v986
        %v1044 = vmul.f32 %v601, %v990
        %v1045 = vmul.f32 %v602, %v994
        %v1046 = vmul.f32 %v603, %v998
        %v1047 = vmul.f32 %v604, %v1002
        %v1048 = vmul.f32 %v605, %v1006
        %v1049 = vmul.f32 %v606, %v1010
        %v1050 = vmul.f32 %v607, %v1014
        %v1051 = vmul.f32 %v608, %v1018
        %v1052 = vpack.c.bf16 %v1021, %v1020
        %v1053 = vpack.c.bf16 %v1023, %v1022
        %v1054 = vpack.c.bf16 %v1025, %v1024
        %v1055 = vpack.c.bf16 %v1027, %v1026
        %v1056 = vpack.c.bf16 %v1029, %v1028
        %v1057 = vpack.c.bf16 %v1031, %v1030
        %v1058 = vpack.c.bf16 %v1033, %v1032
        %v1059 = vpack.c.bf16 %v1035, %v1034
        %v1060 = vpack.c.bf16 %v1037, %v1036
        %v1061 = vpack.c.bf16 %v1039, %v1038
        %v1062 = vpack.c.bf16 %v1041, %v1040
        %v1063 = vpack.c.bf16 %v1043, %v1042
        %v1064 = vpack.c.bf16 %v1045, %v1044
        %v1065 = vpack.c.bf16 %v1047, %v1046
        %v1066 = vpack.c.bf16 %v1049, %v1048
        %v1067 = vpack.c.bf16 %v1051, %v1050
        %v1068 = vld [vmem:[%s404 + $0x20] sm:$0xf]
        %v1069 = vld [vmem:[%s404 + $0x24] sm:$0xf]
        %v1070 = vld [vmem:[%s404 + $0x28] sm:$0xf]
        %v1071 = vld [vmem:[%s404 + $0x2c] sm:$0xf]
        %v1072 = vld [vmem:[%s404 + $0x30] sm:$0xf]
        %v1073 = vld [vmem:[%s404 + $0x34] sm:$0xf]
        %v1074 = vld [vmem:[%s404 + $0x38] sm:$0xf]
        %v1075 = vld [vmem:[%s404 + $0x3c] sm:$0xf]
        %v1084 = vunpack.c.l.b16 %v1068
        %v1085 = vunpack.c.l.b16 %v1069
        %v1086 = vunpack.c.l.b16 %v1070
        %v1087 = vunpack.c.l.b16 %v1071
        %v1088 = vunpack.c.l.b16 %v1072
        %v1089 = vunpack.c.l.b16 %v1073
        %v1090 = vunpack.c.l.b16 %v1074
        %v1091 = vunpack.c.l.b16 %v1075
        %v1092 = vpack.c.b16 %v1085, %v1084
        %v1093 = vpack.c.b16 %v1087, %v1086
        %v1094 = vpack.c.b16 %v1089, %v1088
        %v1095 = vpack.c.b16 %v1091, %v1090
        %vm1100 = vcmask 523264
        %v1102 = vsel %vm1100, %v1052, 0
        %v1105 = vsel %vm1100, %v1053, 0
        %v1108 = vsel %vm1100, %v1054, 0
        %v1111 = vsel %vm1100, %v1055, 0
        %v1114 = vsel %vm1100, %v1056, 0
        %v1117 = vsel %vm1100, %v1057, 0
        %v1120 = vsel %vm1100, %v1058, 0
        %v1123 = vsel %vm1100, %v1059, 0
        %v1126 = vsel %vm1100, %v1060, 0
        %v1129 = vsel %vm1100, %v1061, 0
        %v1132 = vsel %vm1100, %v1062, 0
        %v1135 = vsel %vm1100, %v1063, 0
        %v1138 = vsel %vm1100, %v1064, 0
        %v1141 = vsel %vm1100, %v1065, 0
        %v1144 = vsel %vm1100, %v1066, 0
        %v1147 = vsel %vm1100, %v1067, 0
        %1149 = vmatpush.bf16.msra.mxu0 0
        %1150 = vmatpush.bf16.msra.mxu0 0
        %1151 = vmatpush.bf16.msra.mxu0 0
        %1152 = vmatpush.bf16.msra.mxu0 0
        %1153 = vmatpush.bf16.msra.mxu0 %v1095
        %1154 = vmatpush.bf16.msra.mxu0 %v1094
        %1155 = vmatpush.bf16.msra.mxu0 %v1093
        %1156 = vmatpush.bf16.msra.mxu0 %v1092
        %1157 = vmatmul.bf16.gmra.mxu0 %v1102
        %v1158 = vpop.f32.mrf.mxu0
        %v1159 = vadd.f32 0.0, %v1158
        %v1160 = vpop.f32.mrf.mxu0
        %v1161 = vadd.f32 0.0, %v1160
        %1162 = vmatmul.bf16.gmra.mxu0 %v1105
        %v1163 = vpop.f32.mrf.mxu0
        %v1164 = vadd.f32 0.0, %v1163
        %v1165 = vpop.f32.mrf.mxu0
        %v1166 = vadd.f32 0.0, %v1165
        %1167 = vmatmul.bf16.gmra.mxu0 %v1108
        %v1168 = vpop.f32.mrf.mxu0
        %v1169 = vadd.f32 0.0, %v1168
        %v1170 = vpop.f32.mrf.mxu0
        %v1171 = vadd.f32 0.0, %v1170
        %1172 = vmatmul.bf16.gmra.mxu0 %v1111
        %v1173 = vpop.f32.mrf.mxu0
        %v1174 = vadd.f32 0.0, %v1173
        %v1175 = vpop.f32.mrf.mxu0
        %v1176 = vadd.f32 0.0, %v1175
        %1177 = vmatmul.bf16.gmra.mxu0 %v1114
        %v1178 = vpop.f32.mrf.mxu0
        %v1179 = vadd.f32 0.0, %v1178
        %v1180 = vpop.f32.mrf.mxu0
        %v1181 = vadd.f32 0.0, %v1180
        %1182 = vmatmul.bf16.gmra.mxu0 %v1117
        %v1183 = vpop.f32.mrf.mxu0
        %v1184 = vadd.f32 0.0, %v1183
        %v1185 = vpop.f32.mrf.mxu0
        %v1186 = vadd.f32 0.0, %v1185
        %1187 = vmatmul.bf16.gmra.mxu0 %v1120
        %v1188 = vpop.f32.mrf.mxu0
        %v1189 = vadd.f32 0.0, %v1188
        %v1190 = vpop.f32.mrf.mxu0
        %v1191 = vadd.f32 0.0, %v1190
        %1192 = vmatmul.bf16.gmra.mxu0 %v1123
        %v1193 = vpop.f32.mrf.mxu0
        %v1194 = vadd.f32 0.0, %v1193
        %v1195 = vpop.f32.mrf.mxu0
        %v1196 = vadd.f32 0.0, %v1195
        %1197 = vmatmul.bf16.gmra.mxu0 %v1126
        %v1198 = vpop.f32.mrf.mxu0
        %v1199 = vadd.f32 0.0, %v1198
        %v1200 = vpop.f32.mrf.mxu0
        %v1201 = vadd.f32 0.0, %v1200
        %1202 = vmatmul.bf16.gmra.mxu0 %v1129
        %v1203 = vpop.f32.mrf.mxu0
        %v1204 = vadd.f32 0.0, %v1203
        %v1205 = vpop.f32.mrf.mxu0
        %v1206 = vadd.f32 0.0, %v1205
        %1207 = vmatmul.bf16.gmra.mxu0 %v1132
        %v1208 = vpop.f32.mrf.mxu0
        %v1209 = vadd.f32 0.0, %v1208
        %v1210 = vpop.f32.mrf.mxu0
        %v1211 = vadd.f32 0.0, %v1210
        %1212 = vmatmul.bf16.gmra.mxu0 %v1135
        %v1213 = vpop.f32.mrf.mxu0
        %v1214 = vadd.f32 0.0, %v1213
        %v1215 = vpop.f32.mrf.mxu0
        %v1216 = vadd.f32 0.0, %v1215
        %1217 = vmatmul.bf16.gmra.mxu0 %v1138
        %v1218 = vpop.f32.mrf.mxu0
        %v1219 = vadd.f32 0.0, %v1218
        %v1220 = vpop.f32.mrf.mxu0
        %v1221 = vadd.f32 0.0, %v1220
        %1222 = vmatmul.bf16.gmra.mxu0 %v1141
        %v1223 = vpop.f32.mrf.mxu0
        %v1224 = vadd.f32 0.0, %v1223
        %v1225 = vpop.f32.mrf.mxu0
        %v1226 = vadd.f32 0.0, %v1225
        %1227 = vmatmul.bf16.gmra.mxu0 %v1144
        %v1228 = vpop.f32.mrf.mxu0
        %v1229 = vadd.f32 0.0, %v1228
        %v1230 = vpop.f32.mrf.mxu0
        %v1231 = vadd.f32 0.0, %v1230
        %1232 = vmatmul.bf16.gmra.mxu0 %v1147
        %v1233 = vpop.f32.mrf.mxu0
        %v1234 = vadd.f32 0.0, %v1233
        %v1235 = vpop.f32.mrf.mxu0
        %v1236 = vadd.f32 0.0, %v1235
        %1237 = vdwg.mxu0
        %v1246 = vunpack.c.l.b16 %v884
        %v1247 = vunpack.c.l.b16 %v885
        %v1248 = vunpack.c.l.b16 %v886
        %v1249 = vunpack.c.l.b16 %v887
        %v1250 = vunpack.c.l.b16 %v888
        %v1251 = vunpack.c.l.b16 %v889
        %v1252 = vunpack.c.l.b16 %v890
        %v1253 = vunpack.c.l.b16 %v891
        %v1254 = vpack.c.b16 %v1247, %v1246
        %v1255 = vpack.c.b16 %v1249, %v1248
        %v1256 = vpack.c.b16 %v1251, %v1250
        %v1257 = vpack.c.b16 %v1253, %v1252
        %v1263 = vsel %vm1100, %v868, 0
        %v1266 = vsel %vm1100, %v869, 0
        %v1269 = vsel %vm1100, %v870, 0
        %v1272 = vsel %vm1100, %v871, 0
        %v1275 = vsel %vm1100, %v872, 0
        %v1278 = vsel %vm1100, %v873, 0
        %v1281 = vsel %vm1100, %v874, 0
        %v1284 = vsel %vm1100, %v875, 0
        %v1287 = vsel %vm1100, %v876, 0
        %v1290 = vsel %vm1100, %v877, 0
        %v1293 = vsel %vm1100, %v878, 0
        %v1296 = vsel %vm1100, %v879, 0
        %v1299 = vsel %vm1100, %v880, 0
        %v1302 = vsel %vm1100, %v881, 0
        %v1305 = vsel %vm1100, %v882, 0
        %v1308 = vsel %vm1100, %v883, 0
        %1310 = vmatpush.bf16.msra.mxu0 0
        %1311 = vmatpush.bf16.msra.mxu0 0
        %1312 = vmatpush.bf16.msra.mxu0 0
        %1313 = vmatpush.bf16.msra.mxu0 0
        %1314 = vmatpush.bf16.msra.mxu0 %v1257
        %1315 = vmatpush.bf16.msra.mxu0 %v1256
        %1316 = vmatpush.bf16.msra.mxu0 %v1255
        %1317 = vmatpush.bf16.msra.mxu0 %v1254
        %1318 = vmatmul.bf16.gmra.mxu0 %v1263
        %v1319 = vpop.f32.mrf.mxu0
        %v1320 = vadd.f32 %v1159, %v1319
        %v1321 = vpop.f32.mrf.mxu0
        %v1322 = vadd.f32 %v1161, %v1321
        %1323 = vmatmul.bf16.gmra.mxu0 %v1266
        %v1324 = vpop.f32.mrf.mxu0
        %v1325 = vadd.f32 %v1164, %v1324
        %v1326 = vpop.f32.mrf.mxu0
        %v1327 = vadd.f32 %v1166, %v1326
        %1328 = vmatmul.bf16.gmra.mxu0 %v1269
        %v1329 = vpop.f32.mrf.mxu0
        %v1330 = vadd.f32 %v1169, %v1329
        %v1331 = vpop.f32.mrf.mxu0
        %v1332 = vadd.f32 %v1171, %v1331
        %1333 = vmatmul.bf16.gmra.mxu0 %v1272
        %v1334 = vpop.f32.mrf.mxu0
        %v1335 = vadd.f32 %v1174, %v1334
        %v1336 = vpop.f32.mrf.mxu0
        %v1337 = vadd.f32 %v1176, %v1336
        %1338 = vmatmul.bf16.gmra.mxu0 %v1275
        %v1339 = vpop.f32.mrf.mxu0
        %v1340 = vadd.f32 %v1179, %v1339
        %v1341 = vpop.f32.mrf.mxu0
        %v1342 = vadd.f32 %v1181, %v1341
        %1343 = vmatmul.bf16.gmra.mxu0 %v1278
        %v1344 = vpop.f32.mrf.mxu0
        %v1345 = vadd.f32 %v1184, %v1344
        %v1346 = vpop.f32.mrf.mxu0
        %v1347 = vadd.f32 %v1186, %v1346
        %1348 = vmatmul.bf16.gmra.mxu0 %v1281
        %v1349 = vpop.f32.mrf.mxu0
        %v1350 = vadd.f32 %v1189, %v1349
        %v1351 = vpop.f32.mrf.mxu0
        %v1352 = vadd.f32 %v1191, %v1351
        %1353 = vmatmul.bf16.gmra.mxu0 %v1284
        %v1354 = vpop.f32.mrf.mxu0
        %v1355 = vadd.f32 %v1194, %v1354
        %v1356 = vpop.f32.mrf.mxu0
        %v1357 = vadd.f32 %v1196, %v1356
        %1358 = vmatmul.bf16.gmra.mxu0 %v1287
        %v1359 = vpop.f32.mrf.mxu0
        %v1360 = vadd.f32 %v1199, %v1359
        %v1361 = vpop.f32.mrf.mxu0
        %v1362 = vadd.f32 %v1201, %v1361
        %1363 = vmatmul.bf16.gmra.mxu0 %v1290
        %v1364 = vpop.f32.mrf.mxu0
        %v1365 = vadd.f32 %v1204, %v1364
        %v1366 = vpop.f32.mrf.mxu0
        %v1367 = vadd.f32 %v1206, %v1366
        %1368 = vmatmul.bf16.gmra.mxu0 %v1293
        %v1369 = vpop.f32.mrf.mxu0
        %v1370 = vadd.f32 %v1209, %v1369
        %v1371 = vpop.f32.mrf.mxu0
        %v1372 = vadd.f32 %v1211, %v1371
        %1373 = vmatmul.bf16.gmra.mxu0 %v1296
        %v1374 = vpop.f32.mrf.mxu0
        %v1375 = vadd.f32 %v1214, %v1374
        %v1376 = vpop.f32.mrf.mxu0
        %v1377 = vadd.f32 %v1216, %v1376
        %1378 = vmatmul.bf16.gmra.mxu0 %v1299
        %v1379 = vpop.f32.mrf.mxu0
        %v1380 = vadd.f32 %v1219, %v1379
        %v1381 = vpop.f32.mrf.mxu0
        %v1382 = vadd.f32 %v1221, %v1381
        %1383 = vmatmul.bf16.gmra.mxu0 %v1302
        %v1384 = vpop.f32.mrf.mxu0
        %v1385 = vadd.f32 %v1224, %v1384
        %v1386 = vpop.f32.mrf.mxu0
        %v1387 = vadd.f32 %v1226, %v1386
        %1388 = vmatmul.bf16.gmra.mxu0 %v1305
        %v1389 = vpop.f32.mrf.mxu0
        %v1390 = vadd.f32 %v1229, %v1389
        %v1391 = vpop.f32.mrf.mxu0
        %v1392 = vadd.f32 %v1231, %v1391
        %1393 = vmatmul.bf16.gmra.mxu0 %v1308
        %v1394 = vpop.f32.mrf.mxu0
        %v1395 = vadd.f32 %v1234, %v1394
        %v1396 = vpop.f32.mrf.mxu0
        %v1397 = vadd.f32 %v1236, %v1396
        %1398 = vdwg.mxu0
        %v1399 = vrot.slane %v579, 1
        %v1400 = vrot.slane %v580, 1
        %v1401 = vrot.slane %v581, 1
        %v1402 = vrot.slane %v582, 1
        %v1403 = vrot.slane %v583, 1
        %v1404 = vrot.slane %v584, 1
        %v1405 = vrot.slane %v585, 1
        %v1406 = vrot.slane %v586, 1
        %v1407 = vrot.slane %v587, 1
        %v1408 = vrot.slane %v588, 1
        %v1409 = vrot.slane %v589, 1
        %v1410 = vrot.slane %v590, 1
        %v1411 = vrot.slane %v591, 1
        %v1412 = vrot.slane %v592, 1
        %v1413 = vrot.slane %v593, 1
        %v1414 = vrot.slane %v594, 1
        %v1415 = vrot.slane %v595, 1
        %v1416 = vrot.slane %v596, 1
        %v1417 = vrot.slane %v597, 1
        %v1418 = vrot.slane %v598, 1
        %v1419 = vrot.slane %v599, 1
        %v1420 = vrot.slane %v600, 1
        %v1421 = vrot.slane %v601, 1
        %v1422 = vrot.slane %v602, 1
        %v1423 = vrot.slane %v603, 1
        %v1424 = vrot.slane %v604, 1
        %v1425 = vrot.slane %v605, 1
        %v1426 = vrot.slane %v606, 1
        %v1427 = vrot.slane %v607, 1
        %v1428 = vrot.slane %v608, 1
        %v1429 = vrot.slane %v609, 1
        %v1430 = vrot.slane %v610, 1
        %vm1431 = vcmp.lt.s32.totalorder %v461, 7
        %v1432 = vsel %vm1431, %v1429, %v1430
        %v1433 = vsel %vm1431, %v1428, %v1429
        %v1434 = vsel %vm1431, %v1427, %v1428
        %v1435 = vsel %vm1431, %v1426, %v1427
        %v1436 = vsel %vm1431, %v1425, %v1426
        %v1437 = vsel %vm1431, %v1424, %v1425
        %v1438 = vsel %vm1431, %v1423, %v1424
        %v1439 = vsel %vm1431, %v1422, %v1423
        %v1440 = vsel %vm1431, %v1421, %v1422
        %v1441 = vsel %vm1431, %v1420, %v1421
        %v1442 = vsel %vm1431, %v1419, %v1420
        %v1443 = vsel %vm1431, %v1418, %v1419
        %v1444 = vsel %vm1431, %v1417, %v1418
        %v1445 = vsel %vm1431, %v1416, %v1417
        %v1446 = vsel %vm1431, %v1415, %v1416
        %v1447 = vsel %vm1431, %v1414, %v1415
        %v1448 = vsel %vm1431, %v1413, %v1414
        %v1449 = vsel %vm1431, %v1412, %v1413
        %v1450 = vsel %vm1431, %v1411, %v1412
        %v1451 = vsel %vm1431, %v1410, %v1411
        %v1452 = vsel %vm1431, %v1409, %v1410
        %v1453 = vsel %vm1431, %v1408, %v1409
        %v1454 = vsel %vm1431, %v1407, %v1408
        %v1455 = vsel %vm1431, %v1406, %v1407
        %v1456 = vsel %vm1431, %v1405, %v1406
        %v1457 = vsel %vm1431, %v1404, %v1405
        %v1458 = vsel %vm1431, %v1403, %v1404
        %v1459 = vsel %vm1431, %v1402, %v1403
        %v1460 = vsel %vm1431, %v1401, %v1402
        %v1461 = vsel %vm1431, %v1400, %v1401
        %v1462 = vsel %vm1431, %v1399, %v1400
        %v1463 = vsel %vm1431, %v1430, %v1399
        %1464 = vset.pattern.permute.xlu0 2
        %1465 = vperm.xlu0 %1464, %v428
        %v1466 = vpop.permute.xlu0 %1465
        %1468 = vset.pattern.permute.xlu0 2
        %1469 = vperm.xlu0 %1468, %v429
        %v1470 = vpop.permute.xlu0 %1469
        %1472 = vset.pattern.permute.xlu0 2
        %1473 = vperm.xlu0 %1472, %v430
        %v1474 = vpop.permute.xlu0 %1473
        %1476 = vset.pattern.permute.xlu0 2
        %1477 = vperm.xlu0 %1476, %v431
        %v1478 = vpop.permute.xlu0 %1477
        %1480 = vset.pattern.permute.xlu0 2
        %1481 = vperm.xlu0 %1480, %v432
        %v1482 = vpop.permute.xlu0 %1481
        %1484 = vset.pattern.permute.xlu0 2
        %1485 = vperm.xlu0 %1484, %v433
        %v1486 = vpop.permute.xlu0 %1485
        %1488 = vset.pattern.permute.xlu0 2
        %1489 = vperm.xlu0 %1488, %v434
        %v1490 = vpop.permute.xlu0 %1489
        %1492 = vset.pattern.permute.xlu0 2
        %1493 = vperm.xlu0 %1492, %v435
        %v1494 = vpop.permute.xlu0 %1493
        %1496 = vset.pattern.permute.xlu0 2
        %1497 = vperm.xlu0 %1496, %v436
        %v1498 = vpop.permute.xlu0 %1497
        %1500 = vset.pattern.permute.xlu0 2
        %1501 = vperm.xlu0 %1500, %v437
        %v1502 = vpop.permute.xlu0 %1501
        %1504 = vset.pattern.permute.xlu0 2
        %1505 = vperm.xlu0 %1504, %v438
        %v1506 = vpop.permute.xlu0 %1505
        %1508 = vset.pattern.permute.xlu0 2
        %1509 = vperm.xlu0 %1508, %v439
        %v1510 = vpop.permute.xlu0 %1509
        %1512 = vset.pattern.permute.xlu0 2
        %1513 = vperm.xlu0 %1512, %v440
        %v1514 = vpop.permute.xlu0 %1513
        %1516 = vset.pattern.permute.xlu0 2
        %1517 = vperm.xlu0 %1516, %v441
        %v1518 = vpop.permute.xlu0 %1517
        %1520 = vset.pattern.permute.xlu0 2
        %1521 = vperm.xlu0 %1520, %v442
        %v1522 = vpop.permute.xlu0 %1521
        %1524 = vset.pattern.permute.xlu0 2
        %1525 = vperm.xlu0 %1524, %v443
        %v1526 = vpop.permute.xlu0 %1525
        %1528 = vset.pattern.permute.xlu0 2
        %1529 = vperm.xlu0 %1528, %v444
        %v1530 = vpop.permute.xlu0 %1529
        %1532 = vset.pattern.permute.xlu0 2
        %1533 = vperm.xlu0 %1532, %v445
        %v1534 = vpop.permute.xlu0 %1533
        %1536 = vset.pattern.permute.xlu0 2
        %1537 = vperm.xlu0 %1536, %v446
        %v1538 = vpop.permute.xlu0 %1537
        %1540 = vset.pattern.permute.xlu0 2
        %1541 = vperm.xlu0 %1540, %v447
        %v1542 = vpop.permute.xlu0 %1541
        %1544 = vset.pattern.permute.xlu0 2
        %1545 = vperm.xlu0 %1544, %v448
        %v1546 = vpop.permute.xlu0 %1545
        %1548 = vset.pattern.permute.xlu0 2
        %1549 = vperm.xlu0 %1548, %v449
        %v1550 = vpop.permute.xlu0 %1549
        %1552 = vset.pattern.permute.xlu0 2
        %1553 = vperm.xlu0 %1552, %v450
        %v1554 = vpop.permute.xlu0 %1553
        %1556 = vset.pattern.permute.xlu0 2
        %1557 = vperm.xlu0 %1556, %v451
        %v1558 = vpop.permute.xlu0 %1557
        %1560 = vset.pattern.permute.xlu0 2
        %1561 = vperm.xlu0 %1560, %v452
        %v1562 = vpop.permute.xlu0 %1561
        %1564 = vset.pattern.permute.xlu0 2
        %1565 = vperm.xlu0 %1564, %v453
        %v1566 = vpop.permute.xlu0 %1565
        %1568 = vset.pattern.permute.xlu0 2
        %1569 = vperm.xlu0 %1568, %v454
        %v1570 = vpop.permute.xlu0 %1569
        %1572 = vset.pattern.permute.xlu0 2
        %1573 = vperm.xlu0 %1572, %v455
        %v1574 = vpop.permute.xlu0 %1573
        %1576 = vset.pattern.permute.xlu0 2
        %1577 = vperm.xlu0 %1576, %v456
        %v1578 = vpop.permute.xlu0 %1577
        %1580 = vset.pattern.permute.xlu0 2
        %1581 = vperm.xlu0 %1580, %v457
        %v1582 = vpop.permute.xlu0 %1581
        %1584 = vset.pattern.permute.xlu0 2
        %1585 = vperm.xlu0 %1584, %v458
        %v1586 = vpop.permute.xlu0 %1585
        %1588 = vset.pattern.permute.xlu0 2
        %1589 = vperm.xlu0 %1588, %v459
        %v1590 = vpop.permute.xlu0 %1589
        %v1592 = vmul.f32 %v1432, %v1466
        %v1593 = vmul.f32 %v1463, %v1470
        %v1594 = vmul.f32 %v1462, %v1474
        %v1595 = vmul.f32 %v1461, %v1478
        %v1596 = vmul.f32 %v1460, %v1482
        %v1597 = vmul.f32 %v1459, %v1486
        %v1598 = vmul.f32 %v1458, %v1490
        %v1599 = vmul.f32 %v1457, %v1494
        %v1600 = vmul.f32 %v1456, %v1498
        %v1601 = vmul.f32 %v1455, %v1502
        %v1602 = vmul.f32 %v1454, %v1506
        %v1603 = vmul.f32 %v1453, %v1510
        %v1604 = vmul.f32 %v1452, %v1514
        %v1605 = vmul.f32 %v1451, %v1518
        %v1606 = vmul.f32 %v1450, %v1522
        %v1607 = vmul.f32 %v1449, %v1526
        %v1608 = vmul.f32 %v1448, %v1530
        %v1609 = vmul.f32 %v1447, %v1534
        %v1610 = vmul.f32 %v1446, %v1538
        %v1611 = vmul.f32 %v1445, %v1542
        %v1612 = vmul.f32 %v1444, %v1546
        %v1613 = vmul.f32 %v1443, %v1550
        %v1614 = vmul.f32 %v1442, %v1554
        %v1615 = vmul.f32 %v1441, %v1558
        %v1616 = vmul.f32 %v1440, %v1562
        %v1617 = vmul.f32 %v1439, %v1566
        %v1618 = vmul.f32 %v1438, %v1570
        %v1619 = vmul.f32 %v1437, %v1574
        %v1620 = vmul.f32 %v1436, %v1578
        %v1621 = vmul.f32 %v1435, %v1582
        %v1622 = vmul.f32 %v1434, %v1586
        %v1623 = vmul.f32 %v1433, %v1590
        %v1624 = vpack.c.bf16 %v1593, %v1592
        %v1625 = vpack.c.bf16 %v1595, %v1594
        %v1626 = vpack.c.bf16 %v1597, %v1596
        %v1627 = vpack.c.bf16 %v1599, %v1598
        %v1628 = vpack.c.bf16 %v1601, %v1600
        %v1629 = vpack.c.bf16 %v1603, %v1602
        %v1630 = vpack.c.bf16 %v1605, %v1604
        %v1631 = vpack.c.bf16 %v1607, %v1606
        %v1632 = vpack.c.bf16 %v1609, %v1608
        %v1633 = vpack.c.bf16 %v1611, %v1610
        %v1634 = vpack.c.bf16 %v1613, %v1612
        %v1635 = vpack.c.bf16 %v1615, %v1614
        %v1636 = vpack.c.bf16 %v1617, %v1616
        %v1637 = vpack.c.bf16 %v1619, %v1618
        %v1638 = vpack.c.bf16 %v1621, %v1620
        %v1639 = vpack.c.bf16 %v1623, %v1622
        %v1640 = vld [vmem:[%s404 + $0x40] sm:$0xf]
        %v1641 = vld [vmem:[%s404 + $0x44] sm:$0xf]
        %v1642 = vld [vmem:[%s404 + $0x48] sm:$0xf]
        %v1643 = vld [vmem:[%s404 + $0x4c] sm:$0xf]
        %v1644 = vld [vmem:[%s404 + $0x50] sm:$0xf]
        %v1645 = vld [vmem:[%s404 + $0x54] sm:$0xf]
        %v1646 = vld [vmem:[%s404 + $0x58] sm:$0xf]
        %v1647 = vld [vmem:[%s404 + $0x5c] sm:$0xf]
        %v1656 = vunpack.c.l.b16 %v1640
        %v1657 = vunpack.c.l.b16 %v1641
        %v1658 = vunpack.c.l.b16 %v1642
        %v1659 = vunpack.c.l.b16 %v1643
        %v1660 = vunpack.c.l.b16 %v1644
        %v1661 = vunpack.c.l.b16 %v1645
        %v1662 = vunpack.c.l.b16 %v1646
        %v1663 = vunpack.c.l.b16 %v1647
        %v1664 = vpack.c.b16 %v1657, %v1656
        %v1665 = vpack.c.b16 %v1659, %v1658
        %v1666 = vpack.c.b16 %v1661, %v1660
        %v1667 = vpack.c.b16 %v1663, %v1662
        %v1673 = vsel %vm1100, %v1624, 0
        %v1676 = vsel %vm1100, %v1625, 0
        %v1679 = vsel %vm1100, %v1626, 0
        %v1682 = vsel %vm1100, %v1627, 0
        %v1685 = vsel %vm1100, %v1628, 0
        %v1688 = vsel %vm1100, %v1629, 0
        %v1691 = vsel %vm1100, %v1630, 0
        %v1694 = vsel %vm1100, %v1631, 0
        %v1697 = vsel %vm1100, %v1632, 0
        %v1700 = vsel %vm1100, %v1633, 0
        %v1703 = vsel %vm1100, %v1634, 0
        %v1706 = vsel %vm1100, %v1635, 0
        %v1709 = vsel %vm1100, %v1636, 0
        %v1712 = vsel %vm1100, %v1637, 0
        %v1715 = vsel %vm1100, %v1638, 0
        %v1718 = vsel %vm1100, %v1639, 0
        %1720 = vmatpush.bf16.msra.mxu0 0
        %1721 = vmatpush.bf16.msra.mxu0 0
        %1722 = vmatpush.bf16.msra.mxu0 0
        %1723 = vmatpush.bf16.msra.mxu0 0
        %1724 = vmatpush.bf16.msra.mxu0 %v1667
        %1725 = vmatpush.bf16.msra.mxu0 %v1666
        %1726 = vmatpush.bf16.msra.mxu0 %v1665
        %1727 = vmatpush.bf16.msra.mxu0 %v1664
        %1728 = vmatmul.bf16.gmra.mxu0 %v1673
        %v1729 = vpop.f32.mrf.mxu0
        %v1730 = vadd.f32 0.0, %v1729
        %v1731 = vpop.f32.mrf.mxu0
        %v1732 = vadd.f32 0.0, %v1731
        %1733 = vmatmul.bf16.gmra.mxu0 %v1676
        %v1734 = vpop.f32.mrf.mxu0
        %v1735 = vadd.f32 0.0, %v1734
        %v1736 = vpop.f32.mrf.mxu0
        %v1737 = vadd.f32 0.0, %v1736
        %1738 = vmatmul.bf16.gmra.mxu0 %v1679
        %v1739 = vpop.f32.mrf.mxu0
        %v1740 = vadd.f32 0.0, %v1739
        %v1741 = vpop.f32.mrf.mxu0
        %v1742 = vadd.f32 0.0, %v1741
        %1743 = vmatmul.bf16.gmra.mxu0 %v1682
        %v1744 = vpop.f32.mrf.mxu0
        %v1745 = vadd.f32 0.0, %v1744
        %v1746 = vpop.f32.mrf.mxu0
        %v1747 = vadd.f32 0.0, %v1746
        %1748 = vmatmul.bf16.gmra.mxu0 %v1685
        %v1749 = vpop.f32.mrf.mxu0
        %v1750 = vadd.f32 0.0, %v1749
        %v1751 = vpop.f32.mrf.mxu0
        %v1752 = vadd.f32 0.0, %v1751
        %1753 = vmatmul.bf16.gmra.mxu0 %v1688
        %v1754 = vpop.f32.mrf.mxu0
        %v1755 = vadd.f32 0.0, %v1754
        %v1756 = vpop.f32.mrf.mxu0
        %v1757 = vadd.f32 0.0, %v1756
        %1758 = vmatmul.bf16.gmra.mxu0 %v1691
        %v1759 = vpop.f32.mrf.mxu0
        %v1760 = vadd.f32 0.0, %v1759
        %v1761 = vpop.f32.mrf.mxu0
        %v1762 = vadd.f32 0.0, %v1761
        %1763 = vmatmul.bf16.gmra.mxu0 %v1694
        %v1764 = vpop.f32.mrf.mxu0
        %v1765 = vadd.f32 0.0, %v1764
        %v1766 = vpop.f32.mrf.mxu0
        %v1767 = vadd.f32 0.0, %v1766
        %1768 = vmatmul.bf16.gmra.mxu0 %v1697
        %v1769 = vpop.f32.mrf.mxu0
        %v1770 = vadd.f32 0.0, %v1769
        %v1771 = vpop.f32.mrf.mxu0
        %v1772 = vadd.f32 0.0, %v1771
        %1773 = vmatmul.bf16.gmra.mxu0 %v1700
        %v1774 = vpop.f32.mrf.mxu0
        %v1775 = vadd.f32 0.0, %v1774
        %v1776 = vpop.f32.mrf.mxu0
        %v1777 = vadd.f32 0.0, %v1776
        %1778 = vmatmul.bf16.gmra.mxu0 %v1703
        %v1779 = vpop.f32.mrf.mxu0
        %v1780 = vadd.f32 0.0, %v1779
        %v1781 = vpop.f32.mrf.mxu0
        %v1782 = vadd.f32 0.0, %v1781
        %1783 = vmatmul.bf16.gmra.mxu0 %v1706
        %v1784 = vpop.f32.mrf.mxu0
        %v1785 = vadd.f32 0.0, %v1784
        %v1786 = vpop.f32.mrf.mxu0
        %v1787 = vadd.f32 0.0, %v1786
        %1788 = vmatmul.bf16.gmra.mxu0 %v1709
        %v1789 = vpop.f32.mrf.mxu0
        %v1790 = vadd.f32 0.0, %v1789
        %v1791 = vpop.f32.mrf.mxu0
        %v1792 = vadd.f32 0.0, %v1791
        %1793 = vmatmul.bf16.gmra.mxu0 %v1712
        %v1794 = vpop.f32.mrf.mxu0
        %v1795 = vadd.f32 0.0, %v1794
        %v1796 = vpop.f32.mrf.mxu0
        %v1797 = vadd.f32 0.0, %v1796
        %1798 = vmatmul.bf16.gmra.mxu0 %v1715
        %v1799 = vpop.f32.mrf.mxu0
        %v1800 = vadd.f32 0.0, %v1799
        %v1801 = vpop.f32.mrf.mxu0
        %v1802 = vadd.f32 0.0, %v1801
        %1803 = vmatmul.bf16.gmra.mxu0 %v1718
        %v1804 = vpop.f32.mrf.mxu0
        %v1805 = vadd.f32 0.0, %v1804
        %v1806 = vpop.f32.mrf.mxu0
        %v1807 = vadd.f32 0.0, %v1806
        %1808 = vdwg.mxu0
        %v1809 = vadd.f32 %v1320, %v1730
        %v1810 = vadd.f32 %v1322, %v1732
        %v1811 = vadd.f32 %v1325, %v1735
        %v1812 = vadd.f32 %v1327, %v1737
        %v1813 = vadd.f32 %v1330, %v1740
        %v1814 = vadd.f32 %v1332, %v1742
        %v1815 = vadd.f32 %v1335, %v1745
        %v1816 = vadd.f32 %v1337, %v1747
        %v1817 = vadd.f32 %v1340, %v1750
        %v1818 = vadd.f32 %v1342, %v1752
        %v1819 = vadd.f32 %v1345, %v1755
        %v1820 = vadd.f32 %v1347, %v1757
        %v1821 = vadd.f32 %v1350, %v1760
        %v1822 = vadd.f32 %v1352, %v1762
        %v1823 = vadd.f32 %v1355, %v1765
        %v1824 = vadd.f32 %v1357, %v1767
        %v1825 = vadd.f32 %v1360, %v1770
        %v1826 = vadd.f32 %v1362, %v1772
        %v1827 = vadd.f32 %v1365, %v1775
        %v1828 = vadd.f32 %v1367, %v1777
        %v1829 = vadd.f32 %v1370, %v1780
        %v1830 = vadd.f32 %v1372, %v1782
        %v1831 = vadd.f32 %v1375, %v1785
        %v1832 = vadd.f32 %v1377, %v1787
        %v1833 = vadd.f32 %v1380, %v1790
        %v1834 = vadd.f32 %v1382, %v1792
        %v1835 = vadd.f32 %v1385, %v1795
        %v1836 = vadd.f32 %v1387, %v1797
        %v1837 = vadd.f32 %v1390, %v1800
        %v1838 = vadd.f32 %v1392, %v1802
        %v1839 = vadd.f32 %v1395, %v1805
        %v1840 = vadd.f32 %v1397, %v1807
        %1841 = vset.pattern.permute.xlu0 3
        %1842 = vperm.xlu0 %1841, %v428
        %v1843 = vpop.permute.xlu0 %1842
        %1845 = vset.pattern.permute.xlu0 3
        %1846 = vperm.xlu0 %1845, %v429
        %v1847 = vpop.permute.xlu0 %1846
        %1849 = vset.pattern.permute.xlu0 3
        %1850 = vperm.xlu0 %1849, %v430
        %v1851 = vpop.permute.xlu0 %1850
        %1853 = vset.pattern.permute.xlu0 3
        %1854 = vperm.xlu0 %1853, %v431
        %v1855 = vpop.permute.xlu0 %1854
        %1857 = vset.pattern.permute.xlu0 3
        %1858 = vperm.xlu0 %1857, %v432
        %v1859 = vpop.permute.xlu0 %1858
        %1861 = vset.pattern.permute.xlu0 3
        %1862 = vperm.xlu0 %1861, %v433
        %v1863 = vpop.permute.xlu0 %1862
        %1865 = vset.pattern.permute.xlu0 3
        %1866 = vperm.xlu0 %1865, %v434
        %v1867 = vpop.permute.xlu0 %1866
        %1869 = vset.pattern.permute.xlu0 3
        %1870 = vperm.xlu0 %1869, %v435
        %v1871 = vpop.permute.xlu0 %1870
        %1873 = vset.pattern.permute.xlu0 3
        %1874 = vperm.xlu0 %1873, %v436
        %v1875 = vpop.permute.xlu0 %1874
        %1877 = vset.pattern.permute.xlu0 3
        %1878 = vperm.xlu0 %1877, %v437
        %v1879 = vpop.permute.xlu0 %1878
        %1881 = vset.pattern.permute.xlu0 3
        %1882 = vperm.xlu0 %1881, %v438
        %v1883 = vpop.permute.xlu0 %1882
        %1885 = vset.pattern.permute.xlu0 3
        %1886 = vperm.xlu0 %1885, %v439
        %v1887 = vpop.permute.xlu0 %1886
        %1889 = vset.pattern.permute.xlu0 3
        %1890 = vperm.xlu0 %1889, %v440
        %v1891 = vpop.permute.xlu0 %1890
        %1893 = vset.pattern.permute.xlu0 3
        %1894 = vperm.xlu0 %1893, %v441
        %v1895 = vpop.permute.xlu0 %1894
        %1897 = vset.pattern.permute.xlu0 3
        %1898 = vperm.xlu0 %1897, %v442
        %v1899 = vpop.permute.xlu0 %1898
        %1901 = vset.pattern.permute.xlu0 3
        %1902 = vperm.xlu0 %1901, %v443
        %v1903 = vpop.permute.xlu0 %1902
        %1905 = vset.pattern.permute.xlu0 3
        %1906 = vperm.xlu0 %1905, %v444
        %v1907 = vpop.permute.xlu0 %1906
        %1909 = vset.pattern.permute.xlu0 3
        %1910 = vperm.xlu0 %1909, %v445
        %v1911 = vpop.permute.xlu0 %1910
        %1913 = vset.pattern.permute.xlu0 3
        %1914 = vperm.xlu0 %1913, %v446
        %v1915 = vpop.permute.xlu0 %1914
        %1917 = vset.pattern.permute.xlu0 3
        %1918 = vperm.xlu0 %1917, %v447
        %v1919 = vpop.permute.xlu0 %1918
        %1921 = vset.pattern.permute.xlu0 3
        %1922 = vperm.xlu0 %1921, %v448
        %v1923 = vpop.permute.xlu0 %1922
        %1925 = vset.pattern.permute.xlu0 3
        %1926 = vperm.xlu0 %1925, %v449
        %v1927 = vpop.permute.xlu0 %1926
        %1929 = vset.pattern.permute.xlu0 3
        %1930 = vperm.xlu0 %1929, %v450
        %v1931 = vpop.permute.xlu0 %1930
        %1933 = vset.pattern.permute.xlu0 3
        %1934 = vperm.xlu0 %1933, %v451
        %v1935 = vpop.permute.xlu0 %1934
        %1937 = vset.pattern.permute.xlu0 3
        %1938 = vperm.xlu0 %1937, %v452
        %v1939 = vpop.permute.xlu0 %1938
        %1941 = vset.pattern.permute.xlu0 3
        %1942 = vperm.xlu0 %1941, %v453
        %v1943 = vpop.permute.xlu0 %1942
        %1945 = vset.pattern.permute.xlu0 3
        %1946 = vperm.xlu0 %1945, %v454
        %v1947 = vpop.permute.xlu0 %1946
        %1949 = vset.pattern.permute.xlu0 3
        %1950 = vperm.xlu0 %1949, %v455
        %v1951 = vpop.permute.xlu0 %1950
        %1953 = vset.pattern.permute.xlu0 3
        %1954 = vperm.xlu0 %1953, %v456
        %v1955 = vpop.permute.xlu0 %1954
        %1957 = vset.pattern.permute.xlu0 3
        %1958 = vperm.xlu0 %1957, %v457
        %v1959 = vpop.permute.xlu0 %1958
        %1961 = vset.pattern.permute.xlu0 3
        %1962 = vperm.xlu0 %1961, %v458
        %v1963 = vpop.permute.xlu0 %1962
        %1965 = vset.pattern.permute.xlu0 3
        %1966 = vperm.xlu0 %1965, %v459
        %v1967 = vpop.permute.xlu0 %1966
        %v1969 = vmul.f32 %v675, %v1843
        %v1970 = vmul.f32 %v674, %v1847
        %v1971 = vmul.f32 %v673, %v1851
        %v1972 = vmul.f32 %v672, %v1855
        %v1973 = vmul.f32 %v671, %v1859
        %v1974 = vmul.f32 %v670, %v1863
        %v1975 = vmul.f32 %v669, %v1867
        %v1976 = vmul.f32 %v668, %v1871
        %v1977 = vmul.f32 %v667, %v1875
        %v1978 = vmul.f32 %v666, %v1879
        %v1979 = vmul.f32 %v665, %v1883
        %v1980 = vmul.f32 %v664, %v1887
        %v1981 = vmul.f32 %v663, %v1891
        %v1982 = vmul.f32 %v662, %v1895
        %v1983 = vmul.f32 %v661, %v1899
        %v1984 = vmul.f32 %v660, %v1903
        %v1985 = vmul.f32 %v659, %v1907
        %v1986 = vmul.f32 %v658, %v1911
        %v1987 = vmul.f32 %v657, %v1915
        %v1988 = vmul.f32 %v656, %v1919
        %v1989 = vmul.f32 %v655, %v1923
        %v1990 = vmul.f32 %v654, %v1927
        %v1991 = vmul.f32 %v653, %v1931
        %v1992 = vmul.f32 %v652, %v1935
        %v1993 = vmul.f32 %v651, %v1939
        %v1994 = vmul.f32 %v650, %v1943
        %v1995 = vmul.f32 %v649, %v1947
        %v1996 = vmul.f32 %v648, %v1951
        %v1997 = vmul.f32 %v647, %v1955
        %v1998 = vmul.f32 %v646, %v1959
        %v1999 = vmul.f32 %v645, %v1963
        %v2000 = vmul.f32 %v644, %v1967
        %v2001 = vpack.c.bf16 %v1970, %v1969
        %v2002 = vpack.c.bf16 %v1972, %v1971
        %v2003 = vpack.c.bf16 %v1974, %v1973
        %v2004 = vpack.c.bf16 %v1976, %v1975
        %v2005 = vpack.c.bf16 %v1978, %v1977
        %v2006 = vpack.c.bf16 %v1980, %v1979
        %v2007 = vpack.c.bf16 %v1982, %v1981
        %v2008 = vpack.c.bf16 %v1984, %v1983
        %v2009 = vpack.c.bf16 %v1986, %v1985
        %v2010 = vpack.c.bf16 %v1988, %v1987
        %v2011 = vpack.c.bf16 %v1990, %v1989
        %v2012 = vpack.c.bf16 %v1992, %v1991
        %v2013 = vpack.c.bf16 %v1994, %v1993
        %v2014 = vpack.c.bf16 %v1996, %v1995
        %v2015 = vpack.c.bf16 %v1998, %v1997
        %v2016 = vpack.c.bf16 %v2000, %v1999
        %v2017 = vld [vmem:[%s404 + $0x60] sm:$0xf]
        %v2018 = vld [vmem:[%s404 + $0x64] sm:$0xf]
        %v2019 = vld [vmem:[%s404 + $0x68] sm:$0xf]
        %v2020 = vld [vmem:[%s404 + $0x6c] sm:$0xf]
        %v2021 = vld [vmem:[%s404 + $0x70] sm:$0xf]
        %v2022 = vld [vmem:[%s404 + $0x74] sm:$0xf]
        %v2023 = vld [vmem:[%s404 + $0x78] sm:$0xf]
        %v2024 = vld [vmem:[%s404 + $0x7c] sm:$0xf]
        %v2033 = vunpack.c.l.b16 %v2017
        %v2034 = vunpack.c.l.b16 %v2018
        %v2035 = vunpack.c.l.b16 %v2019
        %v2036 = vunpack.c.l.b16 %v2020
        %v2037 = vunpack.c.l.b16 %v2021
        %v2038 = vunpack.c.l.b16 %v2022
        %v2039 = vunpack.c.l.b16 %v2023
        %v2040 = vunpack.c.l.b16 %v2024
        %v2041 = vpack.c.b16 %v2034, %v2033
        %v2042 = vpack.c.b16 %v2036, %v2035
        %v2043 = vpack.c.b16 %v2038, %v2037
        %v2044 = vpack.c.b16 %v2040, %v2039
        %v2050 = vsel %vm1100, %v2001, 0
        %v2053 = vsel %vm1100, %v2002, 0
        %v2056 = vsel %vm1100, %v2003, 0
        %v2059 = vsel %vm1100, %v2004, 0
        %v2062 = vsel %vm1100, %v2005, 0
        %v2065 = vsel %vm1100, %v2006, 0
        %v2068 = vsel %vm1100, %v2007, 0
        %v2071 = vsel %vm1100, %v2008, 0
        %v2074 = vsel %vm1100, %v2009, 0
        %v2077 = vsel %vm1100, %v2010, 0
        %v2080 = vsel %vm1100, %v2011, 0
        %v2083 = vsel %vm1100, %v2012, 0
        %v2086 = vsel %vm1100, %v2013, 0
        %v2089 = vsel %vm1100, %v2014, 0
        %v2092 = vsel %vm1100, %v2015, 0
        %v2095 = vsel %vm1100, %v2016, 0
        %2097 = vmatpush.bf16.msra.mxu0 0
        %2098 = vmatpush.bf16.msra.mxu0 0
        %2099 = vmatpush.bf16.msra.mxu0 0
        %2100 = vmatpush.bf16.msra.mxu0 0
        %2101 = vmatpush.bf16.msra.mxu0 %v2044
        %2102 = vmatpush.bf16.msra.mxu0 %v2043
        %2103 = vmatpush.bf16.msra.mxu0 %v2042
        %2104 = vmatpush.bf16.msra.mxu0 %v2041
        %2105 = vmatmul.bf16.gmra.mxu0 %v2050
        %v2106 = vpop.f32.mrf.mxu0
        %v2107 = vadd.f32 0.0, %v2106
        %v2108 = vpop.f32.mrf.mxu0
        %v2109 = vadd.f32 0.0, %v2108
        %2110 = vmatmul.bf16.gmra.mxu0 %v2053
        %v2111 = vpop.f32.mrf.mxu0
        %v2112 = vadd.f32 0.0, %v2111
        %v2113 = vpop.f32.mrf.mxu0
        %v2114 = vadd.f32 0.0, %v2113
        %2115 = vmatmul.bf16.gmra.mxu0 %v2056
        %v2116 = vpop.f32.mrf.mxu0
        %v2117 = vadd.f32 0.0, %v2116
        %v2118 = vpop.f32.mrf.mxu0
        %v2119 = vadd.f32 0.0, %v2118
        %2120 = vmatmul.bf16.gmra.mxu0 %v2059
        %v2121 = vpop.f32.mrf.mxu0
        %v2122 = vadd.f32 0.0, %v2121
        %v2123 = vpop.f32.mrf.mxu0
        %v2124 = vadd.f32 0.0, %v2123
        %2125 = vmatmul.bf16.gmra.mxu0 %v2062
        %v2126 = vpop.f32.mrf.mxu0
        %v2127 = vadd.f32 0.0, %v2126
        %v2128 = vpop.f32.mrf.mxu0
        %v2129 = vadd.f32 0.0, %v2128
        %2130 = vmatmul.bf16.gmra.mxu0 %v2065
        %v2131 = vpop.f32.mrf.mxu0
        %v2132 = vadd.f32 0.0, %v2131
        %v2133 = vpop.f32.mrf.mxu0
        %v2134 = vadd.f32 0.0, %v2133
        %2135 = vmatmul.bf16.gmra.mxu0 %v2068
        %v2136 = vpop.f32.mrf.mxu0
        %v2137 = vadd.f32 0.0, %v2136
        %v2138 = vpop.f32.mrf.mxu0
        %v2139 = vadd.f32 0.0, %v2138
        %2140 = vmatmul.bf16.gmra.mxu0 %v2071
        %v2141 = vpop.f32.mrf.mxu0
        %v2142 = vadd.f32 0.0, %v2141
        %v2143 = vpop.f32.mrf.mxu0
        %v2144 = vadd.f32 0.0, %v2143
        %2145 = vmatmul.bf16.gmra.mxu0 %v2074
        %v2146 = vpop.f32.mrf.mxu0
        %v2147 = vadd.f32 0.0, %v2146
        %v2148 = vpop.f32.mrf.mxu0
        %v2149 = vadd.f32 0.0, %v2148
        %2150 = vmatmul.bf16.gmra.mxu0 %v2077
        %v2151 = vpop.f32.mrf.mxu0
        %v2152 = vadd.f32 0.0, %v2151
        %v2153 = vpop.f32.mrf.mxu0
        %v2154 = vadd.f32 0.0, %v2153
        %2155 = vmatmul.bf16.gmra.mxu0 %v2080
        %v2156 = vpop.f32.mrf.mxu0
        %v2157 = vadd.f32 0.0, %v2156
        %v2158 = vpop.f32.mrf.mxu0
        %v2159 = vadd.f32 0.0, %v2158
        %2160 = vmatmul.bf16.gmra.mxu0 %v2083
        %v2161 = vpop.f32.mrf.mxu0
        %v2162 = vadd.f32 0.0, %v2161
        %v2163 = vpop.f32.mrf.mxu0
        %v2164 = vadd.f32 0.0, %v2163
        %2165 = vmatmul.bf16.gmra.mxu0 %v2086
        %v2166 = vpop.f32.mrf.mxu0
        %v2167 = vadd.f32 0.0, %v2166
        %v2168 = vpop.f32.mrf.mxu0
        %v2169 = vadd.f32 0.0, %v2168
        %2170 = vmatmul.bf16.gmra.mxu0 %v2089
        %v2171 = vpop.f32.mrf.mxu0
        %v2172 = vadd.f32 0.0, %v2171
        %v2173 = vpop.f32.mrf.mxu0
        %v2174 = vadd.f32 0.0, %v2173
        %2175 = vmatmul.bf16.gmra.mxu0 %v2092
        %v2176 = vpop.f32.mrf.mxu0
        %v2177 = vadd.f32 0.0, %v2176
        %v2178 = vpop.f32.mrf.mxu0
        %v2179 = vadd.f32 0.0, %v2178
        %2180 = vmatmul.bf16.gmra.mxu0 %v2095
        %v2181 = vpop.f32.mrf.mxu0
        %v2182 = vadd.f32 0.0, %v2181
        %v2183 = vpop.f32.mrf.mxu0
        %v2184 = vadd.f32 0.0, %v2183
        %2185 = vdwg.mxu0
        %v2186 = vadd.f32 %v1809, %v2107
        %v2187 = vadd.f32 %v1810, %v2109
        %v2188 = vadd.f32 %v1811, %v2112
        %v2189 = vadd.f32 %v1812, %v2114
        %v2190 = vadd.f32 %v1813, %v2117
        %v2191 = vadd.f32 %v1814, %v2119
        %v2192 = vadd.f32 %v1815, %v2122
        %v2193 = vadd.f32 %v1816, %v2124
        %v2194 = vadd.f32 %v1817, %v2127
        %v2195 = vadd.f32 %v1818, %v2129
        %v2196 = vadd.f32 %v1819, %v2132
        %v2197 = vadd.f32 %v1820, %v2134
        %v2198 = vadd.f32 %v1821, %v2137
        %v2199 = vadd.f32 %v1822, %v2139
        %v2200 = vadd.f32 %v1823, %v2142
        %v2201 = vadd.f32 %v1824, %v2144
        %v2202 = vadd.f32 %v1825, %v2147
        %v2203 = vadd.f32 %v1826, %v2149
        %v2204 = vadd.f32 %v1827, %v2152
        %v2205 = vadd.f32 %v1828, %v2154
        %v2206 = vadd.f32 %v1829, %v2157
        %v2207 = vadd.f32 %v1830, %v2159
        %v2208 = vadd.f32 %v1831, %v2162
        %v2209 = vadd.f32 %v1832, %v2164
        %v2210 = vadd.f32 %v1833, %v2167
        %v2211 = vadd.f32 %v1834, %v2169
        %v2212 = vadd.f32 %v1835, %v2172
        %v2213 = vadd.f32 %v1836, %v2174
        %v2214 = vadd.f32 %v1837, %v2177
        %v2215 = vadd.f32 %v1838, %v2179
        %v2216 = vadd.f32 %v1839, %v2182
        %v2217 = vadd.f32 %v1840, %v2184
        %v2218 = vld [vmem:[%s404 + $0x80] sm:$0xf]
        %v2219 = vld [vmem:[%s404 + $0x84] sm:$0xf]
        %v2220 = vld [vmem:[%s404 + $0x88] sm:$0xf]
        %v2221 = vld [vmem:[%s404 + $0x8c] sm:$0xf]
        %v2222 = vld [vmem:[%s404 + $0x90] sm:$0xf]
        %v2223 = vld [vmem:[%s404 + $0x94] sm:$0xf]
        %v2224 = vld [vmem:[%s404 + $0x98] sm:$0xf]
        %v2225 = vld [vmem:[%s404 + $0x9c] sm:$0xf]
        %v2258 = vunpack.c.l.b16 %v546
        %v2259 = vunpack.c.l.b16 %v547
        %v2260 = vunpack.c.l.b16 %v548
        %v2261 = vunpack.c.l.b16 %v549
        %v2262 = vunpack.c.l.b16 %v550
        %v2263 = vunpack.c.l.b16 %v551
        %v2264 = vunpack.c.l.b16 %v552
        %v2265 = vunpack.c.l.b16 %v553
        %v2266 = vunpack.c.l.b16 %v554
        %v2267 = vunpack.c.l.b16 %v555
        %v2268 = vunpack.c.l.b16 %v556
        %v2269 = vunpack.c.l.b16 %v557
        %v2270 = vunpack.c.l.b16 %v558
        %v2271 = vunpack.c.l.b16 %v559
        %v2272 = vunpack.c.l.b16 %v560
        %v2273 = vunpack.c.l.b16 %v561
        %v2274 = vunpack.c.l.b16 %v562
        %v2275 = vunpack.c.l.b16 %v563
        %v2276 = vunpack.c.l.b16 %v564
        %v2277 = vunpack.c.l.b16 %v565
        %v2278 = vunpack.c.l.b16 %v566
        %v2279 = vunpack.c.l.b16 %v567
        %v2280 = vunpack.c.l.b16 %v568
        %v2281 = vunpack.c.l.b16 %v569
        %v2282 = vunpack.c.l.b16 %v570
        %v2283 = vunpack.c.l.b16 %v571
        %v2284 = vunpack.c.l.b16 %v572
        %v2285 = vunpack.c.l.b16 %v573
        %v2286 = vunpack.c.l.b16 %v574
        %v2287 = vunpack.c.l.b16 %v575
        %v2288 = vunpack.c.l.b16 %v576
        %v2289 = vunpack.c.l.b16 %v577
        %v2290 = vpack.c.b16 %v2259, %v2258
        %v2291 = vpack.c.b16 %v2261, %v2260
        %v2292 = vpack.c.b16 %v2263, %v2262
        %v2293 = vpack.c.b16 %v2265, %v2264
        %v2294 = vpack.c.b16 %v2267, %v2266
        %v2295 = vpack.c.b16 %v2269, %v2268
        %v2296 = vpack.c.b16 %v2271, %v2270
        %v2297 = vpack.c.b16 %v2273, %v2272
        %v2298 = vpack.c.b16 %v2275, %v2274
        %v2299 = vpack.c.b16 %v2277, %v2276
        %v2300 = vpack.c.b16 %v2279, %v2278
        %v2301 = vpack.c.b16 %v2281, %v2280
        %v2302 = vpack.c.b16 %v2283, %v2282
        %v2303 = vpack.c.b16 %v2285, %v2284
        %v2304 = vpack.c.b16 %v2287, %v2286
        %v2305 = vpack.c.b16 %v2289, %v2288
        %v2314 = vunpack.c.l.b16 %v2218
        %v2315 = vunpack.c.l.b16 %v2219
        %v2316 = vunpack.c.l.b16 %v2220
        %v2317 = vunpack.c.l.b16 %v2221
        %v2318 = vunpack.c.l.b16 %v2222
        %v2319 = vunpack.c.l.b16 %v2223
        %v2320 = vunpack.c.l.b16 %v2224
        %v2321 = vunpack.c.l.b16 %v2225
        %v2322 = vpack.c.b16 %v2315, %v2314
        %v2323 = vpack.c.b16 %v2317, %v2316
        %v2324 = vpack.c.b16 %v2319, %v2318
        %v2325 = vpack.c.b16 %v2321, %v2320
        %v2331 = vsel %vm1100, %v2290, 0
        %v2334 = vsel %vm1100, %v2291, 0
        %v2337 = vsel %vm1100, %v2292, 0
        %v2340 = vsel %vm1100, %v2293, 0
        %v2343 = vsel %vm1100, %v2294, 0
        %v2346 = vsel %vm1100, %v2295, 0
        %v2349 = vsel %vm1100, %v2296, 0
        %v2352 = vsel %vm1100, %v2297, 0
        %v2355 = vsel %vm1100, %v2298, 0
        %v2358 = vsel %vm1100, %v2299, 0
        %v2361 = vsel %vm1100, %v2300, 0
        %v2364 = vsel %vm1100, %v2301, 0
        %v2367 = vsel %vm1100, %v2302, 0
        %v2370 = vsel %vm1100, %v2303, 0
        %v2373 = vsel %vm1100, %v2304, 0
        %v2376 = vsel %vm1100, %v2305, 0
        %2378 = vmatpush.bf16.msra.mxu0 0
        %2379 = vmatpush.bf16.msra.mxu0 0
        %2380 = vmatpush.bf16.msra.mxu0 0
        %2381 = vmatpush.bf16.msra.mxu0 0
        %2382 = vmatpush.bf16.msra.mxu0 %v2325
        %2383 = vmatpush.bf16.msra.mxu0 %v2324
        %2384 = vmatpush.bf16.msra.mxu0 %v2323
        %2385 = vmatpush.bf16.msra.mxu0 %v2322
        %2386 = vmatmul.bf16.gmra.mxu0 %v2331
        %v2387 = vpop.f32.mrf.mxu0
        %v2388 = vadd.f32 0.0, %v2387
        %v2389 = vpop.f32.mrf.mxu0
        %v2390 = vadd.f32 0.0, %v2389
        %2391 = vmatmul.bf16.gmra.mxu0 %v2334
        %v2392 = vpop.f32.mrf.mxu0
        %v2393 = vadd.f32 0.0, %v2392
        %v2394 = vpop.f32.mrf.mxu0
        %v2395 = vadd.f32 0.0, %v2394
        %2396 = vmatmul.bf16.gmra.mxu0 %v2337
        %v2397 = vpop.f32.mrf.mxu0
        %v2398 = vadd.f32 0.0, %v2397
        %v2399 = vpop.f32.mrf.mxu0
        %v2400 = vadd.f32 0.0, %v2399
        %2401 = vmatmul.bf16.gmra.mxu0 %v2340
        %v2402 = vpop.f32.mrf.mxu0
        %v2403 = vadd.f32 0.0, %v2402
        %v2404 = vpop.f32.mrf.mxu0
        %v2405 = vadd.f32 0.0, %v2404
        %2406 = vmatmul.bf16.gmra.mxu0 %v2343
        %v2407 = vpop.f32.mrf.mxu0
        %v2408 = vadd.f32 0.0, %v2407
        %v2409 = vpop.f32.mrf.mxu0
        %v2410 = vadd.f32 0.0, %v2409
        %2411 = vmatmul.bf16.gmra.mxu0 %v2346
        %v2412 = vpop.f32.mrf.mxu0
        %v2413 = vadd.f32 0.0, %v2412
        %v2414 = vpop.f32.mrf.mxu0
        %v2415 = vadd.f32 0.0, %v2414
        %2416 = vmatmul.bf16.gmra.mxu0 %v2349
        %v2417 = vpop.f32.mrf.mxu0
        %v2418 = vadd.f32 0.0, %v2417
        %v2419 = vpop.f32.mrf.mxu0
        %v2420 = vadd.f32 0.0, %v2419
        %2421 = vmatmul.bf16.gmra.mxu0 %v2352
        %v2422 = vpop.f32.mrf.mxu0
        %v2423 = vadd.f32 0.0, %v2422
        %v2424 = vpop.f32.mrf.mxu0
        %v2425 = vadd.f32 0.0, %v2424
        %2426 = vmatmul.bf16.gmra.mxu0 %v2355
        %v2427 = vpop.f32.mrf.mxu0
        %v2428 = vadd.f32 0.0, %v2427
        %v2429 = vpop.f32.mrf.mxu0
        %v2430 = vadd.f32 0.0, %v2429
        %2431 = vmatmul.bf16.gmra.mxu0 %v2358
        %v2432 = vpop.f32.mrf.mxu0
        %v2433 = vadd.f32 0.0, %v2432
        %v2434 = vpop.f32.mrf.mxu0
        %v2435 = vadd.f32 0.0, %v2434
        %2436 = vmatmul.bf16.gmra.mxu0 %v2361
        %v2437 = vpop.f32.mrf.mxu0
        %v2438 = vadd.f32 0.0, %v2437
        %v2439 = vpop.f32.mrf.mxu0
        %v2440 = vadd.f32 0.0, %v2439
        %2441 = vmatmul.bf16.gmra.mxu0 %v2364
        %v2442 = vpop.f32.mrf.mxu0
        %v2443 = vadd.f32 0.0, %v2442
        %v2444 = vpop.f32.mrf.mxu0
        %v2445 = vadd.f32 0.0, %v2444
        %2446 = vmatmul.bf16.gmra.mxu0 %v2367
        %v2447 = vpop.f32.mrf.mxu0
        %v2448 = vadd.f32 0.0, %v2447
        %v2449 = vpop.f32.mrf.mxu0
        %v2450 = vadd.f32 0.0, %v2449
        %2451 = vmatmul.bf16.gmra.mxu0 %v2370
        %v2452 = vpop.f32.mrf.mxu0
        %v2453 = vadd.f32 0.0, %v2452
        %v2454 = vpop.f32.mrf.mxu0
        %v2455 = vadd.f32 0.0, %v2454
        %2456 = vmatmul.bf16.gmra.mxu0 %v2373
        %v2457 = vpop.f32.mrf.mxu0
        %v2458 = vadd.f32 0.0, %v2457
        %v2459 = vpop.f32.mrf.mxu0
        %v2460 = vadd.f32 0.0, %v2459
        %2461 = vmatmul.bf16.gmra.mxu0 %v2376
        %v2462 = vpop.f32.mrf.mxu0
        %v2463 = vadd.f32 0.0, %v2462
        %v2464 = vpop.f32.mrf.mxu0
        %v2465 = vadd.f32 0.0, %v2464
        %2466 = vdwg.mxu0
        %v2467 = vadd.f32 %v2186, %v2388
        %v2468 = vadd.f32 %v2187, %v2390
        %v2469 = vadd.f32 %v2188, %v2393
        %v2470 = vadd.f32 %v2189, %v2395
        %v2471 = vadd.f32 %v2190, %v2398
        %v2472 = vadd.f32 %v2191, %v2400
        %v2473 = vadd.f32 %v2192, %v2403
        %v2474 = vadd.f32 %v2193, %v2405
        %v2475 = vadd.f32 %v2194, %v2408
        %v2476 = vadd.f32 %v2195, %v2410
        %v2477 = vadd.f32 %v2196, %v2413
        %v2478 = vadd.f32 %v2197, %v2415
        %v2479 = vadd.f32 %v2198, %v2418
        %v2480 = vadd.f32 %v2199, %v2420
        %v2481 = vadd.f32 %v2200, %v2423
        %v2482 = vadd.f32 %v2201, %v2425
        %v2483 = vadd.f32 %v2202, %v2428
        %v2484 = vadd.f32 %v2203, %v2430
        %v2485 = vadd.f32 %v2204, %v2433
        %v2486 = vadd.f32 %v2205, %v2435
        %v2487 = vadd.f32 %v2206, %v2438
        %v2488 = vadd.f32 %v2207, %v2440
        %v2489 = vadd.f32 %v2208, %v2443
        %v2490 = vadd.f32 %v2209, %v2445
        %v2491 = vadd.f32 %v2210, %v2448
        %v2492 = vadd.f32 %v2211, %v2450
        %v2493 = vadd.f32 %v2212, %v2453
        %v2494 = vadd.f32 %v2213, %v2455
        %v2495 = vadd.f32 %v2214, %v2458
        %v2496 = vadd.f32 %v2215, %v2460
        %v2497 = vadd.f32 %v2216, %v2463
        %v2498 = vadd.f32 %v2217, %v2465
        %2499 = vset.pattern.permute.xlu0 5
        %2500 = vperm.xlu0 %2499, %v428
        %v2501 = vpop.permute.xlu0 %2500
        %2503 = vset.pattern.permute.xlu0 5
        %2504 = vperm.xlu0 %2503, %v429
        %v2505 = vpop.permute.xlu0 %2504
        %2507 = vset.pattern.permute.xlu0 5
        %2508 = vperm.xlu0 %2507, %v430
        %v2509 = vpop.permute.xlu0 %2508
        %2511 = vset.pattern.permute.xlu0 5
        %2512 = vperm.xlu0 %2511, %v431
        %v2513 = vpop.permute.xlu0 %2512
        %2515 = vset.pattern.permute.xlu0 5
        %2516 = vperm.xlu0 %2515, %v432
        %v2517 = vpop.permute.xlu0 %2516
        %2519 = vset.pattern.permute.xlu0 5
        %2520 = vperm.xlu0 %2519, %v433
        %v2521 = vpop.permute.xlu0 %2520
        %2523 = vset.pattern.permute.xlu0 5
        %2524 = vperm.xlu0 %2523, %v434
        %v2525 = vpop.permute.xlu0 %2524
        %2527 = vset.pattern.permute.xlu0 5
        %2528 = vperm.xlu0 %2527, %v435
        %v2529 = vpop.permute.xlu0 %2528
        %2531 = vset.pattern.permute.xlu0 5
        %2532 = vperm.xlu0 %2531, %v436
        %v2533 = vpop.permute.xlu0 %2532
        %2535 = vset.pattern.permute.xlu0 5
        %2536 = vperm.xlu0 %2535, %v437
        %v2537 = vpop.permute.xlu0 %2536
        %2539 = vset.pattern.permute.xlu0 5
        %2540 = vperm.xlu0 %2539, %v438
        %v2541 = vpop.permute.xlu0 %2540
        %2543 = vset.pattern.permute.xlu0 5
        %2544 = vperm.xlu0 %2543, %v439
        %v2545 = vpop.permute.xlu0 %2544
        %2547 = vset.pattern.permute.xlu0 5
        %2548 = vperm.xlu0 %2547, %v440
        %v2549 = vpop.permute.xlu0 %2548
        %2551 = vset.pattern.permute.xlu0 5
        %2552 = vperm.xlu0 %2551, %v441
        %v2553 = vpop.permute.xlu0 %2552
        %2555 = vset.pattern.permute.xlu0 5
        %2556 = vperm.xlu0 %2555, %v442
        %v2557 = vpop.permute.xlu0 %2556
        %2559 = vset.pattern.permute.xlu0 5
        %2560 = vperm.xlu0 %2559, %v443
        %v2561 = vpop.permute.xlu0 %2560
        %2563 = vset.pattern.permute.xlu0 5
        %2564 = vperm.xlu0 %2563, %v444
        %v2565 = vpop.permute.xlu0 %2564
        %2567 = vset.pattern.permute.xlu0 5
        %2568 = vperm.xlu0 %2567, %v445
        %v2569 = vpop.permute.xlu0 %2568
        %2571 = vset.pattern.permute.xlu0 5
        %2572 = vperm.xlu0 %2571, %v446
        %v2573 = vpop.permute.xlu0 %2572
        %2575 = vset.pattern.permute.xlu0 5
        %2576 = vperm.xlu0 %2575, %v447
        %v2577 = vpop.permute.xlu0 %2576
        %2579 = vset.pattern.permute.xlu0 5
        %2580 = vperm.xlu0 %2579, %v448
        %v2581 = vpop.permute.xlu0 %2580
        %2583 = vset.pattern.permute.xlu0 5
        %2584 = vperm.xlu0 %2583, %v449
        %v2585 = vpop.permute.xlu0 %2584
        %2587 = vset.pattern.permute.xlu0 5
        %2588 = vperm.xlu0 %2587, %v450
        %v2589 = vpop.permute.xlu0 %2588
        %2591 = vset.pattern.permute.xlu0 5
        %2592 = vperm.xlu0 %2591, %v451
        %v2593 = vpop.permute.xlu0 %2592
        %2595 = vset.pattern.permute.xlu0 5
        %2596 = vperm.xlu0 %2595, %v452
        %v2597 = vpop.permute.xlu0 %2596
        %2599 = vset.pattern.permute.xlu0 5
        %2600 = vperm.xlu0 %2599, %v453
        %v2601 = vpop.permute.xlu0 %2600
        %2603 = vset.pattern.permute.xlu0 5
        %2604 = vperm.xlu0 %2603, %v454
        %v2605 = vpop.permute.xlu0 %2604
        %2607 = vset.pattern.permute.xlu0 5
        %2608 = vperm.xlu0 %2607, %v455
        %v2609 = vpop.permute.xlu0 %2608
        %2611 = vset.pattern.permute.xlu0 5
        %2612 = vperm.xlu0 %2611, %v456
        %v2613 = vpop.permute.xlu0 %2612
        %2615 = vset.pattern.permute.xlu0 5
        %2616 = vperm.xlu0 %2615, %v457
        %v2617 = vpop.permute.xlu0 %2616
        %2619 = vset.pattern.permute.xlu0 5
        %2620 = vperm.xlu0 %2619, %v458
        %v2621 = vpop.permute.xlu0 %2620
        %2623 = vset.pattern.permute.xlu0 5
        %2624 = vperm.xlu0 %2623, %v459
        %v2625 = vpop.permute.xlu0 %2624
        %v2627 = vmul.f32 %v1462, %v2501
        %v2628 = vmul.f32 %v1461, %v2505
        %v2629 = vmul.f32 %v1460, %v2509
        %v2630 = vmul.f32 %v1459, %v2513
        %v2631 = vmul.f32 %v1458, %v2517
        %v2632 = vmul.f32 %v1457, %v2521
        %v2633 = vmul.f32 %v1456, %v2525
        %v2634 = vmul.f32 %v1455, %v2529
        %v2635 = vmul.f32 %v1454, %v2533
        %v2636 = vmul.f32 %v1453, %v2537
        %v2637 = vmul.f32 %v1452, %v2541
        %v2638 = vmul.f32 %v1451, %v2545
        %v2639 = vmul.f32 %v1450, %v2549
        %v2640 = vmul.f32 %v1449, %v2553
        %v2641 = vmul.f32 %v1448, %v2557
        %v2642 = vmul.f32 %v1447, %v2561
        %v2643 = vmul.f32 %v1446, %v2565
        %v2644 = vmul.f32 %v1445, %v2569
        %v2645 = vmul.f32 %v1444, %v2573
        %v2646 = vmul.f32 %v1443, %v2577
        %v2647 = vmul.f32 %v1442, %v2581
        %v2648 = vmul.f32 %v1441, %v2585
        %v2649 = vmul.f32 %v1440, %v2589
        %v2650 = vmul.f32 %v1439, %v2593
        %v2651 = vmul.f32 %v1438, %v2597
        %v2652 = vmul.f32 %v1437, %v2601
        %v2653 = vmul.f32 %v1436, %v2605
        %v2654 = vmul.f32 %v1435, %v2609
        %v2655 = vmul.f32 %v1434, %v2613
        %v2656 = vmul.f32 %v1433, %v2617
        %v2657 = vmul.f32 %v1432, %v2621
        %v2658 = vmul.f32 %v1463, %v2625
        %v2659 = vpack.c.bf16 %v2628, %v2627
        %v2660 = vpack.c.bf16 %v2630, %v2629
        %v2661 = vpack.c.bf16 %v2632, %v2631
        %v2662 = vpack.c.bf16 %v2634, %v2633
        %v2663 = vpack.c.bf16 %v2636, %v2635
        %v2664 = vpack.c.bf16 %v2638, %v2637
        %v2665 = vpack.c.bf16 %v2640, %v2639
        %v2666 = vpack.c.bf16 %v2642, %v2641
        %v2667 = vpack.c.bf16 %v2644, %v2643
        %v2668 = vpack.c.bf16 %v2646, %v2645
        %v2669 = vpack.c.bf16 %v2648, %v2647
        %v2670 = vpack.c.bf16 %v2650, %v2649
        %v2671 = vpack.c.bf16 %v2652, %v2651
        %v2672 = vpack.c.bf16 %v2654, %v2653
        %v2673 = vpack.c.bf16 %v2656, %v2655
        %v2674 = vpack.c.bf16 %v2658, %v2657
        %v2675 = vld [vmem:[%s404 + $0xa0] sm:$0xf]
        %v2676 = vld [vmem:[%s404 + $0xa4] sm:$0xf]
        %v2677 = vld [vmem:[%s404 + $0xa8] sm:$0xf]
        %v2678 = vld [vmem:[%s404 + $0xac] sm:$0xf]
        %v2679 = vld [vmem:[%s404 + $0xb0] sm:$0xf]
        %v2680 = vld [vmem:[%s404 + $0xb4] sm:$0xf]
        %v2681 = vld [vmem:[%s404 + $0xb8] sm:$0xf]
        %v2682 = vld [vmem:[%s404 + $0xbc] sm:$0xf]
        %v2691 = vunpack.c.l.b16 %v2675
        %v2692 = vunpack.c.l.b16 %v2676
        %v2693 = vunpack.c.l.b16 %v2677
        %v2694 = vunpack.c.l.b16 %v2678
        %v2695 = vunpack.c.l.b16 %v2679
        %v2696 = vunpack.c.l.b16 %v2680
        %v2697 = vunpack.c.l.b16 %v2681
        %v2698 = vunpack.c.l.b16 %v2682
        %v2699 = vpack.c.b16 %v2692, %v2691
        %v2700 = vpack.c.b16 %v2694, %v2693
        %v2701 = vpack.c.b16 %v2696, %v2695
        %v2702 = vpack.c.b16 %v2698, %v2697
        %v2708 = vsel %vm1100, %v2659, 0
        %v2711 = vsel %vm1100, %v2660, 0
        %v2714 = vsel %vm1100, %v2661, 0
        %v2717 = vsel %vm1100, %v2662, 0
        %v2720 = vsel %vm1100, %v2663, 0
        %v2723 = vsel %vm1100, %v2664, 0
        %v2726 = vsel %vm1100, %v2665, 0
        %v2729 = vsel %vm1100, %v2666, 0
        %v2732 = vsel %vm1100, %v2667, 0
        %v2735 = vsel %vm1100, %v2668, 0
        %v2738 = vsel %vm1100, %v2669, 0
        %v2741 = vsel %vm1100, %v2670, 0
        %v2744 = vsel %vm1100, %v2671, 0
        %v2747 = vsel %vm1100, %v2672, 0
        %v2750 = vsel %vm1100, %v2673, 0
        %v2753 = vsel %vm1100, %v2674, 0
        %2755 = vmatpush.bf16.msra.mxu0 0
        %2756 = vmatpush.bf16.msra.mxu0 0
        %2757 = vmatpush.bf16.msra.mxu0 0
        %2758 = vmatpush.bf16.msra.mxu0 0
        %2759 = vmatpush.bf16.msra.mxu0 %v2702
        %2760 = vmatpush.bf16.msra.mxu0 %v2701
        %2761 = vmatpush.bf16.msra.mxu0 %v2700
        %2762 = vmatpush.bf16.msra.mxu0 %v2699
        %2763 = vmatmul.bf16.gmra.mxu0 %v2708
        %v2764 = vpop.f32.mrf.mxu0
        %v2765 = vadd.f32 0.0, %v2764
        %v2766 = vpop.f32.mrf.mxu0
        %v2767 = vadd.f32 0.0, %v2766
        %2768 = vmatmul.bf16.gmra.mxu0 %v2711
        %v2769 = vpop.f32.mrf.mxu0
        %v2770 = vadd.f32 0.0, %v2769
        %v2771 = vpop.f32.mrf.mxu0
        %v2772 = vadd.f32 0.0, %v2771
        %2773 = vmatmul.bf16.gmra.mxu0 %v2714
        %v2774 = vpop.f32.mrf.mxu0
        %v2775 = vadd.f32 0.0, %v2774
        %v2776 = vpop.f32.mrf.mxu0
        %v2777 = vadd.f32 0.0, %v2776
        %2778 = vmatmul.bf16.gmra.mxu0 %v2717
        %v2779 = vpop.f32.mrf.mxu0
        %v2780 = vadd.f32 0.0, %v2779
        %v2781 = vpop.f32.mrf.mxu0
        %v2782 = vadd.f32 0.0, %v2781
        %2783 = vmatmul.bf16.gmra.mxu0 %v2720
        %v2784 = vpop.f32.mrf.mxu0
        %v2785 = vadd.f32 0.0, %v2784
        %v2786 = vpop.f32.mrf.mxu0
        %v2787 = vadd.f32 0.0, %v2786
        %2788 = vmatmul.bf16.gmra.mxu0 %v2723
        %v2789 = vpop.f32.mrf.mxu0
        %v2790 = vadd.f32 0.0, %v2789
        %v2791 = vpop.f32.mrf.mxu0
        %v2792 = vadd.f32 0.0, %v2791
        %2793 = vmatmul.bf16.gmra.mxu0 %v2726
        %v2794 = vpop.f32.mrf.mxu0
        %v2795 = vadd.f32 0.0, %v2794
        %v2796 = vpop.f32.mrf.mxu0
        %v2797 = vadd.f32 0.0, %v2796
        %2798 = vmatmul.bf16.gmra.mxu0 %v2729
        %v2799 = vpop.f32.mrf.mxu0
        %v2800 = vadd.f32 0.0, %v2799
        %v2801 = vpop.f32.mrf.mxu0
        %v2802 = vadd.f32 0.0, %v2801
        %2803 = vmatmul.bf16.gmra.mxu0 %v2732
        %v2804 = vpop.f32.mrf.mxu0
        %v2805 = vadd.f32 0.0, %v2804
        %v2806 = vpop.f32.mrf.mxu0
        %v2807 = vadd.f32 0.0, %v2806
        %2808 = vmatmul.bf16.gmra.mxu0 %v2735
        %v2809 = vpop.f32.mrf.mxu0
        %v2810 = vadd.f32 0.0, %v2809
        %v2811 = vpop.f32.mrf.mxu0
        %v2812 = vadd.f32 0.0, %v2811
        %2813 = vmatmul.bf16.gmra.mxu0 %v2738
        %v2814 = vpop.f32.mrf.mxu0
        %v2815 = vadd.f32 0.0, %v2814
        %v2816 = vpop.f32.mrf.mxu0
        %v2817 = vadd.f32 0.0, %v2816
        %2818 = vmatmul.bf16.gmra.mxu0 %v2741
        %v2819 = vpop.f32.mrf.mxu0
        %v2820 = vadd.f32 0.0, %v2819
        %v2821 = vpop.f32.mrf.mxu0
        %v2822 = vadd.f32 0.0, %v2821
        %2823 = vmatmul.bf16.gmra.mxu0 %v2744
        %v2824 = vpop.f32.mrf.mxu0
        %v2825 = vadd.f32 0.0, %v2824
        %v2826 = vpop.f32.mrf.mxu0
        %v2827 = vadd.f32 0.0, %v2826
        %2828 = vmatmul.bf16.gmra.mxu0 %v2747
        %v2829 = vpop.f32.mrf.mxu0
        %v2830 = vadd.f32 0.0, %v2829
        %v2831 = vpop.f32.mrf.mxu0
        %v2832 = vadd.f32 0.0, %v2831
        %2833 = vmatmul.bf16.gmra.mxu0 %v2750
        %v2834 = vpop.f32.mrf.mxu0
        %v2835 = vadd.f32 0.0, %v2834
        %v2836 = vpop.f32.mrf.mxu0
        %v2837 = vadd.f32 0.0, %v2836
        %2838 = vmatmul.bf16.gmra.mxu0 %v2753
        %v2839 = vpop.f32.mrf.mxu0
        %v2840 = vadd.f32 0.0, %v2839
        %v2841 = vpop.f32.mrf.mxu0
        %v2842 = vadd.f32 0.0, %v2841
        %2843 = vdwg.mxu0
        %v2844 = vadd.f32 %v2467, %v2765
        %v2845 = vadd.f32 %v2468, %v2767
        %v2846 = vadd.f32 %v2469, %v2770
        %v2847 = vadd.f32 %v2470, %v2772
        %v2848 = vadd.f32 %v2471, %v2775
        %v2849 = vadd.f32 %v2472, %v2777
        %v2850 = vadd.f32 %v2473, %v2780
        %v2851 = vadd.f32 %v2474, %v2782
        %v2852 = vadd.f32 %v2475, %v2785
        %v2853 = vadd.f32 %v2476, %v2787
        %v2854 = vadd.f32 %v2477, %v2790
        %v2855 = vadd.f32 %v2478, %v2792
        %v2856 = vadd.f32 %v2479, %v2795
        %v2857 = vadd.f32 %v2480, %v2797
        %v2858 = vadd.f32 %v2481, %v2800
        %v2859 = vadd.f32 %v2482, %v2802
        %v2860 = vadd.f32 %v2483, %v2805
        %v2861 = vadd.f32 %v2484, %v2807
        %v2862 = vadd.f32 %v2485, %v2810
        %v2863 = vadd.f32 %v2486, %v2812
        %v2864 = vadd.f32 %v2487, %v2815
        %v2865 = vadd.f32 %v2488, %v2817
        %v2866 = vadd.f32 %v2489, %v2820
        %v2867 = vadd.f32 %v2490, %v2822
        %v2868 = vadd.f32 %v2491, %v2825
        %v2869 = vadd.f32 %v2492, %v2827
        %v2870 = vadd.f32 %v2493, %v2830
        %v2871 = vadd.f32 %v2494, %v2832
        %v2872 = vadd.f32 %v2495, %v2835
        %v2873 = vadd.f32 %v2496, %v2837
        %v2874 = vadd.f32 %v2497, %v2840
        %v2875 = vadd.f32 %v2498, %v2842
        %2876 = vset.pattern.permute.xlu0 6
        %2877 = vperm.xlu0 %2876, %v428
        %v2878 = vpop.permute.xlu0 %2877
        %2880 = vset.pattern.permute.xlu0 6
        %2881 = vperm.xlu0 %2880, %v429
        %v2882 = vpop.permute.xlu0 %2881
        %2884 = vset.pattern.permute.xlu0 6
        %2885 = vperm.xlu0 %2884, %v430
        %v2886 = vpop.permute.xlu0 %2885
        %2888 = vset.pattern.permute.xlu0 6
        %2889 = vperm.xlu0 %2888, %v431
        %v2890 = vpop.permute.xlu0 %2889
        %2892 = vset.pattern.permute.xlu0 6
        %2893 = vperm.xlu0 %2892, %v432
        %v2894 = vpop.permute.xlu0 %2893
        %2896 = vset.pattern.permute.xlu0 6
        %2897 = vperm.xlu0 %2896, %v433
        %v2898 = vpop.permute.xlu0 %2897
        %2900 = vset.pattern.permute.xlu0 6
        %2901 = vperm.xlu0 %2900, %v434
        %v2902 = vpop.permute.xlu0 %2901
        %2904 = vset.pattern.permute.xlu0 6
        %2905 = vperm.xlu0 %2904, %v435
        %v2906 = vpop.permute.xlu0 %2905
        %2908 = vset.pattern.permute.xlu0 6
        %2909 = vperm.xlu0 %2908, %v436
        %v2910 = vpop.permute.xlu0 %2909
        %2912 = vset.pattern.permute.xlu0 6
        %2913 = vperm.xlu0 %2912, %v437
        %v2914 = vpop.permute.xlu0 %2913
        %2916 = vset.pattern.permute.xlu0 6
        %2917 = vperm.xlu0 %2916, %v438
        %v2918 = vpop.permute.xlu0 %2917
        %2920 = vset.pattern.permute.xlu0 6
        %2921 = vperm.xlu0 %2920, %v439
        %v2922 = vpop.permute.xlu0 %2921
        %2924 = vset.pattern.permute.xlu0 6
        %2925 = vperm.xlu0 %2924, %v440
        %v2926 = vpop.permute.xlu0 %2925
        %2928 = vset.pattern.permute.xlu0 6
        %2929 = vperm.xlu0 %2928, %v441
        %v2930 = vpop.permute.xlu0 %2929
        %2932 = vset.pattern.permute.xlu0 6
        %2933 = vperm.xlu0 %2932, %v442
        %v2934 = vpop.permute.xlu0 %2933
        %2936 = vset.pattern.permute.xlu0 6
        %2937 = vperm.xlu0 %2936, %v443
        %v2938 = vpop.permute.xlu0 %2937
        %2940 = vset.pattern.permute.xlu0 6
        %2941 = vperm.xlu0 %2940, %v444
        %v2942 = vpop.permute.xlu0 %2941
        %2944 = vset.pattern.permute.xlu0 6
        %2945 = vperm.xlu0 %2944, %v445
        %v2946 = vpop.permute.xlu0 %2945
        %2948 = vset.pattern.permute.xlu0 6
        %2949 = vperm.xlu0 %2948, %v446
        %v2950 = vpop.permute.xlu0 %2949
        %2952 = vset.pattern.permute.xlu0 6
        %2953 = vperm.xlu0 %2952, %v447
        %v2954 = vpop.permute.xlu0 %2953
        %2956 = vset.pattern.permute.xlu0 6
        %2957 = vperm.xlu0 %2956, %v448
        %v2958 = vpop.permute.xlu0 %2957
        %2960 = vset.pattern.permute.xlu0 6
        %2961 = vperm.xlu0 %2960, %v449
        %v2962 = vpop.permute.xlu0 %2961
        %2964 = vset.pattern.permute.xlu0 6
        %2965 = vperm.xlu0 %2964, %v450
        %v2966 = vpop.permute.xlu0 %2965
        %2968 = vset.pattern.permute.xlu0 6
        %2969 = vperm.xlu0 %2968, %v451
        %v2970 = vpop.permute.xlu0 %2969
        %2972 = vset.pattern.permute.xlu0 6
        %2973 = vperm.xlu0 %2972, %v452
        %v2974 = vpop.permute.xlu0 %2973
        %2976 = vset.pattern.permute.xlu0 6
        %2977 = vperm.xlu0 %2976, %v453
        %v2978 = vpop.permute.xlu0 %2977
        %2980 = vset.pattern.permute.xlu0 6
        %2981 = vperm.xlu0 %2980, %v454
        %v2982 = vpop.permute.xlu0 %2981
        %2984 = vset.pattern.permute.xlu0 6
        %2985 = vperm.xlu0 %2984, %v455
        %v2986 = vpop.permute.xlu0 %2985
        %2988 = vset.pattern.permute.xlu0 6
        %2989 = vperm.xlu0 %2988, %v456
        %v2990 = vpop.permute.xlu0 %2989
        %2992 = vset.pattern.permute.xlu0 6
        %2993 = vperm.xlu0 %2992, %v457
        %v2994 = vpop.permute.xlu0 %2993
        %2996 = vset.pattern.permute.xlu0 6
        %2997 = vperm.xlu0 %2996, %v458
        %v2998 = vpop.permute.xlu0 %2997
        %3000 = vset.pattern.permute.xlu0 6
        %3001 = vperm.xlu0 %3000, %v459
        %v3002 = vpop.permute.xlu0 %3001
        %v3004 = vmul.f32 %v673, %v2878
        %v3005 = vmul.f32 %v672, %v2882
        %v3006 = vmul.f32 %v671, %v2886
        %v3007 = vmul.f32 %v670, %v2890
        %v3008 = vmul.f32 %v669, %v2894
        %v3009 = vmul.f32 %v668, %v2898
        %v3010 = vmul.f32 %v667, %v2902
        %v3011 = vmul.f32 %v666, %v2906
        %v3012 = vmul.f32 %v665, %v2910
        %v3013 = vmul.f32 %v664, %v2914
        %v3014 = vmul.f32 %v663, %v2918
        %v3015 = vmul.f32 %v662, %v2922
        %v3016 = vmul.f32 %v661, %v2926
        %v3017 = vmul.f32 %v660, %v2930
        %v3018 = vmul.f32 %v659, %v2934
        %v3019 = vmul.f32 %v658, %v2938
        %v3020 = vmul.f32 %v657, %v2942
        %v3021 = vmul.f32 %v656, %v2946
        %v3022 = vmul.f32 %v655, %v2950
        %v3023 = vmul.f32 %v654, %v2954
        %v3024 = vmul.f32 %v653, %v2958
        %v3025 = vmul.f32 %v652, %v2962
        %v3026 = vmul.f32 %v651, %v2966
        %v3027 = vmul.f32 %v650, %v2970
        %v3028 = vmul.f32 %v649, %v2974
        %v3029 = vmul.f32 %v648, %v2978
        %v3030 = vmul.f32 %v647, %v2982
        %v3031 = vmul.f32 %v646, %v2986
        %v3032 = vmul.f32 %v645, %v2990
        %v3033 = vmul.f32 %v644, %v2994
        %v3034 = vmul.f32 %v675, %v2998
        %v3035 = vmul.f32 %v674, %v3002
        %v3036 = vpack.c.bf16 %v3005, %v3004
        %v3037 = vpack.c.bf16 %v3007, %v3006
        %v3038 = vpack.c.bf16 %v3009, %v3008
        %v3039 = vpack.c.bf16 %v3011, %v3010
        %v3040 = vpack.c.bf16 %v3013, %v3012
        %v3041 = vpack.c.bf16 %v3015, %v3014
        %v3042 = vpack.c.bf16 %v3017, %v3016
        %v3043 = vpack.c.bf16 %v3019, %v3018
        %v3044 = vpack.c.bf16 %v3021, %v3020
        %v3045 = vpack.c.bf16 %v3023, %v3022
        %v3046 = vpack.c.bf16 %v3025, %v3024
        %v3047 = vpack.c.bf16 %v3027, %v3026
        %v3048 = vpack.c.bf16 %v3029, %v3028
        %v3049 = vpack.c.bf16 %v3031, %v3030
        %v3050 = vpack.c.bf16 %v3033, %v3032
        %v3051 = vpack.c.bf16 %v3035, %v3034
        %v3052 = vld [vmem:[%s404 + $0xc0] sm:$0xf]
        %v3053 = vld [vmem:[%s404 + $0xc4] sm:$0xf]
        %v3054 = vld [vmem:[%s404 + $0xc8] sm:$0xf]
        %v3055 = vld [vmem:[%s404 + $0xcc] sm:$0xf]
        %v3056 = vld [vmem:[%s404 + $0xd0] sm:$0xf]
        %v3057 = vld [vmem:[%s404 + $0xd4] sm:$0xf]
        %v3058 = vld [vmem:[%s404 + $0xd8] sm:$0xf]
        %v3059 = vld [vmem:[%s404 + $0xdc] sm:$0xf]
        %v3068 = vunpack.c.l.b16 %v3052
        %v3069 = vunpack.c.l.b16 %v3053
        %v3070 = vunpack.c.l.b16 %v3054
        %v3071 = vunpack.c.l.b16 %v3055
        %v3072 = vunpack.c.l.b16 %v3056
        %v3073 = vunpack.c.l.b16 %v3057
        %v3074 = vunpack.c.l.b16 %v3058
        %v3075 = vunpack.c.l.b16 %v3059
        %v3076 = vpack.c.b16 %v3069, %v3068
        %v3077 = vpack.c.b16 %v3071, %v3070
        %v3078 = vpack.c.b16 %v3073, %v3072
        %v3079 = vpack.c.b16 %v3075, %v3074
        %v3085 = vsel %vm1100, %v3036, 0
        %v3088 = vsel %vm1100, %v3037, 0
        %v3091 = vsel %vm1100, %v3038, 0
        %v3094 = vsel %vm1100, %v3039, 0
        %v3097 = vsel %vm1100, %v3040, 0
        %v3100 = vsel %vm1100, %v3041, 0
        %v3103 = vsel %vm1100, %v3042, 0
        %v3106 = vsel %vm1100, %v3043, 0
        %v3109 = vsel %vm1100, %v3044, 0
        %v3112 = vsel %vm1100, %v3045, 0
        %v3115 = vsel %vm1100, %v3046, 0
        %v3118 = vsel %vm1100, %v3047, 0
        %v3121 = vsel %vm1100, %v3048, 0
        %v3124 = vsel %vm1100, %v3049, 0
        %v3127 = vsel %vm1100, %v3050, 0
        %v3130 = vsel %vm1100, %v3051, 0
        %3132 = vmatpush.bf16.msra.mxu0 0
        %3133 = vmatpush.bf16.msra.mxu0 0
        %3134 = vmatpush.bf16.msra.mxu0 0
        %3135 = vmatpush.bf16.msra.mxu0 0
        %3136 = vmatpush.bf16.msra.mxu0 %v3079
        %3137 = vmatpush.bf16.msra.mxu0 %v3078
        %3138 = vmatpush.bf16.msra.mxu0 %v3077
        %3139 = vmatpush.bf16.msra.mxu0 %v3076
        %3140 = vmatmul.bf16.gmra.mxu0 %v3085
        %v3141 = vpop.f32.mrf.mxu0
        %v3142 = vadd.f32 0.0, %v3141
        %v3143 = vpop.f32.mrf.mxu0
        %v3144 = vadd.f32 0.0, %v3143
        %3145 = vmatmul.bf16.gmra.mxu0 %v3088
        %v3146 = vpop.f32.mrf.mxu0
        %v3147 = vadd.f32 0.0, %v3146
        %v3148 = vpop.f32.mrf.mxu0
        %v3149 = vadd.f32 0.0, %v3148
        %3150 = vmatmul.bf16.gmra.mxu0 %v3091
        %v3151 = vpop.f32.mrf.mxu0
        %v3152 = vadd.f32 0.0, %v3151
        %v3153 = vpop.f32.mrf.mxu0
        %v3154 = vadd.f32 0.0, %v3153
        %3155 = vmatmul.bf16.gmra.mxu0 %v3094
        %v3156 = vpop.f32.mrf.mxu0
        %v3157 = vadd.f32 0.0, %v3156
        %v3158 = vpop.f32.mrf.mxu0
        %v3159 = vadd.f32 0.0, %v3158
        %3160 = vmatmul.bf16.gmra.mxu0 %v3097
        %v3161 = vpop.f32.mrf.mxu0
        %v3162 = vadd.f32 0.0, %v3161
        %v3163 = vpop.f32.mrf.mxu0
        %v3164 = vadd.f32 0.0, %v3163
        %3165 = vmatmul.bf16.gmra.mxu0 %v3100
        %v3166 = vpop.f32.mrf.mxu0
        %v3167 = vadd.f32 0.0, %v3166
        %v3168 = vpop.f32.mrf.mxu0
        %v3169 = vadd.f32 0.0, %v3168
        %3170 = vmatmul.bf16.gmra.mxu0 %v3103
        %v3171 = vpop.f32.mrf.mxu0
        %v3172 = vadd.f32 0.0, %v3171
        %v3173 = vpop.f32.mrf.mxu0
        %v3174 = vadd.f32 0.0, %v3173
        %3175 = vmatmul.bf16.gmra.mxu0 %v3106
        %v3176 = vpop.f32.mrf.mxu0
        %v3177 = vadd.f32 0.0, %v3176
        %v3178 = vpop.f32.mrf.mxu0
        %v3179 = vadd.f32 0.0, %v3178
        %3180 = vmatmul.bf16.gmra.mxu0 %v3109
        %v3181 = vpop.f32.mrf.mxu0
        %v3182 = vadd.f32 0.0, %v3181
        %v3183 = vpop.f32.mrf.mxu0
        %v3184 = vadd.f32 0.0, %v3183
        %3185 = vmatmul.bf16.gmra.mxu0 %v3112
        %v3186 = vpop.f32.mrf.mxu0
        %v3187 = vadd.f32 0.0, %v3186
        %v3188 = vpop.f32.mrf.mxu0
        %v3189 = vadd.f32 0.0, %v3188
        %3190 = vmatmul.bf16.gmra.mxu0 %v3115
        %v3191 = vpop.f32.mrf.mxu0
        %v3192 = vadd.f32 0.0, %v3191
        %v3193 = vpop.f32.mrf.mxu0
        %v3194 = vadd.f32 0.0, %v3193
        %3195 = vmatmul.bf16.gmra.mxu0 %v3118
        %v3196 = vpop.f32.mrf.mxu0
        %v3197 = vadd.f32 0.0, %v3196
        %v3198 = vpop.f32.mrf.mxu0
        %v3199 = vadd.f32 0.0, %v3198
        %3200 = vmatmul.bf16.gmra.mxu0 %v3121
        %v3201 = vpop.f32.mrf.mxu0
        %v3202 = vadd.f32 0.0, %v3201
        %v3203 = vpop.f32.mrf.mxu0
        %v3204 = vadd.f32 0.0, %v3203
        %3205 = vmatmul.bf16.gmra.mxu0 %v3124
        %v3206 = vpop.f32.mrf.mxu0
        %v3207 = vadd.f32 0.0, %v3206
        %v3208 = vpop.f32.mrf.mxu0
        %v3209 = vadd.f32 0.0, %v3208
        %3210 = vmatmul.bf16.gmra.mxu0 %v3127
        %v3211 = vpop.f32.mrf.mxu0
        %v3212 = vadd.f32 0.0, %v3211
        %v3213 = vpop.f32.mrf.mxu0
        %v3214 = vadd.f32 0.0, %v3213
        %3215 = vmatmul.bf16.gmra.mxu0 %v3130
        %v3216 = vpop.f32.mrf.mxu0
        %v3217 = vadd.f32 0.0, %v3216
        %v3218 = vpop.f32.mrf.mxu0
        %v3219 = vadd.f32 0.0, %v3218
        %3220 = vdwg.mxu0
        %v3221 = vadd.f32 %v2844, %v3142
        %v3222 = vadd.f32 %v2845, %v3144
        %v3223 = vadd.f32 %v2846, %v3147
        %v3224 = vadd.f32 %v2847, %v3149
        %v3225 = vadd.f32 %v2848, %v3152
        %v3226 = vadd.f32 %v2849, %v3154
        %v3227 = vadd.f32 %v2850, %v3157
        %v3228 = vadd.f32 %v2851, %v3159
        %v3229 = vadd.f32 %v2852, %v3162
        %v3230 = vadd.f32 %v2853, %v3164
        %v3231 = vadd.f32 %v2854, %v3167
        %v3232 = vadd.f32 %v2855, %v3169
        %v3233 = vadd.f32 %v2856, %v3172
        %v3234 = vadd.f32 %v2857, %v3174
        %v3235 = vadd.f32 %v2858, %v3177
        %v3236 = vadd.f32 %v2859, %v3179
        %v3237 = vadd.f32 %v2860, %v3182
        %v3238 = vadd.f32 %v2861, %v3184
        %v3239 = vadd.f32 %v2862, %v3187
        %v3240 = vadd.f32 %v2863, %v3189
        %v3241 = vadd.f32 %v2864, %v3192
        %v3242 = vadd.f32 %v2865, %v3194
        %v3243 = vadd.f32 %v2866, %v3197
        %v3244 = vadd.f32 %v2867, %v3199
        %v3245 = vadd.f32 %v2868, %v3202
        %v3246 = vadd.f32 %v2869, %v3204
        %v3247 = vadd.f32 %v2870, %v3207
        %v3248 = vadd.f32 %v2871, %v3209
        %v3249 = vadd.f32 %v2872, %v3212
        %v3250 = vadd.f32 %v2873, %v3214
        %v3251 = vadd.f32 %v2874, %v3217
        %v3252 = vadd.f32 %v2875, %v3219
        %3253 = vset.pattern.permute.xlu0 7
        %3254 = vperm.xlu0 %3253, %v428
        %v3255 = vpop.permute.xlu0 %3254
        %3257 = vset.pattern.permute.xlu0 7
        %3258 = vperm.xlu0 %3257, %v429
        %v3259 = vpop.permute.xlu0 %3258
        %3261 = vset.pattern.permute.xlu0 7
        %3262 = vperm.xlu0 %3261, %v430
        %v3263 = vpop.permute.xlu0 %3262
        %3265 = vset.pattern.permute.xlu0 7
        %3266 = vperm.xlu0 %3265, %v431
        %v3267 = vpop.permute.xlu0 %3266
        %3269 = vset.pattern.permute.xlu0 7
        %3270 = vperm.xlu0 %3269, %v432
        %v3271 = vpop.permute.xlu0 %3270
        %3273 = vset.pattern.permute.xlu0 7
        %3274 = vperm.xlu0 %3273, %v433
        %v3275 = vpop.permute.xlu0 %3274
        %3277 = vset.pattern.permute.xlu0 7
        %3278 = vperm.xlu0 %3277, %v434
        %v3279 = vpop.permute.xlu0 %3278
        %3281 = vset.pattern.permute.xlu0 7
        %3282 = vperm.xlu0 %3281, %v435
        %v3283 = vpop.permute.xlu0 %3282
        %3285 = vset.pattern.permute.xlu0 7
        %3286 = vperm.xlu0 %3285, %v436
        %v3287 = vpop.permute.xlu0 %3286
        %3289 = vset.pattern.permute.xlu0 7
        %3290 = vperm.xlu0 %3289, %v437
        %v3291 = vpop.permute.xlu0 %3290
        %3293 = vset.pattern.permute.xlu0 7
        %3294 = vperm.xlu0 %3293, %v438
        %v3295 = vpop.permute.xlu0 %3294
        %3297 = vset.pattern.permute.xlu0 7
        %3298 = vperm.xlu0 %3297, %v439
        %v3299 = vpop.permute.xlu0 %3298
        %3301 = vset.pattern.permute.xlu0 7
        %3302 = vperm.xlu0 %3301, %v440
        %v3303 = vpop.permute.xlu0 %3302
        %3305 = vset.pattern.permute.xlu0 7
        %3306 = vperm.xlu0 %3305, %v441
        %v3307 = vpop.permute.xlu0 %3306
        %3309 = vset.pattern.permute.xlu0 7
        %3310 = vperm.xlu0 %3309, %v442
        %v3311 = vpop.permute.xlu0 %3310
        %3313 = vset.pattern.permute.xlu0 7
        %3314 = vperm.xlu0 %3313, %v443
        %v3315 = vpop.permute.xlu0 %3314
        %3317 = vset.pattern.permute.xlu0 7
        %3318 = vperm.xlu0 %3317, %v444
        %v3319 = vpop.permute.xlu0 %3318
        %3321 = vset.pattern.permute.xlu0 7
        %3322 = vperm.xlu0 %3321, %v445
        %v3323 = vpop.permute.xlu0 %3322
        %3325 = vset.pattern.permute.xlu0 7
        %3326 = vperm.xlu0 %3325, %v446
        %v3327 = vpop.permute.xlu0 %3326
        %3329 = vset.pattern.permute.xlu0 7
        %3330 = vperm.xlu0 %3329, %v447
        %v3331 = vpop.permute.xlu0 %3330
        %3333 = vset.pattern.permute.xlu0 7
        %3334 = vperm.xlu0 %3333, %v448
        %v3335 = vpop.permute.xlu0 %3334
        %3337 = vset.pattern.permute.xlu0 7
        %3338 = vperm.xlu0 %3337, %v449
        %v3339 = vpop.permute.xlu0 %3338
        %3341 = vset.pattern.permute.xlu0 7
        %3342 = vperm.xlu0 %3341, %v450
        %v3343 = vpop.permute.xlu0 %3342
        %3345 = vset.pattern.permute.xlu0 7
        %3346 = vperm.xlu0 %3345, %v451
        %v3347 = vpop.permute.xlu0 %3346
        %3349 = vset.pattern.permute.xlu0 7
        %3350 = vperm.xlu0 %3349, %v452
        %v3351 = vpop.permute.xlu0 %3350
        %3353 = vset.pattern.permute.xlu0 7
        %3354 = vperm.xlu0 %3353, %v453
        %v3355 = vpop.permute.xlu0 %3354
        %3357 = vset.pattern.permute.xlu0 7
        %3358 = vperm.xlu0 %3357, %v454
        %v3359 = vpop.permute.xlu0 %3358
        %3361 = vset.pattern.permute.xlu0 7
        %3362 = vperm.xlu0 %3361, %v455
        %v3363 = vpop.permute.xlu0 %3362
        %3365 = vset.pattern.permute.xlu0 7
        %3366 = vperm.xlu0 %3365, %v456
        %v3367 = vpop.permute.xlu0 %3366
        %3369 = vset.pattern.permute.xlu0 7
        %3370 = vperm.xlu0 %3369, %v457
        %v3371 = vpop.permute.xlu0 %3370
        %3373 = vset.pattern.permute.xlu0 7
        %3374 = vperm.xlu0 %3373, %v458
        %v3375 = vpop.permute.xlu0 %3374
        %3377 = vset.pattern.permute.xlu0 7
        %3378 = vperm.xlu0 %3377, %v459
        %v3379 = vpop.permute.xlu0 %3378
        %v3381 = vmul.f32 %v581, %v3255
        %v3382 = vmul.f32 %v582, %v3259
        %v3383 = vmul.f32 %v583, %v3263
        %v3384 = vmul.f32 %v584, %v3267
        %v3385 = vmul.f32 %v585, %v3271
        %v3386 = vmul.f32 %v586, %v3275
        %v3387 = vmul.f32 %v587, %v3279
        %v3388 = vmul.f32 %v588, %v3283
        %v3389 = vmul.f32 %v589, %v3287
        %v3390 = vmul.f32 %v590, %v3291
        %v3391 = vmul.f32 %v591, %v3295
        %v3392 = vmul.f32 %v592, %v3299
        %v3393 = vmul.f32 %v593, %v3303
        %v3394 = vmul.f32 %v594, %v3307
        %v3395 = vmul.f32 %v595, %v3311
        %v3396 = vmul.f32 %v596, %v3315
        %v3397 = vmul.f32 %v597, %v3319
        %v3398 = vmul.f32 %v598, %v3323
        %v3399 = vmul.f32 %v599, %v3327
        %v3400 = vmul.f32 %v600, %v3331
        %v3401 = vmul.f32 %v601, %v3335
        %v3402 = vmul.f32 %v602, %v3339
        %v3403 = vmul.f32 %v603, %v3343
        %v3404 = vmul.f32 %v604, %v3347
        %v3405 = vmul.f32 %v605, %v3351
        %v3406 = vmul.f32 %v606, %v3355
        %v3407 = vmul.f32 %v607, %v3359
        %v3408 = vmul.f32 %v608, %v3363
        %v3409 = vmul.f32 %v609, %v3367
        %v3410 = vmul.f32 %v610, %v3371
        %v3411 = vmul.f32 %v579, %v3375
        %v3412 = vmul.f32 %v580, %v3379
        %v3413 = vpack.c.bf16 %v3382, %v3381
        %v3414 = vpack.c.bf16 %v3384, %v3383
        %v3415 = vpack.c.bf16 %v3386, %v3385
        %v3416 = vpack.c.bf16 %v3388, %v3387
        %v3417 = vpack.c.bf16 %v3390, %v3389
        %v3418 = vpack.c.bf16 %v3392, %v3391
        %v3419 = vpack.c.bf16 %v3394, %v3393
        %v3420 = vpack.c.bf16 %v3396, %v3395
        %v3421 = vpack.c.bf16 %v3398, %v3397
        %v3422 = vpack.c.bf16 %v3400, %v3399
        %v3423 = vpack.c.bf16 %v3402, %v3401
        %v3424 = vpack.c.bf16 %v3404, %v3403
        %v3425 = vpack.c.bf16 %v3406, %v3405
        %v3426 = vpack.c.bf16 %v3408, %v3407
        %v3427 = vpack.c.bf16 %v3410, %v3409
        %v3428 = vpack.c.bf16 %v3412, %v3411
        %v3429 = vld [vmem:[%s404 + $0xe0] sm:$0xf]
        %v3430 = vld [vmem:[%s404 + $0xe4] sm:$0xf]
        %v3431 = vld [vmem:[%s404 + $0xe8] sm:$0xf]
        %v3432 = vld [vmem:[%s404 + $0xec] sm:$0xf]
        %v3433 = vld [vmem:[%s404 + $0xf0] sm:$0xf]
        %v3434 = vld [vmem:[%s404 + $0xf4] sm:$0xf]
        %v3435 = vld [vmem:[%s404 + $0xf8] sm:$0xf]
        %v3436 = vld [vmem:[%s404 + $0xfc] sm:$0xf]
        %v3445 = vunpack.c.l.b16 %v3429
        %v3446 = vunpack.c.l.b16 %v3430
        %v3447 = vunpack.c.l.b16 %v3431
        %v3448 = vunpack.c.l.b16 %v3432
        %v3449 = vunpack.c.l.b16 %v3433
        %v3450 = vunpack.c.l.b16 %v3434
        %v3451 = vunpack.c.l.b16 %v3435
        %v3452 = vunpack.c.l.b16 %v3436
        %v3453 = vpack.c.b16 %v3446, %v3445
        %v3454 = vpack.c.b16 %v3448, %v3447
        %v3455 = vpack.c.b16 %v3450, %v3449
        %v3456 = vpack.c.b16 %v3452, %v3451
        %v3462 = vsel %vm1100, %v3413, 0
        %v3465 = vsel %vm1100, %v3414, 0
        %v3468 = vsel %vm1100, %v3415, 0
        %v3471 = vsel %vm1100, %v3416, 0
        %v3474 = vsel %vm1100, %v3417, 0
        %v3477 = vsel %vm1100, %v3418, 0
        %v3480 = vsel %vm1100, %v3419, 0
        %v3483 = vsel %vm1100, %v3420, 0
        %v3486 = vsel %vm1100, %v3421, 0
        %v3489 = vsel %vm1100, %v3422, 0
        %v3492 = vsel %vm1100, %v3423, 0
        %v3495 = vsel %vm1100, %v3424, 0
        %v3498 = vsel %vm1100, %v3425, 0
        %v3501 = vsel %vm1100, %v3426, 0
        %v3504 = vsel %vm1100, %v3427, 0
        %v3507 = vsel %vm1100, %v3428, 0
        %3509 = vmatpush.bf16.msra.mxu0 0
        %3510 = vmatpush.bf16.msra.mxu0 0
        %3511 = vmatpush.bf16.msra.mxu0 0
        %3512 = vmatpush.bf16.msra.mxu0 0
        %3513 = vmatpush.bf16.msra.mxu0 %v3456
        %3514 = vmatpush.bf16.msra.mxu0 %v3455
        %3515 = vmatpush.bf16.msra.mxu0 %v3454
        %3516 = vmatpush.bf16.msra.mxu0 %v3453
        %3517 = vmatmul.bf16.gmra.mxu0 %v3462
        %v3518 = vpop.f32.mrf.mxu0
        %v3519 = vadd.f32 0.0, %v3518
        %v3520 = vpop.f32.mrf.mxu0
        %v3521 = vadd.f32 0.0, %v3520
        %3522 = vmatmul.bf16.gmra.mxu0 %v3465
        %v3523 = vpop.f32.mrf.mxu0
        %v3524 = vadd.f32 0.0, %v3523
        %v3525 = vpop.f32.mrf.mxu0
        %v3526 = vadd.f32 0.0, %v3525
        %3527 = vmatmul.bf16.gmra.mxu0 %v3468
        %v3528 = vpop.f32.mrf.mxu0
        %v3529 = vadd.f32 0.0, %v3528
        %v3530 = vpop.f32.mrf.mxu0
        %v3531 = vadd.f32 0.0, %v3530
        %3532 = vmatmul.bf16.gmra.mxu0 %v3471
        %v3533 = vpop.f32.mrf.mxu0
        %v3534 = vadd.f32 0.0, %v3533
        %v3535 = vpop.f32.mrf.mxu0
        %v3536 = vadd.f32 0.0, %v3535
        %3537 = vmatmul.bf16.gmra.mxu0 %v3474
        %v3538 = vpop.f32.mrf.mxu0
        %v3539 = vadd.f32 0.0, %v3538
        %v3540 = vpop.f32.mrf.mxu0
        %v3541 = vadd.f32 0.0, %v3540
        %3542 = vmatmul.bf16.gmra.mxu0 %v3477
        %v3543 = vpop.f32.mrf.mxu0
        %v3544 = vadd.f32 0.0, %v3543
        %v3545 = vpop.f32.mrf.mxu0
        %v3546 = vadd.f32 0.0, %v3545
        %3547 = vmatmul.bf16.gmra.mxu0 %v3480
        %v3548 = vpop.f32.mrf.mxu0
        %v3549 = vadd.f32 0.0, %v3548
        %v3550 = vpop.f32.mrf.mxu0
        %v3551 = vadd.f32 0.0, %v3550
        %3552 = vmatmul.bf16.gmra.mxu0 %v3483
        %v3553 = vpop.f32.mrf.mxu0
        %v3554 = vadd.f32 0.0, %v3553
        %v3555 = vpop.f32.mrf.mxu0
        %v3556 = vadd.f32 0.0, %v3555
        %3557 = vmatmul.bf16.gmra.mxu0 %v3486
        %v3558 = vpop.f32.mrf.mxu0
        %v3559 = vadd.f32 0.0, %v3558
        %v3560 = vpop.f32.mrf.mxu0
        %v3561 = vadd.f32 0.0, %v3560
        %3562 = vmatmul.bf16.gmra.mxu0 %v3489
        %v3563 = vpop.f32.mrf.mxu0
        %v3564 = vadd.f32 0.0, %v3563
        %v3565 = vpop.f32.mrf.mxu0
        %v3566 = vadd.f32 0.0, %v3565
        %3567 = vmatmul.bf16.gmra.mxu0 %v3492
        %v3568 = vpop.f32.mrf.mxu0
        %v3569 = vadd.f32 0.0, %v3568
        %v3570 = vpop.f32.mrf.mxu0
        %v3571 = vadd.f32 0.0, %v3570
        %3572 = vmatmul.bf16.gmra.mxu0 %v3495
        %v3573 = vpop.f32.mrf.mxu0
        %v3574 = vadd.f32 0.0, %v3573
        %v3575 = vpop.f32.mrf.mxu0
        %v3576 = vadd.f32 0.0, %v3575
        %3577 = vmatmul.bf16.gmra.mxu0 %v3498
        %v3578 = vpop.f32.mrf.mxu0
        %v3579 = vadd.f32 0.0, %v3578
        %v3580 = vpop.f32.mrf.mxu0
        %v3581 = vadd.f32 0.0, %v3580
        %3582 = vmatmul.bf16.gmra.mxu0 %v3501
        %v3583 = vpop.f32.mrf.mxu0
        %v3584 = vadd.f32 0.0, %v3583
        %v3585 = vpop.f32.mrf.mxu0
        %v3586 = vadd.f32 0.0, %v3585
        %3587 = vmatmul.bf16.gmra.mxu0 %v3504
        %v3588 = vpop.f32.mrf.mxu0
        %v3589 = vadd.f32 0.0, %v3588
        %v3590 = vpop.f32.mrf.mxu0
        %v3591 = vadd.f32 0.0, %v3590
        %3592 = vmatmul.bf16.gmra.mxu0 %v3507
        %v3593 = vpop.f32.mrf.mxu0
        %v3594 = vadd.f32 0.0, %v3593
        %v3595 = vpop.f32.mrf.mxu0
        %v3596 = vadd.f32 0.0, %v3595
        %3597 = vdwg.mxu0
        %v3598 = vadd.f32 %v3221, %v3519
        %v3599 = vadd.f32 %v3222, %v3521
        %v3600 = vadd.f32 %v3223, %v3524
        %v3601 = vadd.f32 %v3224, %v3526
        %v3602 = vadd.f32 %v3225, %v3529
        %v3603 = vadd.f32 %v3226, %v3531
        %v3604 = vadd.f32 %v3227, %v3534
        %v3605 = vadd.f32 %v3228, %v3536
        %v3606 = vadd.f32 %v3229, %v3539
        %v3607 = vadd.f32 %v3230, %v3541
        %v3608 = vadd.f32 %v3231, %v3544
        %v3609 = vadd.f32 %v3232, %v3546
        %v3610 = vadd.f32 %v3233, %v3549
        %v3611 = vadd.f32 %v3234, %v3551
        %v3612 = vadd.f32 %v3235, %v3554
        %v3613 = vadd.f32 %v3236, %v3556
        %v3614 = vadd.f32 %v3237, %v3559
        %v3615 = vadd.f32 %v3238, %v3561
        %v3616 = vadd.f32 %v3239, %v3564
        %v3617 = vadd.f32 %v3240, %v3566
        %v3618 = vadd.f32 %v3241, %v3569
        %v3619 = vadd.f32 %v3242, %v3571
        %v3620 = vadd.f32 %v3243, %v3574
        %v3621 = vadd.f32 %v3244, %v3576
        %v3622 = vadd.f32 %v3245, %v3579
        %v3623 = vadd.f32 %v3246, %v3581
        %v3624 = vadd.f32 %v3247, %v3584
        %v3625 = vadd.f32 %v3248, %v3586
        %v3626 = vadd.f32 %v3249, %v3589
        %v3627 = vadd.f32 %v3250, %v3591
        %v3628 = vadd.f32 %v3251, %v3594
        %v3629 = vadd.f32 %v3252, %v3596
        %3630 = vset.pattern.permute.xlu0 8
        %3631 = vperm.xlu0 %3630, %v428
        %v3632 = vpop.permute.xlu0 %3631
        %3634 = vset.pattern.permute.xlu0 8
        %3635 = vperm.xlu0 %3634, %v429
        %v3636 = vpop.permute.xlu0 %3635
        %3638 = vset.pattern.permute.xlu0 8
        %3639 = vperm.xlu0 %3638, %v430
        %v3640 = vpop.permute.xlu0 %3639
        %3642 = vset.pattern.permute.xlu0 8
        %3643 = vperm.xlu0 %3642, %v431
        %v3644 = vpop.permute.xlu0 %3643
        %3646 = vset.pattern.permute.xlu0 8
        %3647 = vperm.xlu0 %3646, %v432
        %v3648 = vpop.permute.xlu0 %3647
        %3650 = vset.pattern.permute.xlu0 8
        %3651 = vperm.xlu0 %3650, %v433
        %v3652 = vpop.permute.xlu0 %3651
        %3654 = vset.pattern.permute.xlu0 8
        %3655 = vperm.xlu0 %3654, %v434
        %v3656 = vpop.permute.xlu0 %3655
        %3658 = vset.pattern.permute.xlu0 8
        %3659 = vperm.xlu0 %3658, %v435
        %v3660 = vpop.permute.xlu0 %3659
        %3662 = vset.pattern.permute.xlu0 8
        %3663 = vperm.xlu0 %3662, %v436
        %v3664 = vpop.permute.xlu0 %3663
        %3666 = vset.pattern.permute.xlu0 8
        %3667 = vperm.xlu0 %3666, %v437
        %v3668 = vpop.permute.xlu0 %3667
        %3670 = vset.pattern.permute.xlu0 8
        %3671 = vperm.xlu0 %3670, %v438
        %v3672 = vpop.permute.xlu0 %3671
        %3674 = vset.pattern.permute.xlu0 8
        %3675 = vperm.xlu0 %3674, %v439
        %v3676 = vpop.permute.xlu0 %3675
        %3678 = vset.pattern.permute.xlu0 8
        %3679 = vperm.xlu0 %3678, %v440
        %v3680 = vpop.permute.xlu0 %3679
        %3682 = vset.pattern.permute.xlu0 8
        %3683 = vperm.xlu0 %3682, %v441
        %v3684 = vpop.permute.xlu0 %3683
        %3686 = vset.pattern.permute.xlu0 8
        %3687 = vperm.xlu0 %3686, %v442
        %v3688 = vpop.permute.xlu0 %3687
        %3690 = vset.pattern.permute.xlu0 8
        %3691 = vperm.xlu0 %3690, %v443
        %v3692 = vpop.permute.xlu0 %3691
        %3694 = vset.pattern.permute.xlu0 8
        %3695 = vperm.xlu0 %3694, %v444
        %v3696 = vpop.permute.xlu0 %3695
        %3698 = vset.pattern.permute.xlu0 8
        %3699 = vperm.xlu0 %3698, %v445
        %v3700 = vpop.permute.xlu0 %3699
        %3702 = vset.pattern.permute.xlu0 8
        %3703 = vperm.xlu0 %3702, %v446
        %v3704 = vpop.permute.xlu0 %3703
        %3706 = vset.pattern.permute.xlu0 8
        %3707 = vperm.xlu0 %3706, %v447
        %v3708 = vpop.permute.xlu0 %3707
        %3710 = vset.pattern.permute.xlu0 8
        %3711 = vperm.xlu0 %3710, %v448
        %v3712 = vpop.permute.xlu0 %3711
        %3714 = vset.pattern.permute.xlu0 8
        %3715 = vperm.xlu0 %3714, %v449
        %v3716 = vpop.permute.xlu0 %3715
        %3718 = vset.pattern.permute.xlu0 8
        %3719 = vperm.xlu0 %3718, %v450
        %v3720 = vpop.permute.xlu0 %3719
        %3722 = vset.pattern.permute.xlu0 8
        %3723 = vperm.xlu0 %3722, %v451
        %v3724 = vpop.permute.xlu0 %3723
        %3726 = vset.pattern.permute.xlu0 8
        %3727 = vperm.xlu0 %3726, %v452
        %v3728 = vpop.permute.xlu0 %3727
        %3730 = vset.pattern.permute.xlu0 8
        %3731 = vperm.xlu0 %3730, %v453
        %v3732 = vpop.permute.xlu0 %3731
        %3734 = vset.pattern.permute.xlu0 8
        %3735 = vperm.xlu0 %3734, %v454
        %v3736 = vpop.permute.xlu0 %3735
        %3738 = vset.pattern.permute.xlu0 8
        %3739 = vperm.xlu0 %3738, %v455
        %v3740 = vpop.permute.xlu0 %3739
        %3742 = vset.pattern.permute.xlu0 8
        %3743 = vperm.xlu0 %3742, %v456
        %v3744 = vpop.permute.xlu0 %3743
        %3746 = vset.pattern.permute.xlu0 8
        %3747 = vperm.xlu0 %3746, %v457
        %v3748 = vpop.permute.xlu0 %3747
        %3750 = vset.pattern.permute.xlu0 8
        %3751 = vperm.xlu0 %3750, %v458
        %v3752 = vpop.permute.xlu0 %3751
        %3754 = vset.pattern.permute.xlu0 8
        %3755 = vperm.xlu0 %3754, %v459
        %v3756 = vpop.permute.xlu0 %3755
        %v3758 = vmul.f32 %v1460, %v3632
        %v3759 = vmul.f32 %v1459, %v3636
        %v3760 = vmul.f32 %v1458, %v3640
        %v3761 = vmul.f32 %v1457, %v3644
        %v3762 = vmul.f32 %v1456, %v3648
        %v3763 = vmul.f32 %v1455, %v3652
        %v3764 = vmul.f32 %v1454, %v3656
        %v3765 = vmul.f32 %v1453, %v3660
        %v3766 = vmul.f32 %v1452, %v3664
        %v3767 = vmul.f32 %v1451, %v3668
        %v3768 = vmul.f32 %v1450, %v3672
        %v3769 = vmul.f32 %v1449, %v3676
        %v3770 = vmul.f32 %v1448, %v3680
        %v3771 = vmul.f32 %v1447, %v3684
        %v3772 = vmul.f32 %v1446, %v3688
        %v3773 = vmul.f32 %v1445, %v3692
        %v3774 = vmul.f32 %v1444, %v3696
        %v3775 = vmul.f32 %v1443, %v3700
        %v3776 = vmul.f32 %v1442, %v3704
        %v3777 = vmul.f32 %v1441, %v3708
        %v3778 = vmul.f32 %v1440, %v3712
        %v3779 = vmul.f32 %v1439, %v3716
        %v3780 = vmul.f32 %v1438, %v3720
        %v3781 = vmul.f32 %v1437, %v3724
        %v3782 = vmul.f32 %v1436, %v3728
        %v3783 = vmul.f32 %v1435, %v3732
        %v3784 = vmul.f32 %v1434, %v3736
        %v3785 = vmul.f32 %v1433, %v3740
        %v3786 = vmul.f32 %v1432, %v3744
        %v3787 = vmul.f32 %v1463, %v3748
        %v3788 = vmul.f32 %v1462, %v3752
        %v3789 = vmul.f32 %v1461, %v3756
        %v3790 = vpack.c.bf16 %v3759, %v3758
        %v3791 = vpack.c.bf16 %v3761, %v3760
        %v3792 = vpack.c.bf16 %v3763, %v3762
        %v3793 = vpack.c.bf16 %v3765, %v3764
        %v3794 = vpack.c.bf16 %v3767, %v3766
        %v3795 = vpack.c.bf16 %v3769, %v3768
        %v3796 = vpack.c.bf16 %v3771, %v3770
        %v3797 = vpack.c.bf16 %v3773, %v3772
        %v3798 = vpack.c.bf16 %v3775, %v3774
        %v3799 = vpack.c.bf16 %v3777, %v3776
        %v3800 = vpack.c.bf16 %v3779, %v3778
        %v3801 = vpack.c.bf16 %v3781, %v3780
        %v3802 = vpack.c.bf16 %v3783, %v3782
        %v3803 = vpack.c.bf16 %v3785, %v3784
        %v3804 = vpack.c.bf16 %v3787, %v3786
        %v3805 = vpack.c.bf16 %v3789, %v3788
        %v3806 = vld [vmem:[%s404 + $0x100] sm:$0xf]
        %v3807 = vld [vmem:[%s404 + $0x104] sm:$0xf]
        %v3808 = vld [vmem:[%s404 + $0x108] sm:$0xf]
        %v3809 = vld [vmem:[%s404 + $0x10c] sm:$0xf]
        %v3810 = vld [vmem:[%s404 + $0x110] sm:$0xf]
        %v3811 = vld [vmem:[%s404 + $0x114] sm:$0xf]
        %v3812 = vld [vmem:[%s404 + $0x118] sm:$0xf]
        %v3813 = vld [vmem:[%s404 + $0x11c] sm:$0xf]
        %v3822 = vunpack.c.l.b16 %v3806
        %v3823 = vunpack.c.l.b16 %v3807
        %v3824 = vunpack.c.l.b16 %v3808
        %v3825 = vunpack.c.l.b16 %v3809
        %v3826 = vunpack.c.l.b16 %v3810
        %v3827 = vunpack.c.l.b16 %v3811
        %v3828 = vunpack.c.l.b16 %v3812
        %v3829 = vunpack.c.l.b16 %v3813
        %v3830 = vpack.c.b16 %v3823, %v3822
        %v3831 = vpack.c.b16 %v3825, %v3824
        %v3832 = vpack.c.b16 %v3827, %v3826
        %v3833 = vpack.c.b16 %v3829, %v3828
        %v3839 = vsel %vm1100, %v3790, 0
        %v3842 = vsel %vm1100, %v3791, 0
        %v3845 = vsel %vm1100, %v3792, 0
        %v3848 = vsel %vm1100, %v3793, 0
        %v3851 = vsel %vm1100, %v3794, 0
        %v3854 = vsel %vm1100, %v3795, 0
        %v3857 = vsel %vm1100, %v3796, 0
        %v3860 = vsel %vm1100, %v3797, 0
        %v3863 = vsel %vm1100, %v3798, 0
        %v3866 = vsel %vm1100, %v3799, 0
        %v3869 = vsel %vm1100, %v3800, 0
        %v3872 = vsel %vm1100, %v3801, 0
        %v3875 = vsel %vm1100, %v3802, 0
        %v3878 = vsel %vm1100, %v3803, 0
        %v3881 = vsel %vm1100, %v3804, 0
        %v3884 = vsel %vm1100, %v3805, 0
        %3886 = vmatpush.bf16.msra.mxu0 0
        %3887 = vmatpush.bf16.msra.mxu0 0
        %3888 = vmatpush.bf16.msra.mxu0 0
        %3889 = vmatpush.bf16.msra.mxu0 0
        %3890 = vmatpush.bf16.msra.mxu0 %v3833
        %3891 = vmatpush.bf16.msra.mxu0 %v3832
        %3892 = vmatpush.bf16.msra.mxu0 %v3831
        %3893 = vmatpush.bf16.msra.mxu0 %v3830
        %3894 = vmatmul.bf16.gmra.mxu0 %v3839
        %v3895 = vpop.f32.mrf.mxu0
        %v3896 = vadd.f32 0.0, %v3895
        %v3897 = vpop.f32.mrf.mxu0
        %v3898 = vadd.f32 0.0, %v3897
        %3899 = vmatmul.bf16.gmra.mxu0 %v3842
        %v3900 = vpop.f32.mrf.mxu0
        %v3901 = vadd.f32 0.0, %v3900
        %v3902 = vpop.f32.mrf.mxu0
        %v3903 = vadd.f32 0.0, %v3902
        %3904 = vmatmul.bf16.gmra.mxu0 %v3845
        %v3905 = vpop.f32.mrf.mxu0
        %v3906 = vadd.f32 0.0, %v3905
        %v3907 = vpop.f32.mrf.mxu0
        %v3908 = vadd.f32 0.0, %v3907
        %3909 = vmatmul.bf16.gmra.mxu0 %v3848
        %v3910 = vpop.f32.mrf.mxu0
        %v3911 = vadd.f32 0.0, %v3910
        %v3912 = vpop.f32.mrf.mxu0
        %v3913 = vadd.f32 0.0, %v3912
        %3914 = vmatmul.bf16.gmra.mxu0 %v3851
        %v3915 = vpop.f32.mrf.mxu0
        %v3916 = vadd.f32 0.0, %v3915
        %v3917 = vpop.f32.mrf.mxu0
        %v3918 = vadd.f32 0.0, %v3917
        %3919 = vmatmul.bf16.gmra.mxu0 %v3854
        %v3920 = vpop.f32.mrf.mxu0
        %v3921 = vadd.f32 0.0, %v3920
        %v3922 = vpop.f32.mrf.mxu0
        %v3923 = vadd.f32 0.0, %v3922
        %3924 = vmatmul.bf16.gmra.mxu0 %v3857
        %v3925 = vpop.f32.mrf.mxu0
        %v3926 = vadd.f32 0.0, %v3925
        %v3927 = vpop.f32.mrf.mxu0
        %v3928 = vadd.f32 0.0, %v3927
        %3929 = vmatmul.bf16.gmra.mxu0 %v3860
        %v3930 = vpop.f32.mrf.mxu0
        %v3931 = vadd.f32 0.0, %v3930
        %v3932 = vpop.f32.mrf.mxu0
        %v3933 = vadd.f32 0.0, %v3932
        %3934 = vmatmul.bf16.gmra.mxu0 %v3863
        %v3935 = vpop.f32.mrf.mxu0
        %v3936 = vadd.f32 0.0, %v3935
        %v3937 = vpop.f32.mrf.mxu0
        %v3938 = vadd.f32 0.0, %v3937
        %3939 = vmatmul.bf16.gmra.mxu0 %v3866
        %v3940 = vpop.f32.mrf.mxu0
        %v3941 = vadd.f32 0.0, %v3940
        %v3942 = vpop.f32.mrf.mxu0
        %v3943 = vadd.f32 0.0, %v3942
        %3944 = vmatmul.bf16.gmra.mxu0 %v3869
        %v3945 = vpop.f32.mrf.mxu0
        %v3946 = vadd.f32 0.0, %v3945
        %v3947 = vpop.f32.mrf.mxu0
        %v3948 = vadd.f32 0.0, %v3947
        %3949 = vmatmul.bf16.gmra.mxu0 %v3872
        %v3950 = vpop.f32.mrf.mxu0
        %v3951 = vadd.f32 0.0, %v3950
        %v3952 = vpop.f32.mrf.mxu0
        %v3953 = vadd.f32 0.0, %v3952
        %3954 = vmatmul.bf16.gmra.mxu0 %v3875
        %v3955 = vpop.f32.mrf.mxu0
        %v3956 = vadd.f32 0.0, %v3955
        %v3957 = vpop.f32.mrf.mxu0
        %v3958 = vadd.f32 0.0, %v3957
        %3959 = vmatmul.bf16.gmra.mxu0 %v3878
        %v3960 = vpop.f32.mrf.mxu0
        %v3961 = vadd.f32 0.0, %v3960
        %v3962 = vpop.f32.mrf.mxu0
        %v3963 = vadd.f32 0.0, %v3962
        %3964 = vmatmul.bf16.gmra.mxu0 %v3881
        %v3965 = vpop.f32.mrf.mxu0
        %v3966 = vadd.f32 0.0, %v3965
        %v3967 = vpop.f32.mrf.mxu0
        %v3968 = vadd.f32 0.0, %v3967
        %3969 = vmatmul.bf16.gmra.mxu0 %v3884
        %v3970 = vpop.f32.mrf.mxu0
        %v3971 = vadd.f32 0.0, %v3970
        %v3972 = vpop.f32.mrf.mxu0
        %v3973 = vadd.f32 0.0, %v3972
        %3974 = vdwg.mxu0
        %v3975 = vadd.f32 %v3598, %v3896
        %v3976 = vadd.f32 %v3599, %v3898
        %v3977 = vadd.f32 %v3600, %v3901
        %v3978 = vadd.f32 %v3601, %v3903
        %v3979 = vadd.f32 %v3602, %v3906
        %v3980 = vadd.f32 %v3603, %v3908
        %v3981 = vadd.f32 %v3604, %v3911
        %v3982 = vadd.f32 %v3605, %v3913
        %v3983 = vadd.f32 %v3606, %v3916
        %v3984 = vadd.f32 %v3607, %v3918
        %v3985 = vadd.f32 %v3608, %v3921
        %v3986 = vadd.f32 %v3609, %v3923
        %v3987 = vadd.f32 %v3610, %v3926
        %v3988 = vadd.f32 %v3611, %v3928
        %v3989 = vadd.f32 %v3612, %v3931
        %v3990 = vadd.f32 %v3613, %v3933
        %v3991 = vadd.f32 %v3614, %v3936
        %v3992 = vadd.f32 %v3615, %v3938
        %v3993 = vadd.f32 %v3616, %v3941
        %v3994 = vadd.f32 %v3617, %v3943
        %v3995 = vadd.f32 %v3618, %v3946
        %v3996 = vadd.f32 %v3619, %v3948
        %v3997 = vadd.f32 %v3620, %v3951
        %v3998 = vadd.f32 %v3621, %v3953
        %v3999 = vadd.f32 %v3622, %v3956
        %v4000 = vadd.f32 %v3623, %v3958
        %v4001 = vadd.f32 %v3624, %v3961
        %v4002 = vadd.f32 %v3625, %v3963
        %v4003 = vadd.f32 %v3626, %v3966
        %v4004 = vadd.f32 %v3627, %v3968
        %v4005 = vadd.f32 %v3628, %v3971
        %v4006 = vadd.f32 %v3629, %v3973
        %v4008 = vperm.slane %v578, 0
        %v4010 = vadd.f32 %v3975, %v4008
        %v4011 = vadd.f32 %v3976, %v4008
        %v4012 = vadd.f32 %v3977, %v4008
        %v4013 = vadd.f32 %v3978, %v4008
        %v4014 = vadd.f32 %v3979, %v4008
        %v4015 = vadd.f32 %v3980, %v4008
        %v4016 = vadd.f32 %v3981, %v4008
        %v4017 = vadd.f32 %v3982, %v4008
        %v4018 = vadd.f32 %v3983, %v4008
        %v4019 = vadd.f32 %v3984, %v4008
        %v4020 = vadd.f32 %v3985, %v4008
        %v4021 = vadd.f32 %v3986, %v4008
        %v4022 = vadd.f32 %v3987, %v4008
        %v4023 = vadd.f32 %v3988, %v4008
        %v4024 = vadd.f32 %v3989, %v4008
        %v4025 = vadd.f32 %v3990, %v4008
        %v4026 = vadd.f32 %v3991, %v4008
        %v4027 = vadd.f32 %v3992, %v4008
        %v4028 = vadd.f32 %v3993, %v4008
        %v4029 = vadd.f32 %v3994, %v4008
        %v4030 = vadd.f32 %v3995, %v4008
        %v4031 = vadd.f32 %v3996, %v4008
        %v4032 = vadd.f32 %v3997, %v4008
        %v4033 = vadd.f32 %v3998, %v4008
        %v4034 = vadd.f32 %v3999, %v4008
        %v4035 = vadd.f32 %v4000, %v4008
        %v4036 = vadd.f32 %v4001, %v4008
        %v4037 = vadd.f32 %v4002, %v4008
        %v4038 = vadd.f32 %v4003, %v4008
        %v4039 = vadd.f32 %v4004, %v4008
        %v4040 = vadd.f32 %v4005, %v4008
        %v4041 = vadd.f32 %v4006, %v4008
        %v4042 = vsel %vm1100, %v4010, 0.0
        %v4043 = vsel %vm1100, %v4011, 0.0
        %v4044 = vadd.f32 %v4042, %v4043
        %v4045 = vsel %vm1100, %v4012, 0.0
        %v4046 = vadd.f32 %v4044, %v4045
        %v4047 = vsel %vm1100, %v4013, 0.0
        %v4048 = vadd.f32 %v4046, %v4047
        %v4049 = vsel %vm1100, %v4014, 0.0
        %v4050 = vadd.f32 %v4048, %v4049
        %v4051 = vsel %vm1100, %v4015, 0.0
        %v4052 = vadd.f32 %v4050, %v4051
        %v4053 = vsel %vm1100, %v4016, 0.0
        %v4054 = vadd.f32 %v4052, %v4053
        %v4055 = vsel %vm1100, %v4017, 0.0
        %v4056 = vadd.f32 %v4054, %v4055
        %v4057 = vsel %vm1100, %v4018, 0.0
        %v4058 = vadd.f32 %v4056, %v4057
        %v4059 = vsel %vm1100, %v4019, 0.0
        %v4060 = vadd.f32 %v4058, %v4059
        %v4061 = vsel %vm1100, %v4020, 0.0
        %v4062 = vadd.f32 %v4060, %v4061
        %v4063 = vsel %vm1100, %v4021, 0.0
        %v4064 = vadd.f32 %v4062, %v4063
        %v4065 = vsel %vm1100, %v4022, 0.0
        %v4066 = vadd.f32 %v4064, %v4065
        %v4067 = vsel %vm1100, %v4023, 0.0
        %v4068 = vadd.f32 %v4066, %v4067
        %v4069 = vsel %vm1100, %v4024, 0.0
        %v4070 = vadd.f32 %v4068, %v4069
        %v4071 = vsel %vm1100, %v4025, 0.0
        %v4072 = vadd.f32 %v4070, %v4071
        %v4073 = vsel %vm1100, %v4026, 0.0
        %v4074 = vadd.f32 %v4072, %v4073
        %v4075 = vsel %vm1100, %v4027, 0.0
        %v4076 = vadd.f32 %v4074, %v4075
        %v4077 = vsel %vm1100, %v4028, 0.0
        %v4078 = vadd.f32 %v4076, %v4077
        %v4079 = vsel %vm1100, %v4029, 0.0
        %v4080 = vadd.f32 %v4078, %v4079
        %v4081 = vsel %vm1100, %v4030, 0.0
        %v4082 = vadd.f32 %v4080, %v4081
        %v4083 = vsel %vm1100, %v4031, 0.0
        %v4084 = vadd.f32 %v4082, %v4083
        %v4085 = vsel %vm1100, %v4032, 0.0
        %v4086 = vadd.f32 %v4084, %v4085
        %v4087 = vsel %vm1100, %v4033, 0.0
        %v4088 = vadd.f32 %v4086, %v4087
        %v4089 = vsel %vm1100, %v4034, 0.0
        %v4090 = vadd.f32 %v4088, %v4089
        %v4091 = vsel %vm1100, %v4035, 0.0
        %v4092 = vadd.f32 %v4090, %v4091
        %v4093 = vsel %vm1100, %v4036, 0.0
        %v4094 = vadd.f32 %v4092, %v4093
        %v4095 = vsel %vm1100, %v4037, 0.0
        %v4096 = vadd.f32 %v4094, %v4095
        %v4097 = vsel %vm1100, %v4038, 0.0
        %v4098 = vadd.f32 %v4096, %v4097
        %v4099 = vsel %vm1100, %v4039, 0.0
        %v4100 = vadd.f32 %v4098, %v4099
        %v4101 = vsel %vm1100, %v4040, 0.0
        %v4102 = vadd.f32 %v4100, %v4101
        %v4103 = vsel %vm1100, %v4041, 0.0
        %v4104 = vadd.f32 %v4102, %v4103
        %v4105 = vrot.slane %v4104, 4
        %v4106 = vadd.f32 %v4104, %v4105
        %v4107 = vrot.slane %v4106, 2
        %v4108 = vadd.f32 %v4106, %v4107
        %v4109 = vrot.slane %v4108, 1
        %v4110 = vadd.f32 %v4108, %v4109
        %v4111 = vmul.f32 %v4010, %v4010
        %v4112 = vmul.f32 %v4011, %v4011
        %v4113 = vmul.f32 %v4012, %v4012
        %v4114 = vmul.f32 %v4013, %v4013
        %v4115 = vmul.f32 %v4014, %v4014
        %v4116 = vmul.f32 %v4015, %v4015
        %v4117 = vmul.f32 %v4016, %v4016
        %v4118 = vmul.f32 %v4017, %v4017
        %v4119 = vmul.f32 %v4018, %v4018
        %v4120 = vmul.f32 %v4019, %v4019
        %v4121 = vmul.f32 %v4020, %v4020
        %v4122 = vmul.f32 %v4021, %v4021
        %v4123 = vmul.f32 %v4022, %v4022
        %v4124 = vmul.f32 %v4023, %v4023
        %v4125 = vmul.f32 %v4024, %v4024
        %v4126 = vmul.f32 %v4025, %v4025
        %v4127 = vmul.f32 %v4026, %v4026
        %v4128 = vmul.f32 %v4027, %v4027
        %v4129 = vmul.f32 %v4028, %v4028
        %v4130 = vmul.f32 %v4029, %v4029
        %v4131 = vmul.f32 %v4030, %v4030
        %v4132 = vmul.f32 %v4031, %v4031
        %v4133 = vmul.f32 %v4032, %v4032
        %v4134 = vmul.f32 %v4033, %v4033
        %v4135 = vmul.f32 %v4034, %v4034
        %v4136 = vmul.f32 %v4035, %v4035
        %v4137 = vmul.f32 %v4036, %v4036
        %v4138 = vmul.f32 %v4037, %v4037
        %v4139 = vmul.f32 %v4038, %v4038
        %v4140 = vmul.f32 %v4039, %v4039
        %v4141 = vmul.f32 %v4040, %v4040
        %v4142 = vmul.f32 %v4041, %v4041
        %v4143 = vsel %vm1100, %v4111, 0.0
        %v4144 = vsel %vm1100, %v4112, 0.0
        %v4145 = vadd.f32 %v4143, %v4144
        %v4146 = vsel %vm1100, %v4113, 0.0
        %v4147 = vadd.f32 %v4145, %v4146
        %v4148 = vsel %vm1100, %v4114, 0.0
        %v4149 = vadd.f32 %v4147, %v4148
        %v4150 = vsel %vm1100, %v4115, 0.0
        %v4151 = vadd.f32 %v4149, %v4150
        %v4152 = vsel %vm1100, %v4116, 0.0
        %v4153 = vadd.f32 %v4151, %v4152
        %v4154 = vsel %vm1100, %v4117, 0.0
        %v4155 = vadd.f32 %v4153, %v4154
        %v4156 = vsel %vm1100, %v4118, 0.0
        %v4157 = vadd.f32 %v4155, %v4156
        %v4158 = vsel %vm1100, %v4119, 0.0
        %v4159 = vadd.f32 %v4157, %v4158
        %v4160 = vsel %vm1100, %v4120, 0.0
        %v4161 = vadd.f32 %v4159, %v4160
        %v4162 = vsel %vm1100, %v4121, 0.0
        %v4163 = vadd.f32 %v4161, %v4162
        %v4164 = vsel %vm1100, %v4122, 0.0
        %v4165 = vadd.f32 %v4163, %v4164
        %v4166 = vsel %vm1100, %v4123, 0.0
        %v4167 = vadd.f32 %v4165, %v4166
        %v4168 = vsel %vm1100, %v4124, 0.0
        %v4169 = vadd.f32 %v4167, %v4168
        %v4170 = vsel %vm1100, %v4125, 0.0
        %v4171 = vadd.f32 %v4169, %v4170
        %v4172 = vsel %vm1100, %v4126, 0.0
        %v4173 = vadd.f32 %v4171, %v4172
        %v4174 = vsel %vm1100, %v4127, 0.0
        %v4175 = vadd.f32 %v4173, %v4174
        %v4176 = vsel %vm1100, %v4128, 0.0
        %v4177 = vadd.f32 %v4175, %v4176
        %v4178 = vsel %vm1100, %v4129, 0.0
        %v4179 = vadd.f32 %v4177, %v4178
        %v4180 = vsel %vm1100, %v4130, 0.0
        %v4181 = vadd.f32 %v4179, %v4180
        %v4182 = vsel %vm1100, %v4131, 0.0
        %v4183 = vadd.f32 %v4181, %v4182
        %v4184 = vsel %vm1100, %v4132, 0.0
        %v4185 = vadd.f32 %v4183, %v4184
        %v4186 = vsel %vm1100, %v4133, 0.0
        %v4187 = vadd.f32 %v4185, %v4186
        %v4188 = vsel %vm1100, %v4134, 0.0
        %v4189 = vadd.f32 %v4187, %v4188
        %v4190 = vsel %vm1100, %v4135, 0.0
        %v4191 = vadd.f32 %v4189, %v4190
        %v4192 = vsel %vm1100, %v4136, 0.0
        %v4193 = vadd.f32 %v4191, %v4192
        %v4194 = vsel %vm1100, %v4137, 0.0
        %v4195 = vadd.f32 %v4193, %v4194
        %v4196 = vsel %vm1100, %v4138, 0.0
        %v4197 = vadd.f32 %v4195, %v4196
        %v4198 = vsel %vm1100, %v4139, 0.0
        %v4199 = vadd.f32 %v4197, %v4198
        %v4200 = vsel %vm1100, %v4140, 0.0
        %v4201 = vadd.f32 %v4199, %v4200
        %v4202 = vsel %vm1100, %v4141, 0.0
        %v4203 = vadd.f32 %v4201, %v4202
        %v4204 = vsel %vm1100, %v4142, 0.0
        %v4205 = vadd.f32 %v4203, %v4204
        %v4206 = vrot.slane %v4205, 4
        %v4207 = vadd.f32 %v4205, %v4206
        %v4208 = vrot.slane %v4207, 2
        %v4209 = vadd.f32 %v4207, %v4208
        %v4210 = vrot.slane %v4209, 1
        %v4211 = vadd.f32 %v4209, %v4210
        %v4213 = vsel %vm1100, %v4110, 0
        %4215 = vmatpush.msra.mxu0 0.0
        %4216 = vmatpush.msra.mxu0 0.0
        %4217 = vmatpush.msra.mxu0 0.0
        %4218 = vmatpush.msra.mxu0 0.0
        %4219 = vmatpush.msra.mxu0 0.0
        %4220 = vmatpush.msra.mxu0 0.0
        %4221 = vmatpush.msra.mxu0 0.0
        %4222 = vmatpush.msra.mxu0 0.0
        %4223 = vmatpush.msra.mxu0 %v513
        %4224 = vmatpush.msra.mxu0 %v512
        %4225 = vmatpush.msra.mxu0 %v511
        %4226 = vmatpush.msra.mxu0 %v510
        %4227 = vmatpush.msra.mxu0 %v509
        %4228 = vmatpush.msra.mxu0 %v508
        %4229 = vmatpush.msra.mxu0 %v507
        %4230 = vmatpush.msra.mxu0 %v506
        %4231 = vmatmul.f32.gmra.mxu0 %v4213
        %v4232 = vpop.f32.mrf.mxu0
        %v4233 = vadd.f32 0.0, %v4232
        %4234 = vdwg.mxu0
        %v4235 = vrcp.pop 512.0
        %v4236 = vmul.f32 512.0, %v4235
        %v4237 = vsub.f32 1.0, %v4236
        %v4238 = vmul.f32 %v4235, %v4237
        %v4239 = vadd.f32 %v4235, %v4238
        %vm4240 = vweird.f32 %v4235
        %v4241 = vsel %vm4240, %v4235, %v4239
        %v4242 = vmul.f32 %v4233, %v4241
        %v4244 = vsel %vm1100, %v4211, 0
        %4246 = vmatpush.msra.mxu0 0.0
        %4247 = vmatpush.msra.mxu0 0.0
        %4248 = vmatpush.msra.mxu0 0.0
        %4249 = vmatpush.msra.mxu0 0.0
        %4250 = vmatpush.msra.mxu0 0.0
        %4251 = vmatpush.msra.mxu0 0.0
        %4252 = vmatpush.msra.mxu0 0.0
        %4253 = vmatpush.msra.mxu0 0.0
        %4254 = vmatpush.msra.mxu0 %v513
        %4255 = vmatpush.msra.mxu0 %v512
        %4256 = vmatpush.msra.mxu0 %v511
        %4257 = vmatpush.msra.mxu0 %v510
        %4258 = vmatpush.msra.mxu0 %v509
        %4259 = vmatpush.msra.mxu0 %v508
        %4260 = vmatpush.msra.mxu0 %v507
        %4261 = vmatpush.msra.mxu0 %v506
        %4262 = vmatmul.f32.gmra.mxu0 %v4244
        %v4263 = vpop.f32.mrf.mxu0
        %v4264 = vadd.f32 0.0, %v4263
        %4265 = vdwg.mxu0
        %v4266 = vmul.f32 %v4264, %v4241
        %v4267 = vmul.f32 %v4242, %v4242
        %v4268 = vsub.f32 %v4266, %v4267
        %vm4269 = vcmask 261120
        %v4271 = vsel %vm4269, %v4242, 0
        %4273 = vmatpush.msra.mxu0 0.0
        %4274 = vmatpush.msra.mxu0 0.0
        %4275 = vmatpush.msra.mxu0 0.0
        %4276 = vmatpush.msra.mxu0 0.0
        %4277 = vmatpush.msra.mxu0 0.0
        %4278 = vmatpush.msra.mxu0 0.0
        %4279 = vmatpush.msra.mxu0 0.0
        %4280 = vmatpush.msra.mxu0 0.0
        %4281 = vmatpush.msra.mxu0 0.0
        %4282 = vmatpush.msra.mxu0 0.0
        %4283 = vmatpush.msra.mxu0 0.0
        %4284 = vmatpush.msra.mxu0 0.0
        %4285 = vmatpush.msra.mxu0 %v545
        %4286 = vmatpush.msra.mxu0 %v544
        %4287 = vmatpush.msra.mxu0 %v543
        %4288 = vmatpush.msra.mxu0 %v542
        %4289 = vmatmul.f32.gmra.mxu0 %v4271
        %v4290 = vpop.f32.mrf.mxu0
        %v4291 = vadd.f32 0.0, %v4290
        %4292 = vdwg.mxu0
        %v4294 = vsel %vm4269, %v4268, 0
        %4296 = vmatpush.msra.mxu0 0.0
        %4297 = vmatpush.msra.mxu0 0.0
        %4298 = vmatpush.msra.mxu0 0.0
        %4299 = vmatpush.msra.mxu0 0.0
        %4300 = vmatpush.msra.mxu0 0.0
        %4301 = vmatpush.msra.mxu0 0.0
        %4302 = vmatpush.msra.mxu0 0.0
        %4303 = vmatpush.msra.mxu0 0.0
        %4304 = vmatpush.msra.mxu0 0.0
        %4305 = vmatpush.msra.mxu0 0.0
        %4306 = vmatpush.msra.mxu0 0.0
        %4307 = vmatpush.msra.mxu0 0.0
        %4308 = vmatpush.msra.mxu0 %v545
        %4309 = vmatpush.msra.mxu0 %v544
        %4310 = vmatpush.msra.mxu0 %v543
        %4311 = vmatpush.msra.mxu0 %v542
        %4312 = vmatmul.f32.gmra.mxu0 %v4294
        %v4313 = vpop.f32.mrf.mxu0
        %v4314 = vadd.f32 1e-05, %v4313
        %4315 = vdwg.mxu0
        %v4316 = vrsqrt.pop %v4314
        %v4317 = vmul.f32 %v4316, %v4314
        %v4318 = vmul.f32 %v4317, %v4316
        %v4319 = vmul.f32 0.5, %v4318
        %v4320 = vsub.f32 1.5, %v4319
        %v4321 = vmul.f32 %v4316, %v4320
        %vm4322 = vweird.f32 %v4314
        %vm4323 = vweird.f32 %v4316
        %vm4324 = vmor %vm4322, %vm4323
        %v4325 = vsel %vm4324, %v4316, %v4321
        %v4326 = vld [vmem:[%s412] sm:$0x1]
        %v4327 = vmul.f32 %v4326, %v4325
        %v4328 = vld [vmem:[%s416] sm:$0x1]
        %v4329 = vmul.f32 %v4291, %v4327
        %v4330 = vsub.f32 %v4328, %v4329
        %v4332 = vperm.slane %v4327, 0
        %v4334 = vmul.f32 %v4010, %v4332
        %v4335 = vmul.f32 %v4011, %v4332
        %v4336 = vmul.f32 %v4012, %v4332
        %v4337 = vmul.f32 %v4013, %v4332
        %v4338 = vmul.f32 %v4014, %v4332
        %v4339 = vmul.f32 %v4015, %v4332
        %v4340 = vmul.f32 %v4016, %v4332
        %v4341 = vmul.f32 %v4017, %v4332
        %v4342 = vmul.f32 %v4018, %v4332
        %v4343 = vmul.f32 %v4019, %v4332
        %v4344 = vmul.f32 %v4020, %v4332
        %v4345 = vmul.f32 %v4021, %v4332
        %v4346 = vmul.f32 %v4022, %v4332
        %v4347 = vmul.f32 %v4023, %v4332
        %v4348 = vmul.f32 %v4024, %v4332
        %v4349 = vmul.f32 %v4025, %v4332
        %v4350 = vmul.f32 %v4026, %v4332
        %v4351 = vmul.f32 %v4027, %v4332
        %v4352 = vmul.f32 %v4028, %v4332
        %v4353 = vmul.f32 %v4029, %v4332
        %v4354 = vmul.f32 %v4030, %v4332
        %v4355 = vmul.f32 %v4031, %v4332
        %v4356 = vmul.f32 %v4032, %v4332
        %v4357 = vmul.f32 %v4033, %v4332
        %v4358 = vmul.f32 %v4034, %v4332
        %v4359 = vmul.f32 %v4035, %v4332
        %v4360 = vmul.f32 %v4036, %v4332
        %v4361 = vmul.f32 %v4037, %v4332
        %v4362 = vmul.f32 %v4038, %v4332
        %v4363 = vmul.f32 %v4039, %v4332
        %v4364 = vmul.f32 %v4040, %v4332
        %v4365 = vmul.f32 %v4041, %v4332
        %v4367 = vperm.slane %v4330, 0
        %v4369 = vadd.f32 %v4334, %v4367
        %v4370 = vadd.f32 %v4335, %v4367
        %v4371 = vadd.f32 %v4336, %v4367
        %v4372 = vadd.f32 %v4337, %v4367
        %v4373 = vadd.f32 %v4338, %v4367
        %v4374 = vadd.f32 %v4339, %v4367
        %v4375 = vadd.f32 %v4340, %v4367
        %v4376 = vadd.f32 %v4341, %v4367
        %v4377 = vadd.f32 %v4342, %v4367
        %v4378 = vadd.f32 %v4343, %v4367
        %v4379 = vadd.f32 %v4344, %v4367
        %v4380 = vadd.f32 %v4345, %v4367
        %v4381 = vadd.f32 %v4346, %v4367
        %v4382 = vadd.f32 %v4347, %v4367
        %v4383 = vadd.f32 %v4348, %v4367
        %v4384 = vadd.f32 %v4349, %v4367
        %v4385 = vadd.f32 %v4350, %v4367
        %v4386 = vadd.f32 %v4351, %v4367
        %v4387 = vadd.f32 %v4352, %v4367
        %v4388 = vadd.f32 %v4353, %v4367
        %v4389 = vadd.f32 %v4354, %v4367
        %v4390 = vadd.f32 %v4355, %v4367
        %v4391 = vadd.f32 %v4356, %v4367
        %v4392 = vadd.f32 %v4357, %v4367
        %v4393 = vadd.f32 %v4358, %v4367
        %v4394 = vadd.f32 %v4359, %v4367
        %v4395 = vadd.f32 %v4360, %v4367
        %v4396 = vadd.f32 %v4361, %v4367
        %v4397 = vadd.f32 %v4362, %v4367
        %v4398 = vadd.f32 %v4363, %v4367
        %v4399 = vadd.f32 %v4364, %v4367
        %v4400 = vadd.f32 %v4365, %v4367
        %v4401 = vmax.f32 %v4369, 0.0
        %v4402 = vmax.f32 %v4370, 0.0
        %v4403 = vmax.f32 %v4371, 0.0
        %v4404 = vmax.f32 %v4372, 0.0
        %v4405 = vmax.f32 %v4373, 0.0
        %v4406 = vmax.f32 %v4374, 0.0
        %v4407 = vmax.f32 %v4375, 0.0
        %v4408 = vmax.f32 %v4376, 0.0
        %v4409 = vmax.f32 %v4377, 0.0
        %v4410 = vmax.f32 %v4378, 0.0
        %v4411 = vmax.f32 %v4379, 0.0
        %v4412 = vmax.f32 %v4380, 0.0
        %v4413 = vmax.f32 %v4381, 0.0
        %v4414 = vmax.f32 %v4382, 0.0
        %v4415 = vmax.f32 %v4383, 0.0
        %v4416 = vmax.f32 %v4384, 0.0
        %v4417 = vmax.f32 %v4385, 0.0
        %v4418 = vmax.f32 %v4386, 0.0
        %v4419 = vmax.f32 %v4387, 0.0
        %v4420 = vmax.f32 %v4388, 0.0
        %v4421 = vmax.f32 %v4389, 0.0
        %v4422 = vmax.f32 %v4390, 0.0
        %v4423 = vmax.f32 %v4391, 0.0
        %v4424 = vmax.f32 %v4392, 0.0
        %v4425 = vmax.f32 %v4393, 0.0
        %v4426 = vmax.f32 %v4394, 0.0
        %v4427 = vmax.f32 %v4395, 0.0
        %v4428 = vmax.f32 %v4396, 0.0
        %v4429 = vmax.f32 %v4397, 0.0
        %v4430 = vmax.f32 %v4398, 0.0
        %v4431 = vmax.f32 %v4399, 0.0
        %v4432 = vmax.f32 %v4400, 0.0
        %v4433 = vpack.c.bf16 %v4401, %v4401
        %v4434 = vpack.c.bf16 %v4402, %v4402
        %v4435 = vpack.c.bf16 %v4403, %v4403
        %v4436 = vpack.c.bf16 %v4404, %v4404
        %v4437 = vpack.c.bf16 %v4405, %v4405
        %v4438 = vpack.c.bf16 %v4406, %v4406
        %v4439 = vpack.c.bf16 %v4407, %v4407
        %v4440 = vpack.c.bf16 %v4408, %v4408
        %v4441 = vpack.c.bf16 %v4409, %v4409
        %v4442 = vpack.c.bf16 %v4410, %v4410
        %v4443 = vpack.c.bf16 %v4411, %v4411
        %v4444 = vpack.c.bf16 %v4412, %v4412
        %v4445 = vpack.c.bf16 %v4413, %v4413
        %v4446 = vpack.c.bf16 %v4414, %v4414
        %v4447 = vpack.c.bf16 %v4415, %v4415
        %v4448 = vpack.c.bf16 %v4416, %v4416
        %v4449 = vpack.c.bf16 %v4417, %v4417
        %v4450 = vpack.c.bf16 %v4418, %v4418
        %v4451 = vpack.c.bf16 %v4419, %v4419
        %v4452 = vpack.c.bf16 %v4420, %v4420
        %v4453 = vpack.c.bf16 %v4421, %v4421
        %v4454 = vpack.c.bf16 %v4422, %v4422
        %v4455 = vpack.c.bf16 %v4423, %v4423
        %v4456 = vpack.c.bf16 %v4424, %v4424
        %v4457 = vpack.c.bf16 %v4425, %v4425
        %v4458 = vpack.c.bf16 %v4426, %v4426
        %v4459 = vpack.c.bf16 %v4427, %v4427
        %v4460 = vpack.c.bf16 %v4428, %v4428
        %v4461 = vpack.c.bf16 %v4429, %v4429
        %v4462 = vpack.c.bf16 %v4430, %v4430
        %v4463 = vpack.c.bf16 %v4431, %v4431
        %v4464 = vpack.c.bf16 %v4432, %v4432
        %vm4465 = vcmask 519168
        %4466 = vst.msk [vmem:[#allocation2] sm:$0xf] %vm4465, %v4433
        %4467 = vst.msk [vmem:[#allocation2 + $0x4] sm:$0xf] %vm4465, %v4434
        %4468 = vst.msk [vmem:[#allocation2 + $0x8] sm:$0xf] %vm4465, %v4435
        %4469 = vst.msk [vmem:[#allocation2 + $0xc] sm:$0xf] %vm4465, %v4436
        %4470 = vst.msk [vmem:[#allocation2 + $0x10] sm:$0xf] %vm4465, %v4437
        %4471 = vst.msk [vmem:[#allocation2 + $0x14] sm:$0xf] %vm4465, %v4438
        %4472 = vst.msk [vmem:[#allocation2 + $0x18] sm:$0xf] %vm4465, %v4439
        %4473 = vst.msk [vmem:[#allocation2 + $0x1c] sm:$0xf] %vm4465, %v4440
        %4474 = vst.msk [vmem:[#allocation2 + $0x20] sm:$0xf] %vm4465, %v4441
        %4475 = vst.msk [vmem:[#allocation2 + $0x24] sm:$0xf] %vm4465, %v4442
        %4476 = vst.msk [vmem:[#allocation2 + $0x28] sm:$0xf] %vm4465, %v4443
        %4477 = vst.msk [vmem:[#allocation2 + $0x2c] sm:$0xf] %vm4465, %v4444
        %4478 = vst.msk [vmem:[#allocation2 + $0x30] sm:$0xf] %vm4465, %v4445
        %4479 = vst.msk [vmem:[#allocation2 + $0x34] sm:$0xf] %vm4465, %v4446
        %4480 = vst.msk [vmem:[#allocation2 + $0x38] sm:$0xf] %vm4465, %v4447
        %4481 = vst.msk [vmem:[#allocation2 + $0x3c] sm:$0xf] %vm4465, %v4448
        %4482 = vst.msk [vmem:[#allocation2 + $0x40] sm:$0xf] %vm4465, %v4449
        %4483 = vst.msk [vmem:[#allocation2 + $0x44] sm:$0xf] %vm4465, %v4450
        %4484 = vst.msk [vmem:[#allocation2 + $0x48] sm:$0xf] %vm4465, %v4451
        %4485 = vst.msk [vmem:[#allocation2 + $0x4c] sm:$0xf] %vm4465, %v4452
        %4486 = vst.msk [vmem:[#allocation2 + $0x50] sm:$0xf] %vm4465, %v4453
        %4487 = vst.msk [vmem:[#allocation2 + $0x54] sm:$0xf] %vm4465, %v4454
        %4488 = vst.msk [vmem:[#allocation2 + $0x58] sm:$0xf] %vm4465, %v4455
        %4489 = vst.msk [vmem:[#allocation2 + $0x5c] sm:$0xf] %vm4465, %v4456
        %4490 = vst.msk [vmem:[#allocation2 + $0x60] sm:$0xf] %vm4465, %v4457
        %4491 = vst.msk [vmem:[#allocation2 + $0x64] sm:$0xf] %vm4465, %v4458
        %4492 = vst.msk [vmem:[#allocation2 + $0x68] sm:$0xf] %vm4465, %v4459
        %4493 = vst.msk [vmem:[#allocation2 + $0x6c] sm:$0xf] %vm4465, %v4460
        %4494 = vst.msk [vmem:[#allocation2 + $0x70] sm:$0xf] %vm4465, %v4461
        %4495 = vst.msk [vmem:[#allocation2 + $0x74] sm:$0xf] %vm4465, %v4462
        %4496 = vst.msk [vmem:[#allocation2 + $0x78] sm:$0xf] %vm4465, %v4463
        %4497 = vst.msk [vmem:[#allocation2 + $0x7c] sm:$0xf] %vm4465, %v4464
        %v4498 = vld [vmem:[#allocation2] sm:$0xf]
        %v4499 = vld [vmem:[#allocation2 + $0x4] sm:$0xf]
        %v4500 = vld [vmem:[#allocation2 + $0x8] sm:$0xf]
        %v4501 = vld [vmem:[#allocation2 + $0xc] sm:$0xf]
        %v4502 = vld [vmem:[#allocation2 + $0x10] sm:$0xf]
        %v4503 = vld [vmem:[#allocation2 + $0x14] sm:$0xf]
        %v4504 = vld [vmem:[#allocation2 + $0x18] sm:$0xf]
        %v4505 = vld [vmem:[#allocation2 + $0x1c] sm:$0xf]
        %v4506 = vld [vmem:[#allocation2 + $0x20] sm:$0xf]
        %v4507 = vld [vmem:[#allocation2 + $0x24] sm:$0xf]
        %v4508 = vld [vmem:[#allocation2 + $0x28] sm:$0xf]
        %v4509 = vld [vmem:[#allocation2 + $0x2c] sm:$0xf]
        %v4510 = vld [vmem:[#allocation2 + $0x30] sm:$0xf]
        %v4511 = vld [vmem:[#allocation2 + $0x34] sm:$0xf]
        %v4512 = vld [vmem:[#allocation2 + $0x38] sm:$0xf]
        %v4513 = vld [vmem:[#allocation2 + $0x3c] sm:$0xf]
        %v4514 = vld [vmem:[#allocation2 + $0x40] sm:$0xf]
        %v4515 = vld [vmem:[#allocation2 + $0x44] sm:$0xf]
        %v4516 = vld [vmem:[#allocation2 + $0x48] sm:$0xf]
        %v4517 = vld [vmem:[#allocation2 + $0x4c] sm:$0xf]
        %v4518 = vld [vmem:[#allocation2 + $0x50] sm:$0xf]
        %v4519 = vld [vmem:[#allocation2 + $0x54] sm:$0xf]
        %v4520 = vld [vmem:[#allocation2 + $0x58] sm:$0xf]
        %v4521 = vld [vmem:[#allocation2 + $0x5c] sm:$0xf]
        %v4522 = vld [vmem:[#allocation2 + $0x60] sm:$0xf]
        %v4523 = vld [vmem:[#allocation2 + $0x64] sm:$0xf]
        %v4524 = vld [vmem:[#allocation2 + $0x68] sm:$0xf]
        %v4525 = vld [vmem:[#allocation2 + $0x6c] sm:$0xf]
        %v4526 = vld [vmem:[#allocation2 + $0x70] sm:$0xf]
        %v4527 = vld [vmem:[#allocation2 + $0x74] sm:$0xf]
        %v4528 = vld [vmem:[#allocation2 + $0x78] sm:$0xf]
        %v4529 = vld [vmem:[#allocation2 + $0x7c] sm:$0xf]
        %s4530 = scalar_lea.vmem %s408, 1
        %v4531 = vld [vmem:[%s4530] sm:$0x1]
        %v4532 = vunpack.c.l.bf16 %v4498
        %v4533 = vunpack.c.l.bf16 %v4499
        %v4534 = vunpack.c.l.bf16 %v4500
        %v4535 = vunpack.c.l.bf16 %v4501
        %v4536 = vunpack.c.l.bf16 %v4502
        %v4537 = vunpack.c.l.bf16 %v4503
        %v4538 = vunpack.c.l.bf16 %v4504
        %v4539 = vunpack.c.l.bf16 %v4505
        %v4540 = vunpack.c.l.bf16 %v4506
        %v4541 = vunpack.c.l.bf16 %v4507
        %v4542 = vunpack.c.l.bf16 %v4508
        %v4543 = vunpack.c.l.bf16 %v4509
        %v4544 = vunpack.c.l.bf16 %v4510
        %v4545 = vunpack.c.l.bf16 %v4511
        %v4546 = vunpack.c.l.bf16 %v4512
        %v4547 = vunpack.c.l.bf16 %v4513
        %v4548 = vunpack.c.l.bf16 %v4514
        %v4549 = vunpack.c.l.bf16 %v4515
        %v4550 = vunpack.c.l.bf16 %v4516
        %v4551 = vunpack.c.l.bf16 %v4517
        %v4552 = vunpack.c.l.bf16 %v4518
        %v4553 = vunpack.c.l.bf16 %v4519
        %v4554 = vunpack.c.l.bf16 %v4520
        %v4555 = vunpack.c.l.bf16 %v4521
        %v4556 = vunpack.c.l.bf16 %v4522
        %v4557 = vunpack.c.l.bf16 %v4523
        %v4558 = vunpack.c.l.bf16 %v4524
        %v4559 = vunpack.c.l.bf16 %v4525
        %v4560 = vunpack.c.l.bf16 %v4526
        %v4561 = vunpack.c.l.bf16 %v4527
        %v4562 = vunpack.c.l.bf16 %v4528
        %v4563 = vunpack.c.l.bf16 %v4529
        %v4564 = vrot.slane %v4532, 7
        %v4565 = vrot.slane %v4533, 7
        %v4566 = vrot.slane %v4534, 7
        %v4567 = vrot.slane %v4535, 7
        %v4568 = vrot.slane %v4536, 7
        %v4569 = vrot.slane %v4537, 7
        %v4570 = vrot.slane %v4538, 7
        %v4571 = vrot.slane %v4539, 7
        %v4572 = vrot.slane %v4540, 7
        %v4573 = vrot.slane %v4541, 7
        %v4574 = vrot.slane %v4542, 7
        %v4575 = vrot.slane %v4543, 7
        %v4576 = vrot.slane %v4544, 7
        %v4577 = vrot.slane %v4545, 7
        %v4578 = vrot.slane %v4546, 7
        %v4579 = vrot.slane %v4547, 7
        %v4580 = vrot.slane %v4548, 7
        %v4581 = vrot.slane %v4549, 7
        %v4582 = vrot.slane %v4550, 7
        %v4583 = vrot.slane %v4551, 7
        %v4584 = vrot.slane %v4552, 7
        %v4585 = vrot.slane %v4553, 7
        %v4586 = vrot.slane %v4554, 7
        %v4587 = vrot.slane %v4555, 7
        %v4588 = vrot.slane %v4556, 7
        %v4589 = vrot.slane %v4557, 7
        %v4590 = vrot.slane %v4558, 7
        %v4591 = vrot.slane %v4559, 7
        %v4592 = vrot.slane %v4560, 7
        %v4593 = vrot.slane %v4561, 7
        %v4594 = vrot.slane %v4562, 7
        %v4595 = vrot.slane %v4563, 7
        %v4596 = vsel %vm643, %v4594, %v4595
        %v4597 = vsel %vm643, %v4593, %v4594
        %v4598 = vsel %vm643, %v4592, %v4593
        %v4599 = vsel %vm643, %v4591, %v4592
        %v4600 = vsel %vm643, %v4590, %v4591
        %v4601 = vsel %vm643, %v4589, %v4590
        %v4602 = vsel %vm643, %v4588, %v4589
        %v4603 = vsel %vm643, %v4587, %v4588
        %v4604 = vsel %vm643, %v4586, %v4587
        %v4605 = vsel %vm643, %v4585, %v4586
        %v4606 = vsel %vm643, %v4584, %v4585
        %v4607 = vsel %vm643, %v4583, %v4584
        %v4608 = vsel %vm643, %v4582, %v4583
        %v4609 = vsel %vm643, %v4581, %v4582
        %v4610 = vsel %vm643, %v4580, %v4581
        %v4611 = vsel %vm643, %v4579, %v4580
        %v4612 = vsel %vm643, %v4578, %v4579
        %v4613 = vsel %vm643, %v4577, %v4578
        %v4614 = vsel %vm643, %v4576, %v4577
        %v4615 = vsel %vm643, %v4575, %v4576
        %v4616 = vsel %vm643, %v4574, %v4575
        %v4617 = vsel %vm643, %v4573, %v4574
        %v4618 = vsel %vm643, %v4572, %v4573
        %v4619 = vsel %vm643, %v4571, %v4572
        %v4620 = vsel %vm643, %v4570, %v4571
        %v4621 = vsel %vm643, %v4569, %v4570
        %v4622 = vsel %vm643, %v4568, %v4569
        %v4623 = vsel %vm643, %v4567, %v4568
        %v4624 = vsel %vm643, %v4566, %v4567
        %v4625 = vsel %vm643, %v4565, %v4566
        %v4626 = vsel %vm643, %v4564, %v4565
        %v4627 = vsel %vm643, %v4595, %v4564
        %v4628 = vmul.f32 %v4597, %v679
        %v4629 = vmul.f32 %v4596, %v684
        %v4630 = vmul.f32 %v4627, %v689
        %v4631 = vmul.f32 %v4626, %v694
        %v4632 = vmul.f32 %v4625, %v699
        %v4633 = vmul.f32 %v4624, %v704
        %v4634 = vmul.f32 %v4623, %v709
        %v4635 = vmul.f32 %v4622, %v714
        %v4636 = vmul.f32 %v4621, %v719
        %v4637 = vmul.f32 %v4620, %v724
        %v4638 = vmul.f32 %v4619, %v729
        %v4639 = vmul.f32 %v4618, %v734
        %v4640 = vmul.f32 %v4617, %v739
        %v4641 = vmul.f32 %v4616, %v744
        %v4642 = vmul.f32 %v4615, %v749
        %v4643 = vmul.f32 %v4614, %v754
        %v4644 = vmul.f32 %v4613, %v759
        %v4645 = vmul.f32 %v4612, %v764
        %v4646 = vmul.f32 %v4611, %v769
        %v4647 = vmul.f32 %v4610, %v774
        %v4648 = vmul.f32 %v4609, %v779
        %v4649 = vmul.f32 %v4608, %v784
        %v4650 = vmul.f32 %v4607, %v789
        %v4651 = vmul.f32 %v4606, %v794
        %v4652 = vmul.f32 %v4605, %v799
        %v4653 = vmul.f32 %v4604, %v804
        %v4654 = vmul.f32 %v4603, %v809
        %v4655 = vmul.f32 %v4602, %v814
        %v4656 = vmul.f32 %v4601, %v819
        %v4657 = vmul.f32 %v4600, %v824
        %v4658 = vmul.f32 %v4599, %v829
        %v4659 = vmul.f32 %v4598, %v834
        %v4660 = vpack.c.bf16 %v4629, %v4628
        %v4661 = vpack.c.bf16 %v4631, %v4630
        %v4662 = vpack.c.bf16 %v4633, %v4632
        %v4663 = vpack.c.bf16 %v4635, %v4634
        %v4664 = vpack.c.bf16 %v4637, %v4636
        %v4665 = vpack.c.bf16 %v4639, %v4638
        %v4666 = vpack.c.bf16 %v4641, %v4640
        %v4667 = vpack.c.bf16 %v4643, %v4642
        %v4668 = vpack.c.bf16 %v4645, %v4644
        %v4669 = vpack.c.bf16 %v4647, %v4646
        %v4670 = vpack.c.bf16 %v4649, %v4648
        %v4671 = vpack.c.bf16 %v4651, %v4650
        %v4672 = vpack.c.bf16 %v4653, %v4652
        %v4673 = vpack.c.bf16 %v4655, %v4654
        %v4674 = vpack.c.bf16 %v4657, %v4656
        %v4675 = vpack.c.bf16 %v4659, %v4658
        %s4676 = scalar_lea.vmem %s404, 288
        %v4677 = vld [vmem:[%s4676] sm:$0xf]
        %v4678 = vld [vmem:[%s4676 + $0x4] sm:$0xf]
        %v4679 = vld [vmem:[%s4676 + $0x8] sm:$0xf]
        %v4680 = vld [vmem:[%s4676 + $0xc] sm:$0xf]
        %v4681 = vld [vmem:[%s4676 + $0x10] sm:$0xf]
        %v4682 = vld [vmem:[%s4676 + $0x14] sm:$0xf]
        %v4683 = vld [vmem:[%s4676 + $0x18] sm:$0xf]
        %v4684 = vld [vmem:[%s4676 + $0x1c] sm:$0xf]
        %v4685 = vmul.f32 %v4562, %v894
        %v4686 = vmul.f32 %v4563, %v898
        %v4687 = vmul.f32 %v4532, %v902
        %v4688 = vmul.f32 %v4533, %v906
        %v4689 = vmul.f32 %v4534, %v910
        %v4690 = vmul.f32 %v4535, %v914
        %v4691 = vmul.f32 %v4536, %v918
        %v4692 = vmul.f32 %v4537, %v922
        %v4693 = vmul.f32 %v4538, %v926
        %v4694 = vmul.f32 %v4539, %v930
        %v4695 = vmul.f32 %v4540, %v934
        %v4696 = vmul.f32 %v4541, %v938
        %v4697 = vmul.f32 %v4542, %v942
        %v4698 = vmul.f32 %v4543, %v946
        %v4699 = vmul.f32 %v4544, %v950
        %v4700 = vmul.f32 %v4545, %v954
        %v4701 = vmul.f32 %v4546, %v958
        %v4702 = vmul.f32 %v4547, %v962
        %v4703 = vmul.f32 %v4548, %v966
        %v4704 = vmul.f32 %v4549, %v970
        %v4705 = vmul.f32 %v4550, %v974
        %v4706 = vmul.f32 %v4551, %v978
        %v4707 = vmul.f32 %v4552, %v982
        %v4708 = vmul.f32 %v4553, %v986
        %v4709 = vmul.f32 %v4554, %v990
        %v4710 = vmul.f32 %v4555, %v994
        %v4711 = vmul.f32 %v4556, %v998
        %v4712 = vmul.f32 %v4557, %v1002
        %v4713 = vmul.f32 %v4558, %v1006
        %v4714 = vmul.f32 %v4559, %v1010
        %v4715 = vmul.f32 %v4560, %v1014
        %v4716 = vmul.f32 %v4561, %v1018
        %v4717 = vpack.c.bf16 %v4686, %v4685
        %v4718 = vpack.c.bf16 %v4688, %v4687
        %v4719 = vpack.c.bf16 %v4690, %v4689
        %v4720 = vpack.c.bf16 %v4692, %v4691
        %v4721 = vpack.c.bf16 %v4694, %v4693
        %v4722 = vpack.c.bf16 %v4696, %v4695
        %v4723 = vpack.c.bf16 %v4698, %v4697
        %v4724 = vpack.c.bf16 %v4700, %v4699
        %v4725 = vpack.c.bf16 %v4702, %v4701
        %v4726 = vpack.c.bf16 %v4704, %v4703
        %v4727 = vpack.c.bf16 %v4706, %v4705
        %v4728 = vpack.c.bf16 %v4708, %v4707
        %v4729 = vpack.c.bf16 %v4710, %v4709
        %v4730 = vpack.c.bf16 %v4712, %v4711
        %v4731 = vpack.c.bf16 %v4714, %v4713
        %v4732 = vpack.c.bf16 %v4716, %v4715
        %v4733 = vld [vmem:[%s4676 + $0x20] sm:$0xf]
        %v4734 = vld [vmem:[%s4676 + $0x24] sm:$0xf]
        %v4735 = vld [vmem:[%s4676 + $0x28] sm:$0xf]
        %v4736 = vld [vmem:[%s4676 + $0x2c] sm:$0xf]
        %v4737 = vld [vmem:[%s4676 + $0x30] sm:$0xf]
        %v4738 = vld [vmem:[%s4676 + $0x34] sm:$0xf]
        %v4739 = vld [vmem:[%s4676 + $0x38] sm:$0xf]
        %v4740 = vld [vmem:[%s4676 + $0x3c] sm:$0xf]
        %v4749 = vunpack.c.l.b16 %v4733
        %v4750 = vunpack.c.l.b16 %v4734
        %v4751 = vunpack.c.l.b16 %v4735
        %v4752 = vunpack.c.l.b16 %v4736
        %v4753 = vunpack.c.l.b16 %v4737
        %v4754 = vunpack.c.l.b16 %v4738
        %v4755 = vunpack.c.l.b16 %v4739
        %v4756 = vunpack.c.l.b16 %v4740
        %v4757 = vpack.c.b16 %v4750, %v4749
        %v4758 = vpack.c.b16 %v4752, %v4751
        %v4759 = vpack.c.b16 %v4754, %v4753
        %v4760 = vpack.c.b16 %v4756, %v4755
        %v4766 = vsel %vm1100, %v4717, 0
        %v4769 = vsel %vm1100, %v4718, 0
        %v4772 = vsel %vm1100, %v4719, 0
        %v4775 = vsel %vm1100, %v4720, 0
        %v4778 = vsel %vm1100, %v4721, 0
        %v4781 = vsel %vm1100, %v4722, 0
        %v4784 = vsel %vm1100, %v4723, 0
        %v4787 = vsel %vm1100, %v4724, 0
        %v4790 = vsel %vm1100, %v4725, 0
        %v4793 = vsel %vm1100, %v4726, 0
        %v4796 = vsel %vm1100, %v4727, 0
        %v4799 = vsel %vm1100, %v4728, 0
        %v4802 = vsel %vm1100, %v4729, 0
        %v4805 = vsel %vm1100, %v4730, 0
        %v4808 = vsel %vm1100, %v4731, 0
        %v4811 = vsel %vm1100, %v4732, 0
        %4813 = vmatpush.bf16.msra.mxu0 0
        %4814 = vmatpush.bf16.msra.mxu0 0
        %4815 = vmatpush.bf16.msra.mxu0 0
        %4816 = vmatpush.bf16.msra.mxu0 0
        %4817 = vmatpush.bf16.msra.mxu0 %v4760
        %4818 = vmatpush.bf16.msra.mxu0 %v4759
        %4819 = vmatpush.bf16.msra.mxu0 %v4758
        %4820 = vmatpush.bf16.msra.mxu0 %v4757
        %4821 = vmatmul.bf16.gmra.mxu0 %v4766
        %v4822 = vpop.f32.mrf.mxu0
        %v4823 = vadd.f32 0.0, %v4822
        %v4824 = vpop.f32.mrf.mxu0
        %v4825 = vadd.f32 0.0, %v4824
        %4826 = vmatmul.bf16.gmra.mxu0 %v4769
        %v4827 = vpop.f32.mrf.mxu0
        %v4828 = vadd.f32 0.0, %v4827
        %v4829 = vpop.f32.mrf.mxu0
        %v4830 = vadd.f32 0.0, %v4829
        %4831 = vmatmul.bf16.gmra.mxu0 %v4772
        %v4832 = vpop.f32.mrf.mxu0
        %v4833 = vadd.f32 0.0, %v4832
        %v4834 = vpop.f32.mrf.mxu0
        %v4835 = vadd.f32 0.0, %v4834
        %4836 = vmatmul.bf16.gmra.mxu0 %v4775
        %v4837 = vpop.f32.mrf.mxu0
        %v4838 = vadd.f32 0.0, %v4837
        %v4839 = vpop.f32.mrf.mxu0
        %v4840 = vadd.f32 0.0, %v4839
        %4841 = vmatmul.bf16.gmra.mxu0 %v4778
        %v4842 = vpop.f32.mrf.mxu0
        %v4843 = vadd.f32 0.0, %v4842
        %v4844 = vpop.f32.mrf.mxu0
        %v4845 = vadd.f32 0.0, %v4844
        %4846 = vmatmul.bf16.gmra.mxu0 %v4781
        %v4847 = vpop.f32.mrf.mxu0
        %v4848 = vadd.f32 0.0, %v4847
        %v4849 = vpop.f32.mrf.mxu0
        %v4850 = vadd.f32 0.0, %v4849
        %4851 = vmatmul.bf16.gmra.mxu0 %v4784
        %v4852 = vpop.f32.mrf.mxu0
        %v4853 = vadd.f32 0.0, %v4852
        %v4854 = vpop.f32.mrf.mxu0
        %v4855 = vadd.f32 0.0, %v4854
        %4856 = vmatmul.bf16.gmra.mxu0 %v4787
        %v4857 = vpop.f32.mrf.mxu0
        %v4858 = vadd.f32 0.0, %v4857
        %v4859 = vpop.f32.mrf.mxu0
        %v4860 = vadd.f32 0.0, %v4859
        %4861 = vmatmul.bf16.gmra.mxu0 %v4790
        %v4862 = vpop.f32.mrf.mxu0
        %v4863 = vadd.f32 0.0, %v4862
        %v4864 = vpop.f32.mrf.mxu0
        %v4865 = vadd.f32 0.0, %v4864
        %4866 = vmatmul.bf16.gmra.mxu0 %v4793
        %v4867 = vpop.f32.mrf.mxu0
        %v4868 = vadd.f32 0.0, %v4867
        %v4869 = vpop.f32.mrf.mxu0
        %v4870 = vadd.f32 0.0, %v4869
        %4871 = vmatmul.bf16.gmra.mxu0 %v4796
        %v4872 = vpop.f32.mrf.mxu0
        %v4873 = vadd.f32 0.0, %v4872
        %v4874 = vpop.f32.mrf.mxu0
        %v4875 = vadd.f32 0.0, %v4874
        %4876 = vmatmul.bf16.gmra.mxu0 %v4799
        %v4877 = vpop.f32.mrf.mxu0
        %v4878 = vadd.f32 0.0, %v4877
        %v4879 = vpop.f32.mrf.mxu0
        %v4880 = vadd.f32 0.0, %v4879
        %4881 = vmatmul.bf16.gmra.mxu0 %v4802
        %v4882 = vpop.f32.mrf.mxu0
        %v4883 = vadd.f32 0.0, %v4882
        %v4884 = vpop.f32.mrf.mxu0
        %v4885 = vadd.f32 0.0, %v4884
        %4886 = vmatmul.bf16.gmra.mxu0 %v4805
        %v4887 = vpop.f32.mrf.mxu0
        %v4888 = vadd.f32 0.0, %v4887
        %v4889 = vpop.f32.mrf.mxu0
        %v4890 = vadd.f32 0.0, %v4889
        %4891 = vmatmul.bf16.gmra.mxu0 %v4808
        %v4892 = vpop.f32.mrf.mxu0
        %v4893 = vadd.f32 0.0, %v4892
        %v4894 = vpop.f32.mrf.mxu0
        %v4895 = vadd.f32 0.0, %v4894
        %4896 = vmatmul.bf16.gmra.mxu0 %v4811
        %v4897 = vpop.f32.mrf.mxu0
        %v4898 = vadd.f32 0.0, %v4897
        %v4899 = vpop.f32.mrf.mxu0
        %v4900 = vadd.f32 0.0, %v4899
        %4901 = vdwg.mxu0
        %v4910 = vunpack.c.l.b16 %v4677
        %v4911 = vunpack.c.l.b16 %v4678
        %v4912 = vunpack.c.l.b16 %v4679
        %v4913 = vunpack.c.l.b16 %v4680
        %v4914 = vunpack.c.l.b16 %v4681
        %v4915 = vunpack.c.l.b16 %v4682
        %v4916 = vunpack.c.l.b16 %v4683
        %v4917 = vunpack.c.l.b16 %v4684
        %v4918 = vpack.c.b16 %v4911, %v4910
        %v4919 = vpack.c.b16 %v4913, %v4912
        %v4920 = vpack.c.b16 %v4915, %v4914
        %v4921 = vpack.c.b16 %v4917, %v4916
        %v4927 = vsel %vm1100, %v4660, 0
        %v4930 = vsel %vm1100, %v4661, 0
        %v4933 = vsel %vm1100, %v4662, 0
        %v4936 = vsel %vm1100, %v4663, 0
        %v4939 = vsel %vm1100, %v4664, 0
        %v4942 = vsel %vm1100, %v4665, 0
        %v4945 = vsel %vm1100, %v4666, 0
        %v4948 = vsel %vm1100, %v4667, 0
        %v4951 = vsel %vm1100, %v4668, 0
        %v4954 = vsel %vm1100, %v4669, 0
        %v4957 = vsel %vm1100, %v4670, 0
        %v4960 = vsel %vm1100, %v4671, 0
        %v4963 = vsel %vm1100, %v4672, 0
        %v4966 = vsel %vm1100, %v4673, 0
        %v4969 = vsel %vm1100, %v4674, 0
        %v4972 = vsel %vm1100, %v4675, 0
        %4974 = vmatpush.bf16.msra.mxu0 0
        %4975 = vmatpush.bf16.msra.mxu0 0
        %4976 = vmatpush.bf16.msra.mxu0 0
        %4977 = vmatpush.bf16.msra.mxu0 0
        %4978 = vmatpush.bf16.msra.mxu0 %v4921
        %4979 = vmatpush.bf16.msra.mxu0 %v4920
        %4980 = vmatpush.bf16.msra.mxu0 %v4919
        %4981 = vmatpush.bf16.msra.mxu0 %v4918
        %4982 = vmatmul.bf16.gmra.mxu0 %v4927
        %v4983 = vpop.f32.mrf.mxu0
        %v4984 = vadd.f32 %v4823, %v4983
        %v4985 = vpop.f32.mrf.mxu0
        %v4986 = vadd.f32 %v4825, %v4985
        %4987 = vmatmul.bf16.gmra.mxu0 %v4930
        %v4988 = vpop.f32.mrf.mxu0
        %v4989 = vadd.f32 %v4828, %v4988
        %v4990 = vpop.f32.mrf.mxu0
        %v4991 = vadd.f32 %v4830, %v4990
        %4992 = vmatmul.bf16.gmra.mxu0 %v4933
        %v4993 = vpop.f32.mrf.mxu0
        %v4994 = vadd.f32 %v4833, %v4993
        %v4995 = vpop.f32.mrf.mxu0
        %v4996 = vadd.f32 %v4835, %v4995
        %4997 = vmatmul.bf16.gmra.mxu0 %v4936
        %v4998 = vpop.f32.mrf.mxu0
        %v4999 = vadd.f32 %v4838, %v4998
        %v5000 = vpop.f32.mrf.mxu0
        %v5001 = vadd.f32 %v4840, %v5000
        %5002 = vmatmul.bf16.gmra.mxu0 %v4939
        %v5003 = vpop.f32.mrf.mxu0
        %v5004 = vadd.f32 %v4843, %v5003
        %v5005 = vpop.f32.mrf.mxu0
        %v5006 = vadd.f32 %v4845, %v5005
        %5007 = vmatmul.bf16.gmra.mxu0 %v4942
        %v5008 = vpop.f32.mrf.mxu0
        %v5009 = vadd.f32 %v4848, %v5008
        %v5010 = vpop.f32.mrf.mxu0
        %v5011 = vadd.f32 %v4850, %v5010
        %5012 = vmatmul.bf16.gmra.mxu0 %v4945
        %v5013 = vpop.f32.mrf.mxu0
        %v5014 = vadd.f32 %v4853, %v5013
        %v5015 = vpop.f32.mrf.mxu0
        %v5016 = vadd.f32 %v4855, %v5015
        %5017 = vmatmul.bf16.gmra.mxu0 %v4948
        %v5018 = vpop.f32.mrf.mxu0
        %v5019 = vadd.f32 %v4858, %v5018
        %v5020 = vpop.f32.mrf.mxu0
        %v5021 = vadd.f32 %v4860, %v5020
        %5022 = vmatmul.bf16.gmra.mxu0 %v4951
        %v5023 = vpop.f32.mrf.mxu0
        %v5024 = vadd.f32 %v4863, %v5023
        %v5025 = vpop.f32.mrf.mxu0
        %v5026 = vadd.f32 %v4865, %v5025
        %5027 = vmatmul.bf16.gmra.mxu0 %v4954
        %v5028 = vpop.f32.mrf.mxu0
        %v5029 = vadd.f32 %v4868, %v5028
        %v5030 = vpop.f32.mrf.mxu0
        %v5031 = vadd.f32 %v4870, %v5030
        %5032 = vmatmul.bf16.gmra.mxu0 %v4957
        %v5033 = vpop.f32.mrf.mxu0
        %v5034 = vadd.f32 %v4873, %v5033
        %v5035 = vpop.f32.mrf.mxu0
        %v5036 = vadd.f32 %v4875, %v5035
        %5037 = vmatmul.bf16.gmra.mxu0 %v4960
        %v5038 = vpop.f32.mrf.mxu0
        %v5039 = vadd.f32 %v4878, %v5038
        %v5040 = vpop.f32.mrf.mxu0
        %v5041 = vadd.f32 %v4880, %v5040
        %5042 = vmatmul.bf16.gmra.mxu0 %v4963
        %v5043 = vpop.f32.mrf.mxu0
        %v5044 = vadd.f32 %v4883, %v5043
        %v5045 = vpop.f32.mrf.mxu0
        %v5046 = vadd.f32 %v4885, %v5045
        %5047 = vmatmul.bf16.gmra.mxu0 %v4966
        %v5048 = vpop.f32.mrf.mxu0
        %v5049 = vadd.f32 %v4888, %v5048
        %v5050 = vpop.f32.mrf.mxu0
        %v5051 = vadd.f32 %v4890, %v5050
        %5052 = vmatmul.bf16.gmra.mxu0 %v4969
        %v5053 = vpop.f32.mrf.mxu0
        %v5054 = vadd.f32 %v4893, %v5053
        %v5055 = vpop.f32.mrf.mxu0
        %v5056 = vadd.f32 %v4895, %v5055
        %5057 = vmatmul.bf16.gmra.mxu0 %v4972
        %v5058 = vpop.f32.mrf.mxu0
        %v5059 = vadd.f32 %v4898, %v5058
        %v5060 = vpop.f32.mrf.mxu0
        %v5061 = vadd.f32 %v4900, %v5060
        %5062 = vdwg.mxu0
        %v5063 = vrot.slane %v4532, 1
        %v5064 = vrot.slane %v4533, 1
        %v5065 = vrot.slane %v4534, 1
        %v5066 = vrot.slane %v4535, 1
        %v5067 = vrot.slane %v4536, 1
        %v5068 = vrot.slane %v4537, 1
        %v5069 = vrot.slane %v4538, 1
        %v5070 = vrot.slane %v4539, 1
        %v5071 = vrot.slane %v4540, 1
        %v5072 = vrot.slane %v4541, 1
        %v5073 = vrot.slane %v4542, 1
        %v5074 = vrot.slane %v4543, 1
        %v5075 = vrot.slane %v4544, 1
        %v5076 = vrot.slane %v4545, 1
        %v5077 = vrot.slane %v4546, 1
        %v5078 = vrot.slane %v4547, 1
        %v5079 = vrot.slane %v4548, 1
        %v5080 = vrot.slane %v4549, 1
        %v5081 = vrot.slane %v4550, 1
        %v5082 = vrot.slane %v4551, 1
        %v5083 = vrot.slane %v4552, 1
        %v5084 = vrot.slane %v4553, 1
        %v5085 = vrot.slane %v4554, 1
        %v5086 = vrot.slane %v4555, 1
        %v5087 = vrot.slane %v4556, 1
        %v5088 = vrot.slane %v4557, 1
        %v5089 = vrot.slane %v4558, 1
        %v5090 = vrot.slane %v4559, 1
        %v5091 = vrot.slane %v4560, 1
        %v5092 = vrot.slane %v4561, 1
        %v5093 = vrot.slane %v4562, 1
        %v5094 = vrot.slane %v4563, 1
        %v5095 = vsel %vm1431, %v5093, %v5094
        %v5096 = vsel %vm1431, %v5092, %v5093
        %v5097 = vsel %vm1431, %v5091, %v5092
        %v5098 = vsel %vm1431, %v5090, %v5091
        %v5099 = vsel %vm1431, %v5089, %v5090
        %v5100 = vsel %vm1431, %v5088, %v5089
        %v5101 = vsel %vm1431, %v5087, %v5088
        %v5102 = vsel %vm1431, %v5086, %v5087
        %v5103 = vsel %vm1431, %v5085, %v5086
        %v5104 = vsel %vm1431, %v5084, %v5085
        %v5105 = vsel %vm1431, %v5083, %v5084
        %v5106 = vsel %vm1431, %v5082, %v5083
        %v5107 = vsel %vm1431, %v5081, %v5082
        %v5108 = vsel %vm1431, %v5080, %v5081
        %v5109 = vsel %vm1431, %v5079, %v5080
        %v5110 = vsel %vm1431, %v5078, %v5079
        %v5111 = vsel %vm1431, %v5077, %v5078
        %v5112 = vsel %vm1431, %v5076, %v5077
        %v5113 = vsel %vm1431, %v5075, %v5076
        %v5114 = vsel %vm1431, %v5074, %v5075
        %v5115 = vsel %vm1431, %v5073, %v5074
        %v5116 = vsel %vm1431, %v5072, %v5073
        %v5117 = vsel %vm1431, %v5071, %v5072
        %v5118 = vsel %vm1431, %v5070, %v5071
        %v5119 = vsel %vm1431, %v5069, %v5070
        %v5120 = vsel %vm1431, %v5068, %v5069
        %v5121 = vsel %vm1431, %v5067, %v5068
        %v5122 = vsel %vm1431, %v5066, %v5067
        %v5123 = vsel %vm1431, %v5065, %v5066
        %v5124 = vsel %vm1431, %v5064, %v5065
        %v5125 = vsel %vm1431, %v5063, %v5064
        %v5126 = vsel %vm1431, %v5094, %v5063
        %v5127 = vmul.f32 %v5095, %v1466
        %v5128 = vmul.f32 %v5126, %v1470
        %v5129 = vmul.f32 %v5125, %v1474
        %v5130 = vmul.f32 %v5124, %v1478
        %v5131 = vmul.f32 %v5123, %v1482
        %v5132 = vmul.f32 %v5122, %v1486
        %v5133 = vmul.f32 %v5121, %v1490
        %v5134 = vmul.f32 %v5120, %v1494
        %v5135 = vmul.f32 %v5119, %v1498
        %v5136 = vmul.f32 %v5118, %v1502
        %v5137 = vmul.f32 %v5117, %v1506
        %v5138 = vmul.f32 %v5116, %v1510
        %v5139 = vmul.f32 %v5115, %v1514
        %v5140 = vmul.f32 %v5114, %v1518
        %v5141 = vmul.f32 %v5113, %v1522
        %v5142 = vmul.f32 %v5112, %v1526
        %v5143 = vmul.f32 %v5111, %v1530
        %v5144 = vmul.f32 %v5110, %v1534
        %v5145 = vmul.f32 %v5109, %v1538
        %v5146 = vmul.f32 %v5108, %v1542
        %v5147 = vmul.f32 %v5107, %v1546
        %v5148 = vmul.f32 %v5106, %v1550
        %v5149 = vmul.f32 %v5105, %v1554
        %v5150 = vmul.f32 %v5104, %v1558
        %v5151 = vmul.f32 %v5103, %v1562
        %v5152 = vmul.f32 %v5102, %v1566
        %v5153 = vmul.f32 %v5101, %v1570
        %v5154 = vmul.f32 %v5100, %v1574
        %v5155 = vmul.f32 %v5099, %v1578
        %v5156 = vmul.f32 %v5098, %v1582
        %v5157 = vmul.f32 %v5097, %v1586
        %v5158 = vmul.f32 %v5096, %v1590
        %v5159 = vpack.c.bf16 %v5128, %v5127
        %v5160 = vpack.c.bf16 %v5130, %v5129
        %v5161 = vpack.c.bf16 %v5132, %v5131
        %v5162 = vpack.c.bf16 %v5134, %v5133
        %v5163 = vpack.c.bf16 %v5136, %v5135
        %v5164 = vpack.c.bf16 %v5138, %v5137
        %v5165 = vpack.c.bf16 %v5140, %v5139
        %v5166 = vpack.c.bf16 %v5142, %v5141
        %v5167 = vpack.c.bf16 %v5144, %v5143
        %v5168 = vpack.c.bf16 %v5146, %v5145
        %v5169 = vpack.c.bf16 %v5148, %v5147
        %v5170 = vpack.c.bf16 %v5150, %v5149
        %v5171 = vpack.c.bf16 %v5152, %v5151
        %v5172 = vpack.c.bf16 %v5154, %v5153
        %v5173 = vpack.c.bf16 %v5156, %v5155
        %v5174 = vpack.c.bf16 %v5158, %v5157
        %v5175 = vld [vmem:[%s4676 + $0x40] sm:$0xf]
        %v5176 = vld [vmem:[%s4676 + $0x44] sm:$0xf]
        %v5177 = vld [vmem:[%s4676 + $0x48] sm:$0xf]
        %v5178 = vld [vmem:[%s4676 + $0x4c] sm:$0xf]
        %v5179 = vld [vmem:[%s4676 + $0x50] sm:$0xf]
        %v5180 = vld [vmem:[%s4676 + $0x54] sm:$0xf]
        %v5181 = vld [vmem:[%s4676 + $0x58] sm:$0xf]
        %v5182 = vld [vmem:[%s4676 + $0x5c] sm:$0xf]
        %v5191 = vunpack.c.l.b16 %v5175
        %v5192 = vunpack.c.l.b16 %v5176
        %v5193 = vunpack.c.l.b16 %v5177
        %v5194 = vunpack.c.l.b16 %v5178
        %v5195 = vunpack.c.l.b16 %v5179
        %v5196 = vunpack.c.l.b16 %v5180
        %v5197 = vunpack.c.l.b16 %v5181
        %v5198 = vunpack.c.l.b16 %v5182
        %v5199 = vpack.c.b16 %v5192, %v5191
        %v5200 = vpack.c.b16 %v5194, %v5193
        %v5201 = vpack.c.b16 %v5196, %v5195
        %v5202 = vpack.c.b16 %v5198, %v5197
        %v5208 = vsel %vm1100, %v5159, 0
        %v5211 = vsel %vm1100, %v5160, 0
        %v5214 = vsel %vm1100, %v5161, 0
        %v5217 = vsel %vm1100, %v5162, 0
        %v5220 = vsel %vm1100, %v5163, 0
        %v5223 = vsel %vm1100, %v5164, 0
        %v5226 = vsel %vm1100, %v5165, 0
        %v5229 = vsel %vm1100, %v5166, 0
        %v5232 = vsel %vm1100, %v5167, 0
        %v5235 = vsel %vm1100, %v5168, 0
        %v5238 = vsel %vm1100, %v5169, 0
        %v5241 = vsel %vm1100, %v5170, 0
        %v5244 = vsel %vm1100, %v5171, 0
        %v5247 = vsel %vm1100, %v5172, 0
        %v5250 = vsel %vm1100, %v5173, 0
        %v5253 = vsel %vm1100, %v5174, 0
        %5255 = vmatpush.bf16.msra.mxu0 0
        %5256 = vmatpush.bf16.msra.mxu0 0
        %5257 = vmatpush.bf16.msra.mxu0 0
        %5258 = vmatpush.bf16.msra.mxu0 0
        %5259 = vmatpush.bf16.msra.mxu0 %v5202
        %5260 = vmatpush.bf16.msra.mxu0 %v5201
        %5261 = vmatpush.bf16.msra.mxu0 %v5200
        %5262 = vmatpush.bf16.msra.mxu0 %v5199
        %5263 = vmatmul.bf16.gmra.mxu0 %v5208
        %v5264 = vpop.f32.mrf.mxu0
        %v5265 = vadd.f32 0.0, %v5264
        %v5266 = vpop.f32.mrf.mxu0
        %v5267 = vadd.f32 0.0, %v5266
        %5268 = vmatmul.bf16.gmra.mxu0 %v5211
        %v5269 = vpop.f32.mrf.mxu0
        %v5270 = vadd.f32 0.0, %v5269
        %v5271 = vpop.f32.mrf.mxu0
        %v5272 = vadd.f32 0.0, %v5271
        %5273 = vmatmul.bf16.gmra.mxu0 %v5214
        %v5274 = vpop.f32.mrf.mxu0
        %v5275 = vadd.f32 0.0, %v5274
        %v5276 = vpop.f32.mrf.mxu0
        %v5277 = vadd.f32 0.0, %v5276
        %5278 = vmatmul.bf16.gmra.mxu0 %v5217
        %v5279 = vpop.f32.mrf.mxu0
        %v5280 = vadd.f32 0.0, %v5279
        %v5281 = vpop.f32.mrf.mxu0
        %v5282 = vadd.f32 0.0, %v5281
        %5283 = vmatmul.bf16.gmra.mxu0 %v5220
        %v5284 = vpop.f32.mrf.mxu0
        %v5285 = vadd.f32 0.0, %v5284
        %v5286 = vpop.f32.mrf.mxu0
        %v5287 = vadd.f32 0.0, %v5286
        %5288 = vmatmul.bf16.gmra.mxu0 %v5223
        %v5289 = vpop.f32.mrf.mxu0
        %v5290 = vadd.f32 0.0, %v5289
        %v5291 = vpop.f32.mrf.mxu0
        %v5292 = vadd.f32 0.0, %v5291
        %5293 = vmatmul.bf16.gmra.mxu0 %v5226
        %v5294 = vpop.f32.mrf.mxu0
        %v5295 = vadd.f32 0.0, %v5294
        %v5296 = vpop.f32.mrf.mxu0
        %v5297 = vadd.f32 0.0, %v5296
        %5298 = vmatmul.bf16.gmra.mxu0 %v5229
        %v5299 = vpop.f32.mrf.mxu0
        %v5300 = vadd.f32 0.0, %v5299
        %v5301 = vpop.f32.mrf.mxu0
        %v5302 = vadd.f32 0.0, %v5301
        %5303 = vmatmul.bf16.gmra.mxu0 %v5232
        %v5304 = vpop.f32.mrf.mxu0
        %v5305 = vadd.f32 0.0, %v5304
        %v5306 = vpop.f32.mrf.mxu0
        %v5307 = vadd.f32 0.0, %v5306
        %5308 = vmatmul.bf16.gmra.mxu0 %v5235
        %v5309 = vpop.f32.mrf.mxu0
        %v5310 = vadd.f32 0.0, %v5309
        %v5311 = vpop.f32.mrf.mxu0
        %v5312 = vadd.f32 0.0, %v5311
        %5313 = vmatmul.bf16.gmra.mxu0 %v5238
        %v5314 = vpop.f32.mrf.mxu0
        %v5315 = vadd.f32 0.0, %v5314
        %v5316 = vpop.f32.mrf.mxu0
        %v5317 = vadd.f32 0.0, %v5316
        %5318 = vmatmul.bf16.gmra.mxu0 %v5241
        %v5319 = vpop.f32.mrf.mxu0
        %v5320 = vadd.f32 0.0, %v5319
        %v5321 = vpop.f32.mrf.mxu0
        %v5322 = vadd.f32 0.0, %v5321
        %5323 = vmatmul.bf16.gmra.mxu0 %v5244
        %v5324 = vpop.f32.mrf.mxu0
        %v5325 = vadd.f32 0.0, %v5324
        %v5326 = vpop.f32.mrf.mxu0
        %v5327 = vadd.f32 0.0, %v5326
        %5328 = vmatmul.bf16.gmra.mxu0 %v5247
        %v5329 = vpop.f32.mrf.mxu0
        %v5330 = vadd.f32 0.0, %v5329
        %v5331 = vpop.f32.mrf.mxu0
        %v5332 = vadd.f32 0.0, %v5331
        %5333 = vmatmul.bf16.gmra.mxu0 %v5250
        %v5334 = vpop.f32.mrf.mxu0
        %v5335 = vadd.f32 0.0, %v5334
        %v5336 = vpop.f32.mrf.mxu0
        %v5337 = vadd.f32 0.0, %v5336
        %5338 = vmatmul.bf16.gmra.mxu0 %v5253
        %v5339 = vpop.f32.mrf.mxu0
        %v5340 = vadd.f32 0.0, %v5339
        %v5341 = vpop.f32.mrf.mxu0
        %v5342 = vadd.f32 0.0, %v5341
        %5343 = vdwg.mxu0
        %v5344 = vadd.f32 %v4984, %v5265
        %v5345 = vadd.f32 %v4986, %v5267
        %v5346 = vadd.f32 %v4989, %v5270
        %v5347 = vadd.f32 %v4991, %v5272
        %v5348 = vadd.f32 %v4994, %v5275
        %v5349 = vadd.f32 %v4996, %v5277
        %v5350 = vadd.f32 %v4999, %v5280
        %v5351 = vadd.f32 %v5001, %v5282
        %v5352 = vadd.f32 %v5004, %v5285
        %v5353 = vadd.f32 %v5006, %v5287
        %v5354 = vadd.f32 %v5009, %v5290
        %v5355 = vadd.f32 %v5011, %v5292
        %v5356 = vadd.f32 %v5014, %v5295
        %v5357 = vadd.f32 %v5016, %v5297
        %v5358 = vadd.f32 %v5019, %v5300
        %v5359 = vadd.f32 %v5021, %v5302
        %v5360 = vadd.f32 %v5024, %v5305
        %v5361 = vadd.f32 %v5026, %v5307
        %v5362 = vadd.f32 %v5029, %v5310
        %v5363 = vadd.f32 %v5031, %v5312
        %v5364 = vadd.f32 %v5034, %v5315
        %v5365 = vadd.f32 %v5036, %v5317
        %v5366 = vadd.f32 %v5039, %v5320
        %v5367 = vadd.f32 %v5041, %v5322
        %v5368 = vadd.f32 %v5044, %v5325
        %v5369 = vadd.f32 %v5046, %v5327
        %v5370 = vadd.f32 %v5049, %v5330
        %v5371 = vadd.f32 %v5051, %v5332
        %v5372 = vadd.f32 %v5054, %v5335
        %v5373 = vadd.f32 %v5056, %v5337
        %v5374 = vadd.f32 %v5059, %v5340
        %v5375 = vadd.f32 %v5061, %v5342
        %v5376 = vmul.f32 %v4627, %v1843
        %v5377 = vmul.f32 %v4626, %v1847
        %v5378 = vmul.f32 %v4625, %v1851
        %v5379 = vmul.f32 %v4624, %v1855
        %v5380 = vmul.f32 %v4623, %v1859
        %v5381 = vmul.f32 %v4622, %v1863
        %v5382 = vmul.f32 %v4621, %v1867
        %v5383 = vmul.f32 %v4620, %v1871
        %v5384 = vmul.f32 %v4619, %v1875
        %v5385 = vmul.f32 %v4618, %v1879
        %v5386 = vmul.f32 %v4617, %v1883
        %v5387 = vmul.f32 %v4616, %v1887
        %v5388 = vmul.f32 %v4615, %v1891
        %v5389 = vmul.f32 %v4614, %v1895
        %v5390 = vmul.f32 %v4613, %v1899
        %v5391 = vmul.f32 %v4612, %v1903
        %v5392 = vmul.f32 %v4611, %v1907
        %v5393 = vmul.f32 %v4610, %v1911
        %v5394 = vmul.f32 %v4609, %v1915
        %v5395 = vmul.f32 %v4608, %v1919
        %v5396 = vmul.f32 %v4607, %v1923
        %v5397 = vmul.f32 %v4606, %v1927
        %v5398 = vmul.f32 %v4605, %v1931
        %v5399 = vmul.f32 %v4604, %v1935
        %v5400 = vmul.f32 %v4603, %v1939
        %v5401 = vmul.f32 %v4602, %v1943
        %v5402 = vmul.f32 %v4601, %v1947
        %v5403 = vmul.f32 %v4600, %v1951
        %v5404 = vmul.f32 %v4599, %v1955
        %v5405 = vmul.f32 %v4598, %v1959
        %v5406 = vmul.f32 %v4597, %v1963
        %v5407 = vmul.f32 %v4596, %v1967
        %v5408 = vpack.c.bf16 %v5377, %v5376
        %v5409 = vpack.c.bf16 %v5379, %v5378
        %v5410 = vpack.c.bf16 %v5381, %v5380
        %v5411 = vpack.c.bf16 %v5383, %v5382
        %v5412 = vpack.c.bf16 %v5385, %v5384
        %v5413 = vpack.c.bf16 %v5387, %v5386
        %v5414 = vpack.c.bf16 %v5389, %v5388
        %v5415 = vpack.c.bf16 %v5391, %v5390
        %v5416 = vpack.c.bf16 %v5393, %v5392
        %v5417 = vpack.c.bf16 %v5395, %v5394
        %v5418 = vpack.c.bf16 %v5397, %v5396
        %v5419 = vpack.c.bf16 %v5399, %v5398
        %v5420 = vpack.c.bf16 %v5401, %v5400
        %v5421 = vpack.c.bf16 %v5403, %v5402
        %v5422 = vpack.c.bf16 %v5405, %v5404
        %v5423 = vpack.c.bf16 %v5407, %v5406
        %v5424 = vld [vmem:[%s4676 + $0x60] sm:$0xf]
        %v5425 = vld [vmem:[%s4676 + $0x64] sm:$0xf]
        %v5426 = vld [vmem:[%s4676 + $0x68] sm:$0xf]
        %v5427 = vld [vmem:[%s4676 + $0x6c] sm:$0xf]
        %v5428 = vld [vmem:[%s4676 + $0x70] sm:$0xf]
        %v5429 = vld [vmem:[%s4676 + $0x74] sm:$0xf]
        %v5430 = vld [vmem:[%s4676 + $0x78] sm:$0xf]
        %v5431 = vld [vmem:[%s4676 + $0x7c] sm:$0xf]
        %v5440 = vunpack.c.l.b16 %v5424
        %v5441 = vunpack.c.l.b16 %v5425
        %v5442 = vunpack.c.l.b16 %v5426
        %v5443 = vunpack.c.l.b16 %v5427
        %v5444 = vunpack.c.l.b16 %v5428
        %v5445 = vunpack.c.l.b16 %v5429
        %v5446 = vunpack.c.l.b16 %v5430
        %v5447 = vunpack.c.l.b16 %v5431
        %v5448 = vpack.c.b16 %v5441, %v5440
        %v5449 = vpack.c.b16 %v5443, %v5442
        %v5450 = vpack.c.b16 %v5445, %v5444
        %v5451 = vpack.c.b16 %v5447, %v5446
        %v5457 = vsel %vm1100, %v5408, 0
        %v5460 = vsel %vm1100, %v5409, 0
        %v5463 = vsel %vm1100, %v5410, 0
        %v5466 = vsel %vm1100, %v5411, 0
        %v5469 = vsel %vm1100, %v5412, 0
        %v5472 = vsel %vm1100, %v5413, 0
        %v5475 = vsel %vm1100, %v5414, 0
        %v5478 = vsel %vm1100, %v5415, 0
        %v5481 = vsel %vm1100, %v5416, 0
        %v5484 = vsel %vm1100, %v5417, 0
        %v5487 = vsel %vm1100, %v5418, 0
        %v5490 = vsel %vm1100, %v5419, 0
        %v5493 = vsel %vm1100, %v5420, 0
        %v5496 = vsel %vm1100, %v5421, 0
        %v5499 = vsel %vm1100, %v5422, 0
        %v5502 = vsel %vm1100, %v5423, 0
        %5504 = vmatpush.bf16.msra.mxu0 0
        %5505 = vmatpush.bf16.msra.mxu0 0
        %5506 = vmatpush.bf16.msra.mxu0 0
        %5507 = vmatpush.bf16.msra.mxu0 0
        %5508 = vmatpush.bf16.msra.mxu0 %v5451
        %5509 = vmatpush.bf16.msra.mxu0 %v5450
        %5510 = vmatpush.bf16.msra.mxu0 %v5449
        %5511 = vmatpush.bf16.msra.mxu0 %v5448
        %5512 = vmatmul.bf16.gmra.mxu0 %v5457
        %v5513 = vpop.f32.mrf.mxu0
        %v5514 = vadd.f32 0.0, %v5513
        %v5515 = vpop.f32.mrf.mxu0
        %v5516 = vadd.f32 0.0, %v5515
        %5517 = vmatmul.bf16.gmra.mxu0 %v5460
        %v5518 = vpop.f32.mrf.mxu0
        %v5519 = vadd.f32 0.0, %v5518
        %v5520 = vpop.f32.mrf.mxu0
        %v5521 = vadd.f32 0.0, %v5520
        %5522 = vmatmul.bf16.gmra.mxu0 %v5463
        %v5523 = vpop.f32.mrf.mxu0
        %v5524 = vadd.f32 0.0, %v5523
        %v5525 = vpop.f32.mrf.mxu0
        %v5526 = vadd.f32 0.0, %v5525
        %5527 = vmatmul.bf16.gmra.mxu0 %v5466
        %v5528 = vpop.f32.mrf.mxu0
        %v5529 = vadd.f32 0.0, %v5528
        %v5530 = vpop.f32.mrf.mxu0
        %v5531 = vadd.f32 0.0, %v5530
        %5532 = vmatmul.bf16.gmra.mxu0 %v5469
        %v5533 = vpop.f32.mrf.mxu0
        %v5534 = vadd.f32 0.0, %v5533
        %v5535 = vpop.f32.mrf.mxu0
        %v5536 = vadd.f32 0.0, %v5535
        %5537 = vmatmul.bf16.gmra.mxu0 %v5472
        %v5538 = vpop.f32.mrf.mxu0
        %v5539 = vadd.f32 0.0, %v5538
        %v5540 = vpop.f32.mrf.mxu0
        %v5541 = vadd.f32 0.0, %v5540
        %5542 = vmatmul.bf16.gmra.mxu0 %v5475
        %v5543 = vpop.f32.mrf.mxu0
        %v5544 = vadd.f32 0.0, %v5543
        %v5545 = vpop.f32.mrf.mxu0
        %v5546 = vadd.f32 0.0, %v5545
        %5547 = vmatmul.bf16.gmra.mxu0 %v5478
        %v5548 = vpop.f32.mrf.mxu0
        %v5549 = vadd.f32 0.0, %v5548
        %v5550 = vpop.f32.mrf.mxu0
        %v5551 = vadd.f32 0.0, %v5550
        %5552 = vmatmul.bf16.gmra.mxu0 %v5481
        %v5553 = vpop.f32.mrf.mxu0
        %v5554 = vadd.f32 0.0, %v5553
        %v5555 = vpop.f32.mrf.mxu0
        %v5556 = vadd.f32 0.0, %v5555
        %5557 = vmatmul.bf16.gmra.mxu0 %v5484
        %v5558 = vpop.f32.mrf.mxu0
        %v5559 = vadd.f32 0.0, %v5558
        %v5560 = vpop.f32.mrf.mxu0
        %v5561 = vadd.f32 0.0, %v5560
        %5562 = vmatmul.bf16.gmra.mxu0 %v5487
        %v5563 = vpop.f32.mrf.mxu0
        %v5564 = vadd.f32 0.0, %v5563
        %v5565 = vpop.f32.mrf.mxu0
        %v5566 = vadd.f32 0.0, %v5565
        %5567 = vmatmul.bf16.gmra.mxu0 %v5490
        %v5568 = vpop.f32.mrf.mxu0
        %v5569 = vadd.f32 0.0, %v5568
        %v5570 = vpop.f32.mrf.mxu0
        %v5571 = vadd.f32 0.0, %v5570
        %5572 = vmatmul.bf16.gmra.mxu0 %v5493
        %v5573 = vpop.f32.mrf.mxu0
        %v5574 = vadd.f32 0.0, %v5573
        %v5575 = vpop.f32.mrf.mxu0
        %v5576 = vadd.f32 0.0, %v5575
        %5577 = vmatmul.bf16.gmra.mxu0 %v5496
        %v5578 = vpop.f32.mrf.mxu0
        %v5579 = vadd.f32 0.0, %v5578
        %v5580 = vpop.f32.mrf.mxu0
        %v5581 = vadd.f32 0.0, %v5580
        %5582 = vmatmul.bf16.gmra.mxu0 %v5499
        %v5583 = vpop.f32.mrf.mxu0
        %v5584 = vadd.f32 0.0, %v5583
        %v5585 = vpop.f32.mrf.mxu0
        %v5586 = vadd.f32 0.0, %v5585
        %5587 = vmatmul.bf16.gmra.mxu0 %v5502
        %v5588 = vpop.f32.mrf.mxu0
        %v5589 = vadd.f32 0.0, %v5588
        %v5590 = vpop.f32.mrf.mxu0
        %v5591 = vadd.f32 0.0, %v5590
        %5592 = vdwg.mxu0
        %v5593 = vadd.f32 %v5344, %v5514
        %v5594 = vadd.f32 %v5345, %v5516
        %v5595 = vadd.f32 %v5346, %v5519
        %v5596 = vadd.f32 %v5347, %v5521
        %v5597 = vadd.f32 %v5348, %v5524
        %v5598 = vadd.f32 %v5349, %v5526
        %v5599 = vadd.f32 %v5350, %v5529
        %v5600 = vadd.f32 %v5351, %v5531
        %v5601 = vadd.f32 %v5352, %v5534
        %v5602 = vadd.f32 %v5353, %v5536
        %v5603 = vadd.f32 %v5354, %v5539
        %v5604 = vadd.f32 %v5355, %v5541
        %v5605 = vadd.f32 %v5356, %v5544
        %v5606 = vadd.f32 %v5357, %v5546
        %v5607 = vadd.f32 %v5358, %v5549
        %v5608 = vadd.f32 %v5359, %v5551
        %v5609 = vadd.f32 %v5360, %v5554
        %v5610 = vadd.f32 %v5361, %v5556
        %v5611 = vadd.f32 %v5362, %v5559
        %v5612 = vadd.f32 %v5363, %v5561
        %v5613 = vadd.f32 %v5364, %v5564
        %v5614 = vadd.f32 %v5365, %v5566
        %v5615 = vadd.f32 %v5366, %v5569
        %v5616 = vadd.f32 %v5367, %v5571
        %v5617 = vadd.f32 %v5368, %v5574
        %v5618 = vadd.f32 %v5369, %v5576
        %v5619 = vadd.f32 %v5370, %v5579
        %v5620 = vadd.f32 %v5371, %v5581
        %v5621 = vadd.f32 %v5372, %v5584
        %v5622 = vadd.f32 %v5373, %v5586
        %v5623 = vadd.f32 %v5374, %v5589
        %v5624 = vadd.f32 %v5375, %v5591
        %v5625 = vld [vmem:[%s4676 + $0x80] sm:$0xf]
        %v5626 = vld [vmem:[%s4676 + $0x84] sm:$0xf]
        %v5627 = vld [vmem:[%s4676 + $0x88] sm:$0xf]
        %v5628 = vld [vmem:[%s4676 + $0x8c] sm:$0xf]
        %v5629 = vld [vmem:[%s4676 + $0x90] sm:$0xf]
        %v5630 = vld [vmem:[%s4676 + $0x94] sm:$0xf]
        %v5631 = vld [vmem:[%s4676 + $0x98] sm:$0xf]
        %v5632 = vld [vmem:[%s4676 + $0x9c] sm:$0xf]
        %v5665 = vunpack.c.l.b16 %v4498
        %v5666 = vunpack.c.l.b16 %v4499
        %v5667 = vunpack.c.l.b16 %v4500
        %v5668 = vunpack.c.l.b16 %v4501
        %v5669 = vunpack.c.l.b16 %v4502
        %v5670 = vunpack.c.l.b16 %v4503
        %v5671 = vunpack.c.l.b16 %v4504
        %v5672 = vunpack.c.l.b16 %v4505
        %v5673 = vunpack.c.l.b16 %v4506
        %v5674 = vunpack.c.l.b16 %v4507
        %v5675 = vunpack.c.l.b16 %v4508
        %v5676 = vunpack.c.l.b16 %v4509
        %v5677 = vunpack.c.l.b16 %v4510
        %v5678 = vunpack.c.l.b16 %v4511
        %v5679 = vunpack.c.l.b16 %v4512
        %v5680 = vunpack.c.l.b16 %v4513
        %v5681 = vunpack.c.l.b16 %v4514
        %v5682 = vunpack.c.l.b16 %v4515
        %v5683 = vunpack.c.l.b16 %v4516
        %v5684 = vunpack.c.l.b16 %v4517
        %v5685 = vunpack.c.l.b16 %v4518
        %v5686 = vunpack.c.l.b16 %v4519
        %v5687 = vunpack.c.l.b16 %v4520
        %v5688 = vunpack.c.l.b16 %v4521
        %v5689 = vunpack.c.l.b16 %v4522
        %v5690 = vunpack.c.l.b16 %v4523
        %v5691 = vunpack.c.l.b16 %v4524
        %v5692 = vunpack.c.l.b16 %v4525
        %v5693 = vunpack.c.l.b16 %v4526
        %v5694 = vunpack.c.l.b16 %v4527
        %v5695 = vunpack.c.l.b16 %v4528
        %v5696 = vunpack.c.l.b16 %v4529
        %v5697 = vpack.c.b16 %v5666, %v5665
        %v5698 = vpack.c.b16 %v5668, %v5667
        %v5699 = vpack.c.b16 %v5670, %v5669
        %v5700 = vpack.c.b16 %v5672, %v5671
        %v5701 = vpack.c.b16 %v5674, %v5673
        %v5702 = vpack.c.b16 %v5676, %v5675
        %v5703 = vpack.c.b16 %v5678, %v5677
        %v5704 = vpack.c.b16 %v5680, %v5679
        %v5705 = vpack.c.b16 %v5682, %v5681
        %v5706 = vpack.c.b16 %v5684, %v5683
        %v5707 = vpack.c.b16 %v5686, %v5685
        %v5708 = vpack.c.b16 %v5688, %v5687
        %v5709 = vpack.c.b16 %v5690, %v5689
        %v5710 = vpack.c.b16 %v5692, %v5691
        %v5711 = vpack.c.b16 %v5694, %v5693
        %v5712 = vpack.c.b16 %v5696, %v5695
        %v5721 = vunpack.c.l.b16 %v5625
        %v5722 = vunpack.c.l.b16 %v5626
        %v5723 = vunpack.c.l.b16 %v5627
        %v5724 = vunpack.c.l.b16 %v5628
        %v5725 = vunpack.c.l.b16 %v5629
        %v5726 = vunpack.c.l.b16 %v5630
        %v5727 = vunpack.c.l.b16 %v5631
        %v5728 = vunpack.c.l.b16 %v5632
        %v5729 = vpack.c.b16 %v5722, %v5721
        %v5730 = vpack.c.b16 %v5724, %v5723
        %v5731 = vpack.c.b16 %v5726, %v5725
        %v5732 = vpack.c.b16 %v5728, %v5727
        %v5738 = vsel %vm1100, %v5697, 0
        %v5741 = vsel %vm1100, %v5698, 0
        %v5744 = vsel %vm1100, %v5699, 0
        %v5747 = vsel %vm1100, %v5700, 0
        %v5750 = vsel %vm1100, %v5701, 0
        %v5753 = vsel %vm1100, %v5702, 0
        %v5756 = vsel %vm1100, %v5703, 0
        %v5759 = vsel %vm1100, %v5704, 0
        %v5762 = vsel %vm1100, %v5705, 0
        %v5765 = vsel %vm1100, %v5706, 0
        %v5768 = vsel %vm1100, %v5707, 0
        %v5771 = vsel %vm1100, %v5708, 0
        %v5774 = vsel %vm1100, %v5709, 0
        %v5777 = vsel %vm1100, %v5710, 0
        %v5780 = vsel %vm1100, %v5711, 0
        %v5783 = vsel %vm1100, %v5712, 0
        %5785 = vmatpush.bf16.msra.mxu0 0
        %5786 = vmatpush.bf16.msra.mxu0 0
        %5787 = vmatpush.bf16.msra.mxu0 0
        %5788 = vmatpush.bf16.msra.mxu0 0
        %5789 = vmatpush.bf16.msra.mxu0 %v5732
        %5790 = vmatpush.bf16.msra.mxu0 %v5731
        %5791 = vmatpush.bf16.msra.mxu0 %v5730
        %5792 = vmatpush.bf16.msra.mxu0 %v5729
        %5793 = vmatmul.bf16.gmra.mxu0 %v5738
        %v5794 = vpop.f32.mrf.mxu0
        %v5795 = vadd.f32 0.0, %v5794
        %v5796 = vpop.f32.mrf.mxu0
        %v5797 = vadd.f32 0.0, %v5796
        %5798 = vmatmul.bf16.gmra.mxu0 %v5741
        %v5799 = vpop.f32.mrf.mxu0
        %v5800 = vadd.f32 0.0, %v5799
        %v5801 = vpop.f32.mrf.mxu0
        %v5802 = vadd.f32 0.0, %v5801
        %5803 = vmatmul.bf16.gmra.mxu0 %v5744
        %v5804 = vpop.f32.mrf.mxu0
        %v5805 = vadd.f32 0.0, %v5804
        %v5806 = vpop.f32.mrf.mxu0
        %v5807 = vadd.f32 0.0, %v5806
        %5808 = vmatmul.bf16.gmra.mxu0 %v5747
        %v5809 = vpop.f32.mrf.mxu0
        %v5810 = vadd.f32 0.0, %v5809
        %v5811 = vpop.f32.mrf.mxu0
        %v5812 = vadd.f32 0.0, %v5811
        %5813 = vmatmul.bf16.gmra.mxu0 %v5750
        %v5814 = vpop.f32.mrf.mxu0
        %v5815 = vadd.f32 0.0, %v5814
        %v5816 = vpop.f32.mrf.mxu0
        %v5817 = vadd.f32 0.0, %v5816
        %5818 = vmatmul.bf16.gmra.mxu0 %v5753
        %v5819 = vpop.f32.mrf.mxu0
        %v5820 = vadd.f32 0.0, %v5819
        %v5821 = vpop.f32.mrf.mxu0
        %v5822 = vadd.f32 0.0, %v5821
        %5823 = vmatmul.bf16.gmra.mxu0 %v5756
        %v5824 = vpop.f32.mrf.mxu0
        %v5825 = vadd.f32 0.0, %v5824
        %v5826 = vpop.f32.mrf.mxu0
        %v5827 = vadd.f32 0.0, %v5826
        %5828 = vmatmul.bf16.gmra.mxu0 %v5759
        %v5829 = vpop.f32.mrf.mxu0
        %v5830 = vadd.f32 0.0, %v5829
        %v5831 = vpop.f32.mrf.mxu0
        %v5832 = vadd.f32 0.0, %v5831
        %5833 = vmatmul.bf16.gmra.mxu0 %v5762
        %v5834 = vpop.f32.mrf.mxu0
        %v5835 = vadd.f32 0.0, %v5834
        %v5836 = vpop.f32.mrf.mxu0
        %v5837 = vadd.f32 0.0, %v5836
        %5838 = vmatmul.bf16.gmra.mxu0 %v5765
        %v5839 = vpop.f32.mrf.mxu0
        %v5840 = vadd.f32 0.0, %v5839
        %v5841 = vpop.f32.mrf.mxu0
        %v5842 = vadd.f32 0.0, %v5841
        %5843 = vmatmul.bf16.gmra.mxu0 %v5768
        %v5844 = vpop.f32.mrf.mxu0
        %v5845 = vadd.f32 0.0, %v5844
        %v5846 = vpop.f32.mrf.mxu0
        %v5847 = vadd.f32 0.0, %v5846
        %5848 = vmatmul.bf16.gmra.mxu0 %v5771
        %v5849 = vpop.f32.mrf.mxu0
        %v5850 = vadd.f32 0.0, %v5849
        %v5851 = vpop.f32.mrf.mxu0
        %v5852 = vadd.f32 0.0, %v5851
        %5853 = vmatmul.bf16.gmra.mxu0 %v5774
        %v5854 = vpop.f32.mrf.mxu0
        %v5855 = vadd.f32 0.0, %v5854
        %v5856 = vpop.f32.mrf.mxu0
        %v5857 = vadd.f32 0.0, %v5856
        %5858 = vmatmul.bf16.gmra.mxu0 %v5777
        %v5859 = vpop.f32.mrf.mxu0
        %v5860 = vadd.f32 0.0, %v5859
        %v5861 = vpop.f32.mrf.mxu0
        %v5862 = vadd.f32 0.0, %v5861
        %5863 = vmatmul.bf16.gmra.mxu0 %v5780
        %v5864 = vpop.f32.mrf.mxu0
        %v5865 = vadd.f32 0.0, %v5864
        %v5866 = vpop.f32.mrf.mxu0
        %v5867 = vadd.f32 0.0, %v5866
        %5868 = vmatmul.bf16.gmra.mxu0 %v5783
        %v5869 = vpop.f32.mrf.mxu0
        %v5870 = vadd.f32 0.0, %v5869
        %v5871 = vpop.f32.mrf.mxu0
        %v5872 = vadd.f32 0.0, %v5871
        %5873 = vdwg.mxu0
        %v5874 = vadd.f32 %v5593, %v5795
        %v5875 = vadd.f32 %v5594, %v5797
        %v5876 = vadd.f32 %v5595, %v5800
        %v5877 = vadd.f32 %v5596, %v5802
        %v5878 = vadd.f32 %v5597, %v5805
        %v5879 = vadd.f32 %v5598, %v5807
        %v5880 = vadd.f32 %v5599, %v5810
        %v5881 = vadd.f32 %v5600, %v5812
        %v5882 = vadd.f32 %v5601, %v5815
        %v5883 = vadd.f32 %v5602, %v5817
        %v5884 = vadd.f32 %v5603, %v5820
        %v5885 = vadd.f32 %v5604, %v5822
        %v5886 = vadd.f32 %v5605, %v5825
        %v5887 = vadd.f32 %v5606, %v5827
        %v5888 = vadd.f32 %v5607, %v5830
        %v5889 = vadd.f32 %v5608, %v5832
        %v5890 = vadd.f32 %v5609, %v5835
        %v5891 = vadd.f32 %v5610, %v5837
        %v5892 = vadd.f32 %v5611, %v5840
        %v5893 = vadd.f32 %v5612, %v5842
        %v5894 = vadd.f32 %v5613, %v5845
        %v5895 = vadd.f32 %v5614, %v5847
        %v5896 = vadd.f32 %v5615, %v5850
        %v5897 = vadd.f32 %v5616, %v5852
        %v5898 = vadd.f32 %v5617, %v5855
        %v5899 = vadd.f32 %v5618, %v5857
        %v5900 = vadd.f32 %v5619, %v5860
        %v5901 = vadd.f32 %v5620, %v5862
        %v5902 = vadd.f32 %v5621, %v5865
        %v5903 = vadd.f32 %v5622, %v5867
        %v5904 = vadd.f32 %v5623, %v5870
        %v5905 = vadd.f32 %v5624, %v5872
        %v5906 = vmul.f32 %v5125, %v2501
        %v5907 = vmul.f32 %v5124, %v2505
        %v5908 = vmul.f32 %v5123, %v2509
        %v5909 = vmul.f32 %v5122, %v2513
        %v5910 = vmul.f32 %v5121, %v2517
        %v5911 = vmul.f32 %v5120, %v2521
        %v5912 = vmul.f32 %v5119, %v2525
        %v5913 = vmul.f32 %v5118, %v2529
        %v5914 = vmul.f32 %v5117, %v2533
        %v5915 = vmul.f32 %v5116, %v2537
        %v5916 = vmul.f32 %v5115, %v2541
        %v5917 = vmul.f32 %v5114, %v2545
        %v5918 = vmul.f32 %v5113, %v2549
        %v5919 = vmul.f32 %v5112, %v2553
        %v5920 = vmul.f32 %v5111, %v2557
        %v5921 = vmul.f32 %v5110, %v2561
        %v5922 = vmul.f32 %v5109, %v2565
        %v5923 = vmul.f32 %v5108, %v2569
        %v5924 = vmul.f32 %v5107, %v2573
        %v5925 = vmul.f32 %v5106, %v2577
        %v5926 = vmul.f32 %v5105, %v2581
        %v5927 = vmul.f32 %v5104, %v2585
        %v5928 = vmul.f32 %v5103, %v2589
        %v5929 = vmul.f32 %v5102, %v2593
        %v5930 = vmul.f32 %v5101, %v2597
        %v5931 = vmul.f32 %v5100, %v2601
        %v5932 = vmul.f32 %v5099, %v2605
        %v5933 = vmul.f32 %v5098, %v2609
        %v5934 = vmul.f32 %v5097, %v2613
        %v5935 = vmul.f32 %v5096, %v2617
        %v5936 = vmul.f32 %v5095, %v2621
        %v5937 = vmul.f32 %v5126, %v2625
        %v5938 = vpack.c.bf16 %v5907, %v5906
        %v5939 = vpack.c.bf16 %v5909, %v5908
        %v5940 = vpack.c.bf16 %v5911, %v5910
        %v5941 = vpack.c.bf16 %v5913, %v5912
        %v5942 = vpack.c.bf16 %v5915, %v5914
        %v5943 = vpack.c.bf16 %v5917, %v5916
        %v5944 = vpack.c.bf16 %v5919, %v5918
        %v5945 = vpack.c.bf16 %v5921, %v5920
        %v5946 = vpack.c.bf16 %v5923, %v5922
        %v5947 = vpack.c.bf16 %v5925, %v5924
        %v5948 = vpack.c.bf16 %v5927, %v5926
        %v5949 = vpack.c.bf16 %v5929, %v5928
        %v5950 = vpack.c.bf16 %v5931, %v5930
        %v5951 = vpack.c.bf16 %v5933, %v5932
        %v5952 = vpack.c.bf16 %v5935, %v5934
        %v5953 = vpack.c.bf16 %v5937, %v5936
        %v5954 = vld [vmem:[%s4676 + $0xa0] sm:$0xf]
        %v5955 = vld [vmem:[%s4676 + $0xa4] sm:$0xf]
        %v5956 = vld [vmem:[%s4676 + $0xa8] sm:$0xf]
        %v5957 = vld [vmem:[%s4676 + $0xac] sm:$0xf]
        %v5958 = vld [vmem:[%s4676 + $0xb0] sm:$0xf]
        %v5959 = vld [vmem:[%s4676 + $0xb4] sm:$0xf]
        %v5960 = vld [vmem:[%s4676 + $0xb8] sm:$0xf]
        %v5961 = vld [vmem:[%s4676 + $0xbc] sm:$0xf]
        %v5970 = vunpack.c.l.b16 %v5954
        %v5971 = vunpack.c.l.b16 %v5955
        %v5972 = vunpack.c.l.b16 %v5956
        %v5973 = vunpack.c.l.b16 %v5957
        %v5974 = vunpack.c.l.b16 %v5958
        %v5975 = vunpack.c.l.b16 %v5959
        %v5976 = vunpack.c.l.b16 %v5960
        %v5977 = vunpack.c.l.b16 %v5961
        %v5978 = vpack.c.b16 %v5971, %v5970
        %v5979 = vpack.c.b16 %v5973, %v5972
        %v5980 = vpack.c.b16 %v5975, %v5974
        %v5981 = vpack.c.b16 %v5977, %v5976
        %v5987 = vsel %vm1100, %v5938, 0
        %v5990 = vsel %vm1100, %v5939, 0
        %v5993 = vsel %vm1100, %v5940, 0
        %v5996 = vsel %vm1100, %v5941, 0
        %v5999 = vsel %vm1100, %v5942, 0
        %v6002 = vsel %vm1100, %v5943, 0
        %v6005 = vsel %vm1100, %v5944, 0
        %v6008 = vsel %vm1100, %v5945, 0
        %v6011 = vsel %vm1100, %v5946, 0
        %v6014 = vsel %vm1100, %v5947, 0
        %v6017 = vsel %vm1100, %v5948, 0
        %v6020 = vsel %vm1100, %v5949, 0
        %v6023 = vsel %vm1100, %v5950, 0
        %v6026 = vsel %vm1100, %v5951, 0
        %v6029 = vsel %vm1100, %v5952, 0
        %v6032 = vsel %vm1100, %v5953, 0
        %6034 = vmatpush.bf16.msra.mxu0 0
        %6035 = vmatpush.bf16.msra.mxu0 0
        %6036 = vmatpush.bf16.msra.mxu0 0
        %6037 = vmatpush.bf16.msra.mxu0 0
        %6038 = vmatpush.bf16.msra.mxu0 %v5981
        %6039 = vmatpush.bf16.msra.mxu0 %v5980
        %6040 = vmatpush.bf16.msra.mxu0 %v5979
        %6041 = vmatpush.bf16.msra.mxu0 %v5978
        %6042 = vmatmul.bf16.gmra.mxu0 %v5987
        %v6043 = vpop.f32.mrf.mxu0
        %v6044 = vadd.f32 0.0, %v6043
        %v6045 = vpop.f32.mrf.mxu0
        %v6046 = vadd.f32 0.0, %v6045
        %6047 = vmatmul.bf16.gmra.mxu0 %v5990
        %v6048 = vpop.f32.mrf.mxu0
        %v6049 = vadd.f32 0.0, %v6048
        %v6050 = vpop.f32.mrf.mxu0
        %v6051 = vadd.f32 0.0, %v6050
        %6052 = vmatmul.bf16.gmra.mxu0 %v5993
        %v6053 = vpop.f32.mrf.mxu0
        %v6054 = vadd.f32 0.0, %v6053
        %v6055 = vpop.f32.mrf.mxu0
        %v6056 = vadd.f32 0.0, %v6055
        %6057 = vmatmul.bf16.gmra.mxu0 %v5996
        %v6058 = vpop.f32.mrf.mxu0
        %v6059 = vadd.f32 0.0, %v6058
        %v6060 = vpop.f32.mrf.mxu0
        %v6061 = vadd.f32 0.0, %v6060
        %6062 = vmatmul.bf16.gmra.mxu0 %v5999
        %v6063 = vpop.f32.mrf.mxu0
        %v6064 = vadd.f32 0.0, %v6063
        %v6065 = vpop.f32.mrf.mxu0
        %v6066 = vadd.f32 0.0, %v6065
        %6067 = vmatmul.bf16.gmra.mxu0 %v6002
        %v6068 = vpop.f32.mrf.mxu0
        %v6069 = vadd.f32 0.0, %v6068
        %v6070 = vpop.f32.mrf.mxu0
        %v6071 = vadd.f32 0.0, %v6070
        %6072 = vmatmul.bf16.gmra.mxu0 %v6005
        %v6073 = vpop.f32.mrf.mxu0
        %v6074 = vadd.f32 0.0, %v6073
        %v6075 = vpop.f32.mrf.mxu0
        %v6076 = vadd.f32 0.0, %v6075
        %6077 = vmatmul.bf16.gmra.mxu0 %v6008
        %v6078 = vpop.f32.mrf.mxu0
        %v6079 = vadd.f32 0.0, %v6078
        %v6080 = vpop.f32.mrf.mxu0
        %v6081 = vadd.f32 0.0, %v6080
        %6082 = vmatmul.bf16.gmra.mxu0 %v6011
        %v6083 = vpop.f32.mrf.mxu0
        %v6084 = vadd.f32 0.0, %v6083
        %v6085 = vpop.f32.mrf.mxu0
        %v6086 = vadd.f32 0.0, %v6085
        %6087 = vmatmul.bf16.gmra.mxu0 %v6014
        %v6088 = vpop.f32.mrf.mxu0
        %v6089 = vadd.f32 0.0, %v6088
        %v6090 = vpop.f32.mrf.mxu0
        %v6091 = vadd.f32 0.0, %v6090
        %6092 = vmatmul.bf16.gmra.mxu0 %v6017
        %v6093 = vpop.f32.mrf.mxu0
        %v6094 = vadd.f32 0.0, %v6093
        %v6095 = vpop.f32.mrf.mxu0
        %v6096 = vadd.f32 0.0, %v6095
        %6097 = vmatmul.bf16.gmra.mxu0 %v6020
        %v6098 = vpop.f32.mrf.mxu0
        %v6099 = vadd.f32 0.0, %v6098
        %v6100 = vpop.f32.mrf.mxu0
        %v6101 = vadd.f32 0.0, %v6100
        %6102 = vmatmul.bf16.gmra.mxu0 %v6023
        %v6103 = vpop.f32.mrf.mxu0
        %v6104 = vadd.f32 0.0, %v6103
        %v6105 = vpop.f32.mrf.mxu0
        %v6106 = vadd.f32 0.0, %v6105
        %6107 = vmatmul.bf16.gmra.mxu0 %v6026
        %v6108 = vpop.f32.mrf.mxu0
        %v6109 = vadd.f32 0.0, %v6108
        %v6110 = vpop.f32.mrf.mxu0
        %v6111 = vadd.f32 0.0, %v6110
        %6112 = vmatmul.bf16.gmra.mxu0 %v6029
        %v6113 = vpop.f32.mrf.mxu0
        %v6114 = vadd.f32 0.0, %v6113
        %v6115 = vpop.f32.mrf.mxu0
        %v6116 = vadd.f32 0.0, %v6115
        %6117 = vmatmul.bf16.gmra.mxu0 %v6032
        %v6118 = vpop.f32.mrf.mxu0
        %v6119 = vadd.f32 0.0, %v6118
        %v6120 = vpop.f32.mrf.mxu0
        %v6121 = vadd.f32 0.0, %v6120
        %6122 = vdwg.mxu0
        %v6123 = vadd.f32 %v5874, %v6044
        %v6124 = vadd.f32 %v5875, %v6046
        %v6125 = vadd.f32 %v5876, %v6049
        %v6126 = vadd.f32 %v5877, %v6051
        %v6127 = vadd.f32 %v5878, %v6054
        %v6128 = vadd.f32 %v5879, %v6056
        %v6129 = vadd.f32 %v5880, %v6059
        %v6130 = vadd.f32 %v5881, %v6061
        %v6131 = vadd.f32 %v5882, %v6064
        %v6132 = vadd.f32 %v5883, %v6066
        %v6133 = vadd.f32 %v5884, %v6069
        %v6134 = vadd.f32 %v5885, %v6071
        %v6135 = vadd.f32 %v5886, %v6074
        %v6136 = vadd.f32 %v5887, %v6076
        %v6137 = vadd.f32 %v5888, %v6079
        %v6138 = vadd.f32 %v5889, %v6081
        %v6139 = vadd.f32 %v5890, %v6084
        %v6140 = vadd.f32 %v5891, %v6086
        %v6141 = vadd.f32 %v5892, %v6089
        %v6142 = vadd.f32 %v5893, %v6091
        %v6143 = vadd.f32 %v5894, %v6094
        %v6144 = vadd.f32 %v5895, %v6096
        %v6145 = vadd.f32 %v5896, %v6099
        %v6146 = vadd.f32 %v5897, %v6101
        %v6147 = vadd.f32 %v5898, %v6104
        %v6148 = vadd.f32 %v5899, %v6106
        %v6149 = vadd.f32 %v5900, %v6109
        %v6150 = vadd.f32 %v5901, %v6111
        %v6151 = vadd.f32 %v5902, %v6114
        %v6152 = vadd.f32 %v5903, %v6116
        %v6153 = vadd.f32 %v5904, %v6119
        %v6154 = vadd.f32 %v5905, %v6121
        %v6155 = vmul.f32 %v4625, %v2878
        %v6156 = vmul.f32 %v4624, %v2882
        %v6157 = vmul.f32 %v4623, %v2886
        %v6158 = vmul.f32 %v4622, %v2890
        %v6159 = vmul.f32 %v4621, %v2894
        %v6160 = vmul.f32 %v4620, %v2898
        %v6161 = vmul.f32 %v4619, %v2902
        %v6162 = vmul.f32 %v4618, %v2906
        %v6163 = vmul.f32 %v4617, %v2910
        %v6164 = vmul.f32 %v4616, %v2914
        %v6165 = vmul.f32 %v4615, %v2918
        %v6166 = vmul.f32 %v4614, %v2922
        %v6167 = vmul.f32 %v4613, %v2926
        %v6168 = vmul.f32 %v4612, %v2930
        %v6169 = vmul.f32 %v4611, %v2934
        %v6170 = vmul.f32 %v4610, %v2938
        %v6171 = vmul.f32 %v4609, %v2942
        %v6172 = vmul.f32 %v4608, %v2946
        %v6173 = vmul.f32 %v4607, %v2950
        %v6174 = vmul.f32 %v4606, %v2954
        %v6175 = vmul.f32 %v4605, %v2958
        %v6176 = vmul.f32 %v4604, %v2962
        %v6177 = vmul.f32 %v4603, %v2966
        %v6178 = vmul.f32 %v4602, %v2970
        %v6179 = vmul.f32 %v4601, %v2974
        %v6180 = vmul.f32 %v4600, %v2978
        %v6181 = vmul.f32 %v4599, %v2982
        %v6182 = vmul.f32 %v4598, %v2986
        %v6183 = vmul.f32 %v4597, %v2990
        %v6184 = vmul.f32 %v4596, %v2994
        %v6185 = vmul.f32 %v4627, %v2998
        %v6186 = vmul.f32 %v4626, %v3002
        %v6187 = vpack.c.bf16 %v6156, %v6155
        %v6188 = vpack.c.bf16 %v6158, %v6157
        %v6189 = vpack.c.bf16 %v6160, %v6159
        %v6190 = vpack.c.bf16 %v6162, %v6161
        %v6191 = vpack.c.bf16 %v6164, %v6163
        %v6192 = vpack.c.bf16 %v6166, %v6165
        %v6193 = vpack.c.bf16 %v6168, %v6167
        %v6194 = vpack.c.bf16 %v6170, %v6169
        %v6195 = vpack.c.bf16 %v6172, %v6171
        %v6196 = vpack.c.bf16 %v6174, %v6173
        %v6197 = vpack.c.bf16 %v6176, %v6175
        %v6198 = vpack.c.bf16 %v6178, %v6177
        %v6199 = vpack.c.bf16 %v6180, %v6179
        %v6200 = vpack.c.bf16 %v6182, %v6181
        %v6201 = vpack.c.bf16 %v6184, %v6183
        %v6202 = vpack.c.bf16 %v6186, %v6185
        %v6203 = vld [vmem:[%s4676 + $0xc0] sm:$0xf]
        %v6204 = vld [vmem:[%s4676 + $0xc4] sm:$0xf]
        %v6205 = vld [vmem:[%s4676 + $0xc8] sm:$0xf]
        %v6206 = vld [vmem:[%s4676 + $0xcc] sm:$0xf]
        %v6207 = vld [vmem:[%s4676 + $0xd0] sm:$0xf]
        %v6208 = vld [vmem:[%s4676 + $0xd4] sm:$0xf]
        %v6209 = vld [vmem:[%s4676 + $0xd8] sm:$0xf]
        %v6210 = vld [vmem:[%s4676 + $0xdc] sm:$0xf]
        %v6219 = vunpack.c.l.b16 %v6203
        %v6220 = vunpack.c.l.b16 %v6204
        %v6221 = vunpack.c.l.b16 %v6205
        %v6222 = vunpack.c.l.b16 %v6206
        %v6223 = vunpack.c.l.b16 %v6207
        %v6224 = vunpack.c.l.b16 %v6208
        %v6225 = vunpack.c.l.b16 %v6209
        %v6226 = vunpack.c.l.b16 %v6210
        %v6227 = vpack.c.b16 %v6220, %v6219
        %v6228 = vpack.c.b16 %v6222, %v6221
        %v6229 = vpack.c.b16 %v6224, %v6223
        %v6230 = vpack.c.b16 %v6226, %v6225
        %v6236 = vsel %vm1100, %v6187, 0
        %v6239 = vsel %vm1100, %v6188, 0
        %v6242 = vsel %vm1100, %v6189, 0
        %v6245 = vsel %vm1100, %v6190, 0
        %v6248 = vsel %vm1100, %v6191, 0
        %v6251 = vsel %vm1100, %v6192, 0
        %v6254 = vsel %vm1100, %v6193, 0
        %v6257 = vsel %vm1100, %v6194, 0
        %v6260 = vsel %vm1100, %v6195, 0
        %v6263 = vsel %vm1100, %v6196, 0
        %v6266 = vsel %vm1100, %v6197, 0
        %v6269 = vsel %vm1100, %v6198, 0
        %v6272 = vsel %vm1100, %v6199, 0
        %v6275 = vsel %vm1100, %v6200, 0
        %v6278 = vsel %vm1100, %v6201, 0
        %v6281 = vsel %vm1100, %v6202, 0
        %6283 = vmatpush.bf16.msra.mxu0 0
        %6284 = vmatpush.bf16.msra.mxu0 0
        %6285 = vmatpush.bf16.msra.mxu0 0
        %6286 = vmatpush.bf16.msra.mxu0 0
        %6287 = vmatpush.bf16.msra.mxu0 %v6230
        %6288 = vmatpush.bf16.msra.mxu0 %v6229
        %6289 = vmatpush.bf16.msra.mxu0 %v6228
        %6290 = vmatpush.bf16.msra.mxu0 %v6227
        %6291 = vmatmul.bf16.gmra.mxu0 %v6236
        %v6292 = vpop.f32.mrf.mxu0
        %v6293 = vadd.f32 0.0, %v6292
        %v6294 = vpop.f32.mrf.mxu0
        %v6295 = vadd.f32 0.0, %v6294
        %6296 = vmatmul.bf16.gmra.mxu0 %v6239
        %v6297 = vpop.f32.mrf.mxu0
        %v6298 = vadd.f32 0.0, %v6297
        %v6299 = vpop.f32.mrf.mxu0
        %v6300 = vadd.f32 0.0, %v6299
        %6301 = vmatmul.bf16.gmra.mxu0 %v6242
        %v6302 = vpop.f32.mrf.mxu0
        %v6303 = vadd.f32 0.0, %v6302
        %v6304 = vpop.f32.mrf.mxu0
        %v6305 = vadd.f32 0.0, %v6304
        %6306 = vmatmul.bf16.gmra.mxu0 %v6245
        %v6307 = vpop.f32.mrf.mxu0
        %v6308 = vadd.f32 0.0, %v6307
        %v6309 = vpop.f32.mrf.mxu0
        %v6310 = vadd.f32 0.0, %v6309
        %6311 = vmatmul.bf16.gmra.mxu0 %v6248
        %v6312 = vpop.f32.mrf.mxu0
        %v6313 = vadd.f32 0.0, %v6312
        %v6314 = vpop.f32.mrf.mxu0
        %v6315 = vadd.f32 0.0, %v6314
        %6316 = vmatmul.bf16.gmra.mxu0 %v6251
        %v6317 = vpop.f32.mrf.mxu0
        %v6318 = vadd.f32 0.0, %v6317
        %v6319 = vpop.f32.mrf.mxu0
        %v6320 = vadd.f32 0.0, %v6319
        %6321 = vmatmul.bf16.gmra.mxu0 %v6254
        %v6322 = vpop.f32.mrf.mxu0
        %v6323 = vadd.f32 0.0, %v6322
        %v6324 = vpop.f32.mrf.mxu0
        %v6325 = vadd.f32 0.0, %v6324
        %6326 = vmatmul.bf16.gmra.mxu0 %v6257
        %v6327 = vpop.f32.mrf.mxu0
        %v6328 = vadd.f32 0.0, %v6327
        %v6329 = vpop.f32.mrf.mxu0
        %v6330 = vadd.f32 0.0, %v6329
        %6331 = vmatmul.bf16.gmra.mxu0 %v6260
        %v6332 = vpop.f32.mrf.mxu0
        %v6333 = vadd.f32 0.0, %v6332
        %v6334 = vpop.f32.mrf.mxu0
        %v6335 = vadd.f32 0.0, %v6334
        %6336 = vmatmul.bf16.gmra.mxu0 %v6263
        %v6337 = vpop.f32.mrf.mxu0
        %v6338 = vadd.f32 0.0, %v6337
        %v6339 = vpop.f32.mrf.mxu0
        %v6340 = vadd.f32 0.0, %v6339
        %6341 = vmatmul.bf16.gmra.mxu0 %v6266
        %v6342 = vpop.f32.mrf.mxu0
        %v6343 = vadd.f32 0.0, %v6342
        %v6344 = vpop.f32.mrf.mxu0
        %v6345 = vadd.f32 0.0, %v6344
        %6346 = vmatmul.bf16.gmra.mxu0 %v6269
        %v6347 = vpop.f32.mrf.mxu0
        %v6348 = vadd.f32 0.0, %v6347
        %v6349 = vpop.f32.mrf.mxu0
        %v6350 = vadd.f32 0.0, %v6349
        %6351 = vmatmul.bf16.gmra.mxu0 %v6272
        %v6352 = vpop.f32.mrf.mxu0
        %v6353 = vadd.f32 0.0, %v6352
        %v6354 = vpop.f32.mrf.mxu0
        %v6355 = vadd.f32 0.0, %v6354
        %6356 = vmatmul.bf16.gmra.mxu0 %v6275
        %v6357 = vpop.f32.mrf.mxu0
        %v6358 = vadd.f32 0.0, %v6357
        %v6359 = vpop.f32.mrf.mxu0
        %v6360 = vadd.f32 0.0, %v6359
        %6361 = vmatmul.bf16.gmra.mxu0 %v6278
        %v6362 = vpop.f32.mrf.mxu0
        %v6363 = vadd.f32 0.0, %v6362
        %v6364 = vpop.f32.mrf.mxu0
        %v6365 = vadd.f32 0.0, %v6364
        %6366 = vmatmul.bf16.gmra.mxu0 %v6281
        %v6367 = vpop.f32.mrf.mxu0
        %v6368 = vadd.f32 0.0, %v6367
        %v6369 = vpop.f32.mrf.mxu0
        %v6370 = vadd.f32 0.0, %v6369
        %6371 = vdwg.mxu0
        %v6372 = vadd.f32 %v6123, %v6293
        %v6373 = vadd.f32 %v6124, %v6295
        %v6374 = vadd.f32 %v6125, %v6298
        %v6375 = vadd.f32 %v6126, %v6300
        %v6376 = vadd.f32 %v6127, %v6303
        %v6377 = vadd.f32 %v6128, %v6305
        %v6378 = vadd.f32 %v6129, %v6308
        %v6379 = vadd.f32 %v6130, %v6310
        %v6380 = vadd.f32 %v6131, %v6313
        %v6381 = vadd.f32 %v6132, %v6315
        %v6382 = vadd.f32 %v6133, %v6318
        %v6383 = vadd.f32 %v6134, %v6320
        %v6384 = vadd.f32 %v6135, %v6323
        %v6385 = vadd.f32 %v6136, %v6325
        %v6386 = vadd.f32 %v6137, %v6328
        %v6387 = vadd.f32 %v6138, %v6330
        %v6388 = vadd.f32 %v6139, %v6333
        %v6389 = vadd.f32 %v6140, %v6335
        %v6390 = vadd.f32 %v6141, %v6338
        %v6391 = vadd.f32 %v6142, %v6340
        %v6392 = vadd.f32 %v6143, %v6343
        %v6393 = vadd.f32 %v6144, %v6345
        %v6394 = vadd.f32 %v6145, %v6348
        %v6395 = vadd.f32 %v6146, %v6350
        %v6396 = vadd.f32 %v6147, %v6353
        %v6397 = vadd.f32 %v6148, %v6355
        %v6398 = vadd.f32 %v6149, %v6358
        %v6399 = vadd.f32 %v6150, %v6360
        %v6400 = vadd.f32 %v6151, %v6363
        %v6401 = vadd.f32 %v6152, %v6365
        %v6402 = vadd.f32 %v6153, %v6368
        %v6403 = vadd.f32 %v6154, %v6370
        %v6404 = vmul.f32 %v4534, %v3255
        %v6405 = vmul.f32 %v4535, %v3259
        %v6406 = vmul.f32 %v4536, %v3263
        %v6407 = vmul.f32 %v4537, %v3267
        %v6408 = vmul.f32 %v4538, %v3271
        %v6409 = vmul.f32 %v4539, %v3275
        %v6410 = vmul.f32 %v4540, %v3279
        %v6411 = vmul.f32 %v4541, %v3283
        %v6412 = vmul.f32 %v4542, %v3287
        %v6413 = vmul.f32 %v4543, %v3291
        %v6414 = vmul.f32 %v4544, %v3295
        %v6415 = vmul.f32 %v4545, %v3299
        %v6416 = vmul.f32 %v4546, %v3303
        %v6417 = vmul.f32 %v4547, %v3307
        %v6418 = vmul.f32 %v4548, %v3311
        %v6419 = vmul.f32 %v4549, %v3315
        %v6420 = vmul.f32 %v4550, %v3319
        %v6421 = vmul.f32 %v4551, %v3323
        %v6422 = vmul.f32 %v4552, %v3327
        %v6423 = vmul.f32 %v4553, %v3331
        %v6424 = vmul.f32 %v4554, %v3335
        %v6425 = vmul.f32 %v4555, %v3339
        %v6426 = vmul.f32 %v4556, %v3343
        %v6427 = vmul.f32 %v4557, %v3347
        %v6428 = vmul.f32 %v4558, %v3351
        %v6429 = vmul.f32 %v4559, %v3355
        %v6430 = vmul.f32 %v4560, %v3359
        %v6431 = vmul.f32 %v4561, %v3363
        %v6432 = vmul.f32 %v4562, %v3367
        %v6433 = vmul.f32 %v4563, %v3371
        %v6434 = vmul.f32 %v4532, %v3375
        %v6435 = vmul.f32 %v4533, %v3379
        %v6436 = vpack.c.bf16 %v6405, %v6404
        %v6437 = vpack.c.bf16 %v6407, %v6406
        %v6438 = vpack.c.bf16 %v6409, %v6408
        %v6439 = vpack.c.bf16 %v6411, %v6410
        %v6440 = vpack.c.bf16 %v6413, %v6412
        %v6441 = vpack.c.bf16 %v6415, %v6414
        %v6442 = vpack.c.bf16 %v6417, %v6416
        %v6443 = vpack.c.bf16 %v6419, %v6418
        %v6444 = vpack.c.bf16 %v6421, %v6420
        %v6445 = vpack.c.bf16 %v6423, %v6422
        %v6446 = vpack.c.bf16 %v6425, %v6424
        %v6447 = vpack.c.bf16 %v6427, %v6426
        %v6448 = vpack.c.bf16 %v6429, %v6428
        %v6449 = vpack.c.bf16 %v6431, %v6430
        %v6450 = vpack.c.bf16 %v6433, %v6432
        %v6451 = vpack.c.bf16 %v6435, %v6434
        %v6452 = vld [vmem:[%s4676 + $0xe0] sm:$0xf]
        %v6453 = vld [vmem:[%s4676 + $0xe4] sm:$0xf]
        %v6454 = vld [vmem:[%s4676 + $0xe8] sm:$0xf]
        %v6455 = vld [vmem:[%s4676 + $0xec] sm:$0xf]
        %v6456 = vld [vmem:[%s4676 + $0xf0] sm:$0xf]
        %v6457 = vld [vmem:[%s4676 + $0xf4] sm:$0xf]
        %v6458 = vld [vmem:[%s4676 + $0xf8] sm:$0xf]
        %v6459 = vld [vmem:[%s4676 + $0xfc] sm:$0xf]
        %v6468 = vunpack.c.l.b16 %v6452
        %v6469 = vunpack.c.l.b16 %v6453
        %v6470 = vunpack.c.l.b16 %v6454
        %v6471 = vunpack.c.l.b16 %v6455
        %v6472 = vunpack.c.l.b16 %v6456
        %v6473 = vunpack.c.l.b16 %v6457
        %v6474 = vunpack.c.l.b16 %v6458
        %v6475 = vunpack.c.l.b16 %v6459
        %v6476 = vpack.c.b16 %v6469, %v6468
        %v6477 = vpack.c.b16 %v6471, %v6470
        %v6478 = vpack.c.b16 %v6473, %v6472
        %v6479 = vpack.c.b16 %v6475, %v6474
        %v6485 = vsel %vm1100, %v6436, 0
        %v6488 = vsel %vm1100, %v6437, 0
        %v6491 = vsel %vm1100, %v6438, 0
        %v6494 = vsel %vm1100, %v6439, 0
        %v6497 = vsel %vm1100, %v6440, 0
        %v6500 = vsel %vm1100, %v6441, 0
        %v6503 = vsel %vm1100, %v6442, 0
        %v6506 = vsel %vm1100, %v6443, 0
        %v6509 = vsel %vm1100, %v6444, 0
        %v6512 = vsel %vm1100, %v6445, 0
        %v6515 = vsel %vm1100, %v6446, 0
        %v6518 = vsel %vm1100, %v6447, 0
        %v6521 = vsel %vm1100, %v6448, 0
        %v6524 = vsel %vm1100, %v6449, 0
        %v6527 = vsel %vm1100, %v6450, 0
        %v6530 = vsel %vm1100, %v6451, 0
        %6532 = vmatpush.bf16.msra.mxu0 0
        %6533 = vmatpush.bf16.msra.mxu0 0
        %6534 = vmatpush.bf16.msra.mxu0 0
        %6535 = vmatpush.bf16.msra.mxu0 0
        %6536 = vmatpush.bf16.msra.mxu0 %v6479
        %6537 = vmatpush.bf16.msra.mxu0 %v6478
        %6538 = vmatpush.bf16.msra.mxu0 %v6477
        %6539 = vmatpush.bf16.msra.mxu0 %v6476
        %6540 = vmatmul.bf16.gmra.mxu0 %v6485
        %v6541 = vpop.f32.mrf.mxu0
        %v6542 = vadd.f32 0.0, %v6541
        %v6543 = vpop.f32.mrf.mxu0
        %v6544 = vadd.f32 0.0, %v6543
        %6545 = vmatmul.bf16.gmra.mxu0 %v6488
        %v6546 = vpop.f32.mrf.mxu0
        %v6547 = vadd.f32 0.0, %v6546
        %v6548 = vpop.f32.mrf.mxu0
        %v6549 = vadd.f32 0.0, %v6548
        %6550 = vmatmul.bf16.gmra.mxu0 %v6491
        %v6551 = vpop.f32.mrf.mxu0
        %v6552 = vadd.f32 0.0, %v6551
        %v6553 = vpop.f32.mrf.mxu0
        %v6554 = vadd.f32 0.0, %v6553
        %6555 = vmatmul.bf16.gmra.mxu0 %v6494
        %v6556 = vpop.f32.mrf.mxu0
        %v6557 = vadd.f32 0.0, %v6556
        %v6558 = vpop.f32.mrf.mxu0
        %v6559 = vadd.f32 0.0, %v6558
        %6560 = vmatmul.bf16.gmra.mxu0 %v6497
        %v6561 = vpop.f32.mrf.mxu0
        %v6562 = vadd.f32 0.0, %v6561
        %v6563 = vpop.f32.mrf.mxu0
        %v6564 = vadd.f32 0.0, %v6563
        %6565 = vmatmul.bf16.gmra.mxu0 %v6500
        %v6566 = vpop.f32.mrf.mxu0
        %v6567 = vadd.f32 0.0, %v6566
        %v6568 = vpop.f32.mrf.mxu0
        %v6569 = vadd.f32 0.0, %v6568
        %6570 = vmatmul.bf16.gmra.mxu0 %v6503
        %v6571 = vpop.f32.mrf.mxu0
        %v6572 = vadd.f32 0.0, %v6571
        %v6573 = vpop.f32.mrf.mxu0
        %v6574 = vadd.f32 0.0, %v6573
        %6575 = vmatmul.bf16.gmra.mxu0 %v6506
        %v6576 = vpop.f32.mrf.mxu0
        %v6577 = vadd.f32 0.0, %v6576
        %v6578 = vpop.f32.mrf.mxu0
        %v6579 = vadd.f32 0.0, %v6578
        %6580 = vmatmul.bf16.gmra.mxu0 %v6509
        %v6581 = vpop.f32.mrf.mxu0
        %v6582 = vadd.f32 0.0, %v6581
        %v6583 = vpop.f32.mrf.mxu0
        %v6584 = vadd.f32 0.0, %v6583
        %6585 = vmatmul.bf16.gmra.mxu0 %v6512
        %v6586 = vpop.f32.mrf.mxu0
        %v6587 = vadd.f32 0.0, %v6586
        %v6588 = vpop.f32.mrf.mxu0
        %v6589 = vadd.f32 0.0, %v6588
        %6590 = vmatmul.bf16.gmra.mxu0 %v6515
        %v6591 = vpop.f32.mrf.mxu0
        %v6592 = vadd.f32 0.0, %v6591
        %v6593 = vpop.f32.mrf.mxu0
        %v6594 = vadd.f32 0.0, %v6593
        %6595 = vmatmul.bf16.gmra.mxu0 %v6518
        %v6596 = vpop.f32.mrf.mxu0
        %v6597 = vadd.f32 0.0, %v6596
        %v6598 = vpop.f32.mrf.mxu0
        %v6599 = vadd.f32 0.0, %v6598
        %6600 = vmatmul.bf16.gmra.mxu0 %v6521
        %v6601 = vpop.f32.mrf.mxu0
        %v6602 = vadd.f32 0.0, %v6601
        %v6603 = vpop.f32.mrf.mxu0
        %v6604 = vadd.f32 0.0, %v6603
        %6605 = vmatmul.bf16.gmra.mxu0 %v6524
        %v6606 = vpop.f32.mrf.mxu0
        %v6607 = vadd.f32 0.0, %v6606
        %v6608 = vpop.f32.mrf.mxu0
        %v6609 = vadd.f32 0.0, %v6608
        %6610 = vmatmul.bf16.gmra.mxu0 %v6527
        %v6611 = vpop.f32.mrf.mxu0
        %v6612 = vadd.f32 0.0, %v6611
        %v6613 = vpop.f32.mrf.mxu0
        %v6614 = vadd.f32 0.0, %v6613
        %6615 = vmatmul.bf16.gmra.mxu0 %v6530
        %v6616 = vpop.f32.mrf.mxu0
        %v6617 = vadd.f32 0.0, %v6616
        %v6618 = vpop.f32.mrf.mxu0
        %v6619 = vadd.f32 0.0, %v6618
        %6620 = vdwg.mxu0
        %v6621 = vadd.f32 %v6372, %v6542
        %v6622 = vadd.f32 %v6373, %v6544
        %v6623 = vadd.f32 %v6374, %v6547
        %v6624 = vadd.f32 %v6375, %v6549
        %v6625 = vadd.f32 %v6376, %v6552
        %v6626 = vadd.f32 %v6377, %v6554
        %v6627 = vadd.f32 %v6378, %v6557
        %v6628 = vadd.f32 %v6379, %v6559
        %v6629 = vadd.f32 %v6380, %v6562
        %v6630 = vadd.f32 %v6381, %v6564
        %v6631 = vadd.f32 %v6382, %v6567
        %v6632 = vadd.f32 %v6383, %v6569
        %v6633 = vadd.f32 %v6384, %v6572
        %v6634 = vadd.f32 %v6385, %v6574
        %v6635 = vadd.f32 %v6386, %v6577
        %v6636 = vadd.f32 %v6387, %v6579
        %v6637 = vadd.f32 %v6388, %v6582
        %v6638 = vadd.f32 %v6389, %v6584
        %v6639 = vadd.f32 %v6390, %v6587
        %v6640 = vadd.f32 %v6391, %v6589
        %v6641 = vadd.f32 %v6392, %v6592
        %v6642 = vadd.f32 %v6393, %v6594
        %v6643 = vadd.f32 %v6394, %v6597
        %v6644 = vadd.f32 %v6395, %v6599
        %v6645 = vadd.f32 %v6396, %v6602
        %v6646 = vadd.f32 %v6397, %v6604
        %v6647 = vadd.f32 %v6398, %v6607
        %v6648 = vadd.f32 %v6399, %v6609
        %v6649 = vadd.f32 %v6400, %v6612
        %v6650 = vadd.f32 %v6401, %v6614
        %v6651 = vadd.f32 %v6402, %v6617
        %v6652 = vadd.f32 %v6403, %v6619
        %v6653 = vmul.f32 %v5123, %v3632
        %v6654 = vmul.f32 %v5122, %v3636
        %v6655 = vmul.f32 %v5121, %v3640
        %v6656 = vmul.f32 %v5120, %v3644
        %v6657 = vmul.f32 %v5119, %v3648
        %v6658 = vmul.f32 %v5118, %v3652
        %v6659 = vmul.f32 %v5117, %v3656
        %v6660 = vmul.f32 %v5116, %v3660
        %v6661 = vmul.f32 %v5115, %v3664
        %v6662 = vmul.f32 %v5114, %v3668
        %v6663 = vmul.f32 %v5113, %v3672
        %v6664 = vmul.f32 %v5112, %v3676
        %v6665 = vmul.f32 %v5111, %v3680
        %v6666 = vmul.f32 %v5110, %v3684
        %v6667 = vmul.f32 %v5109, %v3688
        %v6668 = vmul.f32 %v5108, %v3692
        %v6669 = vmul.f32 %v5107, %v3696
        %v6670 = vmul.f32 %v5106, %v3700
        %v6671 = vmul.f32 %v5105, %v3704
        %v6672 = vmul.f32 %v5104, %v3708
        %v6673 = vmul.f32 %v5103, %v3712
        %v6674 = vmul.f32 %v5102, %v3716
        %v6675 = vmul.f32 %v5101, %v3720
        %v6676 = vmul.f32 %v5100, %v3724
        %v6677 = vmul.f32 %v5099, %v3728
        %v6678 = vmul.f32 %v5098, %v3732
        %v6679 = vmul.f32 %v5097, %v3736
        %v6680 = vmul.f32 %v5096, %v3740
        %v6681 = vmul.f32 %v5095, %v3744
        %v6682 = vmul.f32 %v5126, %v3748
        %v6683 = vmul.f32 %v5125, %v3752
        %v6684 = vmul.f32 %v5124, %v3756
        %v6685 = vpack.c.bf16 %v6654, %v6653
        %v6686 = vpack.c.bf16 %v6656, %v6655
        %v6687 = vpack.c.bf16 %v6658, %v6657
        %v6688 = vpack.c.bf16 %v6660, %v6659
        %v6689 = vpack.c.bf16 %v6662, %v6661
        %v6690 = vpack.c.bf16 %v6664, %v6663
        %v6691 = vpack.c.bf16 %v6666, %v6665
        %v6692 = vpack.c.bf16 %v6668, %v6667
        %v6693 = vpack.c.bf16 %v6670, %v6669
        %v6694 = vpack.c.bf16 %v6672, %v6671
        %v6695 = vpack.c.bf16 %v6674, %v6673
        %v6696 = vpack.c.bf16 %v6676, %v6675
        %v6697 = vpack.c.bf16 %v6678, %v6677
        %v6698 = vpack.c.bf16 %v6680, %v6679
        %v6699 = vpack.c.bf16 %v6682, %v6681
        %v6700 = vpack.c.bf16 %v6684, %v6683
        %v6701 = vld [vmem:[%s4676 + $0x100] sm:$0xf]
        %v6702 = vld [vmem:[%s4676 + $0x104] sm:$0xf]
        %v6703 = vld [vmem:[%s4676 + $0x108] sm:$0xf]
        %v6704 = vld [vmem:[%s4676 + $0x10c] sm:$0xf]
        %v6705 = vld [vmem:[%s4676 + $0x110] sm:$0xf]
        %v6706 = vld [vmem:[%s4676 + $0x114] sm:$0xf]
        %v6707 = vld [vmem:[%s4676 + $0x118] sm:$0xf]
        %v6708 = vld [vmem:[%s4676 + $0x11c] sm:$0xf]
        %v6717 = vunpack.c.l.b16 %v6701
        %v6718 = vunpack.c.l.b16 %v6702
        %v6719 = vunpack.c.l.b16 %v6703
        %v6720 = vunpack.c.l.b16 %v6704
        %v6721 = vunpack.c.l.b16 %v6705
        %v6722 = vunpack.c.l.b16 %v6706
        %v6723 = vunpack.c.l.b16 %v6707
        %v6724 = vunpack.c.l.b16 %v6708
        %v6725 = vpack.c.b16 %v6718, %v6717
        %v6726 = vpack.c.b16 %v6720, %v6719
        %v6727 = vpack.c.b16 %v6722, %v6721
        %v6728 = vpack.c.b16 %v6724, %v6723
        %v6734 = vsel %vm1100, %v6685, 0
        %v6737 = vsel %vm1100, %v6686, 0
        %v6740 = vsel %vm1100, %v6687, 0
        %v6743 = vsel %vm1100, %v6688, 0
        %v6746 = vsel %vm1100, %v6689, 0
        %v6749 = vsel %vm1100, %v6690, 0
        %v6752 = vsel %vm1100, %v6691, 0
        %v6755 = vsel %vm1100, %v6692, 0
        %v6758 = vsel %vm1100, %v6693, 0
        %v6761 = vsel %vm1100, %v6694, 0
        %v6764 = vsel %vm1100, %v6695, 0
        %v6767 = vsel %vm1100, %v6696, 0
        %v6770 = vsel %vm1100, %v6697, 0
        %v6773 = vsel %vm1100, %v6698, 0
        %v6776 = vsel %vm1100, %v6699, 0
        %v6779 = vsel %vm1100, %v6700, 0
        %6781 = vmatpush.bf16.msra.mxu0 0
        %6782 = vmatpush.bf16.msra.mxu0 0
        %6783 = vmatpush.bf16.msra.mxu0 0
        %6784 = vmatpush.bf16.msra.mxu0 0
        %6785 = vmatpush.bf16.msra.mxu0 %v6728
        %6786 = vmatpush.bf16.msra.mxu0 %v6727
        %6787 = vmatpush.bf16.msra.mxu0 %v6726
        %6788 = vmatpush.bf16.msra.mxu0 %v6725
        %6789 = vmatmul.bf16.gmra.mxu0 %v6734
        %v6790 = vpop.f32.mrf.mxu0
        %v6791 = vadd.f32 0.0, %v6790
        %v6792 = vpop.f32.mrf.mxu0
        %v6793 = vadd.f32 0.0, %v6792
        %6794 = vmatmul.bf16.gmra.mxu0 %v6737
        %v6795 = vpop.f32.mrf.mxu0
        %v6796 = vadd.f32 0.0, %v6795
        %v6797 = vpop.f32.mrf.mxu0
        %v6798 = vadd.f32 0.0, %v6797
        %6799 = vmatmul.bf16.gmra.mxu0 %v6740
        %v6800 = vpop.f32.mrf.mxu0
        %v6801 = vadd.f32 0.0, %v6800
        %v6802 = vpop.f32.mrf.mxu0
        %v6803 = vadd.f32 0.0, %v6802
        %6804 = vmatmul.bf16.gmra.mxu0 %v6743
        %v6805 = vpop.f32.mrf.mxu0
        %v6806 = vadd.f32 0.0, %v6805
        %v6807 = vpop.f32.mrf.mxu0
        %v6808 = vadd.f32 0.0, %v6807
        %6809 = vmatmul.bf16.gmra.mxu0 %v6746
        %v6810 = vpop.f32.mrf.mxu0
        %v6811 = vadd.f32 0.0, %v6810
        %v6812 = vpop.f32.mrf.mxu0
        %v6813 = vadd.f32 0.0, %v6812
        %6814 = vmatmul.bf16.gmra.mxu0 %v6749
        %v6815 = vpop.f32.mrf.mxu0
        %v6816 = vadd.f32 0.0, %v6815
        %v6817 = vpop.f32.mrf.mxu0
        %v6818 = vadd.f32 0.0, %v6817
        %6819 = vmatmul.bf16.gmra.mxu0 %v6752
        %v6820 = vpop.f32.mrf.mxu0
        %v6821 = vadd.f32 0.0, %v6820
        %v6822 = vpop.f32.mrf.mxu0
        %v6823 = vadd.f32 0.0, %v6822
        %6824 = vmatmul.bf16.gmra.mxu0 %v6755
        %v6825 = vpop.f32.mrf.mxu0
        %v6826 = vadd.f32 0.0, %v6825
        %v6827 = vpop.f32.mrf.mxu0
        %v6828 = vadd.f32 0.0, %v6827
        %6829 = vmatmul.bf16.gmra.mxu0 %v6758
        %v6830 = vpop.f32.mrf.mxu0
        %v6831 = vadd.f32 0.0, %v6830
        %v6832 = vpop.f32.mrf.mxu0
        %v6833 = vadd.f32 0.0, %v6832
        %6834 = vmatmul.bf16.gmra.mxu0 %v6761
        %v6835 = vpop.f32.mrf.mxu0
        %v6836 = vadd.f32 0.0, %v6835
        %v6837 = vpop.f32.mrf.mxu0
        %v6838 = vadd.f32 0.0, %v6837
        %6839 = vmatmul.bf16.gmra.mxu0 %v6764
        %v6840 = vpop.f32.mrf.mxu0
        %v6841 = vadd.f32 0.0, %v6840
        %v6842 = vpop.f32.mrf.mxu0
        %v6843 = vadd.f32 0.0, %v6842
        %6844 = vmatmul.bf16.gmra.mxu0 %v6767
        %v6845 = vpop.f32.mrf.mxu0
        %v6846 = vadd.f32 0.0, %v6845
        %v6847 = vpop.f32.mrf.mxu0
        %v6848 = vadd.f32 0.0, %v6847
        %6849 = vmatmul.bf16.gmra.mxu0 %v6770
        %v6850 = vpop.f32.mrf.mxu0
        %v6851 = vadd.f32 0.0, %v6850
        %v6852 = vpop.f32.mrf.mxu0
        %v6853 = vadd.f32 0.0, %v6852
        %6854 = vmatmul.bf16.gmra.mxu0 %v6773
        %v6855 = vpop.f32.mrf.mxu0
        %v6856 = vadd.f32 0.0, %v6855
        %v6857 = vpop.f32.mrf.mxu0
        %v6858 = vadd.f32 0.0, %v6857
        %6859 = vmatmul.bf16.gmra.mxu0 %v6776
        %v6860 = vpop.f32.mrf.mxu0
        %v6861 = vadd.f32 0.0, %v6860
        %v6862 = vpop.f32.mrf.mxu0
        %v6863 = vadd.f32 0.0, %v6862
        %6864 = vmatmul.bf16.gmra.mxu0 %v6779
        %v6865 = vpop.f32.mrf.mxu0
        %v6866 = vadd.f32 0.0, %v6865
        %v6867 = vpop.f32.mrf.mxu0
        %v6868 = vadd.f32 0.0, %v6867
        %6869 = vdwg.mxu0
        %v6870 = vadd.f32 %v6621, %v6791
        %v6871 = vadd.f32 %v6622, %v6793
        %v6872 = vadd.f32 %v6623, %v6796
        %v6873 = vadd.f32 %v6624, %v6798
        %v6874 = vadd.f32 %v6625, %v6801
        %v6875 = vadd.f32 %v6626, %v6803
        %v6876 = vadd.f32 %v6627, %v6806
        %v6877 = vadd.f32 %v6628, %v6808
        %v6878 = vadd.f32 %v6629, %v6811
        %v6879 = vadd.f32 %v6630, %v6813
        %v6880 = vadd.f32 %v6631, %v6816
        %v6881 = vadd.f32 %v6632, %v6818
        %v6882 = vadd.f32 %v6633, %v6821
        %v6883 = vadd.f32 %v6634, %v6823
        %v6884 = vadd.f32 %v6635, %v6826
        %v6885 = vadd.f32 %v6636, %v6828
        %v6886 = vadd.f32 %v6637, %v6831
        %v6887 = vadd.f32 %v6638, %v6833
        %v6888 = vadd.f32 %v6639, %v6836
        %v6889 = vadd.f32 %v6640, %v6838
        %v6890 = vadd.f32 %v6641, %v6841
        %v6891 = vadd.f32 %v6642, %v6843
        %v6892 = vadd.f32 %v6643, %v6846
        %v6893 = vadd.f32 %v6644, %v6848
        %v6894 = vadd.f32 %v6645, %v6851
        %v6895 = vadd.f32 %v6646, %v6853
        %v6896 = vadd.f32 %v6647, %v6856
        %v6897 = vadd.f32 %v6648, %v6858
        %v6898 = vadd.f32 %v6649, %v6861
        %v6899 = vadd.f32 %v6650, %v6863
        %v6900 = vadd.f32 %v6651, %v6866
        %v6901 = vadd.f32 %v6652, %v6868
        %v6903 = vperm.slane %v4531, 0
        %v6905 = vadd.f32 %v6870, %v6903
        %v6906 = vadd.f32 %v6871, %v6903
        %v6907 = vadd.f32 %v6872, %v6903
        %v6908 = vadd.f32 %v6873, %v6903
        %v6909 = vadd.f32 %v6874, %v6903
        %v6910 = vadd.f32 %v6875, %v6903
        %v6911 = vadd.f32 %v6876, %v6903
        %v6912 = vadd.f32 %v6877, %v6903
        %v6913 = vadd.f32 %v6878, %v6903
        %v6914 = vadd.f32 %v6879, %v6903
        %v6915 = vadd.f32 %v6880, %v6903
        %v6916 = vadd.f32 %v6881, %v6903
        %v6917 = vadd.f32 %v6882, %v6903
        %v6918 = vadd.f32 %v6883, %v6903
        %v6919 = vadd.f32 %v6884, %v6903
        %v6920 = vadd.f32 %v6885, %v6903
        %v6921 = vadd.f32 %v6886, %v6903
        %v6922 = vadd.f32 %v6887, %v6903
        %v6923 = vadd.f32 %v6888, %v6903
        %v6924 = vadd.f32 %v6889, %v6903
        %v6925 = vadd.f32 %v6890, %v6903
        %v6926 = vadd.f32 %v6891, %v6903
        %v6927 = vadd.f32 %v6892, %v6903
        %v6928 = vadd.f32 %v6893, %v6903
        %v6929 = vadd.f32 %v6894, %v6903
        %v6930 = vadd.f32 %v6895, %v6903
        %v6931 = vadd.f32 %v6896, %v6903
        %v6932 = vadd.f32 %v6897, %v6903
        %v6933 = vadd.f32 %v6898, %v6903
        %v6934 = vadd.f32 %v6899, %v6903
        %v6935 = vadd.f32 %v6900, %v6903
        %v6936 = vadd.f32 %v6901, %v6903
        %v6937 = vsel %vm1100, %v6905, 0.0
        %v6938 = vsel %vm1100, %v6906, 0.0
        %v6939 = vadd.f32 %v6937, %v6938
        %v6940 = vsel %vm1100, %v6907, 0.0
        %v6941 = vadd.f32 %v6939, %v6940
        %v6942 = vsel %vm1100, %v6908, 0.0
        %v6943 = vadd.f32 %v6941, %v6942
        %v6944 = vsel %vm1100, %v6909, 0.0
        %v6945 = vadd.f32 %v6943, %v6944
        %v6946 = vsel %vm1100, %v6910, 0.0
        %v6947 = vadd.f32 %v6945, %v6946
        %v6948 = vsel %vm1100, %v6911, 0.0
        %v6949 = vadd.f32 %v6947, %v6948
        %v6950 = vsel %vm1100, %v6912, 0.0
        %v6951 = vadd.f32 %v6949, %v6950
        %v6952 = vsel %vm1100, %v6913, 0.0
        %v6953 = vadd.f32 %v6951, %v6952
        %v6954 = vsel %vm1100, %v6914, 0.0
        %v6955 = vadd.f32 %v6953, %v6954
        %v6956 = vsel %vm1100, %v6915, 0.0
        %v6957 = vadd.f32 %v6955, %v6956
        %v6958 = vsel %vm1100, %v6916, 0.0
        %v6959 = vadd.f32 %v6957, %v6958
        %v6960 = vsel %vm1100, %v6917, 0.0
        %v6961 = vadd.f32 %v6959, %v6960
        %v6962 = vsel %vm1100, %v6918, 0.0
        %v6963 = vadd.f32 %v6961, %v6962
        %v6964 = vsel %vm1100, %v6919, 0.0
        %v6965 = vadd.f32 %v6963, %v6964
        %v6966 = vsel %vm1100, %v6920, 0.0
        %v6967 = vadd.f32 %v6965, %v6966
        %v6968 = vsel %vm1100, %v6921, 0.0
        %v6969 = vadd.f32 %v6967, %v6968
        %v6970 = vsel %vm1100, %v6922, 0.0
        %v6971 = vadd.f32 %v6969, %v6970
        %v6972 = vsel %vm1100, %v6923, 0.0
        %v6973 = vadd.f32 %v6971, %v6972
        %v6974 = vsel %vm1100, %v6924, 0.0
        %v6975 = vadd.f32 %v6973, %v6974
        %v6976 = vsel %vm1100, %v6925, 0.0
        %v6977 = vadd.f32 %v6975, %v6976
        %v6978 = vsel %vm1100, %v6926, 0.0
        %v6979 = vadd.f32 %v6977, %v6978
        %v6980 = vsel %vm1100, %v6927, 0.0
        %v6981 = vadd.f32 %v6979, %v6980
        %v6982 = vsel %vm1100, %v6928, 0.0
        %v6983 = vadd.f32 %v6981, %v6982
        %v6984 = vsel %vm1100, %v6929, 0.0
        %v6985 = vadd.f32 %v6983, %v6984
        %v6986 = vsel %vm1100, %v6930, 0.0
        %v6987 = vadd.f32 %v6985, %v6986
        %v6988 = vsel %vm1100, %v6931, 0.0
        %v6989 = vadd.f32 %v6987, %v6988
        %v6990 = vsel %vm1100, %v6932, 0.0
        %v6991 = vadd.f32 %v6989, %v6990
        %v6992 = vsel %vm1100, %v6933, 0.0
        %v6993 = vadd.f32 %v6991, %v6992
        %v6994 = vsel %vm1100, %v6934, 0.0
        %v6995 = vadd.f32 %v6993, %v6994
        %v6996 = vsel %vm1100, %v6935, 0.0
        %v6997 = vadd.f32 %v6995, %v6996
        %v6998 = vsel %vm1100, %v6936, 0.0
        %v6999 = vadd.f32 %v6997, %v6998
        %v7000 = vrot.slane %v6999, 4
        %v7001 = vadd.f32 %v6999, %v7000
        %v7002 = vrot.slane %v7001, 2
        %v7003 = vadd.f32 %v7001, %v7002
        %v7004 = vrot.slane %v7003, 1
        %v7005 = vadd.f32 %v7003, %v7004
        %v7006 = vmul.f32 %v6905, %v6905
        %v7007 = vmul.f32 %v6906, %v6906
        %v7008 = vmul.f32 %v6907, %v6907
        %v7009 = vmul.f32 %v6908, %v6908
        %v7010 = vmul.f32 %v6909, %v6909
        %v7011 = vmul.f32 %v6910, %v6910
        %v7012 = vmul.f32 %v6911, %v6911
        %v7013 = vmul.f32 %v6912, %v6912
        %v7014 = vmul.f32 %v6913, %v6913
        %v7015 = vmul.f32 %v6914, %v6914
        %v7016 = vmul.f32 %v6915, %v6915
        %v7017 = vmul.f32 %v6916, %v6916
        %v7018 = vmul.f32 %v6917, %v6917
        %v7019 = vmul.f32 %v6918, %v6918
        %v7020 = vmul.f32 %v6919, %v6919
        %v7021 = vmul.f32 %v6920, %v6920
        %v7022 = vmul.f32 %v6921, %v6921
        %v7023 = vmul.f32 %v6922, %v6922
        %v7024 = vmul.f32 %v6923, %v6923
        %v7025 = vmul.f32 %v6924, %v6924
        %v7026 = vmul.f32 %v6925, %v6925
        %v7027 = vmul.f32 %v6926, %v6926
        %v7028 = vmul.f32 %v6927, %v6927
        %v7029 = vmul.f32 %v6928, %v6928
        %v7030 = vmul.f32 %v6929, %v6929
        %v7031 = vmul.f32 %v6930, %v6930
        %v7032 = vmul.f32 %v6931, %v6931
        %v7033 = vmul.f32 %v6932, %v6932
        %v7034 = vmul.f32 %v6933, %v6933
        %v7035 = vmul.f32 %v6934, %v6934
        %v7036 = vmul.f32 %v6935, %v6935
        %v7037 = vmul.f32 %v6936, %v6936
        %v7038 = vsel %vm1100, %v7006, 0.0
        %v7039 = vsel %vm1100, %v7007, 0.0
        %v7040 = vadd.f32 %v7038, %v7039
        %v7041 = vsel %vm1100, %v7008, 0.0
        %v7042 = vadd.f32 %v7040, %v7041
        %v7043 = vsel %vm1100, %v7009, 0.0
        %v7044 = vadd.f32 %v7042, %v7043
        %v7045 = vsel %vm1100, %v7010, 0.0
        %v7046 = vadd.f32 %v7044, %v7045
        %v7047 = vsel %vm1100, %v7011, 0.0
        %v7048 = vadd.f32 %v7046, %v7047
        %v7049 = vsel %vm1100, %v7012, 0.0
        %v7050 = vadd.f32 %v7048, %v7049
        %v7051 = vsel %vm1100, %v7013, 0.0
        %v7052 = vadd.f32 %v7050, %v7051
        %v7053 = vsel %vm1100, %v7014, 0.0
        %v7054 = vadd.f32 %v7052, %v7053
        %v7055 = vsel %vm1100, %v7015, 0.0
        %v7056 = vadd.f32 %v7054, %v7055
        %v7057 = vsel %vm1100, %v7016, 0.0
        %v7058 = vadd.f32 %v7056, %v7057
        %v7059 = vsel %vm1100, %v7017, 0.0
        %v7060 = vadd.f32 %v7058, %v7059
        %v7061 = vsel %vm1100, %v7018, 0.0
        %v7062 = vadd.f32 %v7060, %v7061
        %v7063 = vsel %vm1100, %v7019, 0.0
        %v7064 = vadd.f32 %v7062, %v7063
        %v7065 = vsel %vm1100, %v7020, 0.0
        %v7066 = vadd.f32 %v7064, %v7065
        %v7067 = vsel %vm1100, %v7021, 0.0
        %v7068 = vadd.f32 %v7066, %v7067
        %v7069 = vsel %vm1100, %v7022, 0.0
        %v7070 = vadd.f32 %v7068, %v7069
        %v7071 = vsel %vm1100, %v7023, 0.0
        %v7072 = vadd.f32 %v7070, %v7071
        %v7073 = vsel %vm1100, %v7024, 0.0
        %v7074 = vadd.f32 %v7072, %v7073
        %v7075 = vsel %vm1100, %v7025, 0.0
        %v7076 = vadd.f32 %v7074, %v7075
        %v7077 = vsel %vm1100, %v7026, 0.0
        %v7078 = vadd.f32 %v7076, %v7077
        %v7079 = vsel %vm1100, %v7027, 0.0
        %v7080 = vadd.f32 %v7078, %v7079
        %v7081 = vsel %vm1100, %v7028, 0.0
        %v7082 = vadd.f32 %v7080, %v7081
        %v7083 = vsel %vm1100, %v7029, 0.0
        %v7084 = vadd.f32 %v7082, %v7083
        %v7085 = vsel %vm1100, %v7030, 0.0
        %v7086 = vadd.f32 %v7084, %v7085
        %v7087 = vsel %vm1100, %v7031, 0.0
        %v7088 = vadd.f32 %v7086, %v7087
        %v7089 = vsel %vm1100, %v7032, 0.0
        %v7090 = vadd.f32 %v7088, %v7089
        %v7091 = vsel %vm1100, %v7033, 0.0
        %v7092 = vadd.f32 %v7090, %v7091
        %v7093 = vsel %vm1100, %v7034, 0.0
        %v7094 = vadd.f32 %v7092, %v7093
        %v7095 = vsel %vm1100, %v7035, 0.0
        %v7096 = vadd.f32 %v7094, %v7095
        %v7097 = vsel %vm1100, %v7036, 0.0
        %v7098 = vadd.f32 %v7096, %v7097
        %v7099 = vsel %vm1100, %v7037, 0.0
        %v7100 = vadd.f32 %v7098, %v7099
        %v7101 = vrot.slane %v7100, 4
        %v7102 = vadd.f32 %v7100, %v7101
        %v7103 = vrot.slane %v7102, 2
        %v7104 = vadd.f32 %v7102, %v7103
        %v7105 = vrot.slane %v7104, 1
        %v7106 = vadd.f32 %v7104, %v7105
        %v7108 = vsel %vm1100, %v7005, 0
        %7110 = vmatpush.msra.mxu0 0.0
        %7111 = vmatpush.msra.mxu0 0.0
        %7112 = vmatpush.msra.mxu0 0.0
        %7113 = vmatpush.msra.mxu0 0.0
        %7114 = vmatpush.msra.mxu0 0.0
        %7115 = vmatpush.msra.mxu0 0.0
        %7116 = vmatpush.msra.mxu0 0.0
        %7117 = vmatpush.msra.mxu0 0.0
        %7118 = vmatpush.msra.mxu0 %v513
        %7119 = vmatpush.msra.mxu0 %v512
        %7120 = vmatpush.msra.mxu0 %v511
        %7121 = vmatpush.msra.mxu0 %v510
        %7122 = vmatpush.msra.mxu0 %v509
        %7123 = vmatpush.msra.mxu0 %v508
        %7124 = vmatpush.msra.mxu0 %v507
        %7125 = vmatpush.msra.mxu0 %v506
        %7126 = vmatmul.f32.gmra.mxu0 %v7108
        %v7127 = vpop.f32.mrf.mxu0
        %v7128 = vadd.f32 0.0, %v7127
        %7129 = vdwg.mxu0
        %v7130 = vmul.f32 %v7128, %v4241
        %v7132 = vsel %vm1100, %v7106, 0
        %7134 = vmatpush.msra.mxu0 0.0
        %7135 = vmatpush.msra.mxu0 0.0
        %7136 = vmatpush.msra.mxu0 0.0
        %7137 = vmatpush.msra.mxu0 0.0
        %7138 = vmatpush.msra.mxu0 0.0
        %7139 = vmatpush.msra.mxu0 0.0
        %7140 = vmatpush.msra.mxu0 0.0
        %7141 = vmatpush.msra.mxu0 0.0
        %7142 = vmatpush.msra.mxu0 %v513
        %7143 = vmatpush.msra.mxu0 %v512
        %7144 = vmatpush.msra.mxu0 %v511
        %7145 = vmatpush.msra.mxu0 %v510
        %7146 = vmatpush.msra.mxu0 %v509
        %7147 = vmatpush.msra.mxu0 %v508
        %7148 = vmatpush.msra.mxu0 %v507
        %7149 = vmatpush.msra.mxu0 %v506
        %7150 = vmatmul.f32.gmra.mxu0 %v7132
        %v7151 = vpop.f32.mrf.mxu0
        %v7152 = vadd.f32 0.0, %v7151
        %7153 = vdwg.mxu0
        %v7154 = vmul.f32 %v7152, %v4241
        %v7155 = vmul.f32 %v7130, %v7130
        %v7156 = vsub.f32 %v7154, %v7155
        %v7158 = vsel %vm4269, %v7130, 0
        %7160 = vmatpush.msra.mxu0 0.0
        %7161 = vmatpush.msra.mxu0 0.0
        %7162 = vmatpush.msra.mxu0 0.0
        %7163 = vmatpush.msra.mxu0 0.0
        %7164 = vmatpush.msra.mxu0 0.0
        %7165 = vmatpush.msra.mxu0 0.0
        %7166 = vmatpush.msra.mxu0 0.0
        %7167 = vmatpush.msra.mxu0 0.0
        %7168 = vmatpush.msra.mxu0 0.0
        %7169 = vmatpush.msra.mxu0 0.0
        %7170 = vmatpush.msra.mxu0 0.0
        %7171 = vmatpush.msra.mxu0 0.0
        %7172 = vmatpush.msra.mxu0 %v545
        %7173 = vmatpush.msra.mxu0 %v544
        %7174 = vmatpush.msra.mxu0 %v543
        %7175 = vmatpush.msra.mxu0 %v542
        %7176 = vmatmul.f32.gmra.mxu0 %v7158
        %v7177 = vpop.f32.mrf.mxu0
        %v7178 = vadd.f32 0.0, %v7177
        %7179 = vdwg.mxu0
        %v7181 = vsel %vm4269, %v7156, 0
        %7183 = vmatpush.msra.mxu0 0.0
        %7184 = vmatpush.msra.mxu0 0.0
        %7185 = vmatpush.msra.mxu0 0.0
        %7186 = vmatpush.msra.mxu0 0.0
        %7187 = vmatpush.msra.mxu0 0.0
        %7188 = vmatpush.msra.mxu0 0.0
        %7189 = vmatpush.msra.mxu0 0.0
        %7190 = vmatpush.msra.mxu0 0.0
        %7191 = vmatpush.msra.mxu0 0.0
        %7192 = vmatpush.msra.mxu0 0.0
        %7193 = vmatpush.msra.mxu0 0.0
        %7194 = vmatpush.msra.mxu0 0.0
        %7195 = vmatpush.msra.mxu0 %v545
        %7196 = vmatpush.msra.mxu0 %v544
        %7197 = vmatpush.msra.mxu0 %v543
        %7198 = vmatpush.msra.mxu0 %v542
        %7199 = vmatmul.f32.gmra.mxu0 %v7181
        %v7200 = vpop.f32.mrf.mxu0
        %v7201 = vadd.f32 1e-05, %v7200
        %7202 = vdwg.mxu0
        %v7203 = vrsqrt.pop %v7201
        %v7204 = vmul.f32 %v7203, %v7201
        %v7205 = vmul.f32 %v7204, %v7203
        %v7206 = vmul.f32 0.5, %v7205
        %v7207 = vsub.f32 1.5, %v7206
        %v7208 = vmul.f32 %v7203, %v7207
        %vm7209 = vweird.f32 %v7201
        %vm7210 = vweird.f32 %v7203
        %vm7211 = vmor %vm7209, %vm7210
        %v7212 = vsel %vm7211, %v7203, %v7208
        %s7213 = scalar_lea.vmem %s412, 1
        %v7214 = vld [vmem:[%s7213] sm:$0x1]
        %v7215 = vmul.f32 %v7214, %v7212
        %s7216 = scalar_lea.vmem %s416, 1
        %v7217 = vld [vmem:[%s7216] sm:$0x1]
        %v7218 = vmul.f32 %v7178, %v7215
        %v7219 = vsub.f32 %v7217, %v7218
        %v7221 = vperm.slane %v7215, 0
        %v7223 = vmul.f32 %v6905, %v7221
        %v7224 = vmul.f32 %v6906, %v7221
        %v7225 = vmul.f32 %v6907, %v7221
        %v7226 = vmul.f32 %v6908, %v7221
        %v7227 = vmul.f32 %v6909, %v7221
        %v7228 = vmul.f32 %v6910, %v7221
        %v7229 = vmul.f32 %v6911, %v7221
        %v7230 = vmul.f32 %v6912, %v7221
        %v7231 = vmul.f32 %v6913, %v7221
        %v7232 = vmul.f32 %v6914, %v7221
        %v7233 = vmul.f32 %v6915, %v7221
        %v7234 = vmul.f32 %v6916, %v7221
        %v7235 = vmul.f32 %v6917, %v7221
        %v7236 = vmul.f32 %v6918, %v7221
        %v7237 = vmul.f32 %v6919, %v7221
        %v7238 = vmul.f32 %v6920, %v7221
        %v7239 = vmul.f32 %v6921, %v7221
        %v7240 = vmul.f32 %v6922, %v7221
        %v7241 = vmul.f32 %v6923, %v7221
        %v7242 = vmul.f32 %v6924, %v7221
        %v7243 = vmul.f32 %v6925, %v7221
        %v7244 = vmul.f32 %v6926, %v7221
        %v7245 = vmul.f32 %v6927, %v7221
        %v7246 = vmul.f32 %v6928, %v7221
        %v7247 = vmul.f32 %v6929, %v7221
        %v7248 = vmul.f32 %v6930, %v7221
        %v7249 = vmul.f32 %v6931, %v7221
        %v7250 = vmul.f32 %v6932, %v7221
        %v7251 = vmul.f32 %v6933, %v7221
        %v7252 = vmul.f32 %v6934, %v7221
        %v7253 = vmul.f32 %v6935, %v7221
        %v7254 = vmul.f32 %v6936, %v7221
        %v7256 = vperm.slane %v7219, 0
        %v7258 = vadd.f32 %v7223, %v7256
        %v7259 = vadd.f32 %v7224, %v7256
        %v7260 = vadd.f32 %v7225, %v7256
        %v7261 = vadd.f32 %v7226, %v7256
        %v7262 = vadd.f32 %v7227, %v7256
        %v7263 = vadd.f32 %v7228, %v7256
        %v7264 = vadd.f32 %v7229, %v7256
        %v7265 = vadd.f32 %v7230, %v7256
        %v7266 = vadd.f32 %v7231, %v7256
        %v7267 = vadd.f32 %v7232, %v7256
        %v7268 = vadd.f32 %v7233, %v7256
        %v7269 = vadd.f32 %v7234, %v7256
        %v7270 = vadd.f32 %v7235, %v7256
        %v7271 = vadd.f32 %v7236, %v7256
        %v7272 = vadd.f32 %v7237, %v7256
        %v7273 = vadd.f32 %v7238, %v7256
        %v7274 = vadd.f32 %v7239, %v7256
        %v7275 = vadd.f32 %v7240, %v7256
        %v7276 = vadd.f32 %v7241, %v7256
        %v7277 = vadd.f32 %v7242, %v7256
        %v7278 = vadd.f32 %v7243, %v7256
        %v7279 = vadd.f32 %v7244, %v7256
        %v7280 = vadd.f32 %v7245, %v7256
        %v7281 = vadd.f32 %v7246, %v7256
        %v7282 = vadd.f32 %v7247, %v7256
        %v7283 = vadd.f32 %v7248, %v7256
        %v7284 = vadd.f32 %v7249, %v7256
        %v7285 = vadd.f32 %v7250, %v7256
        %v7286 = vadd.f32 %v7251, %v7256
        %v7287 = vadd.f32 %v7252, %v7256
        %v7288 = vadd.f32 %v7253, %v7256
        %v7289 = vadd.f32 %v7254, %v7256
        %v7290 = vmax.f32 %v7258, 0.0
        %v7291 = vmax.f32 %v7259, 0.0
        %v7292 = vmax.f32 %v7260, 0.0
        %v7293 = vmax.f32 %v7261, 0.0
        %v7294 = vmax.f32 %v7262, 0.0
        %v7295 = vmax.f32 %v7263, 0.0
        %v7296 = vmax.f32 %v7264, 0.0
        %v7297 = vmax.f32 %v7265, 0.0
        %v7298 = vmax.f32 %v7266, 0.0
        %v7299 = vmax.f32 %v7267, 0.0
        %v7300 = vmax.f32 %v7268, 0.0
        %v7301 = vmax.f32 %v7269, 0.0
        %v7302 = vmax.f32 %v7270, 0.0
        %v7303 = vmax.f32 %v7271, 0.0
        %v7304 = vmax.f32 %v7272, 0.0
        %v7305 = vmax.f32 %v7273, 0.0
        %v7306 = vmax.f32 %v7274, 0.0
        %v7307 = vmax.f32 %v7275, 0.0
        %v7308 = vmax.f32 %v7276, 0.0
        %v7309 = vmax.f32 %v7277, 0.0
        %v7310 = vmax.f32 %v7278, 0.0
        %v7311 = vmax.f32 %v7279, 0.0
        %v7312 = vmax.f32 %v7280, 0.0
        %v7313 = vmax.f32 %v7281, 0.0
        %v7314 = vmax.f32 %v7282, 0.0
        %v7315 = vmax.f32 %v7283, 0.0
        %v7316 = vmax.f32 %v7284, 0.0
        %v7317 = vmax.f32 %v7285, 0.0
        %v7318 = vmax.f32 %v7286, 0.0
        %v7319 = vmax.f32 %v7287, 0.0
        %v7320 = vmax.f32 %v7288, 0.0
        %v7321 = vmax.f32 %v7289, 0.0
        %v7322 = vpack.c.bf16 %v7290, %v7290
        %v7323 = vpack.c.bf16 %v7291, %v7291
        %v7324 = vpack.c.bf16 %v7292, %v7292
        %v7325 = vpack.c.bf16 %v7293, %v7293
        %v7326 = vpack.c.bf16 %v7294, %v7294
        %v7327 = vpack.c.bf16 %v7295, %v7295
        %v7328 = vpack.c.bf16 %v7296, %v7296
        %v7329 = vpack.c.bf16 %v7297, %v7297
        %v7330 = vpack.c.bf16 %v7298, %v7298
        %v7331 = vpack.c.bf16 %v7299, %v7299
        %v7332 = vpack.c.bf16 %v7300, %v7300
        %v7333 = vpack.c.bf16 %v7301, %v7301
        %v7334 = vpack.c.bf16 %v7302, %v7302
        %v7335 = vpack.c.bf16 %v7303, %v7303
        %v7336 = vpack.c.bf16 %v7304, %v7304
        %v7337 = vpack.c.bf16 %v7305, %v7305
        %v7338 = vpack.c.bf16 %v7306, %v7306
        %v7339 = vpack.c.bf16 %v7307, %v7307
        %v7340 = vpack.c.bf16 %v7308, %v7308
        %v7341 = vpack.c.bf16 %v7309, %v7309
        %v7342 = vpack.c.bf16 %v7310, %v7310
        %v7343 = vpack.c.bf16 %v7311, %v7311
        %v7344 = vpack.c.bf16 %v7312, %v7312
        %v7345 = vpack.c.bf16 %v7313, %v7313
        %v7346 = vpack.c.bf16 %v7314, %v7314
        %v7347 = vpack.c.bf16 %v7315, %v7315
        %v7348 = vpack.c.bf16 %v7316, %v7316
        %v7349 = vpack.c.bf16 %v7317, %v7317
        %v7350 = vpack.c.bf16 %v7318, %v7318
        %v7351 = vpack.c.bf16 %v7319, %v7319
        %v7352 = vpack.c.bf16 %v7320, %v7320
        %v7353 = vpack.c.bf16 %v7321, %v7321
        %7354 = vst.msk [vmem:[#allocation2] sm:$0xf] %vm4465, %v7322
        %7355 = vst.msk [vmem:[#allocation2 + $0x4] sm:$0xf] %vm4465, %v7323
        %7356 = vst.msk [vmem:[#allocation2 + $0x8] sm:$0xf] %vm4465, %v7324
        %7357 = vst.msk [vmem:[#allocation2 + $0xc] sm:$0xf] %vm4465, %v7325
        %7358 = vst.msk [vmem:[#allocation2 + $0x10] sm:$0xf] %vm4465, %v7326
        %7359 = vst.msk [vmem:[#allocation2 + $0x14] sm:$0xf] %vm4465, %v7327
        %7360 = vst.msk [vmem:[#allocation2 + $0x18] sm:$0xf] %vm4465, %v7328
        %7361 = vst.msk [vmem:[#allocation2 + $0x1c] sm:$0xf] %vm4465, %v7329
        %7362 = vst.msk [vmem:[#allocation2 + $0x20] sm:$0xf] %vm4465, %v7330
        %7363 = vst.msk [vmem:[#allocation2 + $0x24] sm:$0xf] %vm4465, %v7331
        %7364 = vst.msk [vmem:[#allocation2 + $0x28] sm:$0xf] %vm4465, %v7332
        %7365 = vst.msk [vmem:[#allocation2 + $0x2c] sm:$0xf] %vm4465, %v7333
        %7366 = vst.msk [vmem:[#allocation2 + $0x30] sm:$0xf] %vm4465, %v7334
        %7367 = vst.msk [vmem:[#allocation2 + $0x34] sm:$0xf] %vm4465, %v7335
        %7368 = vst.msk [vmem:[#allocation2 + $0x38] sm:$0xf] %vm4465, %v7336
        %7369 = vst.msk [vmem:[#allocation2 + $0x3c] sm:$0xf] %vm4465, %v7337
        %7370 = vst.msk [vmem:[#allocation2 + $0x40] sm:$0xf] %vm4465, %v7338
        %7371 = vst.msk [vmem:[#allocation2 + $0x44] sm:$0xf] %vm4465, %v7339
        %7372 = vst.msk [vmem:[#allocation2 + $0x48] sm:$0xf] %vm4465, %v7340
        %7373 = vst.msk [vmem:[#allocation2 + $0x4c] sm:$0xf] %vm4465, %v7341
        %7374 = vst.msk [vmem:[#allocation2 + $0x50] sm:$0xf] %vm4465, %v7342
        %7375 = vst.msk [vmem:[#allocation2 + $0x54] sm:$0xf] %vm4465, %v7343
        %7376 = vst.msk [vmem:[#allocation2 + $0x58] sm:$0xf] %vm4465, %v7344
        %7377 = vst.msk [vmem:[#allocation2 + $0x5c] sm:$0xf] %vm4465, %v7345
        %7378 = vst.msk [vmem:[#allocation2 + $0x60] sm:$0xf] %vm4465, %v7346
        %7379 = vst.msk [vmem:[#allocation2 + $0x64] sm:$0xf] %vm4465, %v7347
        %7380 = vst.msk [vmem:[#allocation2 + $0x68] sm:$0xf] %vm4465, %v7348
        %7381 = vst.msk [vmem:[#allocation2 + $0x6c] sm:$0xf] %vm4465, %v7349
        %7382 = vst.msk [vmem:[#allocation2 + $0x70] sm:$0xf] %vm4465, %v7350
        %7383 = vst.msk [vmem:[#allocation2 + $0x74] sm:$0xf] %vm4465, %v7351
        %7384 = vst.msk [vmem:[#allocation2 + $0x78] sm:$0xf] %vm4465, %v7352
        %7385 = vst.msk [vmem:[#allocation2 + $0x7c] sm:$0xf] %vm4465, %v7353
        %v7386 = vld [vmem:[#allocation2] sm:$0xf]
        %v7387 = vld [vmem:[#allocation2 + $0x4] sm:$0xf]
        %v7388 = vld [vmem:[#allocation2 + $0x8] sm:$0xf]
        %v7389 = vld [vmem:[#allocation2 + $0xc] sm:$0xf]
        %v7390 = vld [vmem:[#allocation2 + $0x10] sm:$0xf]
        %v7391 = vld [vmem:[#allocation2 + $0x14] sm:$0xf]
        %v7392 = vld [vmem:[#allocation2 + $0x18] sm:$0xf]
        %v7393 = vld [vmem:[#allocation2 + $0x1c] sm:$0xf]
        %v7394 = vld [vmem:[#allocation2 + $0x20] sm:$0xf]
        %v7395 = vld [vmem:[#allocation2 + $0x24] sm:$0xf]
        %v7396 = vld [vmem:[#allocation2 + $0x28] sm:$0xf]
        %v7397 = vld [vmem:[#allocation2 + $0x2c] sm:$0xf]
        %v7398 = vld [vmem:[#allocation2 + $0x30] sm:$0xf]
        %v7399 = vld [vmem:[#allocation2 + $0x34] sm:$0xf]
        %v7400 = vld [vmem:[#allocation2 + $0x38] sm:$0xf]
        %v7401 = vld [vmem:[#allocation2 + $0x3c] sm:$0xf]
        %v7402 = vld [vmem:[#allocation2 + $0x40] sm:$0xf]
        %v7403 = vld [vmem:[#allocation2 + $0x44] sm:$0xf]
        %v7404 = vld [vmem:[#allocation2 + $0x48] sm:$0xf]
        %v7405 = vld [vmem:[#allocation2 + $0x4c] sm:$0xf]
        %v7406 = vld [vmem:[#allocation2 + $0x50] sm:$0xf]
        %v7407 = vld [vmem:[#allocation2 + $0x54] sm:$0xf]
        %v7408 = vld [vmem:[#allocation2 + $0x58] sm:$0xf]
        %v7409 = vld [vmem:[#allocation2 + $0x5c] sm:$0xf]
        %v7410 = vld [vmem:[#allocation2 + $0x60] sm:$0xf]
        %v7411 = vld [vmem:[#allocation2 + $0x64] sm:$0xf]
        %v7412 = vld [vmem:[#allocation2 + $0x68] sm:$0xf]
        %v7413 = vld [vmem:[#allocation2 + $0x6c] sm:$0xf]
        %v7414 = vld [vmem:[#allocation2 + $0x70] sm:$0xf]
        %v7415 = vld [vmem:[#allocation2 + $0x74] sm:$0xf]
        %v7416 = vld [vmem:[#allocation2 + $0x78] sm:$0xf]
        %v7417 = vld [vmem:[#allocation2 + $0x7c] sm:$0xf]
        %v7418 = vld [vmem:[%s424] sm:$0x1]
        %v7419 = vunpack.c.l.bf16 %v7386
        %v7420 = vunpack.c.l.bf16 %v7387
        %v7421 = vunpack.c.l.bf16 %v7388
        %v7422 = vunpack.c.l.bf16 %v7389
        %v7423 = vunpack.c.l.bf16 %v7390
        %v7424 = vunpack.c.l.bf16 %v7391
        %v7425 = vunpack.c.l.bf16 %v7392
        %v7426 = vunpack.c.l.bf16 %v7393
        %v7427 = vunpack.c.l.bf16 %v7394
        %v7428 = vunpack.c.l.bf16 %v7395
        %v7429 = vunpack.c.l.bf16 %v7396
        %v7430 = vunpack.c.l.bf16 %v7397
        %v7431 = vunpack.c.l.bf16 %v7398
        %v7432 = vunpack.c.l.bf16 %v7399
        %v7433 = vunpack.c.l.bf16 %v7400
        %v7434 = vunpack.c.l.bf16 %v7401
        %v7435 = vunpack.c.l.bf16 %v7402
        %v7436 = vunpack.c.l.bf16 %v7403
        %v7437 = vunpack.c.l.bf16 %v7404
        %v7438 = vunpack.c.l.bf16 %v7405
        %v7439 = vunpack.c.l.bf16 %v7406
        %v7440 = vunpack.c.l.bf16 %v7407
        %v7441 = vunpack.c.l.bf16 %v7408
        %v7442 = vunpack.c.l.bf16 %v7409
        %v7443 = vunpack.c.l.bf16 %v7410
        %v7444 = vunpack.c.l.bf16 %v7411
        %v7445 = vunpack.c.l.bf16 %v7412
        %v7446 = vunpack.c.l.bf16 %v7413
        %v7447 = vunpack.c.l.bf16 %v7414
        %v7448 = vunpack.c.l.bf16 %v7415
        %v7449 = vunpack.c.l.bf16 %v7416
        %v7450 = vunpack.c.l.bf16 %v7417
        %v7451 = vrot.slane %v7419, 7
        %v7452 = vrot.slane %v7420, 7
        %v7453 = vrot.slane %v7421, 7
        %v7454 = vrot.slane %v7422, 7
        %v7455 = vrot.slane %v7423, 7
        %v7456 = vrot.slane %v7424, 7
        %v7457 = vrot.slane %v7425, 7
        %v7458 = vrot.slane %v7426, 7
        %v7459 = vrot.slane %v7427, 7
        %v7460 = vrot.slane %v7428, 7
        %v7461 = vrot.slane %v7429, 7
        %v7462 = vrot.slane %v7430, 7
        %v7463 = vrot.slane %v7431, 7
        %v7464 = vrot.slane %v7432, 7
        %v7465 = vrot.slane %v7433, 7
        %v7466 = vrot.slane %v7434, 7
        %v7467 = vrot.slane %v7435, 7
        %v7468 = vrot.slane %v7436, 7
        %v7469 = vrot.slane %v7437, 7
        %v7470 = vrot.slane %v7438, 7
        %v7471 = vrot.slane %v7439, 7
        %v7472 = vrot.slane %v7440, 7
        %v7473 = vrot.slane %v7441, 7
        %v7474 = vrot.slane %v7442, 7
        %v7475 = vrot.slane %v7443, 7
        %v7476 = vrot.slane %v7444, 7
        %v7477 = vrot.slane %v7445, 7
        %v7478 = vrot.slane %v7446, 7
        %v7479 = vrot.slane %v7447, 7
        %v7480 = vrot.slane %v7448, 7
        %v7481 = vrot.slane %v7449, 7
        %v7482 = vrot.slane %v7450, 7
        %v7483 = vsel %vm643, %v7481, %v7482
        %v7484 = vsel %vm643, %v7480, %v7481
        %v7485 = vsel %vm643, %v7479, %v7480
        %v7486 = vsel %vm643, %v7478, %v7479
        %v7487 = vsel %vm643, %v7477, %v7478
        %v7488 = vsel %vm643, %v7476, %v7477
        %v7489 = vsel %vm643, %v7475, %v7476
        %v7490 = vsel %vm643, %v7474, %v7475
        %v7491 = vsel %vm643, %v7473, %v7474
        %v7492 = vsel %vm643, %v7472, %v7473
        %v7493 = vsel %vm643, %v7471, %v7472
        %v7494 = vsel %vm643, %v7470, %v7471
        %v7495 = vsel %vm643, %v7469, %v7470
        %v7496 = vsel %vm643, %v7468, %v7469
        %v7497 = vsel %vm643, %v7467, %v7468
        %v7498 = vsel %vm643, %v7466, %v7467
        %v7499 = vsel %vm643, %v7465, %v7466
        %v7500 = vsel %vm643, %v7464, %v7465
        %v7501 = vsel %vm643, %v7463, %v7464
        %v7502 = vsel %vm643, %v7462, %v7463
        %v7503 = vsel %vm643, %v7461, %v7462
        %v7504 = vsel %vm643, %v7460, %v7461
        %v7505 = vsel %vm643, %v7459, %v7460
        %v7506 = vsel %vm643, %v7458, %v7459
        %v7507 = vsel %vm643, %v7457, %v7458
        %v7508 = vsel %vm643, %v7456, %v7457
        %v7509 = vsel %vm643, %v7455, %v7456
        %v7510 = vsel %vm643, %v7454, %v7455
        %v7511 = vsel %vm643, %v7453, %v7454
        %v7512 = vsel %vm643, %v7452, %v7453
        %v7513 = vsel %vm643, %v7451, %v7452
        %v7514 = vsel %vm643, %v7482, %v7451
        %v7515 = vmul.f32 %v7484, %v679
        %v7516 = vmul.f32 %v7483, %v684
        %v7517 = vmul.f32 %v7514, %v689
        %v7518 = vmul.f32 %v7513, %v694
        %v7519 = vmul.f32 %v7512, %v699
        %v7520 = vmul.f32 %v7511, %v704
        %v7521 = vmul.f32 %v7510, %v709
        %v7522 = vmul.f32 %v7509, %v714
        %v7523 = vmul.f32 %v7508, %v719
        %v7524 = vmul.f32 %v7507, %v724
        %v7525 = vmul.f32 %v7506, %v729
        %v7526 = vmul.f32 %v7505, %v734
        %v7527 = vmul.f32 %v7504, %v739
        %v7528 = vmul.f32 %v7503, %v744
        %v7529 = vmul.f32 %v7502, %v749
        %v7530 = vmul.f32 %v7501, %v754
        %v7531 = vmul.f32 %v7500, %v759
        %v7532 = vmul.f32 %v7499, %v764
        %v7533 = vmul.f32 %v7498, %v769
        %v7534 = vmul.f32 %v7497, %v774
        %v7535 = vmul.f32 %v7496, %v779
        %v7536 = vmul.f32 %v7495, %v784
        %v7537 = vmul.f32 %v7494, %v789
        %v7538 = vmul.f32 %v7493, %v794
        %v7539 = vmul.f32 %v7492, %v799
        %v7540 = vmul.f32 %v7491, %v804
        %v7541 = vmul.f32 %v7490, %v809
        %v7542 = vmul.f32 %v7489, %v814
        %v7543 = vmul.f32 %v7488, %v819
        %v7544 = vmul.f32 %v7487, %v824
        %v7545 = vmul.f32 %v7486, %v829
        %v7546 = vmul.f32 %v7485, %v834
        %v7547 = vpack.c.bf16 %v7516, %v7515
        %v7548 = vpack.c.bf16 %v7518, %v7517
        %v7549 = vpack.c.bf16 %v7520, %v7519
        %v7550 = vpack.c.bf16 %v7522, %v7521
        %v7551 = vpack.c.bf16 %v7524, %v7523
        %v7552 = vpack.c.bf16 %v7526, %v7525
        %v7553 = vpack.c.bf16 %v7528, %v7527
        %v7554 = vpack.c.bf16 %v7530, %v7529
        %v7555 = vpack.c.bf16 %v7532, %v7531
        %v7556 = vpack.c.bf16 %v7534, %v7533
        %v7557 = vpack.c.bf16 %v7536, %v7535
        %v7558 = vpack.c.bf16 %v7538, %v7537
        %v7559 = vpack.c.bf16 %v7540, %v7539
        %v7560 = vpack.c.bf16 %v7542, %v7541
        %v7561 = vpack.c.bf16 %v7544, %v7543
        %v7562 = vpack.c.bf16 %v7546, %v7545
        %v7563 = vld [vmem:[%s421] sm:$0xf]
        %v7564 = vld [vmem:[%s421 + $0x4] sm:$0xf]
        %v7565 = vld [vmem:[%s421 + $0x8] sm:$0xf]
        %v7566 = vld [vmem:[%s421 + $0xc] sm:$0xf]
        %v7567 = vld [vmem:[%s421 + $0x10] sm:$0xf]
        %v7568 = vld [vmem:[%s421 + $0x14] sm:$0xf]
        %v7569 = vld [vmem:[%s421 + $0x18] sm:$0xf]
        %v7570 = vld [vmem:[%s421 + $0x1c] sm:$0xf]
        %v7571 = vmul.f32 %v7449, %v894
        %v7572 = vmul.f32 %v7450, %v898
        %v7573 = vmul.f32 %v7419, %v902
        %v7574 = vmul.f32 %v7420, %v906
        %v7575 = vmul.f32 %v7421, %v910
        %v7576 = vmul.f32 %v7422, %v914
        %v7577 = vmul.f32 %v7423, %v918
        %v7578 = vmul.f32 %v7424, %v922
        %v7579 = vmul.f32 %v7425, %v926
        %v7580 = vmul.f32 %v7426, %v930
        %v7581 = vmul.f32 %v7427, %v934
        %v7582 = vmul.f32 %v7428, %v938
        %v7583 = vmul.f32 %v7429, %v942
        %v7584 = vmul.f32 %v7430, %v946
        %v7585 = vmul.f32 %v7431, %v950
        %v7586 = vmul.f32 %v7432, %v954
        %v7587 = vmul.f32 %v7433, %v958
        %v7588 = vmul.f32 %v7434, %v962
        %v7589 = vmul.f32 %v7435, %v966
        %v7590 = vmul.f32 %v7436, %v970
        %v7591 = vmul.f32 %v7437, %v974
        %v7592 = vmul.f32 %v7438, %v978
        %v7593 = vmul.f32 %v7439, %v982
        %v7594 = vmul.f32 %v7440, %v986
        %v7595 = vmul.f32 %v7441, %v990
        %v7596 = vmul.f32 %v7442, %v994
        %v7597 = vmul.f32 %v7443, %v998
        %v7598 = vmul.f32 %v7444, %v1002
        %v7599 = vmul.f32 %v7445, %v1006
        %v7600 = vmul.f32 %v7446, %v1010
        %v7601 = vmul.f32 %v7447, %v1014
        %v7602 = vmul.f32 %v7448, %v1018
        %v7603 = vpack.c.bf16 %v7572, %v7571
        %v7604 = vpack.c.bf16 %v7574, %v7573
        %v7605 = vpack.c.bf16 %v7576, %v7575
        %v7606 = vpack.c.bf16 %v7578, %v7577
        %v7607 = vpack.c.bf16 %v7580, %v7579
        %v7608 = vpack.c.bf16 %v7582, %v7581
        %v7609 = vpack.c.bf16 %v7584, %v7583
        %v7610 = vpack.c.bf16 %v7586, %v7585
        %v7611 = vpack.c.bf16 %v7588, %v7587
        %v7612 = vpack.c.bf16 %v7590, %v7589
        %v7613 = vpack.c.bf16 %v7592, %v7591
        %v7614 = vpack.c.bf16 %v7594, %v7593
        %v7615 = vpack.c.bf16 %v7596, %v7595
        %v7616 = vpack.c.bf16 %v7598, %v7597
        %v7617 = vpack.c.bf16 %v7600, %v7599
        %v7618 = vpack.c.bf16 %v7602, %v7601
        %v7619 = vld [vmem:[%s421 + $0x20] sm:$0xf]
        %v7620 = vld [vmem:[%s421 + $0x24] sm:$0xf]
        %v7621 = vld [vmem:[%s421 + $0x28] sm:$0xf]
        %v7622 = vld [vmem:[%s421 + $0x2c] sm:$0xf]
        %v7623 = vld [vmem:[%s421 + $0x30] sm:$0xf]
        %v7624 = vld [vmem:[%s421 + $0x34] sm:$0xf]
        %v7625 = vld [vmem:[%s421 + $0x38] sm:$0xf]
        %v7626 = vld [vmem:[%s421 + $0x3c] sm:$0xf]
        %v7635 = vunpack.c.l.b16 %v7619
        %v7636 = vunpack.c.l.b16 %v7620
        %v7637 = vunpack.c.l.b16 %v7621
        %v7638 = vunpack.c.l.b16 %v7622
        %v7639 = vunpack.c.l.b16 %v7623
        %v7640 = vunpack.c.l.b16 %v7624
        %v7641 = vunpack.c.l.b16 %v7625
        %v7642 = vunpack.c.l.b16 %v7626
        %v7643 = vpack.c.b16 %v7636, %v7635
        %v7644 = vpack.c.b16 %v7638, %v7637
        %v7645 = vpack.c.b16 %v7640, %v7639
        %v7646 = vpack.c.b16 %v7642, %v7641
        %v7652 = vsel %vm1100, %v7603, 0
        %v7655 = vsel %vm1100, %v7604, 0
        %v7658 = vsel %vm1100, %v7605, 0
        %v7661 = vsel %vm1100, %v7606, 0
        %v7664 = vsel %vm1100, %v7607, 0
        %v7667 = vsel %vm1100, %v7608, 0
        %v7670 = vsel %vm1100, %v7609, 0
        %v7673 = vsel %vm1100, %v7610, 0
        %v7676 = vsel %vm1100, %v7611, 0
        %v7679 = vsel %vm1100, %v7612, 0
        %v7682 = vsel %vm1100, %v7613, 0
        %v7685 = vsel %vm1100, %v7614, 0
        %v7688 = vsel %vm1100, %v7615, 0
        %v7691 = vsel %vm1100, %v7616, 0
        %v7694 = vsel %vm1100, %v7617, 0
        %v7697 = vsel %vm1100, %v7618, 0
        %7699 = vmatpush.bf16.msra.mxu0 0
        %7700 = vmatpush.bf16.msra.mxu0 0
        %7701 = vmatpush.bf16.msra.mxu0 0
        %7702 = vmatpush.bf16.msra.mxu0 0
        %7703 = vmatpush.bf16.msra.mxu0 %v7646
        %7704 = vmatpush.bf16.msra.mxu0 %v7645
        %7705 = vmatpush.bf16.msra.mxu0 %v7644
        %7706 = vmatpush.bf16.msra.mxu0 %v7643
        %7707 = vmatmul.bf16.gmra.mxu0 %v7652
        %v7708 = vpop.f32.mrf.mxu0
        %v7709 = vadd.f32 0.0, %v7708
        %v7710 = vpop.f32.mrf.mxu0
        %v7711 = vadd.f32 0.0, %v7710
        %7712 = vmatmul.bf16.gmra.mxu0 %v7655
        %v7713 = vpop.f32.mrf.mxu0
        %v7714 = vadd.f32 0.0, %v7713
        %v7715 = vpop.f32.mrf.mxu0
        %v7716 = vadd.f32 0.0, %v7715
        %7717 = vmatmul.bf16.gmra.mxu0 %v7658
        %v7718 = vpop.f32.mrf.mxu0
        %v7719 = vadd.f32 0.0, %v7718
        %v7720 = vpop.f32.mrf.mxu0
        %v7721 = vadd.f32 0.0, %v7720
        %7722 = vmatmul.bf16.gmra.mxu0 %v7661
        %v7723 = vpop.f32.mrf.mxu0
        %v7724 = vadd.f32 0.0, %v7723
        %v7725 = vpop.f32.mrf.mxu0
        %v7726 = vadd.f32 0.0, %v7725
        %7727 = vmatmul.bf16.gmra.mxu0 %v7664
        %v7728 = vpop.f32.mrf.mxu0
        %v7729 = vadd.f32 0.0, %v7728
        %v7730 = vpop.f32.mrf.mxu0
        %v7731 = vadd.f32 0.0, %v7730
        %7732 = vmatmul.bf16.gmra.mxu0 %v7667
        %v7733 = vpop.f32.mrf.mxu0
        %v7734 = vadd.f32 0.0, %v7733
        %v7735 = vpop.f32.mrf.mxu0
        %v7736 = vadd.f32 0.0, %v7735
        %7737 = vmatmul.bf16.gmra.mxu0 %v7670
        %v7738 = vpop.f32.mrf.mxu0
        %v7739 = vadd.f32 0.0, %v7738
        %v7740 = vpop.f32.mrf.mxu0
        %v7741 = vadd.f32 0.0, %v7740
        %7742 = vmatmul.bf16.gmra.mxu0 %v7673
        %v7743 = vpop.f32.mrf.mxu0
        %v7744 = vadd.f32 0.0, %v7743
        %v7745 = vpop.f32.mrf.mxu0
        %v7746 = vadd.f32 0.0, %v7745
        %7747 = vmatmul.bf16.gmra.mxu0 %v7676
        %v7748 = vpop.f32.mrf.mxu0
        %v7749 = vadd.f32 0.0, %v7748
        %v7750 = vpop.f32.mrf.mxu0
        %v7751 = vadd.f32 0.0, %v7750
        %7752 = vmatmul.bf16.gmra.mxu0 %v7679
        %v7753 = vpop.f32.mrf.mxu0
        %v7754 = vadd.f32 0.0, %v7753
        %v7755 = vpop.f32.mrf.mxu0
        %v7756 = vadd.f32 0.0, %v7755
        %7757 = vmatmul.bf16.gmra.mxu0 %v7682
        %v7758 = vpop.f32.mrf.mxu0
        %v7759 = vadd.f32 0.0, %v7758
        %v7760 = vpop.f32.mrf.mxu0
        %v7761 = vadd.f32 0.0, %v7760
        %7762 = vmatmul.bf16.gmra.mxu0 %v7685
        %v7763 = vpop.f32.mrf.mxu0
        %v7764 = vadd.f32 0.0, %v7763
        %v7765 = vpop.f32.mrf.mxu0
        %v7766 = vadd.f32 0.0, %v7765
        %7767 = vmatmul.bf16.gmra.mxu0 %v7688
        %v7768 = vpop.f32.mrf.mxu0
        %v7769 = vadd.f32 0.0, %v7768
        %v7770 = vpop.f32.mrf.mxu0
        %v7771 = vadd.f32 0.0, %v7770
        %7772 = vmatmul.bf16.gmra.mxu0 %v7691
        %v7773 = vpop.f32.mrf.mxu0
        %v7774 = vadd.f32 0.0, %v7773
        %v7775 = vpop.f32.mrf.mxu0
        %v7776 = vadd.f32 0.0, %v7775
        %7777 = vmatmul.bf16.gmra.mxu0 %v7694
        %v7778 = vpop.f32.mrf.mxu0
        %v7779 = vadd.f32 0.0, %v7778
        %v7780 = vpop.f32.mrf.mxu0
        %v7781 = vadd.f32 0.0, %v7780
        %7782 = vmatmul.bf16.gmra.mxu0 %v7697
        %v7783 = vpop.f32.mrf.mxu0
        %v7784 = vadd.f32 0.0, %v7783
        %v7785 = vpop.f32.mrf.mxu0
        %v7786 = vadd.f32 0.0, %v7785
        %7787 = vdwg.mxu0
        %v7796 = vunpack.c.l.b16 %v7563
        %v7797 = vunpack.c.l.b16 %v7564
        %v7798 = vunpack.c.l.b16 %v7565
        %v7799 = vunpack.c.l.b16 %v7566
        %v7800 = vunpack.c.l.b16 %v7567
        %v7801 = vunpack.c.l.b16 %v7568
        %v7802 = vunpack.c.l.b16 %v7569
        %v7803 = vunpack.c.l.b16 %v7570
        %v7804 = vpack.c.b16 %v7797, %v7796
        %v7805 = vpack.c.b16 %v7799, %v7798
        %v7806 = vpack.c.b16 %v7801, %v7800
        %v7807 = vpack.c.b16 %v7803, %v7802
        %v7813 = vsel %vm1100, %v7547, 0
        %v7816 = vsel %vm1100, %v7548, 0
        %v7819 = vsel %vm1100, %v7549, 0
        %v7822 = vsel %vm1100, %v7550, 0
        %v7825 = vsel %vm1100, %v7551, 0
        %v7828 = vsel %vm1100, %v7552, 0
        %v7831 = vsel %vm1100, %v7553, 0
        %v7834 = vsel %vm1100, %v7554, 0
        %v7837 = vsel %vm1100, %v7555, 0
        %v7840 = vsel %vm1100, %v7556, 0
        %v7843 = vsel %vm1100, %v7557, 0
        %v7846 = vsel %vm1100, %v7558, 0
        %v7849 = vsel %vm1100, %v7559, 0
        %v7852 = vsel %vm1100, %v7560, 0
        %v7855 = vsel %vm1100, %v7561, 0
        %v7858 = vsel %vm1100, %v7562, 0
        %7860 = vmatpush.bf16.msra.mxu0 0
        %7861 = vmatpush.bf16.msra.mxu0 0
        %7862 = vmatpush.bf16.msra.mxu0 0
        %7863 = vmatpush.bf16.msra.mxu0 0
        %7864 = vmatpush.bf16.msra.mxu0 %v7807
        %7865 = vmatpush.bf16.msra.mxu0 %v7806
        %7866 = vmatpush.bf16.msra.mxu0 %v7805
        %7867 = vmatpush.bf16.msra.mxu0 %v7804
        %7868 = vmatmul.bf16.gmra.mxu0 %v7813
        %v7869 = vpop.f32.mrf.mxu0
        %v7870 = vadd.f32 %v7709, %v7869
        %v7871 = vpop.f32.mrf.mxu0
        %v7872 = vadd.f32 %v7711, %v7871
        %7873 = vmatmul.bf16.gmra.mxu0 %v7816
        %v7874 = vpop.f32.mrf.mxu0
        %v7875 = vadd.f32 %v7714, %v7874
        %v7876 = vpop.f32.mrf.mxu0
        %v7877 = vadd.f32 %v7716, %v7876
        %7878 = vmatmul.bf16.gmra.mxu0 %v7819
        %v7879 = vpop.f32.mrf.mxu0
        %v7880 = vadd.f32 %v7719, %v7879
        %v7881 = vpop.f32.mrf.mxu0
        %v7882 = vadd.f32 %v7721, %v7881
        %7883 = vmatmul.bf16.gmra.mxu0 %v7822
        %v7884 = vpop.f32.mrf.mxu0
        %v7885 = vadd.f32 %v7724, %v7884
        %v7886 = vpop.f32.mrf.mxu0
        %v7887 = vadd.f32 %v7726, %v7886
        %7888 = vmatmul.bf16.gmra.mxu0 %v7825
        %v7889 = vpop.f32.mrf.mxu0
        %v7890 = vadd.f32 %v7729, %v7889
        %v7891 = vpop.f32.mrf.mxu0
        %v7892 = vadd.f32 %v7731, %v7891
        %7893 = vmatmul.bf16.gmra.mxu0 %v7828
        %v7894 = vpop.f32.mrf.mxu0
        %v7895 = vadd.f32 %v7734, %v7894
        %v7896 = vpop.f32.mrf.mxu0
        %v7897 = vadd.f32 %v7736, %v7896
        %7898 = vmatmul.bf16.gmra.mxu0 %v7831
        %v7899 = vpop.f32.mrf.mxu0
        %v7900 = vadd.f32 %v7739, %v7899
        %v7901 = vpop.f32.mrf.mxu0
        %v7902 = vadd.f32 %v7741, %v7901
        %7903 = vmatmul.bf16.gmra.mxu0 %v7834
        %v7904 = vpop.f32.mrf.mxu0
        %v7905 = vadd.f32 %v7744, %v7904
        %v7906 = vpop.f32.mrf.mxu0
        %v7907 = vadd.f32 %v7746, %v7906
        %7908 = vmatmul.bf16.gmra.mxu0 %v7837
        %v7909 = vpop.f32.mrf.mxu0
        %v7910 = vadd.f32 %v7749, %v7909
        %v7911 = vpop.f32.mrf.mxu0
        %v7912 = vadd.f32 %v7751, %v7911
        %7913 = vmatmul.bf16.gmra.mxu0 %v7840
        %v7914 = vpop.f32.mrf.mxu0
        %v7915 = vadd.f32 %v7754, %v7914
        %v7916 = vpop.f32.mrf.mxu0
        %v7917 = vadd.f32 %v7756, %v7916
        %7918 = vmatmul.bf16.gmra.mxu0 %v7843
        %v7919 = vpop.f32.mrf.mxu0
        %v7920 = vadd.f32 %v7759, %v7919
        %v7921 = vpop.f32.mrf.mxu0
        %v7922 = vadd.f32 %v7761, %v7921
        %7923 = vmatmul.bf16.gmra.mxu0 %v7846
        %v7924 = vpop.f32.mrf.mxu0
        %v7925 = vadd.f32 %v7764, %v7924
        %v7926 = vpop.f32.mrf.mxu0
        %v7927 = vadd.f32 %v7766, %v7926
        %7928 = vmatmul.bf16.gmra.mxu0 %v7849
        %v7929 = vpop.f32.mrf.mxu0
        %v7930 = vadd.f32 %v7769, %v7929
        %v7931 = vpop.f32.mrf.mxu0
        %v7932 = vadd.f32 %v7771, %v7931
        %7933 = vmatmul.bf16.gmra.mxu0 %v7852
        %v7934 = vpop.f32.mrf.mxu0
        %v7935 = vadd.f32 %v7774, %v7934
        %v7936 = vpop.f32.mrf.mxu0
        %v7937 = vadd.f32 %v7776, %v7936
        %7938 = vmatmul.bf16.gmra.mxu0 %v7855
        %v7939 = vpop.f32.mrf.mxu0
        %v7940 = vadd.f32 %v7779, %v7939
        %v7941 = vpop.f32.mrf.mxu0
        %v7942 = vadd.f32 %v7781, %v7941
        %7943 = vmatmul.bf16.gmra.mxu0 %v7858
        %v7944 = vpop.f32.mrf.mxu0
        %v7945 = vadd.f32 %v7784, %v7944
        %v7946 = vpop.f32.mrf.mxu0
        %v7947 = vadd.f32 %v7786, %v7946
        %7948 = vdwg.mxu0
        %v7949 = vrot.slane %v7419, 1
        %v7950 = vrot.slane %v7420, 1
        %v7951 = vrot.slane %v7421, 1
        %v7952 = vrot.slane %v7422, 1
        %v7953 = vrot.slane %v7423, 1
        %v7954 = vrot.slane %v7424, 1
        %v7955 = vrot.slane %v7425, 1
        %v7956 = vrot.slane %v7426, 1
        %v7957 = vrot.slane %v7427, 1
        %v7958 = vrot.slane %v7428, 1
        %v7959 = vrot.slane %v7429, 1
        %v7960 = vrot.slane %v7430, 1
        %v7961 = vrot.slane %v7431, 1
        %v7962 = vrot.slane %v7432, 1
        %v7963 = vrot.slane %v7433, 1
        %v7964 = vrot.slane %v7434, 1
        %v7965 = vrot.slane %v7435, 1
        %v7966 = vrot.slane %v7436, 1
        %v7967 = vrot.slane %v7437, 1
        %v7968 = vrot.slane %v7438, 1
        %v7969 = vrot.slane %v7439, 1
        %v7970 = vrot.slane %v7440, 1
        %v7971 = vrot.slane %v7441, 1
        %v7972 = vrot.slane %v7442, 1
        %v7973 = vrot.slane %v7443, 1
        %v7974 = vrot.slane %v7444, 1
        %v7975 = vrot.slane %v7445, 1
        %v7976 = vrot.slane %v7446, 1
        %v7977 = vrot.slane %v7447, 1
        %v7978 = vrot.slane %v7448, 1
        %v7979 = vrot.slane %v7449, 1
        %v7980 = vrot.slane %v7450, 1
        %v7981 = vsel %vm1431, %v7979, %v7980
        %v7982 = vsel %vm1431, %v7978, %v7979
        %v7983 = vsel %vm1431, %v7977, %v7978
        %v7984 = vsel %vm1431, %v7976, %v7977
        %v7985 = vsel %vm1431, %v7975, %v7976
        %v7986 = vsel %vm1431, %v7974, %v7975
        %v7987 = vsel %vm1431, %v7973, %v7974
        %v7988 = vsel %vm1431, %v7972, %v7973
        %v7989 = vsel %vm1431, %v7971, %v7972
        %v7990 = vsel %vm1431, %v7970, %v7971
        %v7991 = vsel %vm1431, %v7969, %v7970
        %v7992 = vsel %vm1431, %v7968, %v7969
        %v7993 = vsel %vm1431, %v7967, %v7968
        %v7994 = vsel %vm1431, %v7966, %v7967
        %v7995 = vsel %vm1431, %v7965, %v7966
        %v7996 = vsel %vm1431, %v7964, %v7965
        %v7997 = vsel %vm1431, %v7963, %v7964
        %v7998 = vsel %vm1431, %v7962, %v7963
        %v7999 = vsel %vm1431, %v7961, %v7962
        %v8000 = vsel %vm1431, %v7960, %v7961
        %v8001 = vsel %vm1431, %v7959, %v7960
        %v8002 = vsel %vm1431, %v7958, %v7959
        %v8003 = vsel %vm1431, %v7957, %v7958
        %v8004 = vsel %vm1431, %v7956, %v7957
        %v8005 = vsel %vm1431, %v7955, %v7956
        %v8006 = vsel %vm1431, %v7954, %v7955
        %v8007 = vsel %vm1431, %v7953, %v7954
        %v8008 = vsel %vm1431, %v7952, %v7953
        %v8009 = vsel %vm1431, %v7951, %v7952
        %v8010 = vsel %vm1431, %v7950, %v7951
        %v8011 = vsel %vm1431, %v7949, %v7950
        %v8012 = vsel %vm1431, %v7980, %v7949
        %v8013 = vmul.f32 %v7981, %v1466
        %v8014 = vmul.f32 %v8012, %v1470
        %v8015 = vmul.f32 %v8011, %v1474
        %v8016 = vmul.f32 %v8010, %v1478
        %v8017 = vmul.f32 %v8009, %v1482
        %v8018 = vmul.f32 %v8008, %v1486
        %v8019 = vmul.f32 %v8007, %v1490
        %v8020 = vmul.f32 %v8006, %v1494
        %v8021 = vmul.f32 %v8005, %v1498
        %v8022 = vmul.f32 %v8004, %v1502
        %v8023 = vmul.f32 %v8003, %v1506
        %v8024 = vmul.f32 %v8002, %v1510
        %v8025 = vmul.f32 %v8001, %v1514
        %v8026 = vmul.f32 %v8000, %v1518
        %v8027 = vmul.f32 %v7999, %v1522
        %v8028 = vmul.f32 %v7998, %v1526
        %v8029 = vmul.f32 %v7997, %v1530
        %v8030 = vmul.f32 %v7996, %v1534
        %v8031 = vmul.f32 %v7995, %v1538
        %v8032 = vmul.f32 %v7994, %v1542
        %v8033 = vmul.f32 %v7993, %v1546
        %v8034 = vmul.f32 %v7992, %v1550
        %v8035 = vmul.f32 %v7991, %v1554
        %v8036 = vmul.f32 %v7990, %v1558
        %v8037 = vmul.f32 %v7989, %v1562
        %v8038 = vmul.f32 %v7988, %v1566
        %v8039 = vmul.f32 %v7987, %v1570
        %v8040 = vmul.f32 %v7986, %v1574
        %v8041 = vmul.f32 %v7985, %v1578
        %v8042 = vmul.f32 %v7984, %v1582
        %v8043 = vmul.f32 %v7983, %v1586
        %v8044 = vmul.f32 %v7982, %v1590
        %v8045 = vpack.c.bf16 %v8014, %v8013
        %v8046 = vpack.c.bf16 %v8016, %v8015
        %v8047 = vpack.c.bf16 %v8018, %v8017
        %v8048 = vpack.c.bf16 %v8020, %v8019
        %v8049 = vpack.c.bf16 %v8022, %v8021
        %v8050 = vpack.c.bf16 %v8024, %v8023
        %v8051 = vpack.c.bf16 %v8026, %v8025
        %v8052 = vpack.c.bf16 %v8028, %v8027
        %v8053 = vpack.c.bf16 %v8030, %v8029
        %v8054 = vpack.c.bf16 %v8032, %v8031
        %v8055 = vpack.c.bf16 %v8034, %v8033
        %v8056 = vpack.c.bf16 %v8036, %v8035
        %v8057 = vpack.c.bf16 %v8038, %v8037
        %v8058 = vpack.c.bf16 %v8040, %v8039
        %v8059 = vpack.c.bf16 %v8042, %v8041
        %v8060 = vpack.c.bf16 %v8044, %v8043
        %v8061 = vld [vmem:[%s421 + $0x40] sm:$0xf]
        %v8062 = vld [vmem:[%s421 + $0x44] sm:$0xf]
        %v8063 = vld [vmem:[%s421 + $0x48] sm:$0xf]
        %v8064 = vld [vmem:[%s421 + $0x4c] sm:$0xf]
        %v8065 = vld [vmem:[%s421 + $0x50] sm:$0xf]
        %v8066 = vld [vmem:[%s421 + $0x54] sm:$0xf]
        %v8067 = vld [vmem:[%s421 + $0x58] sm:$0xf]
        %v8068 = vld [vmem:[%s421 + $0x5c] sm:$0xf]
        %v8077 = vunpack.c.l.b16 %v8061
        %v8078 = vunpack.c.l.b16 %v8062
        %v8079 = vunpack.c.l.b16 %v8063
        %v8080 = vunpack.c.l.b16 %v8064
        %v8081 = vunpack.c.l.b16 %v8065
        %v8082 = vunpack.c.l.b16 %v8066
        %v8083 = vunpack.c.l.b16 %v8067
        %v8084 = vunpack.c.l.b16 %v8068
        %v8085 = vpack.c.b16 %v8078, %v8077
        %v8086 = vpack.c.b16 %v8080, %v8079
        %v8087 = vpack.c.b16 %v8082, %v8081
        %v8088 = vpack.c.b16 %v8084, %v8083
        %v8094 = vsel %vm1100, %v8045, 0
        %v8097 = vsel %vm1100, %v8046, 0
        %v8100 = vsel %vm1100, %v8047, 0
        %v8103 = vsel %vm1100, %v8048, 0
        %v8106 = vsel %vm1100, %v8049, 0
        %v8109 = vsel %vm1100, %v8050, 0
        %v8112 = vsel %vm1100, %v8051, 0
        %v8115 = vsel %vm1100, %v8052, 0
        %v8118 = vsel %vm1100, %v8053, 0
        %v8121 = vsel %vm1100, %v8054, 0
        %v8124 = vsel %vm1100, %v8055, 0
        %v8127 = vsel %vm1100, %v8056, 0
        %v8130 = vsel %vm1100, %v8057, 0
        %v8133 = vsel %vm1100, %v8058, 0
        %v8136 = vsel %vm1100, %v8059, 0
        %v8139 = vsel %vm1100, %v8060, 0
        %8141 = vmatpush.bf16.msra.mxu0 0
        %8142 = vmatpush.bf16.msra.mxu0 0
        %8143 = vmatpush.bf16.msra.mxu0 0
        %8144 = vmatpush.bf16.msra.mxu0 0
        %8145 = vmatpush.bf16.msra.mxu0 %v8088
        %8146 = vmatpush.bf16.msra.mxu0 %v8087
        %8147 = vmatpush.bf16.msra.mxu0 %v8086
        %8148 = vmatpush.bf16.msra.mxu0 %v8085
        %8149 = vmatmul.bf16.gmra.mxu0 %v8094
        %v8150 = vpop.f32.mrf.mxu0
        %v8151 = vadd.f32 0.0, %v8150
        %v8152 = vpop.f32.mrf.mxu0
        %v8153 = vadd.f32 0.0, %v8152
        %8154 = vmatmul.bf16.gmra.mxu0 %v8097
        %v8155 = vpop.f32.mrf.mxu0
        %v8156 = vadd.f32 0.0, %v8155
        %v8157 = vpop.f32.mrf.mxu0
        %v8158 = vadd.f32 0.0, %v8157
        %8159 = vmatmul.bf16.gmra.mxu0 %v8100
        %v8160 = vpop.f32.mrf.mxu0
        %v8161 = vadd.f32 0.0, %v8160
        %v8162 = vpop.f32.mrf.mxu0
        %v8163 = vadd.f32 0.0, %v8162
        %8164 = vmatmul.bf16.gmra.mxu0 %v8103
        %v8165 = vpop.f32.mrf.mxu0
        %v8166 = vadd.f32 0.0, %v8165
        %v8167 = vpop.f32.mrf.mxu0
        %v8168 = vadd.f32 0.0, %v8167
        %8169 = vmatmul.bf16.gmra.mxu0 %v8106
        %v8170 = vpop.f32.mrf.mxu0
        %v8171 = vadd.f32 0.0, %v8170
        %v8172 = vpop.f32.mrf.mxu0
        %v8173 = vadd.f32 0.0, %v8172
        %8174 = vmatmul.bf16.gmra.mxu0 %v8109
        %v8175 = vpop.f32.mrf.mxu0
        %v8176 = vadd.f32 0.0, %v8175
        %v8177 = vpop.f32.mrf.mxu0
        %v8178 = vadd.f32 0.0, %v8177
        %8179 = vmatmul.bf16.gmra.mxu0 %v8112
        %v8180 = vpop.f32.mrf.mxu0
        %v8181 = vadd.f32 0.0, %v8180
        %v8182 = vpop.f32.mrf.mxu0
        %v8183 = vadd.f32 0.0, %v8182
        %8184 = vmatmul.bf16.gmra.mxu0 %v8115
        %v8185 = vpop.f32.mrf.mxu0
        %v8186 = vadd.f32 0.0, %v8185
        %v8187 = vpop.f32.mrf.mxu0
        %v8188 = vadd.f32 0.0, %v8187
        %8189 = vmatmul.bf16.gmra.mxu0 %v8118
        %v8190 = vpop.f32.mrf.mxu0
        %v8191 = vadd.f32 0.0, %v8190
        %v8192 = vpop.f32.mrf.mxu0
        %v8193 = vadd.f32 0.0, %v8192
        %8194 = vmatmul.bf16.gmra.mxu0 %v8121
        %v8195 = vpop.f32.mrf.mxu0
        %v8196 = vadd.f32 0.0, %v8195
        %v8197 = vpop.f32.mrf.mxu0
        %v8198 = vadd.f32 0.0, %v8197
        %8199 = vmatmul.bf16.gmra.mxu0 %v8124
        %v8200 = vpop.f32.mrf.mxu0
        %v8201 = vadd.f32 0.0, %v8200
        %v8202 = vpop.f32.mrf.mxu0
        %v8203 = vadd.f32 0.0, %v8202
        %8204 = vmatmul.bf16.gmra.mxu0 %v8127
        %v8205 = vpop.f32.mrf.mxu0
        %v8206 = vadd.f32 0.0, %v8205
        %v8207 = vpop.f32.mrf.mxu0
        %v8208 = vadd.f32 0.0, %v8207
        %8209 = vmatmul.bf16.gmra.mxu0 %v8130
        %v8210 = vpop.f32.mrf.mxu0
        %v8211 = vadd.f32 0.0, %v8210
        %v8212 = vpop.f32.mrf.mxu0
        %v8213 = vadd.f32 0.0, %v8212
        %8214 = vmatmul.bf16.gmra.mxu0 %v8133
        %v8215 = vpop.f32.mrf.mxu0
        %v8216 = vadd.f32 0.0, %v8215
        %v8217 = vpop.f32.mrf.mxu0
        %v8218 = vadd.f32 0.0, %v8217
        %8219 = vmatmul.bf16.gmra.mxu0 %v8136
        %v8220 = vpop.f32.mrf.mxu0
        %v8221 = vadd.f32 0.0, %v8220
        %v8222 = vpop.f32.mrf.mxu0
        %v8223 = vadd.f32 0.0, %v8222
        %8224 = vmatmul.bf16.gmra.mxu0 %v8139
        %v8225 = vpop.f32.mrf.mxu0
        %v8226 = vadd.f32 0.0, %v8225
        %v8227 = vpop.f32.mrf.mxu0
        %v8228 = vadd.f32 0.0, %v8227
        %8229 = vdwg.mxu0
        %v8230 = vadd.f32 %v7870, %v8151
        %v8231 = vadd.f32 %v7872, %v8153
        %v8232 = vadd.f32 %v7875, %v8156
        %v8233 = vadd.f32 %v7877, %v8158
        %v8234 = vadd.f32 %v7880, %v8161
        %v8235 = vadd.f32 %v7882, %v8163
        %v8236 = vadd.f32 %v7885, %v8166
        %v8237 = vadd.f32 %v7887, %v8168
        %v8238 = vadd.f32 %v7890, %v8171
        %v8239 = vadd.f32 %v7892, %v8173
        %v8240 = vadd.f32 %v7895, %v8176
        %v8241 = vadd.f32 %v7897, %v8178
        %v8242 = vadd.f32 %v7900, %v8181
        %v8243 = vadd.f32 %v7902, %v8183
        %v8244 = vadd.f32 %v7905, %v8186
        %v8245 = vadd.f32 %v7907, %v8188
        %v8246 = vadd.f32 %v7910, %v8191
        %v8247 = vadd.f32 %v7912, %v8193
        %v8248 = vadd.f32 %v7915, %v8196
        %v8249 = vadd.f32 %v7917, %v8198
        %v8250 = vadd.f32 %v7920, %v8201
        %v8251 = vadd.f32 %v7922, %v8203
        %v8252 = vadd.f32 %v7925, %v8206
        %v8253 = vadd.f32 %v7927, %v8208
        %v8254 = vadd.f32 %v7930, %v8211
        %v8255 = vadd.f32 %v7932, %v8213
        %v8256 = vadd.f32 %v7935, %v8216
        %v8257 = vadd.f32 %v7937, %v8218
        %v8258 = vadd.f32 %v7940, %v8221
        %v8259 = vadd.f32 %v7942, %v8223
        %v8260 = vadd.f32 %v7945, %v8226
        %v8261 = vadd.f32 %v7947, %v8228
        %v8262 = vmul.f32 %v7514, %v1843
        %v8263 = vmul.f32 %v7513, %v1847
        %v8264 = vmul.f32 %v7512, %v1851
        %v8265 = vmul.f32 %v7511, %v1855
        %v8266 = vmul.f32 %v7510, %v1859
        %v8267 = vmul.f32 %v7509, %v1863
        %v8268 = vmul.f32 %v7508, %v1867
        %v8269 = vmul.f32 %v7507, %v1871
        %v8270 = vmul.f32 %v7506, %v1875
        %v8271 = vmul.f32 %v7505, %v1879
        %v8272 = vmul.f32 %v7504, %v1883
        %v8273 = vmul.f32 %v7503, %v1887
        %v8274 = vmul.f32 %v7502, %v1891
        %v8275 = vmul.f32 %v7501, %v1895
        %v8276 = vmul.f32 %v7500, %v1899
        %v8277 = vmul.f32 %v7499, %v1903
        %v8278 = vmul.f32 %v7498, %v1907
        %v8279 = vmul.f32 %v7497, %v1911
        %v8280 = vmul.f32 %v7496, %v1915
        %v8281 = vmul.f32 %v7495, %v1919
        %v8282 = vmul.f32 %v7494, %v1923
        %v8283 = vmul.f32 %v7493, %v1927
        %v8284 = vmul.f32 %v7492, %v1931
        %v8285 = vmul.f32 %v7491, %v1935
        %v8286 = vmul.f32 %v7490, %v1939
        %v8287 = vmul.f32 %v7489, %v1943
        %v8288 = vmul.f32 %v7488, %v1947
        %v8289 = vmul.f32 %v7487, %v1951
        %v8290 = vmul.f32 %v7486, %v1955
        %v8291 = vmul.f32 %v7485, %v1959
        %v8292 = vmul.f32 %v7484, %v1963
        %v8293 = vmul.f32 %v7483, %v1967
        %v8294 = vpack.c.bf16 %v8263, %v8262
        %v8295 = vpack.c.bf16 %v8265, %v8264
        %v8296 = vpack.c.bf16 %v8267, %v8266
        %v8297 = vpack.c.bf16 %v8269, %v8268
        %v8298 = vpack.c.bf16 %v8271, %v8270
        %v8299 = vpack.c.bf16 %v8273, %v8272
        %v8300 = vpack.c.bf16 %v8275, %v8274
        %v8301 = vpack.c.bf16 %v8277, %v8276
        %v8302 = vpack.c.bf16 %v8279, %v8278
        %v8303 = vpack.c.bf16 %v8281, %v8280
        %v8304 = vpack.c.bf16 %v8283, %v8282
        %v8305 = vpack.c.bf16 %v8285, %v8284
        %v8306 = vpack.c.bf16 %v8287, %v8286
        %v8307 = vpack.c.bf16 %v8289, %v8288
        %v8308 = vpack.c.bf16 %v8291, %v8290
        %v8309 = vpack.c.bf16 %v8293, %v8292
        %v8310 = vld [vmem:[%s421 + $0x60] sm:$0xf]
        %v8311 = vld [vmem:[%s421 + $0x64] sm:$0xf]
        %v8312 = vld [vmem:[%s421 + $0x68] sm:$0xf]
        %v8313 = vld [vmem:[%s421 + $0x6c] sm:$0xf]
        %v8314 = vld [vmem:[%s421 + $0x70] sm:$0xf]
        %v8315 = vld [vmem:[%s421 + $0x74] sm:$0xf]
        %v8316 = vld [vmem:[%s421 + $0x78] sm:$0xf]
        %v8317 = vld [vmem:[%s421 + $0x7c] sm:$0xf]
        %v8326 = vunpack.c.l.b16 %v8310
        %v8327 = vunpack.c.l.b16 %v8311
        %v8328 = vunpack.c.l.b16 %v8312
        %v8329 = vunpack.c.l.b16 %v8313
        %v8330 = vunpack.c.l.b16 %v8314
        %v8331 = vunpack.c.l.b16 %v8315
        %v8332 = vunpack.c.l.b16 %v8316
        %v8333 = vunpack.c.l.b16 %v8317
        %v8334 = vpack.c.b16 %v8327, %v8326
        %v8335 = vpack.c.b16 %v8329, %v8328
        %v8336 = vpack.c.b16 %v8331, %v8330
        %v8337 = vpack.c.b16 %v8333, %v8332
        %v8343 = vsel %vm1100, %v8294, 0
        %v8346 = vsel %vm1100, %v8295, 0
        %v8349 = vsel %vm1100, %v8296, 0
        %v8352 = vsel %vm1100, %v8297, 0
        %v8355 = vsel %vm1100, %v8298, 0
        %v8358 = vsel %vm1100, %v8299, 0
        %v8361 = vsel %vm1100, %v8300, 0
        %v8364 = vsel %vm1100, %v8301, 0
        %v8367 = vsel %vm1100, %v8302, 0
        %v8370 = vsel %vm1100, %v8303, 0
        %v8373 = vsel %vm1100, %v8304, 0
        %v8376 = vsel %vm1100, %v8305, 0
        %v8379 = vsel %vm1100, %v8306, 0
        %v8382 = vsel %vm1100, %v8307, 0
        %v8385 = vsel %vm1100, %v8308, 0
        %v8388 = vsel %vm1100, %v8309, 0
        %8390 = vmatpush.bf16.msra.mxu0 0
        %8391 = vmatpush.bf16.msra.mxu0 0
        %8392 = vmatpush.bf16.msra.mxu0 0
        %8393 = vmatpush.bf16.msra.mxu0 0
        %8394 = vmatpush.bf16.msra.mxu0 %v8337
        %8395 = vmatpush.bf16.msra.mxu0 %v8336
        %8396 = vmatpush.bf16.msra.mxu0 %v8335
        %8397 = vmatpush.bf16.msra.mxu0 %v8334
        %8398 = vmatmul.bf16.gmra.mxu0 %v8343
        %v8399 = vpop.f32.mrf.mxu0
        %v8400 = vadd.f32 0.0, %v8399
        %v8401 = vpop.f32.mrf.mxu0
        %v8402 = vadd.f32 0.0, %v8401
        %8403 = vmatmul.bf16.gmra.mxu0 %v8346
        %v8404 = vpop.f32.mrf.mxu0
        %v8405 = vadd.f32 0.0, %v8404
        %v8406 = vpop.f32.mrf.mxu0
        %v8407 = vadd.f32 0.0, %v8406
        %8408 = vmatmul.bf16.gmra.mxu0 %v8349
        %v8409 = vpop.f32.mrf.mxu0
        %v8410 = vadd.f32 0.0, %v8409
        %v8411 = vpop.f32.mrf.mxu0
        %v8412 = vadd.f32 0.0, %v8411
        %8413 = vmatmul.bf16.gmra.mxu0 %v8352
        %v8414 = vpop.f32.mrf.mxu0
        %v8415 = vadd.f32 0.0, %v8414
        %v8416 = vpop.f32.mrf.mxu0
        %v8417 = vadd.f32 0.0, %v8416
        %8418 = vmatmul.bf16.gmra.mxu0 %v8355
        %v8419 = vpop.f32.mrf.mxu0
        %v8420 = vadd.f32 0.0, %v8419
        %v8421 = vpop.f32.mrf.mxu0
        %v8422 = vadd.f32 0.0, %v8421
        %8423 = vmatmul.bf16.gmra.mxu0 %v8358
        %v8424 = vpop.f32.mrf.mxu0
        %v8425 = vadd.f32 0.0, %v8424
        %v8426 = vpop.f32.mrf.mxu0
        %v8427 = vadd.f32 0.0, %v8426
        %8428 = vmatmul.bf16.gmra.mxu0 %v8361
        %v8429 = vpop.f32.mrf.mxu0
        %v8430 = vadd.f32 0.0, %v8429
        %v8431 = vpop.f32.mrf.mxu0
        %v8432 = vadd.f32 0.0, %v8431
        %8433 = vmatmul.bf16.gmra.mxu0 %v8364
        %v8434 = vpop.f32.mrf.mxu0
        %v8435 = vadd.f32 0.0, %v8434
        %v8436 = vpop.f32.mrf.mxu0
        %v8437 = vadd.f32 0.0, %v8436
        %8438 = vmatmul.bf16.gmra.mxu0 %v8367
        %v8439 = vpop.f32.mrf.mxu0
        %v8440 = vadd.f32 0.0, %v8439
        %v8441 = vpop.f32.mrf.mxu0
        %v8442 = vadd.f32 0.0, %v8441
        %8443 = vmatmul.bf16.gmra.mxu0 %v8370
        %v8444 = vpop.f32.mrf.mxu0
        %v8445 = vadd.f32 0.0, %v8444
        %v8446 = vpop.f32.mrf.mxu0
        %v8447 = vadd.f32 0.0, %v8446
        %8448 = vmatmul.bf16.gmra.mxu0 %v8373
        %v8449 = vpop.f32.mrf.mxu0
        %v8450 = vadd.f32 0.0, %v8449
        %v8451 = vpop.f32.mrf.mxu0
        %v8452 = vadd.f32 0.0, %v8451
        %8453 = vmatmul.bf16.gmra.mxu0 %v8376
        %v8454 = vpop.f32.mrf.mxu0
        %v8455 = vadd.f32 0.0, %v8454
        %v8456 = vpop.f32.mrf.mxu0
        %v8457 = vadd.f32 0.0, %v8456
        %8458 = vmatmul.bf16.gmra.mxu0 %v8379
        %v8459 = vpop.f32.mrf.mxu0
        %v8460 = vadd.f32 0.0, %v8459
        %v8461 = vpop.f32.mrf.mxu0
        %v8462 = vadd.f32 0.0, %v8461
        %8463 = vmatmul.bf16.gmra.mxu0 %v8382
        %v8464 = vpop.f32.mrf.mxu0
        %v8465 = vadd.f32 0.0, %v8464
        %v8466 = vpop.f32.mrf.mxu0
        %v8467 = vadd.f32 0.0, %v8466
        %8468 = vmatmul.bf16.gmra.mxu0 %v8385
        %v8469 = vpop.f32.mrf.mxu0
        %v8470 = vadd.f32 0.0, %v8469
        %v8471 = vpop.f32.mrf.mxu0
        %v8472 = vadd.f32 0.0, %v8471
        %8473 = vmatmul.bf16.gmra.mxu0 %v8388
        %v8474 = vpop.f32.mrf.mxu0
        %v8475 = vadd.f32 0.0, %v8474
        %v8476 = vpop.f32.mrf.mxu0
        %v8477 = vadd.f32 0.0, %v8476
        %8478 = vdwg.mxu0
        %v8479 = vadd.f32 %v8230, %v8400
        %v8480 = vadd.f32 %v8231, %v8402
        %v8481 = vadd.f32 %v8232, %v8405
        %v8482 = vadd.f32 %v8233, %v8407
        %v8483 = vadd.f32 %v8234, %v8410
        %v8484 = vadd.f32 %v8235, %v8412
        %v8485 = vadd.f32 %v8236, %v8415
        %v8486 = vadd.f32 %v8237, %v8417
        %v8487 = vadd.f32 %v8238, %v8420
        %v8488 = vadd.f32 %v8239, %v8422
        %v8489 = vadd.f32 %v8240, %v8425
        %v8490 = vadd.f32 %v8241, %v8427
        %v8491 = vadd.f32 %v8242, %v8430
        %v8492 = vadd.f32 %v8243, %v8432
        %v8493 = vadd.f32 %v8244, %v8435
        %v8494 = vadd.f32 %v8245, %v8437
        %v8495 = vadd.f32 %v8246, %v8440
        %v8496 = vadd.f32 %v8247, %v8442
        %v8497 = vadd.f32 %v8248, %v8445
        %v8498 = vadd.f32 %v8249, %v8447
        %v8499 = vadd.f32 %v8250, %v8450
        %v8500 = vadd.f32 %v8251, %v8452
        %v8501 = vadd.f32 %v8252, %v8455
        %v8502 = vadd.f32 %v8253, %v8457
        %v8503 = vadd.f32 %v8254, %v8460
        %v8504 = vadd.f32 %v8255, %v8462
        %v8505 = vadd.f32 %v8256, %v8465
        %v8506 = vadd.f32 %v8257, %v8467
        %v8507 = vadd.f32 %v8258, %v8470
        %v8508 = vadd.f32 %v8259, %v8472
        %v8509 = vadd.f32 %v8260, %v8475
        %v8510 = vadd.f32 %v8261, %v8477
        %v8511 = vld [vmem:[%s421 + $0x80] sm:$0xf]
        %v8512 = vld [vmem:[%s421 + $0x84] sm:$0xf]
        %v8513 = vld [vmem:[%s421 + $0x88] sm:$0xf]
        %v8514 = vld [vmem:[%s421 + $0x8c] sm:$0xf]
        %v8515 = vld [vmem:[%s421 + $0x90] sm:$0xf]
        %v8516 = vld [vmem:[%s421 + $0x94] sm:$0xf]
        %v8517 = vld [vmem:[%s421 + $0x98] sm:$0xf]
        %v8518 = vld [vmem:[%s421 + $0x9c] sm:$0xf]
        %v8551 = vunpack.c.l.b16 %v7386
        %v8552 = vunpack.c.l.b16 %v7387
        %v8553 = vunpack.c.l.b16 %v7388
        %v8554 = vunpack.c.l.b16 %v7389
        %v8555 = vunpack.c.l.b16 %v7390
        %v8556 = vunpack.c.l.b16 %v7391
        %v8557 = vunpack.c.l.b16 %v7392
        %v8558 = vunpack.c.l.b16 %v7393
        %v8559 = vunpack.c.l.b16 %v7394
        %v8560 = vunpack.c.l.b16 %v7395
        %v8561 = vunpack.c.l.b16 %v7396
        %v8562 = vunpack.c.l.b16 %v7397
        %v8563 = vunpack.c.l.b16 %v7398
        %v8564 = vunpack.c.l.b16 %v7399
        %v8565 = vunpack.c.l.b16 %v7400
        %v8566 = vunpack.c.l.b16 %v7401
        %v8567 = vunpack.c.l.b16 %v7402
        %v8568 = vunpack.c.l.b16 %v7403
        %v8569 = vunpack.c.l.b16 %v7404
        %v8570 = vunpack.c.l.b16 %v7405
        %v8571 = vunpack.c.l.b16 %v7406
        %v8572 = vunpack.c.l.b16 %v7407
        %v8573 = vunpack.c.l.b16 %v7408
        %v8574 = vunpack.c.l.b16 %v7409
        %v8575 = vunpack.c.l.b16 %v7410
        %v8576 = vunpack.c.l.b16 %v7411
        %v8577 = vunpack.c.l.b16 %v7412
        %v8578 = vunpack.c.l.b16 %v7413
        %v8579 = vunpack.c.l.b16 %v7414
        %v8580 = vunpack.c.l.b16 %v7415
        %v8581 = vunpack.c.l.b16 %v7416
        %v8582 = vunpack.c.l.b16 %v7417
        %v8583 = vpack.c.b16 %v8552, %v8551
        %v8584 = vpack.c.b16 %v8554, %v8553
        %v8585 = vpack.c.b16 %v8556, %v8555
        %v8586 = vpack.c.b16 %v8558, %v8557
        %v8587 = vpack.c.b16 %v8560, %v8559
        %v8588 = vpack.c.b16 %v8562, %v8561
        %v8589 = vpack.c.b16 %v8564, %v8563
        %v8590 = vpack.c.b16 %v8566, %v8565
        %v8591 = vpack.c.b16 %v8568, %v8567
        %v8592 = vpack.c.b16 %v8570, %v8569
        %v8593 = vpack.c.b16 %v8572, %v8571
        %v8594 = vpack.c.b16 %v8574, %v8573
        %v8595 = vpack.c.b16 %v8576, %v8575
        %v8596 = vpack.c.b16 %v8578, %v8577
        %v8597 = vpack.c.b16 %v8580, %v8579
        %v8598 = vpack.c.b16 %v8582, %v8581
        %v8607 = vunpack.c.l.b16 %v8511
        %v8608 = vunpack.c.l.b16 %v8512
        %v8609 = vunpack.c.l.b16 %v8513
        %v8610 = vunpack.c.l.b16 %v8514
        %v8611 = vunpack.c.l.b16 %v8515
        %v8612 = vunpack.c.l.b16 %v8516
        %v8613 = vunpack.c.l.b16 %v8517
        %v8614 = vunpack.c.l.b16 %v8518
        %v8615 = vpack.c.b16 %v8608, %v8607
        %v8616 = vpack.c.b16 %v8610, %v8609
        %v8617 = vpack.c.b16 %v8612, %v8611
        %v8618 = vpack.c.b16 %v8614, %v8613
        %v8624 = vsel %vm1100, %v8583, 0
        %v8627 = vsel %vm1100, %v8584, 0
        %v8630 = vsel %vm1100, %v8585, 0
        %v8633 = vsel %vm1100, %v8586, 0
        %v8636 = vsel %vm1100, %v8587, 0
        %v8639 = vsel %vm1100, %v8588, 0
        %v8642 = vsel %vm1100, %v8589, 0
        %v8645 = vsel %vm1100, %v8590, 0
        %v8648 = vsel %vm1100, %v8591, 0
        %v8651 = vsel %vm1100, %v8592, 0
        %v8654 = vsel %vm1100, %v8593, 0
        %v8657 = vsel %vm1100, %v8594, 0
        %v8660 = vsel %vm1100, %v8595, 0
        %v8663 = vsel %vm1100, %v8596, 0
        %v8666 = vsel %vm1100, %v8597, 0
        %v8669 = vsel %vm1100, %v8598, 0
        %8671 = vmatpush.bf16.msra.mxu0 0
        %8672 = vmatpush.bf16.msra.mxu0 0
        %8673 = vmatpush.bf16.msra.mxu0 0
        %8674 = vmatpush.bf16.msra.mxu0 0
        %8675 = vmatpush.bf16.msra.mxu0 %v8618
        %8676 = vmatpush.bf16.msra.mxu0 %v8617
        %8677 = vmatpush.bf16.msra.mxu0 %v8616
        %8678 = vmatpush.bf16.msra.mxu0 %v8615
        %8679 = vmatmul.bf16.gmra.mxu0 %v8624
        %v8680 = vpop.f32.mrf.mxu0
        %v8681 = vadd.f32 0.0, %v8680
        %v8682 = vpop.f32.mrf.mxu0
        %v8683 = vadd.f32 0.0, %v8682
        %8684 = vmatmul.bf16.gmra.mxu0 %v8627
        %v8685 = vpop.f32.mrf.mxu0
        %v8686 = vadd.f32 0.0, %v8685
        %v8687 = vpop.f32.mrf.mxu0
        %v8688 = vadd.f32 0.0, %v8687
        %8689 = vmatmul.bf16.gmra.mxu0 %v8630
        %v8690 = vpop.f32.mrf.mxu0
        %v8691 = vadd.f32 0.0, %v8690
        %v8692 = vpop.f32.mrf.mxu0
        %v8693 = vadd.f32 0.0, %v8692
        %8694 = vmatmul.bf16.gmra.mxu0 %v8633
        %v8695 = vpop.f32.mrf.mxu0
        %v8696 = vadd.f32 0.0, %v8695
        %v8697 = vpop.f32.mrf.mxu0
        %v8698 = vadd.f32 0.0, %v8697
        %8699 = vmatmul.bf16.gmra.mxu0 %v8636
        %v8700 = vpop.f32.mrf.mxu0
        %v8701 = vadd.f32 0.0, %v8700
        %v8702 = vpop.f32.mrf.mxu0
        %v8703 = vadd.f32 0.0, %v8702
        %8704 = vmatmul.bf16.gmra.mxu0 %v8639
        %v8705 = vpop.f32.mrf.mxu0
        %v8706 = vadd.f32 0.0, %v8705
        %v8707 = vpop.f32.mrf.mxu0
        %v8708 = vadd.f32 0.0, %v8707
        %8709 = vmatmul.bf16.gmra.mxu0 %v8642
        %v8710 = vpop.f32.mrf.mxu0
        %v8711 = vadd.f32 0.0, %v8710
        %v8712 = vpop.f32.mrf.mxu0
        %v8713 = vadd.f32 0.0, %v8712
        %8714 = vmatmul.bf16.gmra.mxu0 %v8645
        %v8715 = vpop.f32.mrf.mxu0
        %v8716 = vadd.f32 0.0, %v8715
        %v8717 = vpop.f32.mrf.mxu0
        %v8718 = vadd.f32 0.0, %v8717
        %8719 = vmatmul.bf16.gmra.mxu0 %v8648
        %v8720 = vpop.f32.mrf.mxu0
        %v8721 = vadd.f32 0.0, %v8720
        %v8722 = vpop.f32.mrf.mxu0
        %v8723 = vadd.f32 0.0, %v8722
        %8724 = vmatmul.bf16.gmra.mxu0 %v8651
        %v8725 = vpop.f32.mrf.mxu0
        %v8726 = vadd.f32 0.0, %v8725
        %v8727 = vpop.f32.mrf.mxu0
        %v8728 = vadd.f32 0.0, %v8727
        %8729 = vmatmul.bf16.gmra.mxu0 %v8654
        %v8730 = vpop.f32.mrf.mxu0
        %v8731 = vadd.f32 0.0, %v8730
        %v8732 = vpop.f32.mrf.mxu0
        %v8733 = vadd.f32 0.0, %v8732
        %8734 = vmatmul.bf16.gmra.mxu0 %v8657
        %v8735 = vpop.f32.mrf.mxu0
        %v8736 = vadd.f32 0.0, %v8735
        %v8737 = vpop.f32.mrf.mxu0
        %v8738 = vadd.f32 0.0, %v8737
        %8739 = vmatmul.bf16.gmra.mxu0 %v8660
        %v8740 = vpop.f32.mrf.mxu0
        %v8741 = vadd.f32 0.0, %v8740
        %v8742 = vpop.f32.mrf.mxu0
        %v8743 = vadd.f32 0.0, %v8742
        %8744 = vmatmul.bf16.gmra.mxu0 %v8663
        %v8745 = vpop.f32.mrf.mxu0
        %v8746 = vadd.f32 0.0, %v8745
        %v8747 = vpop.f32.mrf.mxu0
        %v8748 = vadd.f32 0.0, %v8747
        %8749 = vmatmul.bf16.gmra.mxu0 %v8666
        %v8750 = vpop.f32.mrf.mxu0
        %v8751 = vadd.f32 0.0, %v8750
        %v8752 = vpop.f32.mrf.mxu0
        %v8753 = vadd.f32 0.0, %v8752
        %8754 = vmatmul.bf16.gmra.mxu0 %v8669
        %v8755 = vpop.f32.mrf.mxu0
        %v8756 = vadd.f32 0.0, %v8755
        %v8757 = vpop.f32.mrf.mxu0
        %v8758 = vadd.f32 0.0, %v8757
        %8759 = vdwg.mxu0
        %v8760 = vadd.f32 %v8479, %v8681
        %v8761 = vadd.f32 %v8480, %v8683
        %v8762 = vadd.f32 %v8481, %v8686
        %v8763 = vadd.f32 %v8482, %v8688
        %v8764 = vadd.f32 %v8483, %v8691
        %v8765 = vadd.f32 %v8484, %v8693
        %v8766 = vadd.f32 %v8485, %v8696
        %v8767 = vadd.f32 %v8486, %v8698
        %v8768 = vadd.f32 %v8487, %v8701
        %v8769 = vadd.f32 %v8488, %v8703
        %v8770 = vadd.f32 %v8489, %v8706
        %v8771 = vadd.f32 %v8490, %v8708
        %v8772 = vadd.f32 %v8491, %v8711
        %v8773 = vadd.f32 %v8492, %v8713
        %v8774 = vadd.f32 %v8493, %v8716
        %v8775 = vadd.f32 %v8494, %v8718
        %v8776 = vadd.f32 %v8495, %v8721
        %v8777 = vadd.f32 %v8496, %v8723
        %v8778 = vadd.f32 %v8497, %v8726
        %v8779 = vadd.f32 %v8498, %v8728
        %v8780 = vadd.f32 %v8499, %v8731
        %v8781 = vadd.f32 %v8500, %v8733
        %v8782 = vadd.f32 %v8501, %v8736
        %v8783 = vadd.f32 %v8502, %v8738
        %v8784 = vadd.f32 %v8503, %v8741
        %v8785 = vadd.f32 %v8504, %v8743
        %v8786 = vadd.f32 %v8505, %v8746
        %v8787 = vadd.f32 %v8506, %v8748
        %v8788 = vadd.f32 %v8507, %v8751
        %v8789 = vadd.f32 %v8508, %v8753
        %v8790 = vadd.f32 %v8509, %v8756
        %v8791 = vadd.f32 %v8510, %v8758
        %v8792 = vmul.f32 %v8011, %v2501
        %v8793 = vmul.f32 %v8010, %v2505
        %v8794 = vmul.f32 %v8009, %v2509
        %v8795 = vmul.f32 %v8008, %v2513
        %v8796 = vmul.f32 %v8007, %v2517
        %v8797 = vmul.f32 %v8006, %v2521
        %v8798 = vmul.f32 %v8005, %v2525
        %v8799 = vmul.f32 %v8004, %v2529
        %v8800 = vmul.f32 %v8003, %v2533
        %v8801 = vmul.f32 %v8002, %v2537
        %v8802 = vmul.f32 %v8001, %v2541
        %v8803 = vmul.f32 %v8000, %v2545
        %v8804 = vmul.f32 %v7999, %v2549
        %v8805 = vmul.f32 %v7998, %v2553
        %v8806 = vmul.f32 %v7997, %v2557
        %v8807 = vmul.f32 %v7996, %v2561
        %v8808 = vmul.f32 %v7995, %v2565
        %v8809 = vmul.f32 %v7994, %v2569
        %v8810 = vmul.f32 %v7993, %v2573
        %v8811 = vmul.f32 %v7992, %v2577
        %v8812 = vmul.f32 %v7991, %v2581
        %v8813 = vmul.f32 %v7990, %v2585
        %v8814 = vmul.f32 %v7989, %v2589
        %v8815 = vmul.f32 %v7988, %v2593
        %v8816 = vmul.f32 %v7987, %v2597
        %v8817 = vmul.f32 %v7986, %v2601
        %v8818 = vmul.f32 %v7985, %v2605
        %v8819 = vmul.f32 %v7984, %v2609
        %v8820 = vmul.f32 %v7983, %v2613
        %v8821 = vmul.f32 %v7982, %v2617
        %v8822 = vmul.f32 %v7981, %v2621
        %v8823 = vmul.f32 %v8012, %v2625
        %v8824 = vpack.c.bf16 %v8793, %v8792
        %v8825 = vpack.c.bf16 %v8795, %v8794
        %v8826 = vpack.c.bf16 %v8797, %v8796
        %v8827 = vpack.c.bf16 %v8799, %v8798
        %v8828 = vpack.c.bf16 %v8801, %v8800
        %v8829 = vpack.c.bf16 %v8803, %v8802
        %v8830 = vpack.c.bf16 %v8805, %v8804
        %v8831 = vpack.c.bf16 %v8807, %v8806
        %v8832 = vpack.c.bf16 %v8809, %v8808
        %v8833 = vpack.c.bf16 %v8811, %v8810
        %v8834 = vpack.c.bf16 %v8813, %v8812
        %v8835 = vpack.c.bf16 %v8815, %v8814
        %v8836 = vpack.c.bf16 %v8817, %v8816
        %v8837 = vpack.c.bf16 %v8819, %v8818
        %v8838 = vpack.c.bf16 %v8821, %v8820
        %v8839 = vpack.c.bf16 %v8823, %v8822
        %v8840 = vld [vmem:[%s421 + $0xa0] sm:$0xf]
        %v8841 = vld [vmem:[%s421 + $0xa4] sm:$0xf]
        %v8842 = vld [vmem:[%s421 + $0xa8] sm:$0xf]
        %v8843 = vld [vmem:[%s421 + $0xac] sm:$0xf]
        %v8844 = vld [vmem:[%s421 + $0xb0] sm:$0xf]
        %v8845 = vld [vmem:[%s421 + $0xb4] sm:$0xf]
        %v8846 = vld [vmem:[%s421 + $0xb8] sm:$0xf]
        %v8847 = vld [vmem:[%s421 + $0xbc] sm:$0xf]
        %v8856 = vunpack.c.l.b16 %v8840
        %v8857 = vunpack.c.l.b16 %v8841
        %v8858 = vunpack.c.l.b16 %v8842
        %v8859 = vunpack.c.l.b16 %v8843
        %v8860 = vunpack.c.l.b16 %v8844
        %v8861 = vunpack.c.l.b16 %v8845
        %v8862 = vunpack.c.l.b16 %v8846
        %v8863 = vunpack.c.l.b16 %v8847
        %v8864 = vpack.c.b16 %v8857, %v8856
        %v8865 = vpack.c.b16 %v8859, %v8858
        %v8866 = vpack.c.b16 %v8861, %v8860
        %v8867 = vpack.c.b16 %v8863, %v8862
        %v8873 = vsel %vm1100, %v8824, 0
        %v8876 = vsel %vm1100, %v8825, 0
        %v8879 = vsel %vm1100, %v8826, 0
        %v8882 = vsel %vm1100, %v8827, 0
        %v8885 = vsel %vm1100, %v8828, 0
        %v8888 = vsel %vm1100, %v8829, 0
        %v8891 = vsel %vm1100, %v8830, 0
        %v8894 = vsel %vm1100, %v8831, 0
        %v8897 = vsel %vm1100, %v8832, 0
        %v8900 = vsel %vm1100, %v8833, 0
        %v8903 = vsel %vm1100, %v8834, 0
        %v8906 = vsel %vm1100, %v8835, 0
        %v8909 = vsel %vm1100, %v8836, 0
        %v8912 = vsel %vm1100, %v8837, 0
        %v8915 = vsel %vm1100, %v8838, 0
        %v8918 = vsel %vm1100, %v8839, 0
        %8920 = vmatpush.bf16.msra.mxu0 0
        %8921 = vmatpush.bf16.msra.mxu0 0
        %8922 = vmatpush.bf16.msra.mxu0 0
        %8923 = vmatpush.bf16.msra.mxu0 0
        %8924 = vmatpush.bf16.msra.mxu0 %v8867
        %8925 = vmatpush.bf16.msra.mxu0 %v8866
        %8926 = vmatpush.bf16.msra.mxu0 %v8865
        %8927 = vmatpush.bf16.msra.mxu0 %v8864
        %8928 = vmatmul.bf16.gmra.mxu0 %v8873
        %v8929 = vpop.f32.mrf.mxu0
        %v8930 = vadd.f32 0.0, %v8929
        %v8931 = vpop.f32.mrf.mxu0
        %v8932 = vadd.f32 0.0, %v8931
        %8933 = vmatmul.bf16.gmra.mxu0 %v8876
        %v8934 = vpop.f32.mrf.mxu0
        %v8935 = vadd.f32 0.0, %v8934
        %v8936 = vpop.f32.mrf.mxu0
        %v8937 = vadd.f32 0.0, %v8936
        %8938 = vmatmul.bf16.gmra.mxu0 %v8879
        %v8939 = vpop.f32.mrf.mxu0
        %v8940 = vadd.f32 0.0, %v8939
        %v8941 = vpop.f32.mrf.mxu0
        %v8942 = vadd.f32 0.0, %v8941
        %8943 = vmatmul.bf16.gmra.mxu0 %v8882
        %v8944 = vpop.f32.mrf.mxu0
        %v8945 = vadd.f32 0.0, %v8944
        %v8946 = vpop.f32.mrf.mxu0
        %v8947 = vadd.f32 0.0, %v8946
        %8948 = vmatmul.bf16.gmra.mxu0 %v8885
        %v8949 = vpop.f32.mrf.mxu0
        %v8950 = vadd.f32 0.0, %v8949
        %v8951 = vpop.f32.mrf.mxu0
        %v8952 = vadd.f32 0.0, %v8951
        %8953 = vmatmul.bf16.gmra.mxu0 %v8888
        %v8954 = vpop.f32.mrf.mxu0
        %v8955 = vadd.f32 0.0, %v8954
        %v8956 = vpop.f32.mrf.mxu0
        %v8957 = vadd.f32 0.0, %v8956
        %8958 = vmatmul.bf16.gmra.mxu0 %v8891
        %v8959 = vpop.f32.mrf.mxu0
        %v8960 = vadd.f32 0.0, %v8959
        %v8961 = vpop.f32.mrf.mxu0
        %v8962 = vadd.f32 0.0, %v8961
        %8963 = vmatmul.bf16.gmra.mxu0 %v8894
        %v8964 = vpop.f32.mrf.mxu0
        %v8965 = vadd.f32 0.0, %v8964
        %v8966 = vpop.f32.mrf.mxu0
        %v8967 = vadd.f32 0.0, %v8966
        %8968 = vmatmul.bf16.gmra.mxu0 %v8897
        %v8969 = vpop.f32.mrf.mxu0
        %v8970 = vadd.f32 0.0, %v8969
        %v8971 = vpop.f32.mrf.mxu0
        %v8972 = vadd.f32 0.0, %v8971
        %8973 = vmatmul.bf16.gmra.mxu0 %v8900
        %v8974 = vpop.f32.mrf.mxu0
        %v8975 = vadd.f32 0.0, %v8974
        %v8976 = vpop.f32.mrf.mxu0
        %v8977 = vadd.f32 0.0, %v8976
        %8978 = vmatmul.bf16.gmra.mxu0 %v8903
        %v8979 = vpop.f32.mrf.mxu0
        %v8980 = vadd.f32 0.0, %v8979
        %v8981 = vpop.f32.mrf.mxu0
        %v8982 = vadd.f32 0.0, %v8981
        %8983 = vmatmul.bf16.gmra.mxu0 %v8906
        %v8984 = vpop.f32.mrf.mxu0
        %v8985 = vadd.f32 0.0, %v8984
        %v8986 = vpop.f32.mrf.mxu0
        %v8987 = vadd.f32 0.0, %v8986
        %8988 = vmatmul.bf16.gmra.mxu0 %v8909
        %v8989 = vpop.f32.mrf.mxu0
        %v8990 = vadd.f32 0.0, %v8989
        %v8991 = vpop.f32.mrf.mxu0
        %v8992 = vadd.f32 0.0, %v8991
        %8993 = vmatmul.bf16.gmra.mxu0 %v8912
        %v8994 = vpop.f32.mrf.mxu0
        %v8995 = vadd.f32 0.0, %v8994
        %v8996 = vpop.f32.mrf.mxu0
        %v8997 = vadd.f32 0.0, %v8996
        %8998 = vmatmul.bf16.gmra.mxu0 %v8915
        %v8999 = vpop.f32.mrf.mxu0
        %v9000 = vadd.f32 0.0, %v8999
        %v9001 = vpop.f32.mrf.mxu0
        %v9002 = vadd.f32 0.0, %v9001
        %9003 = vmatmul.bf16.gmra.mxu0 %v8918
        %v9004 = vpop.f32.mrf.mxu0
        %v9005 = vadd.f32 0.0, %v9004
        %v9006 = vpop.f32.mrf.mxu0
        %v9007 = vadd.f32 0.0, %v9006
        %9008 = vdwg.mxu0
        %v9009 = vadd.f32 %v8760, %v8930
        %v9010 = vadd.f32 %v8761, %v8932
        %v9011 = vadd.f32 %v8762, %v8935
        %v9012 = vadd.f32 %v8763, %v8937
        %v9013 = vadd.f32 %v8764, %v8940
        %v9014 = vadd.f32 %v8765, %v8942
        %v9015 = vadd.f32 %v8766, %v8945
        %v9016 = vadd.f32 %v8767, %v8947
        %v9017 = vadd.f32 %v8768, %v8950
        %v9018 = vadd.f32 %v8769, %v8952
        %v9019 = vadd.f32 %v8770, %v8955
        %v9020 = vadd.f32 %v8771, %v8957
        %v9021 = vadd.f32 %v8772, %v8960
        %v9022 = vadd.f32 %v8773, %v8962
        %v9023 = vadd.f32 %v8774, %v8965
        %v9024 = vadd.f32 %v8775, %v8967
        %v9025 = vadd.f32 %v8776, %v8970
        %v9026 = vadd.f32 %v8777, %v8972
        %v9027 = vadd.f32 %v8778, %v8975
        %v9028 = vadd.f32 %v8779, %v8977
        %v9029 = vadd.f32 %v8780, %v8980
        %v9030 = vadd.f32 %v8781, %v8982
        %v9031 = vadd.f32 %v8782, %v8985
        %v9032 = vadd.f32 %v8783, %v8987
        %v9033 = vadd.f32 %v8784, %v8990
        %v9034 = vadd.f32 %v8785, %v8992
        %v9035 = vadd.f32 %v8786, %v8995
        %v9036 = vadd.f32 %v8787, %v8997
        %v9037 = vadd.f32 %v8788, %v9000
        %v9038 = vadd.f32 %v8789, %v9002
        %v9039 = vadd.f32 %v8790, %v9005
        %v9040 = vadd.f32 %v8791, %v9007
        %v9041 = vmul.f32 %v7512, %v2878
        %v9042 = vmul.f32 %v7511, %v2882
        %v9043 = vmul.f32 %v7510, %v2886
        %v9044 = vmul.f32 %v7509, %v2890
        %v9045 = vmul.f32 %v7508, %v2894
        %v9046 = vmul.f32 %v7507, %v2898
        %v9047 = vmul.f32 %v7506, %v2902
        %v9048 = vmul.f32 %v7505, %v2906
        %v9049 = vmul.f32 %v7504, %v2910
        %v9050 = vmul.f32 %v7503, %v2914
        %v9051 = vmul.f32 %v7502, %v2918
        %v9052 = vmul.f32 %v7501, %v2922
        %v9053 = vmul.f32 %v7500, %v2926
        %v9054 = vmul.f32 %v7499, %v2930
        %v9055 = vmul.f32 %v7498, %v2934
        %v9056 = vmul.f32 %v7497, %v2938
        %v9057 = vmul.f32 %v7496, %v2942
        %v9058 = vmul.f32 %v7495, %v2946
        %v9059 = vmul.f32 %v7494, %v2950
        %v9060 = vmul.f32 %v7493, %v2954
        %v9061 = vmul.f32 %v7492, %v2958
        %v9062 = vmul.f32 %v7491, %v2962
        %v9063 = vmul.f32 %v7490, %v2966
        %v9064 = vmul.f32 %v7489, %v2970
        %v9065 = vmul.f32 %v7488, %v2974
        %v9066 = vmul.f32 %v7487, %v2978
        %v9067 = vmul.f32 %v7486, %v2982
        %v9068 = vmul.f32 %v7485, %v2986
        %v9069 = vmul.f32 %v7484, %v2990
        %v9070 = vmul.f32 %v7483, %v2994
        %v9071 = vmul.f32 %v7514, %v2998
        %v9072 = vmul.f32 %v7513, %v3002
        %v9073 = vpack.c.bf16 %v9042, %v9041
        %v9074 = vpack.c.bf16 %v9044, %v9043
        %v9075 = vpack.c.bf16 %v9046, %v9045
        %v9076 = vpack.c.bf16 %v9048, %v9047
        %v9077 = vpack.c.bf16 %v9050, %v9049
        %v9078 = vpack.c.bf16 %v9052, %v9051
        %v9079 = vpack.c.bf16 %v9054, %v9053
        %v9080 = vpack.c.bf16 %v9056, %v9055
        %v9081 = vpack.c.bf16 %v9058, %v9057
        %v9082 = vpack.c.bf16 %v9060, %v9059
        %v9083 = vpack.c.bf16 %v9062, %v9061
        %v9084 = vpack.c.bf16 %v9064, %v9063
        %v9085 = vpack.c.bf16 %v9066, %v9065
        %v9086 = vpack.c.bf16 %v9068, %v9067
        %v9087 = vpack.c.bf16 %v9070, %v9069
        %v9088 = vpack.c.bf16 %v9072, %v9071
        %v9089 = vld [vmem:[%s421 + $0xc0] sm:$0xf]
        %v9090 = vld [vmem:[%s421 + $0xc4] sm:$0xf]
        %v9091 = vld [vmem:[%s421 + $0xc8] sm:$0xf]
        %v9092 = vld [vmem:[%s421 + $0xcc] sm:$0xf]
        %v9093 = vld [vmem:[%s421 + $0xd0] sm:$0xf]
        %v9094 = vld [vmem:[%s421 + $0xd4] sm:$0xf]
        %v9095 = vld [vmem:[%s421 + $0xd8] sm:$0xf]
        %v9096 = vld [vmem:[%s421 + $0xdc] sm:$0xf]
        %v9105 = vunpack.c.l.b16 %v9089
        %v9106 = vunpack.c.l.b16 %v9090
        %v9107 = vunpack.c.l.b16 %v9091
        %v9108 = vunpack.c.l.b16 %v9092
        %v9109 = vunpack.c.l.b16 %v9093
        %v9110 = vunpack.c.l.b16 %v9094
        %v9111 = vunpack.c.l.b16 %v9095
        %v9112 = vunpack.c.l.b16 %v9096
        %v9113 = vpack.c.b16 %v9106, %v9105
        %v9114 = vpack.c.b16 %v9108, %v9107
        %v9115 = vpack.c.b16 %v9110, %v9109
        %v9116 = vpack.c.b16 %v9112, %v9111
        %v9122 = vsel %vm1100, %v9073, 0
        %v9125 = vsel %vm1100, %v9074, 0
        %v9128 = vsel %vm1100, %v9075, 0
        %v9131 = vsel %vm1100, %v9076, 0
        %v9134 = vsel %vm1100, %v9077, 0
        %v9137 = vsel %vm1100, %v9078, 0
        %v9140 = vsel %vm1100, %v9079, 0
        %v9143 = vsel %vm1100, %v9080, 0
        %v9146 = vsel %vm1100, %v9081, 0
        %v9149 = vsel %vm1100, %v9082, 0
        %v9152 = vsel %vm1100, %v9083, 0
        %v9155 = vsel %vm1100, %v9084, 0
        %v9158 = vsel %vm1100, %v9085, 0
        %v9161 = vsel %vm1100, %v9086, 0
        %v9164 = vsel %vm1100, %v9087, 0
        %v9167 = vsel %vm1100, %v9088, 0
        %9169 = vmatpush.bf16.msra.mxu0 0
        %9170 = vmatpush.bf16.msra.mxu0 0
        %9171 = vmatpush.bf16.msra.mxu0 0
        %9172 = vmatpush.bf16.msra.mxu0 0
        %9173 = vmatpush.bf16.msra.mxu0 %v9116
        %9174 = vmatpush.bf16.msra.mxu0 %v9115
        %9175 = vmatpush.bf16.msra.mxu0 %v9114
        %9176 = vmatpush.bf16.msra.mxu0 %v9113
        %9177 = vmatmul.bf16.gmra.mxu0 %v9122
        %v9178 = vpop.f32.mrf.mxu0
        %v9179 = vadd.f32 0.0, %v9178
        %v9180 = vpop.f32.mrf.mxu0
        %v9181 = vadd.f32 0.0, %v9180
        %9182 = vmatmul.bf16.gmra.mxu0 %v9125
        %v9183 = vpop.f32.mrf.mxu0
        %v9184 = vadd.f32 0.0, %v9183
        %v9185 = vpop.f32.mrf.mxu0
        %v9186 = vadd.f32 0.0, %v9185
        %9187 = vmatmul.bf16.gmra.mxu0 %v9128
        %v9188 = vpop.f32.mrf.mxu0
        %v9189 = vadd.f32 0.0, %v9188
        %v9190 = vpop.f32.mrf.mxu0
        %v9191 = vadd.f32 0.0, %v9190
        %9192 = vmatmul.bf16.gmra.mxu0 %v9131
        %v9193 = vpop.f32.mrf.mxu0
        %v9194 = vadd.f32 0.0, %v9193
        %v9195 = vpop.f32.mrf.mxu0
        %v9196 = vadd.f32 0.0, %v9195
        %9197 = vmatmul.bf16.gmra.mxu0 %v9134
        %v9198 = vpop.f32.mrf.mxu0
        %v9199 = vadd.f32 0.0, %v9198
        %v9200 = vpop.f32.mrf.mxu0
        %v9201 = vadd.f32 0.0, %v9200
        %9202 = vmatmul.bf16.gmra.mxu0 %v9137
        %v9203 = vpop.f32.mrf.mxu0
        %v9204 = vadd.f32 0.0, %v9203
        %v9205 = vpop.f32.mrf.mxu0
        %v9206 = vadd.f32 0.0, %v9205
        %9207 = vmatmul.bf16.gmra.mxu0 %v9140
        %v9208 = vpop.f32.mrf.mxu0
        %v9209 = vadd.f32 0.0, %v9208
        %v9210 = vpop.f32.mrf.mxu0
        %v9211 = vadd.f32 0.0, %v9210
        %9212 = vmatmul.bf16.gmra.mxu0 %v9143
        %v9213 = vpop.f32.mrf.mxu0
        %v9214 = vadd.f32 0.0, %v9213
        %v9215 = vpop.f32.mrf.mxu0
        %v9216 = vadd.f32 0.0, %v9215
        %9217 = vmatmul.bf16.gmra.mxu0 %v9146
        %v9218 = vpop.f32.mrf.mxu0
        %v9219 = vadd.f32 0.0, %v9218
        %v9220 = vpop.f32.mrf.mxu0
        %v9221 = vadd.f32 0.0, %v9220
        %9222 = vmatmul.bf16.gmra.mxu0 %v9149
        %v9223 = vpop.f32.mrf.mxu0
        %v9224 = vadd.f32 0.0, %v9223
        %v9225 = vpop.f32.mrf.mxu0
        %v9226 = vadd.f32 0.0, %v9225
        %9227 = vmatmul.bf16.gmra.mxu0 %v9152
        %v9228 = vpop.f32.mrf.mxu0
        %v9229 = vadd.f32 0.0, %v9228
        %v9230 = vpop.f32.mrf.mxu0
        %v9231 = vadd.f32 0.0, %v9230
        %9232 = vmatmul.bf16.gmra.mxu0 %v9155
        %v9233 = vpop.f32.mrf.mxu0
        %v9234 = vadd.f32 0.0, %v9233
        %v9235 = vpop.f32.mrf.mxu0
        %v9236 = vadd.f32 0.0, %v9235
        %9237 = vmatmul.bf16.gmra.mxu0 %v9158
        %v9238 = vpop.f32.mrf.mxu0
        %v9239 = vadd.f32 0.0, %v9238
        %v9240 = vpop.f32.mrf.mxu0
        %v9241 = vadd.f32 0.0, %v9240
        %9242 = vmatmul.bf16.gmra.mxu0 %v9161
        %v9243 = vpop.f32.mrf.mxu0
        %v9244 = vadd.f32 0.0, %v9243
        %v9245 = vpop.f32.mrf.mxu0
        %v9246 = vadd.f32 0.0, %v9245
        %9247 = vmatmul.bf16.gmra.mxu0 %v9164
        %v9248 = vpop.f32.mrf.mxu0
        %v9249 = vadd.f32 0.0, %v9248
        %v9250 = vpop.f32.mrf.mxu0
        %v9251 = vadd.f32 0.0, %v9250
        %9252 = vmatmul.bf16.gmra.mxu0 %v9167
        %v9253 = vpop.f32.mrf.mxu0
        %v9254 = vadd.f32 0.0, %v9253
        %v9255 = vpop.f32.mrf.mxu0
        %v9256 = vadd.f32 0.0, %v9255
        %9257 = vdwg.mxu0
        %v9258 = vadd.f32 %v9009, %v9179
        %v9259 = vadd.f32 %v9010, %v9181
        %v9260 = vadd.f32 %v9011, %v9184
        %v9261 = vadd.f32 %v9012, %v9186
        %v9262 = vadd.f32 %v9013, %v9189
        %v9263 = vadd.f32 %v9014, %v9191
        %v9264 = vadd.f32 %v9015, %v9194
        %v9265 = vadd.f32 %v9016, %v9196
        %v9266 = vadd.f32 %v9017, %v9199
        %v9267 = vadd.f32 %v9018, %v9201
        %v9268 = vadd.f32 %v9019, %v9204
        %v9269 = vadd.f32 %v9020, %v9206
        %v9270 = vadd.f32 %v9021, %v9209
        %v9271 = vadd.f32 %v9022, %v9211
        %v9272 = vadd.f32 %v9023, %v9214
        %v9273 = vadd.f32 %v9024, %v9216
        %v9274 = vadd.f32 %v9025, %v9219
        %v9275 = vadd.f32 %v9026, %v9221
        %v9276 = vadd.f32 %v9027, %v9224
        %v9277 = vadd.f32 %v9028, %v9226
        %v9278 = vadd.f32 %v9029, %v9229
        %v9279 = vadd.f32 %v9030, %v9231
        %v9280 = vadd.f32 %v9031, %v9234
        %v9281 = vadd.f32 %v9032, %v9236
        %v9282 = vadd.f32 %v9033, %v9239
        %v9283 = vadd.f32 %v9034, %v9241
        %v9284 = vadd.f32 %v9035, %v9244
        %v9285 = vadd.f32 %v9036, %v9246
        %v9286 = vadd.f32 %v9037, %v9249
        %v9287 = vadd.f32 %v9038, %v9251
        %v9288 = vadd.f32 %v9039, %v9254
        %v9289 = vadd.f32 %v9040, %v9256
        %v9290 = vmul.f32 %v7421, %v3255
        %v9291 = vmul.f32 %v7422, %v3259
        %v9292 = vmul.f32 %v7423, %v3263
        %v9293 = vmul.f32 %v7424, %v3267
        %v9294 = vmul.f32 %v7425, %v3271
        %v9295 = vmul.f32 %v7426, %v3275
        %v9296 = vmul.f32 %v7427, %v3279
        %v9297 = vmul.f32 %v7428, %v3283
        %v9298 = vmul.f32 %v7429, %v3287
        %v9299 = vmul.f32 %v7430, %v3291
        %v9300 = vmul.f32 %v7431, %v3295
        %v9301 = vmul.f32 %v7432, %v3299
        %v9302 = vmul.f32 %v7433, %v3303
        %v9303 = vmul.f32 %v7434, %v3307
        %v9304 = vmul.f32 %v7435, %v3311
        %v9305 = vmul.f32 %v7436, %v3315
        %v9306 = vmul.f32 %v7437, %v3319
        %v9307 = vmul.f32 %v7438, %v3323
        %v9308 = vmul.f32 %v7439, %v3327
        %v9309 = vmul.f32 %v7440, %v3331
        %v9310 = vmul.f32 %v7441, %v3335
        %v9311 = vmul.f32 %v7442, %v3339
        %v9312 = vmul.f32 %v7443, %v3343
        %v9313 = vmul.f32 %v7444, %v3347
        %v9314 = vmul.f32 %v7445, %v3351
        %v9315 = vmul.f32 %v7446, %v3355
        %v9316 = vmul.f32 %v7447, %v3359
        %v9317 = vmul.f32 %v7448, %v3363
        %v9318 = vmul.f32 %v7449, %v3367
        %v9319 = vmul.f32 %v7450, %v3371
        %v9320 = vmul.f32 %v7419, %v3375
        %v9321 = vmul.f32 %v7420, %v3379
        %v9322 = vpack.c.bf16 %v9291, %v9290
        %v9323 = vpack.c.bf16 %v9293, %v9292
        %v9324 = vpack.c.bf16 %v9295, %v9294
        %v9325 = vpack.c.bf16 %v9297, %v9296
        %v9326 = vpack.c.bf16 %v9299, %v9298
        %v9327 = vpack.c.bf16 %v9301, %v9300
        %v9328 = vpack.c.bf16 %v9303, %v9302
        %v9329 = vpack.c.bf16 %v9305, %v9304
        %v9330 = vpack.c.bf16 %v9307, %v9306
        %v9331 = vpack.c.bf16 %v9309, %v9308
        %v9332 = vpack.c.bf16 %v9311, %v9310
        %v9333 = vpack.c.bf16 %v9313, %v9312
        %v9334 = vpack.c.bf16 %v9315, %v9314
        %v9335 = vpack.c.bf16 %v9317, %v9316
        %v9336 = vpack.c.bf16 %v9319, %v9318
        %v9337 = vpack.c.bf16 %v9321, %v9320
        %v9338 = vld [vmem:[%s421 + $0xe0] sm:$0xf]
        %v9339 = vld [vmem:[%s421 + $0xe4] sm:$0xf]
        %v9340 = vld [vmem:[%s421 + $0xe8] sm:$0xf]
        %v9341 = vld [vmem:[%s421 + $0xec] sm:$0xf]
        %v9342 = vld [vmem:[%s421 + $0xf0] sm:$0xf]
        %v9343 = vld [vmem:[%s421 + $0xf4] sm:$0xf]
        %v9344 = vld [vmem:[%s421 + $0xf8] sm:$0xf]
        %v9345 = vld [vmem:[%s421 + $0xfc] sm:$0xf]
        %v9354 = vunpack.c.l.b16 %v9338
        %v9355 = vunpack.c.l.b16 %v9339
        %v9356 = vunpack.c.l.b16 %v9340
        %v9357 = vunpack.c.l.b16 %v9341
        %v9358 = vunpack.c.l.b16 %v9342
        %v9359 = vunpack.c.l.b16 %v9343
        %v9360 = vunpack.c.l.b16 %v9344
        %v9361 = vunpack.c.l.b16 %v9345
        %v9362 = vpack.c.b16 %v9355, %v9354
        %v9363 = vpack.c.b16 %v9357, %v9356
        %v9364 = vpack.c.b16 %v9359, %v9358
        %v9365 = vpack.c.b16 %v9361, %v9360
        %v9371 = vsel %vm1100, %v9322, 0
        %v9374 = vsel %vm1100, %v9323, 0
        %v9377 = vsel %vm1100, %v9324, 0
        %v9380 = vsel %vm1100, %v9325, 0
        %v9383 = vsel %vm1100, %v9326, 0
        %v9386 = vsel %vm1100, %v9327, 0
        %v9389 = vsel %vm1100, %v9328, 0
        %v9392 = vsel %vm1100, %v9329, 0
        %v9395 = vsel %vm1100, %v9330, 0
        %v9398 = vsel %vm1100, %v9331, 0
        %v9401 = vsel %vm1100, %v9332, 0
        %v9404 = vsel %vm1100, %v9333, 0
        %v9407 = vsel %vm1100, %v9334, 0
        %v9410 = vsel %vm1100, %v9335, 0
        %v9413 = vsel %vm1100, %v9336, 0
        %v9416 = vsel %vm1100, %v9337, 0
        %9418 = vmatpush.bf16.msra.mxu0 0
        %9419 = vmatpush.bf16.msra.mxu0 0
        %9420 = vmatpush.bf16.msra.mxu0 0
        %9421 = vmatpush.bf16.msra.mxu0 0
        %9422 = vmatpush.bf16.msra.mxu0 %v9365
        %9423 = vmatpush.bf16.msra.mxu0 %v9364
        %9424 = vmatpush.bf16.msra.mxu0 %v9363
        %9425 = vmatpush.bf16.msra.mxu0 %v9362
        %9426 = vmatmul.bf16.gmra.mxu0 %v9371
        %v9427 = vpop.f32.mrf.mxu0
        %v9428 = vadd.f32 0.0, %v9427
        %v9429 = vpop.f32.mrf.mxu0
        %v9430 = vadd.f32 0.0, %v9429
        %9431 = vmatmul.bf16.gmra.mxu0 %v9374
        %v9432 = vpop.f32.mrf.mxu0
        %v9433 = vadd.f32 0.0, %v9432
        %v9434 = vpop.f32.mrf.mxu0
        %v9435 = vadd.f32 0.0, %v9434
        %9436 = vmatmul.bf16.gmra.mxu0 %v9377
        %v9437 = vpop.f32.mrf.mxu0
        %v9438 = vadd.f32 0.0, %v9437
        %v9439 = vpop.f32.mrf.mxu0
        %v9440 = vadd.f32 0.0, %v9439
        %9441 = vmatmul.bf16.gmra.mxu0 %v9380
        %v9442 = vpop.f32.mrf.mxu0
        %v9443 = vadd.f32 0.0, %v9442
        %v9444 = vpop.f32.mrf.mxu0
        %v9445 = vadd.f32 0.0, %v9444
        %9446 = vmatmul.bf16.gmra.mxu0 %v9383
        %v9447 = vpop.f32.mrf.mxu0
        %v9448 = vadd.f32 0.0, %v9447
        %v9449 = vpop.f32.mrf.mxu0
        %v9450 = vadd.f32 0.0, %v9449
        %9451 = vmatmul.bf16.gmra.mxu0 %v9386
        %v9452 = vpop.f32.mrf.mxu0
        %v9453 = vadd.f32 0.0, %v9452
        %v9454 = vpop.f32.mrf.mxu0
        %v9455 = vadd.f32 0.0, %v9454
        %9456 = vmatmul.bf16.gmra.mxu0 %v9389
        %v9457 = vpop.f32.mrf.mxu0
        %v9458 = vadd.f32 0.0, %v9457
        %v9459 = vpop.f32.mrf.mxu0
        %v9460 = vadd.f32 0.0, %v9459
        %9461 = vmatmul.bf16.gmra.mxu0 %v9392
        %v9462 = vpop.f32.mrf.mxu0
        %v9463 = vadd.f32 0.0, %v9462
        %v9464 = vpop.f32.mrf.mxu0
        %v9465 = vadd.f32 0.0, %v9464
        %9466 = vmatmul.bf16.gmra.mxu0 %v9395
        %v9467 = vpop.f32.mrf.mxu0
        %v9468 = vadd.f32 0.0, %v9467
        %v9469 = vpop.f32.mrf.mxu0
        %v9470 = vadd.f32 0.0, %v9469
        %9471 = vmatmul.bf16.gmra.mxu0 %v9398
        %v9472 = vpop.f32.mrf.mxu0
        %v9473 = vadd.f32 0.0, %v9472
        %v9474 = vpop.f32.mrf.mxu0
        %v9475 = vadd.f32 0.0, %v9474
        %9476 = vmatmul.bf16.gmra.mxu0 %v9401
        %v9477 = vpop.f32.mrf.mxu0
        %v9478 = vadd.f32 0.0, %v9477
        %v9479 = vpop.f32.mrf.mxu0
        %v9480 = vadd.f32 0.0, %v9479
        %9481 = vmatmul.bf16.gmra.mxu0 %v9404
        %v9482 = vpop.f32.mrf.mxu0
        %v9483 = vadd.f32 0.0, %v9482
        %v9484 = vpop.f32.mrf.mxu0
        %v9485 = vadd.f32 0.0, %v9484
        %9486 = vmatmul.bf16.gmra.mxu0 %v9407
        %v9487 = vpop.f32.mrf.mxu0
        %v9488 = vadd.f32 0.0, %v9487
        %v9489 = vpop.f32.mrf.mxu0
        %v9490 = vadd.f32 0.0, %v9489
        %9491 = vmatmul.bf16.gmra.mxu0 %v9410
        %v9492 = vpop.f32.mrf.mxu0
        %v9493 = vadd.f32 0.0, %v9492
        %v9494 = vpop.f32.mrf.mxu0
        %v9495 = vadd.f32 0.0, %v9494
        %9496 = vmatmul.bf16.gmra.mxu0 %v9413
        %v9497 = vpop.f32.mrf.mxu0
        %v9498 = vadd.f32 0.0, %v9497
        %v9499 = vpop.f32.mrf.mxu0
        %v9500 = vadd.f32 0.0, %v9499
        %9501 = vmatmul.bf16.gmra.mxu0 %v9416
        %v9502 = vpop.f32.mrf.mxu0
        %v9503 = vadd.f32 0.0, %v9502
        %v9504 = vpop.f32.mrf.mxu0
        %v9505 = vadd.f32 0.0, %v9504
        %9506 = vdwg.mxu0
        %v9507 = vadd.f32 %v9258, %v9428
        %v9508 = vadd.f32 %v9259, %v9430
        %v9509 = vadd.f32 %v9260, %v9433
        %v9510 = vadd.f32 %v9261, %v9435
        %v9511 = vadd.f32 %v9262, %v9438
        %v9512 = vadd.f32 %v9263, %v9440
        %v9513 = vadd.f32 %v9264, %v9443
        %v9514 = vadd.f32 %v9265, %v9445
        %v9515 = vadd.f32 %v9266, %v9448
        %v9516 = vadd.f32 %v9267, %v9450
        %v9517 = vadd.f32 %v9268, %v9453
        %v9518 = vadd.f32 %v9269, %v9455
        %v9519 = vadd.f32 %v9270, %v9458
        %v9520 = vadd.f32 %v9271, %v9460
        %v9521 = vadd.f32 %v9272, %v9463
        %v9522 = vadd.f32 %v9273, %v9465
        %v9523 = vadd.f32 %v9274, %v9468
        %v9524 = vadd.f32 %v9275, %v9470
        %v9525 = vadd.f32 %v9276, %v9473
        %v9526 = vadd.f32 %v9277, %v9475
        %v9527 = vadd.f32 %v9278, %v9478
        %v9528 = vadd.f32 %v9279, %v9480
        %v9529 = vadd.f32 %v9280, %v9483
        %v9530 = vadd.f32 %v9281, %v9485
        %v9531 = vadd.f32 %v9282, %v9488
        %v9532 = vadd.f32 %v9283, %v9490
        %v9533 = vadd.f32 %v9284, %v9493
        %v9534 = vadd.f32 %v9285, %v9495
        %v9535 = vadd.f32 %v9286, %v9498
        %v9536 = vadd.f32 %v9287, %v9500
        %v9537 = vadd.f32 %v9288, %v9503
        %v9538 = vadd.f32 %v9289, %v9505
        %v9539 = vmul.f32 %v8009, %v3632
        %v9540 = vmul.f32 %v8008, %v3636
        %v9541 = vmul.f32 %v8007, %v3640
        %v9542 = vmul.f32 %v8006, %v3644
        %v9543 = vmul.f32 %v8005, %v3648
        %v9544 = vmul.f32 %v8004, %v3652
        %v9545 = vmul.f32 %v8003, %v3656
        %v9546 = vmul.f32 %v8002, %v3660
        %v9547 = vmul.f32 %v8001, %v3664
        %v9548 = vmul.f32 %v8000, %v3668
        %v9549 = vmul.f32 %v7999, %v3672
        %v9550 = vmul.f32 %v7998, %v3676
        %v9551 = vmul.f32 %v7997, %v3680
        %v9552 = vmul.f32 %v7996, %v3684
        %v9553 = vmul.f32 %v7995, %v3688
        %v9554 = vmul.f32 %v7994, %v3692
        %v9555 = vmul.f32 %v7993, %v3696
        %v9556 = vmul.f32 %v7992, %v3700
        %v9557 = vmul.f32 %v7991, %v3704
        %v9558 = vmul.f32 %v7990, %v3708
        %v9559 = vmul.f32 %v7989, %v3712
        %v9560 = vmul.f32 %v7988, %v3716
        %v9561 = vmul.f32 %v7987, %v3720
        %v9562 = vmul.f32 %v7986, %v3724
        %v9563 = vmul.f32 %v7985, %v3728
        %v9564 = vmul.f32 %v7984, %v3732
        %v9565 = vmul.f32 %v7983, %v3736
        %v9566 = vmul.f32 %v7982, %v3740
        %v9567 = vmul.f32 %v7981, %v3744
        %v9568 = vmul.f32 %v8012, %v3748
        %v9569 = vmul.f32 %v8011, %v3752
        %v9570 = vmul.f32 %v8010, %v3756
        %v9571 = vpack.c.bf16 %v9540, %v9539
        %v9572 = vpack.c.bf16 %v9542, %v9541
        %v9573 = vpack.c.bf16 %v9544, %v9543
        %v9574 = vpack.c.bf16 %v9546, %v9545
        %v9575 = vpack.c.bf16 %v9548, %v9547
        %v9576 = vpack.c.bf16 %v9550, %v9549
        %v9577 = vpack.c.bf16 %v9552, %v9551
        %v9578 = vpack.c.bf16 %v9554, %v9553
        %v9579 = vpack.c.bf16 %v9556, %v9555
        %v9580 = vpack.c.bf16 %v9558, %v9557
        %v9581 = vpack.c.bf16 %v9560, %v9559
        %v9582 = vpack.c.bf16 %v9562, %v9561
        %v9583 = vpack.c.bf16 %v9564, %v9563
        %v9584 = vpack.c.bf16 %v9566, %v9565
        %v9585 = vpack.c.bf16 %v9568, %v9567
        %v9586 = vpack.c.bf16 %v9570, %v9569
        %v9587 = vld [vmem:[%s421 + $0x100] sm:$0xf]
        %v9588 = vld [vmem:[%s421 + $0x104] sm:$0xf]
        %v9589 = vld [vmem:[%s421 + $0x108] sm:$0xf]
        %v9590 = vld [vmem:[%s421 + $0x10c] sm:$0xf]
        %v9591 = vld [vmem:[%s421 + $0x110] sm:$0xf]
        %v9592 = vld [vmem:[%s421 + $0x114] sm:$0xf]
        %v9593 = vld [vmem:[%s421 + $0x118] sm:$0xf]
        %v9594 = vld [vmem:[%s421 + $0x11c] sm:$0xf]
        %v9603 = vunpack.c.l.b16 %v9587
        %v9604 = vunpack.c.l.b16 %v9588
        %v9605 = vunpack.c.l.b16 %v9589
        %v9606 = vunpack.c.l.b16 %v9590
        %v9607 = vunpack.c.l.b16 %v9591
        %v9608 = vunpack.c.l.b16 %v9592
        %v9609 = vunpack.c.l.b16 %v9593
        %v9610 = vunpack.c.l.b16 %v9594
        %v9611 = vpack.c.b16 %v9604, %v9603
        %v9612 = vpack.c.b16 %v9606, %v9605
        %v9613 = vpack.c.b16 %v9608, %v9607
        %v9614 = vpack.c.b16 %v9610, %v9609
        %v9620 = vsel %vm1100, %v9571, 0
        %v9623 = vsel %vm1100, %v9572, 0
        %v9626 = vsel %vm1100, %v9573, 0
        %v9629 = vsel %vm1100, %v9574, 0
        %v9632 = vsel %vm1100, %v9575, 0
        %v9635 = vsel %vm1100, %v9576, 0
        %v9638 = vsel %vm1100, %v9577, 0
        %v9641 = vsel %vm1100, %v9578, 0
        %v9644 = vsel %vm1100, %v9579, 0
        %v9647 = vsel %vm1100, %v9580, 0
        %v9650 = vsel %vm1100, %v9581, 0
        %v9653 = vsel %vm1100, %v9582, 0
        %v9656 = vsel %vm1100, %v9583, 0
        %v9659 = vsel %vm1100, %v9584, 0
        %v9662 = vsel %vm1100, %v9585, 0
        %v9665 = vsel %vm1100, %v9586, 0
        %9667 = vmatpush.bf16.msra.mxu0 0
        %9668 = vmatpush.bf16.msra.mxu0 0
        %9669 = vmatpush.bf16.msra.mxu0 0
        %9670 = vmatpush.bf16.msra.mxu0 0
        %9671 = vmatpush.bf16.msra.mxu0 %v9614
        %9672 = vmatpush.bf16.msra.mxu0 %v9613
        %9673 = vmatpush.bf16.msra.mxu0 %v9612
        %9674 = vmatpush.bf16.msra.mxu0 %v9611
        %9675 = vmatmul.bf16.gmra.mxu0 %v9620
        %v9676 = vpop.f32.mrf.mxu0
        %v9677 = vadd.f32 0.0, %v9676
        %v9678 = vpop.f32.mrf.mxu0
        %v9679 = vadd.f32 0.0, %v9678
        %9680 = vmatmul.bf16.gmra.mxu0 %v9623
        %v9681 = vpop.f32.mrf.mxu0
        %v9682 = vadd.f32 0.0, %v9681
        %v9683 = vpop.f32.mrf.mxu0
        %v9684 = vadd.f32 0.0, %v9683
        %9685 = vmatmul.bf16.gmra.mxu0 %v9626
        %v9686 = vpop.f32.mrf.mxu0
        %v9687 = vadd.f32 0.0, %v9686
        %v9688 = vpop.f32.mrf.mxu0
        %v9689 = vadd.f32 0.0, %v9688
        %9690 = vmatmul.bf16.gmra.mxu0 %v9629
        %v9691 = vpop.f32.mrf.mxu0
        %v9692 = vadd.f32 0.0, %v9691
        %v9693 = vpop.f32.mrf.mxu0
        %v9694 = vadd.f32 0.0, %v9693
        %9695 = vmatmul.bf16.gmra.mxu0 %v9632
        %v9696 = vpop.f32.mrf.mxu0
        %v9697 = vadd.f32 0.0, %v9696
        %v9698 = vpop.f32.mrf.mxu0
        %v9699 = vadd.f32 0.0, %v9698
        %9700 = vmatmul.bf16.gmra.mxu0 %v9635
        %v9701 = vpop.f32.mrf.mxu0
        %v9702 = vadd.f32 0.0, %v9701
        %v9703 = vpop.f32.mrf.mxu0
        %v9704 = vadd.f32 0.0, %v9703
        %9705 = vmatmul.bf16.gmra.mxu0 %v9638
        %v9706 = vpop.f32.mrf.mxu0
        %v9707 = vadd.f32 0.0, %v9706
        %v9708 = vpop.f32.mrf.mxu0
        %v9709 = vadd.f32 0.0, %v9708
        %9710 = vmatmul.bf16.gmra.mxu0 %v9641
        %v9711 = vpop.f32.mrf.mxu0
        %v9712 = vadd.f32 0.0, %v9711
        %v9713 = vpop.f32.mrf.mxu0
        %v9714 = vadd.f32 0.0, %v9713
        %9715 = vmatmul.bf16.gmra.mxu0 %v9644
        %v9716 = vpop.f32.mrf.mxu0
        %v9717 = vadd.f32 0.0, %v9716
        %v9718 = vpop.f32.mrf.mxu0
        %v9719 = vadd.f32 0.0, %v9718
        %9720 = vmatmul.bf16.gmra.mxu0 %v9647
        %v9721 = vpop.f32.mrf.mxu0
        %v9722 = vadd.f32 0.0, %v9721
        %v9723 = vpop.f32.mrf.mxu0
        %v9724 = vadd.f32 0.0, %v9723
        %9725 = vmatmul.bf16.gmra.mxu0 %v9650
        %v9726 = vpop.f32.mrf.mxu0
        %v9727 = vadd.f32 0.0, %v9726
        %v9728 = vpop.f32.mrf.mxu0
        %v9729 = vadd.f32 0.0, %v9728
        %9730 = vmatmul.bf16.gmra.mxu0 %v9653
        %v9731 = vpop.f32.mrf.mxu0
        %v9732 = vadd.f32 0.0, %v9731
        %v9733 = vpop.f32.mrf.mxu0
        %v9734 = vadd.f32 0.0, %v9733
        %9735 = vmatmul.bf16.gmra.mxu0 %v9656
        %v9736 = vpop.f32.mrf.mxu0
        %v9737 = vadd.f32 0.0, %v9736
        %v9738 = vpop.f32.mrf.mxu0
        %v9739 = vadd.f32 0.0, %v9738
        %9740 = vmatmul.bf16.gmra.mxu0 %v9659
        %v9741 = vpop.f32.mrf.mxu0
        %v9742 = vadd.f32 0.0, %v9741
        %v9743 = vpop.f32.mrf.mxu0
        %v9744 = vadd.f32 0.0, %v9743
        %9745 = vmatmul.bf16.gmra.mxu0 %v9662
        %v9746 = vpop.f32.mrf.mxu0
        %v9747 = vadd.f32 0.0, %v9746
        %v9748 = vpop.f32.mrf.mxu0
        %v9749 = vadd.f32 0.0, %v9748
        %9750 = vmatmul.bf16.gmra.mxu0 %v9665
        %v9751 = vpop.f32.mrf.mxu0
        %v9752 = vadd.f32 0.0, %v9751
        %v9753 = vpop.f32.mrf.mxu0
        %v9754 = vadd.f32 0.0, %v9753
        %9755 = vdwg.mxu0
        %v9756 = vadd.f32 %v9507, %v9677
        %v9757 = vadd.f32 %v9508, %v9679
        %v9758 = vadd.f32 %v9509, %v9682
        %v9759 = vadd.f32 %v9510, %v9684
        %v9760 = vadd.f32 %v9511, %v9687
        %v9761 = vadd.f32 %v9512, %v9689
        %v9762 = vadd.f32 %v9513, %v9692
        %v9763 = vadd.f32 %v9514, %v9694
        %v9764 = vadd.f32 %v9515, %v9697
        %v9765 = vadd.f32 %v9516, %v9699
        %v9766 = vadd.f32 %v9517, %v9702
        %v9767 = vadd.f32 %v9518, %v9704
        %v9768 = vadd.f32 %v9519, %v9707
        %v9769 = vadd.f32 %v9520, %v9709
        %v9770 = vadd.f32 %v9521, %v9712
        %v9771 = vadd.f32 %v9522, %v9714
        %v9772 = vadd.f32 %v9523, %v9717
        %v9773 = vadd.f32 %v9524, %v9719
        %v9774 = vadd.f32 %v9525, %v9722
        %v9775 = vadd.f32 %v9526, %v9724
        %v9776 = vadd.f32 %v9527, %v9727
        %v9777 = vadd.f32 %v9528, %v9729
        %v9778 = vadd.f32 %v9529, %v9732
        %v9779 = vadd.f32 %v9530, %v9734
        %v9780 = vadd.f32 %v9531, %v9737
        %v9781 = vadd.f32 %v9532, %v9739
        %v9782 = vadd.f32 %v9533, %v9742
        %v9783 = vadd.f32 %v9534, %v9744
        %v9784 = vadd.f32 %v9535, %v9747
        %v9785 = vadd.f32 %v9536, %v9749
        %v9786 = vadd.f32 %v9537, %v9752
        %v9787 = vadd.f32 %v9538, %v9754
        %v9789 = vperm.slane %v7418, 0
        %v9791 = vadd.f32 %v9756, %v9789
        %v9792 = vadd.f32 %v9757, %v9789
        %v9793 = vadd.f32 %v9758, %v9789
        %v9794 = vadd.f32 %v9759, %v9789
        %v9795 = vadd.f32 %v9760, %v9789
        %v9796 = vadd.f32 %v9761, %v9789
        %v9797 = vadd.f32 %v9762, %v9789
        %v9798 = vadd.f32 %v9763, %v9789
        %v9799 = vadd.f32 %v9764, %v9789
        %v9800 = vadd.f32 %v9765, %v9789
        %v9801 = vadd.f32 %v9766, %v9789
        %v9802 = vadd.f32 %v9767, %v9789
        %v9803 = vadd.f32 %v9768, %v9789
        %v9804 = vadd.f32 %v9769, %v9789
        %v9805 = vadd.f32 %v9770, %v9789
        %v9806 = vadd.f32 %v9771, %v9789
        %v9807 = vadd.f32 %v9772, %v9789
        %v9808 = vadd.f32 %v9773, %v9789
        %v9809 = vadd.f32 %v9774, %v9789
        %v9810 = vadd.f32 %v9775, %v9789
        %v9811 = vadd.f32 %v9776, %v9789
        %v9812 = vadd.f32 %v9777, %v9789
        %v9813 = vadd.f32 %v9778, %v9789
        %v9814 = vadd.f32 %v9779, %v9789
        %v9815 = vadd.f32 %v9780, %v9789
        %v9816 = vadd.f32 %v9781, %v9789
        %v9817 = vadd.f32 %v9782, %v9789
        %v9818 = vadd.f32 %v9783, %v9789
        %v9819 = vadd.f32 %v9784, %v9789
        %v9820 = vadd.f32 %v9785, %v9789
        %v9821 = vadd.f32 %v9786, %v9789
        %v9822 = vadd.f32 %v9787, %v9789
        %p9823 = scmp.eq.s32.totalorder %s26, 0
        // Predicated region
        $region53: #{tpu_custom_call.1} parent=51 // pred_check
          %p9824 = pneg %p9823
        $region54: #{tpu_custom_call.1} parent=51 // pred_check_branch
          %9826 = sbr.rel (%p9824) target = $region56
        $region55: #{tpu_custom_call.1} parent=51 // pred_region
          %9827 = vst [vmem:[%s394] sm:$0xff] %v9791
          %9828 = vst [vmem:[%s394 + $0x8] sm:$0xff] %v9792
          %9829 = vst [vmem:[%s394 + $0x10] sm:$0xff] %v9793
          %9830 = vst [vmem:[%s394 + $0x18] sm:$0xff] %v9794
          %9831 = vst [vmem:[%s394 + $0x20] sm:$0xff] %v9795
          %9832 = vst [vmem:[%s394 + $0x28] sm:$0xff] %v9796
          %9833 = vst [vmem:[%s394 + $0x30] sm:$0xff] %v9797
          %9834 = vst [vmem:[%s394 + $0x38] sm:$0xff] %v9798
          %9835 = vst [vmem:[%s394 + $0x40] sm:$0xff] %v9799
          %9836 = vst [vmem:[%s394 + $0x48] sm:$0xff] %v9800
          %9837 = vst [vmem:[%s394 + $0x50] sm:$0xff] %v9801
          %9838 = vst [vmem:[%s394 + $0x58] sm:$0xff] %v9802
          %9839 = vst [vmem:[%s394 + $0x60] sm:$0xff] %v9803
          %9840 = vst [vmem:[%s394 + $0x68] sm:$0xff] %v9804
          %9841 = vst [vmem:[%s394 + $0x70] sm:$0xff] %v9805
          %9842 = vst [vmem:[%s394 + $0x78] sm:$0xff] %v9806
          %9843 = vst [vmem:[%s394 + $0x80] sm:$0xff] %v9807
          %9844 = vst [vmem:[%s394 + $0x88] sm:$0xff] %v9808
          %9845 = vst [vmem:[%s394 + $0x90] sm:$0xff] %v9809
          %9846 = vst [vmem:[%s394 + $0x98] sm:$0xff] %v9810
          %9847 = vst [vmem:[%s394 + $0xa0] sm:$0xff] %v9811
          %9848 = vst [vmem:[%s394 + $0xa8] sm:$0xff] %v9812
          %9849 = vst [vmem:[%s394 + $0xb0] sm:$0xff] %v9813
          %9850 = vst [vmem:[%s394 + $0xb8] sm:$0xff] %v9814
          %9851 = vst [vmem:[%s394 + $0xc0] sm:$0xff] %v9815
          %9852 = vst [vmem:[%s394 + $0xc8] sm:$0xff] %v9816
          %9853 = vst [vmem:[%s394 + $0xd0] sm:$0xff] %v9817
          %9854 = vst [vmem:[%s394 + $0xd8] sm:$0xff] %v9818
          %9855 = vst [vmem:[%s394 + $0xe0] sm:$0xff] %v9819
          %9856 = vst [vmem:[%s394 + $0xe8] sm:$0xff] %v9820
          %9857 = vst [vmem:[%s394 + $0xf0] sm:$0xff] %v9821
          %9858 = vst [vmem:[%s394 + $0xf8] sm:$0xff] %v9822
        $region56: #{tpu_custom_call.1} parent=51 // pred_fallthru
          _
        %p9859 = scmp.eq.s32.totalorder %s26, 1
        // Predicated region
        $region57: #{tpu_custom_call.1} parent=51 // pred_check
          %p9860 = pneg %p9859
        $region58: #{tpu_custom_call.1} parent=51 // pred_check_branch
          %9862 = sbr.rel (%p9860) target = $region60
        $region59: #{tpu_custom_call.1} parent=51 // pred_region
          %v9863 = vmul.f32 %v9791, 1.442695
          %v9864 = vpow.pop %v9863
          %v9865 = vmul.f32 %v9792, 1.442695
          %v9866 = vpow.pop %v9865
          %v9867 = vmul.f32 %v9793, 1.442695
          %v9868 = vpow.pop %v9867
          %v9869 = vmul.f32 %v9794, 1.442695
          %v9870 = vpow.pop %v9869
          %v9871 = vmul.f32 %v9795, 1.442695
          %v9872 = vpow.pop %v9871
          %v9873 = vmul.f32 %v9796, 1.442695
          %v9874 = vpow.pop %v9873
          %v9875 = vmul.f32 %v9797, 1.442695
          %v9876 = vpow.pop %v9875
          %v9877 = vmul.f32 %v9798, 1.442695
          %v9878 = vpow.pop %v9877
          %v9879 = vmul.f32 %v9799, 1.442695
          %v9880 = vpow.pop %v9879
          %v9881 = vmul.f32 %v9800, 1.442695
          %v9882 = vpow.pop %v9881
          %v9883 = vmul.f32 %v9801, 1.442695
          %v9884 = vpow.pop %v9883
          %v9885 = vmul.f32 %v9802, 1.442695
          %v9886 = vpow.pop %v9885
          %v9887 = vmul.f32 %v9803, 1.442695
          %v9888 = vpow.pop %v9887
          %v9889 = vmul.f32 %v9804, 1.442695
          %v9890 = vpow.pop %v9889
          %v9891 = vmul.f32 %v9805, 1.442695
          %v9892 = vpow.pop %v9891
          %v9893 = vmul.f32 %v9806, 1.442695
          %v9894 = vpow.pop %v9893
          %v9895 = vmul.f32 %v9807, 1.442695
          %v9896 = vpow.pop %v9895
          %v9897 = vmul.f32 %v9808, 1.442695
          %v9898 = vpow.pop %v9897
          %v9899 = vmul.f32 %v9809, 1.442695
          %v9900 = vpow.pop %v9899
          %v9901 = vmul.f32 %v9810, 1.442695
          %v9902 = vpow.pop %v9901
          %v9903 = vmul.f32 %v9811, 1.442695
          %v9904 = vpow.pop %v9903
          %v9905 = vmul.f32 %v9812, 1.442695
          %v9906 = vpow.pop %v9905
          %v9907 = vmul.f32 %v9813, 1.442695
          %v9908 = vpow.pop %v9907
          %v9909 = vmul.f32 %v9814, 1.442695
          %v9910 = vpow.pop %v9909
          %v9911 = vmul.f32 %v9815, 1.442695
          %v9912 = vpow.pop %v9911
          %v9913 = vmul.f32 %v9816, 1.442695
          %v9914 = vpow.pop %v9913
          %v9915 = vmul.f32 %v9817, 1.442695
          %v9916 = vpow.pop %v9915
          %v9917 = vmul.f32 %v9818, 1.442695
          %v9918 = vpow.pop %v9917
          %v9919 = vmul.f32 %v9819, 1.442695
          %v9920 = vpow.pop %v9919
          %v9921 = vmul.f32 %v9820, 1.442695
          %v9922 = vpow.pop %v9921
          %v9923 = vmul.f32 %v9821, 1.442695
          %v9924 = vpow.pop %v9923
          %v9925 = vmul.f32 %v9822, 1.442695
          %v9926 = vpow.pop %v9925
          %9927 = vst [vmem:[%s394] sm:$0xff] %v9864
          %9928 = vst [vmem:[%s394 + $0x8] sm:$0xff] %v9866
          %9929 = vst [vmem:[%s394 + $0x10] sm:$0xff] %v9868
          %9930 = vst [vmem:[%s394 + $0x18] sm:$0xff] %v9870
          %9931 = vst [vmem:[%s394 + $0x20] sm:$0xff] %v9872
          %9932 = vst [vmem:[%s394 + $0x28] sm:$0xff] %v9874
          %9933 = vst [vmem:[%s394 + $0x30] sm:$0xff] %v9876
          %9934 = vst [vmem:[%s394 + $0x38] sm:$0xff] %v9878
          %9935 = vst [vmem:[%s394 + $0x40] sm:$0xff] %v9880
          %9936 = vst [vmem:[%s394 + $0x48] sm:$0xff] %v9882
          %9937 = vst [vmem:[%s394 + $0x50] sm:$0xff] %v9884
          %9938 = vst [vmem:[%s394 + $0x58] sm:$0xff] %v9886
          %9939 = vst [vmem:[%s394 + $0x60] sm:$0xff] %v9888
          %9940 = vst [vmem:[%s394 + $0x68] sm:$0xff] %v9890
          %9941 = vst [vmem:[%s394 + $0x70] sm:$0xff] %v9892
          %9942 = vst [vmem:[%s394 + $0x78] sm:$0xff] %v9894
          %9943 = vst [vmem:[%s394 + $0x80] sm:$0xff] %v9896
          %9944 = vst [vmem:[%s394 + $0x88] sm:$0xff] %v9898
          %9945 = vst [vmem:[%s394 + $0x90] sm:$0xff] %v9900
          %9946 = vst [vmem:[%s394 + $0x98] sm:$0xff] %v9902
          %9947 = vst [vmem:[%s394 + $0xa0] sm:$0xff] %v9904
          %9948 = vst [vmem:[%s394 + $0xa8] sm:$0xff] %v9906
          %9949 = vst [vmem:[%s394 + $0xb0] sm:$0xff] %v9908
          %9950 = vst [vmem:[%s394 + $0xb8] sm:$0xff] %v9910
          %9951 = vst [vmem:[%s394 + $0xc0] sm:$0xff] %v9912
          %9952 = vst [vmem:[%s394 + $0xc8] sm:$0xff] %v9914
          %9953 = vst [vmem:[%s394 + $0xd0] sm:$0xff] %v9916
          %9954 = vst [vmem:[%s394 + $0xd8] sm:$0xff] %v9918
          %9955 = vst [vmem:[%s394 + $0xe0] sm:$0xff] %v9920
          %9956 = vst [vmem:[%s394 + $0xe8] sm:$0xff] %v9922
          %9957 = vst [vmem:[%s394 + $0xf0] sm:$0xff] %v9924
          %9958 = vst [vmem:[%s394 + $0xf8] sm:$0xff] %v9926
        $region60: #{tpu_custom_call.1} parent=51 // pred_fallthru
          _
        %s9959 = sand.u32 %s249, 1
        %s9960 = scalar_lea.sflag [#allocation4], %s9959
        %s9961 = sand.u32 %s249, 1
        %s9962 = smul.addr %s9961, 256
        %s9963 = scalar_lea.vmem [#allocation3], %s9962
        // Predicated region
        $region61: #{tpu_custom_call.1} parent=51 // pred_check
          %p9964 = pneg %p259
        $region62: #{tpu_custom_call.1} parent=51 // pred_check_branch
          %9966 = sbr.rel (%p9964) target = $region64
        $region63: #{tpu_custom_call.1} parent=51 // pred_region
          %s9967 = smul.u32 %s26, 2
          %s9968 = sadd.s32 %s9967, %s27
          %9970 = vsyncadd %s9960, 0
          %s9971 = smul.addr %s9968, 32
          %s9972 = smul.addr %s9971, 8
          %s9973 = scalar_lea.hbm %s8, %s9972
          %s9974 = sshll.u32 %s9963, 4
          %s9975 = int_to_ptr.vmem [resolvable:$true] %s9974
          %s9976 = sshll.u32 %s9973, 4
          %s9977 = int_to_ptr.hbm [resolvable:$true] %s9976
          %9982 = dma.vmem_to_hbm [thread:$0]  %s9975, 4096, %s9977, %s9960, 128, 128, 8
        $region64: #{tpu_custom_call.1} parent=51 // pred_fallthru
          _
      $region52: #{tpu_custom_call.1} parent=5 // pred_fallthru
        _
      %p9983 = scmp.le.s32.totalorder 2, %s17
      // Predicated region
      $region65: #{tpu_custom_call.1} parent=5 // pred_check
        %p9984 = pneg %p9983
      $region66: #{tpu_custom_call.1} parent=5 // pred_check_branch
        %9986 = sbr.rel (%p9984) target = $region68
      $region67: #{tpu_custom_call.1} parent=5 // pred_region
        %s9987 = ssub.s32 %s17, 2
        // Predicated region
        $region69: #{tpu_custom_call.1} parent=67 // pred_check
          %p9988 = pneg %p265
        $region70: #{tpu_custom_call.1} parent=67 // pred_check_branch
          %9990 = sbr.rel (%p9988) target = $region72
        $region71: #{tpu_custom_call.1} parent=67 // pred_region
          %s9991 = sand.u32 %s250, 1
          %s9992 = scalar_lea.sflag [#allocation4], %s9991
          %s9993 = sand.u32 %s250, 1
          %s9994 = smul.addr %s9993, 256
          %s9995 = scalar_lea.vmem [#allocation3], %s9994
          %9997 = dma.done %s9992, 4096
        $region72: #{tpu_custom_call.1} parent=67 // pred_fallthru
          _
      $region68: #{tpu_custom_call.1} parent=5 // pred_fallthru
        _
    $region6: #{tpu_custom_call.1} parent=1 // loop_footer
      %s21 = sadd.s32 1, %s17
    $region7: #{tpu_custom_call.1} parent=1 // loop_footer_branch
      %16 = sbr.rel target = $region3
    $region8: #{tpu_custom_call.1} parent=1 // loop_exit
      _
    %9998 = vsyncpa [#allocation4], 1
    %s9999 = scalar_lea.sflag [#allocation4], 1
    %10000 = vsyncpa %s9999, 1

</llo_original>
